<compile_context>
chip_gen: v5e
topology: v5e:2x2
jax: 0.10.0
libtpu: 0.0.40
codegen_flags: <defaults>
</compile_context>

<pallas_src>
import jax
import jax.numpy as jnp
from jax.experimental import pallas as pl
from jax.experimental.pallas import tpu as pltpu

BN_EPS = 1e-5
LEAKY_SLOPE = 0.2


# ----------------------------------------------------------------------------
# Pallas kernels
# ----------------------------------------------------------------------------
def _conv_gemm_leaky_kernel(a_ref, w_ref, b_ref, o_ref):
    """One M-tile of (M,K)@(K,N) with fused per-channel bias (BN pre-folded
    into the weight columns) and LeakyReLU(0.2). bf16 operands, f32
    accumulation/epilogue, bf16 output."""
    acc = jnp.dot(a_ref[...], w_ref[...], preferred_element_type=jnp.float32)
    y = acc + b_ref[...]
    o_ref[...] = jnp.where(y > 0, y, LEAKY_SLOPE * y).astype(o_ref.dtype)


def conv_gemm_leaky(patches_bf16, w_bf16, bias, *, tm):
    M, K = patches_bf16.shape
    Kw, N = w_bf16.shape
    assert K == Kw
    tm = min(tm, M)
    return pl.pallas_call(
        _conv_gemm_leaky_kernel,
        out_shape=jax.ShapeDtypeStruct((M, N), jnp.bfloat16),
        grid=(pl.cdiv(M, tm),),
        in_specs=[
            pl.BlockSpec((tm, K), lambda i: (i, 0)),
            pl.BlockSpec((K, N), lambda i: (0, 0)),
            pl.BlockSpec((1, N), lambda i: (0, 0)),
        ],
        out_specs=pl.BlockSpec((tm, N), lambda i: (i, 0)),
        compiler_params=pltpu.CompilerParams(
            dimension_semantics=("parallel",)),
    )(patches_bf16, w_bf16, bias.reshape(1, N))


def _block3_tail_kernel(a_ref, w3_ref, b3_ref, pool_ref,
                        caw1_ref, cab1_ref, caw2_ref, cab2_ref,
                        wph_ref, bph_ref, wout_ref, bout_ref,
                        o_ref, acc_ref):
    """Fused tail, gridded over K so the 4 MiB w3 load is pipelined:
    block3 conv (GEMM, folded BN) + LeakyReLU, CALayer, global avg-pool, and
    all FC heads -> packed (N, 10) output [type(6)|rank(3)|score(1)]."""
    k = pl.program_id(0)

    @pl.when(k == 0)
    def _():
        acc_ref[...] = jnp.zeros_like(acc_ref)

    acc_ref[...] += jnp.dot(a_ref[...], w3_ref[...],
                            preferred_element_type=jnp.float32)

    @pl.when(k == pl.num_programs(0) - 1)
    def _():
        # folded-BN bias + LeakyReLU(0.2)
        y = acc_ref[...] + b3_ref[...]
        y = jnp.where(y > 0, y, LEAKY_SLOPE * y)                    # (N*HW, 512)

        # AdaptiveAvgPool2d((1,1)) as a tiny pooling matmul (rows per sample)
        pooled_pre = jnp.dot(pool_ref[...], y,
                             preferred_element_type=jnp.float32)    # (N, 512)

        # CALayer: 1x1 conv (512->32) + ReLU, 1x1 conv (32->512) + Sigmoid.
        # Gate is constant over HW, so mean_HW(x * gate) == mean_HW(x) * gate.
        g1 = jnp.dot(pooled_pre, caw1_ref[...],
                     preferred_element_type=jnp.float32) + cab1_ref[...]
        g1 = jnp.maximum(g1, 0.0)
        g2 = jnp.dot(g1, caw2_ref[...],
                     preferred_element_type=jnp.float32) + cab2_ref[...]
        pooled = pooled_pre * jax.nn.sigmoid(g2)                    # (N, 512)

        # FC heads (Dropout = identity at inference).
        h = jnp.dot(pooled, wph_ref[...],
                    preferred_element_type=jnp.float32) + bph_ref[...]   # (N, 32)
        o_ref[...] = jnp.dot(h, wout_ref[...],
                             preferred_element_type=jnp.float32) + bout_ref[...]


def block3_ca_heads(patches_bf16, prep, n_batch, hw, *, n_ksteps=4):
    M, K = patches_bf16.shape                       # (n_batch*hw, 4096)
    assert K % n_ksteps == 0
    tk = K // n_ksteps
    # per-sample mean over HW as a (N, N*HW) pooling matrix
    pool_mat = jnp.repeat(jnp.eye(n_batch, dtype=jnp.float32), hw, axis=1) / hw

    args = (patches_bf16, prep["w3"], prep["b3"], pool_mat,
            prep["caw1"], prep["cab1"], prep["caw2"], prep["cab2"],
            prep["wph"], prep["bph"], prep["wout"], prep["bout"])
    in_specs = [
        pl.BlockSpec((M, tk), lambda k: (0, k)),          # patches: stream K
        pl.BlockSpec((tk, 512), lambda k: (k, 0)),        # w3: stream K
        pl.BlockSpec((1, 512), lambda k: (0, 0)),         # b3
        pl.BlockSpec((n_batch, M), lambda k: (0, 0)),     # pool matrix
        pl.BlockSpec((512, 32), lambda k: (0, 0)),        # caw1
        pl.BlockSpec((1, 32), lambda k: (0, 0)),          # cab1
        pl.BlockSpec((32, 512), lambda k: (0, 0)),        # caw2
        pl.BlockSpec((1, 512), lambda k: (0, 0)),         # cab2
        pl.BlockSpec((512, 32), lambda k: (0, 0)),        # wph
        pl.BlockSpec((1, 32), lambda k: (0, 0)),          # bph
        pl.BlockSpec((32, 10), lambda k: (0, 0)),         # wout
        pl.BlockSpec((1, 10), lambda k: (0, 0)),          # bout
    ]
    return pl.pallas_call(
        _block3_tail_kernel,
        out_shape=jax.ShapeDtypeStruct((n_batch, 10), jnp.float32),
        grid=(n_ksteps,),
        in_specs=in_specs,
        out_specs=pl.BlockSpec((n_batch, 10), lambda k: (0, 0)),
        scratch_shapes=[pltpu.VMEM((M, 512), jnp.float32)],
        compiler_params=pltpu.CompilerParams(
            dimension_semantics=("arbitrary",)),
    )(*args)


# ----------------------------------------------------------------------------
# Glue: channels-last im2col (bf16), maxpool, weight prep (BN folds, merges)
# ----------------------------------------------------------------------------
def im2col_nhwc(x, ksize, stride, pad):
    """x: (N, H, W, C) bf16 -> (N*Ho*Wo, ksize*ksize*C) bf16 patches.
    K ordering is (kh, kw, Cin), matching the prepared weight layout."""
    N, H, W, C = x.shape
    x = x.astype(jnp.bfloat16)
    xp = jnp.pad(x, ((0, 0), (pad, pad), (pad, pad), (0, 0)))
    Ho = (H + 2 * pad - ksize) // stride + 1
    Wo = (W + 2 * pad - ksize) // stride + 1
    cols = []
    for di in range(ksize):
        for dj in range(ksize):
            cols.append(xp[:, di:di + stride * Ho:stride,
                           dj:dj + stride * Wo:stride, :])
    patches = jnp.stack(cols, axis=3)                    # (N, Ho, Wo, k*k, C)
    patches = patches.reshape(N * Ho * Wo, ksize * ksize * C)
    return patches, Ho, Wo


def maxpool2_nhwc(x):  # MaxPool2d(2), channels-last
    N, H, W, C = x.shape
    return x.reshape(N, H // 2, 2, W // 2, 2, C).max(axis=(2, 4))


def _conv_w_f32(w_oihw):
    """OIHW conv weight -> (kh*kw*Cin, Cout) f32, matching im2col K order."""
    Cout, Cin, kh, kw = w_oihw.shape
    return w_oihw.transpose(2, 3, 1, 0).reshape(kh * kw * Cin, Cout)


def _fold_bn(bn):
    scale = bn["gamma"] / jnp.sqrt(bn["var"] + BN_EPS)
    bias = bn["beta"] - bn["mean"] * scale
    return scale, bias


def prepare_params(p):
    """Pre-transpose / BN-fold (scale into weight columns) / merge all weights
    once, outside jit."""
    prep = {}

    # stage 1: block1 conv#1 (no BN) + skip1 conv (BN) share x's patches -> 64 lanes
    s_s1, b_s1 = _fold_bn(p["s1_bn"])
    w_a = jnp.concatenate(
        [_conv_w_f32(p["b1c1_w"]), _conv_w_f32(p["s1c_w"]) * s_s1[None, :]], axis=1)
    prep["w_a"] = w_a.astype(jnp.bfloat16)
    prep["b_a"] = jnp.concatenate([jnp.zeros((32,), jnp.float32), b_s1])

    # stage 2: block1 conv#2 + BN
    s_b, b_b = _fold_bn(p["b1_bn"])
    prep["w_b"] = (_conv_w_f32(p["b1c2_w"]) * s_b[None, :]).astype(jnp.bfloat16)
    prep["b_b"] = b_b

    # stage 3: block2 conv#1 (BN) + skip2 conv (BN) share x2's patches -> 192 lanes
    s_21, b_21 = _fold_bn(p["b2_bn1"])
    s_s2, b_s2 = _fold_bn(p["s2_bn"])
    w_c = jnp.concatenate(
        [_conv_w_f32(p["b2c1_w"]) * s_21[None, :],
         _conv_w_f32(p["s2c_w"]) * s_s2[None, :]], axis=1)
    prep["w_c"] = w_c.astype(jnp.bfloat16)
    prep["b_c"] = jnp.concatenate([b_21, b_s2])

    # stage 4: block2 conv#2 + BN
    s_d, b_d = _fold_bn(p["b2_bn2"])
    prep["w_d"] = (_conv_w_f32(p["b2c2_w"]) * s_d[None, :]).astype(jnp.bfloat16)
    prep["b_d"] = b_d

    # stage 5 (fused tail): block3 conv + BN (folded) + CA + heads
    s3, b3 = _fold_bn(p["b3_bn"])
    prep["w3"] = (_conv_w_f32(p["b3c_w"]) * s3[None, :]).astype(jnp.bfloat16)
    prep["b3"] = b3.reshape(1, -1)
    prep["caw1"] = p["ca_c1_w"].reshape(32, 512).T            # (512, 32)
    prep["cab1"] = p["ca_c1_b"].reshape(1, 32)
    prep["caw2"] = p["ca_c2_w"].reshape(512, 32).T            # (32, 512)
    prep["cab2"] = p["ca_c2_b"].reshape(1, 512)
    # [fc_classify | fc_score] merged into one (512, 32) matmul
    prep["wph"] = jnp.concatenate([p["fc_classify_w"].T, p["fc_score_w"].T], axis=1)
    prep["bph"] = jnp.concatenate([p["fc_classify_b"], p["fc_score_b"]]).reshape(1, 32)
    # block-diagonal head weight: [type(6)|rank(3)] from classify, [score(1)] from score
    wout = jnp.zeros((32, 10), jnp.float32)
    wout = wout.at[:16, 0:6].set(p["fc_type_w"].T)
    wout = wout.at[:16, 6:9].set(p["fc_rank_w"].T)
    wout = wout.at[16:, 9:10].set(p["fc_value_w"].T)
    prep["wout"] = wout
    prep["bout"] = jnp.concatenate(
        [p["fc_type_b"], p["fc_rank_b"], p["fc_value_b"]]).reshape(1, 10)
    return prep


# ----------------------------------------------------------------------------
# Model: parameters + forward
# ----------------------------------------------------------------------------
def init_params(key):
    keys = iter(jax.random.split(key, 64))

    def nrm(shape, s=0.05):
        return jax.random.normal(next(keys), shape, jnp.float32) * s

    def bn(c):
        return dict(
            gamma=1.0 + 0.1 * jax.random.normal(next(keys), (c,), jnp.float32),
            beta=0.1 * jax.random.normal(next(keys), (c,), jnp.float32),
            mean=0.1 * jax.random.normal(next(keys), (c,), jnp.float32),
            var=0.5 + jax.random.uniform(next(keys), (c,), jnp.float32),
        )

    return dict(
        b1c1_w=nrm((32, 1, 4, 4)),
        b1c2_w=nrm((32, 32, 4, 4)), b1_bn=bn(32),
        s1c_w=nrm((32, 1, 4, 4)), s1_bn=bn(32),
        b2c1_w=nrm((64, 64, 4, 4)), b2_bn1=bn(64),
        b2c2_w=nrm((128, 64, 4, 4)), b2_bn2=bn(128),
        s2c_w=nrm((128, 64, 4, 4)), s2_bn=bn(128),
        b3c_w=nrm((512, 256, 4, 4)), b3_bn=bn(512),
        ca_c1_w=nrm((32, 512, 1, 1)), ca_c1_b=nrm((32,)),
        ca_c2_w=nrm((512, 32, 1, 1)), ca_c2_b=nrm((512,)),
        fc_classify_w=nrm((16, 512)), fc_classify_b=nrm((16,)),
        fc_rank_w=nrm((3, 16)), fc_rank_b=nrm((3,)),
        fc_type_w=nrm((6, 16)), fc_type_b=nrm((6,)),
        fc_score_w=nrm((16, 512)), fc_score_b=nrm((16,)),
        fc_value_w=nrm((1, 16)), fc_value_b=nrm((1,)),
    )


def second_model_forward(x_nchw, prep):
    N = x_nchw.shape[0]
    x = jnp.transpose(x_nchw, (0, 2, 3, 1)).astype(jnp.bfloat16)   # NHWC, bf16

    # stage 1: block1 conv#1 (+LeakyReLU) and skip1 conv+BN+LeakyReLU (merged)
    pat, Ho, Wo = im2col_nhwc(x, 4, 2, 1)
    y = conv_gemm_leaky(pat, prep["w_a"], prep["b_a"], tm=1024)
    y = y.reshape(N, Ho, Wo, 64)
    b1a, s1 = y[..., :32], y[..., 32:]
    s1 = maxpool2_nhwc(s1)                                   # skip1 MaxPool2d(2)

    # stage 2: block1 conv#2 + BN + LeakyReLU
    pat, Ho, Wo = im2col_nhwc(b1a, 4, 2, 1)
    b1 = conv_gemm_leaky(pat, prep["w_b"], prep["b_b"], tm=256)
    b1 = b1.reshape(N, Ho, Wo, 32)

    x2 = jnp.concatenate([b1, s1], axis=-1)                  # (N, H/4, W/4, 64)

    # stage 3: block2 conv#1 + BN + LeakyReLU and skip2 conv+BN+LeakyReLU (merged)
    pat, Ho, Wo = im2col_nhwc(x2, 4, 2, 1)
    y = conv_gemm_leaky(pat, prep["w_c"], prep["b_c"], tm=64)
    y = y.reshape(N, Ho, Wo, 192)
    b2a, s2 = y[..., :64], y[..., 64:]
    s2 = maxpool2_nhwc(s2)                                   # skip2 MaxPool2d(2)

    # stage 4: block2 conv#2 + BN + LeakyReLU
    pat, Ho, Wo = im2col_nhwc(b2a, 4, 2, 1)
    b2 = conv_gemm_leaky(pat, prep["w_d"], prep["b_d"], tm=32)
    b2 = b2.reshape(N, Ho, Wo, 128)

    x3 = jnp.concatenate([b2, s2], axis=-1)                  # (N, H/16, W/16, 256)

    # stage 5: fused block3 + CALayer + global avg-pool + FC heads (K-streamed)
    pat, Ho, Wo = im2col_nhwc(x3, 4, 2, 1)
    out = block3_ca_heads(pat, prep, N, Ho * Wo)             # (N, 10) packed

    return out[:, 0:6], out[:, 6:9], out[:, 9:10]


if __name__ == "__main__":
    key = jax.random.PRNGKey(0)
    k_in, k_par = jax.random.split(key)
    x = jax.random.normal(k_in, (2, 1, 64, 64), jnp.float32)  # NCHW, 1 channel
    params = init_params(k_par)
    prep = prepare_params(params)          # one-time weight prep, outside jit

    fwd = jax.jit(second_model_forward)
    out_type, out_rank, out_score = fwd(x, prep)
    jax.block_until_ready((out_type, out_rank, out_score))

    assert out_type.shape == (2, 6)
    assert out_rank.shape == (2, 3)
    assert out_score.shape == (2, 1)
    print("KERNEL_OK")
</pallas_src>

<mosaic_0001>
module attributes {stable_mosaic.version = 11 : i64} {
  func.func @_conv_gemm_leaky_kernel(%arg0: i32, %arg1: memref<1024x16xbf16, #tpu.memory_space<vmem>>, %arg2: memref<16x64xbf16, #tpu.memory_space<vmem>>, %arg3: memref<1x64xf32, #tpu.memory_space<vmem>>, %arg4: memref<1024x64xbf16, #tpu.memory_space<vmem>>) attributes {dimension_semantics = [#tpu.dimension_semantics<parallel>], iteration_bounds = array<i64: 2>, scalar_prefetch = 0 : i64, scratch_operands = 0 : i64, tpu.core_type = #tpu.core_type<tc>, window_params = [{transform_indices = @transform_0, window_bounds = array<i64: 1024, 16>}, {pipeline_mode = #tpu.pipeline_mode<synchronous>, transform_indices = @transform_1, window_bounds = array<i64: 16, 64>}, {pipeline_mode = #tpu.pipeline_mode<synchronous>, transform_indices = @transform_2, window_bounds = array<i64: 1, 64>}, {transform_indices = @transform_3, window_bounds = array<i64: 1024, 64>}]} {
    %c0 = arith.constant 0 : index
    %c0_0 = arith.constant 0 : index
    %0 = vector.load %arg1[%c0, %c0_0] : memref<1024x16xbf16, #tpu.memory_space<vmem>>, vector<1024x16xbf16>
    %c0_1 = arith.constant 0 : index
    %c0_2 = arith.constant 0 : index
    %1 = vector.load %arg2[%c0_1, %c0_2] : memref<16x64xbf16, #tpu.memory_space<vmem>>, vector<16x64xbf16>
    %cst = arith.constant dense<0.000000e+00> : vector<1024x64xf32>
    %2 = tpu.matmul %0, %1, %cst {dimension_numbers = #tpu.dot_dimension_numbers<[1], [0], [0], [1], [0, 0, 1, 1], [], []>} : vector<1024x16xbf16>, vector<16x64xbf16>, vector<1024x64xf32> -> vector<1024x64xf32>
    %c0_3 = arith.constant 0 : index
    %c0_4 = arith.constant 0 : index
    %3 = vector.load %arg3[%c0_3, %c0_4] : memref<1x64xf32, #tpu.memory_space<vmem>>, vector<1x64xf32>
    %4 = vector.broadcast %3 : vector<1x64xf32> to vector<1024x64xf32>
    %5 = arith.addf %2, %4 : vector<1024x64xf32>
    %cst_5 = arith.constant 0.000000e+00 : f32
    %6 = vector.broadcast %cst_5 : f32 to vector<1024x64xf32>
    %7 = arith.cmpf ogt, %5, %6 : vector<1024x64xf32>
    %cst_6 = arith.constant 2.000000e-01 : f32
    %8 = vector.broadcast %cst_6 : f32 to vector<1024x64xf32>
    %9 = arith.mulf %8, %5 : vector<1024x64xf32>
    %10 = arith.select %7, %5, %9 : vector<1024x64xi1>, vector<1024x64xf32>
    %11 = arith.truncf %10 : vector<1024x64xf32> to vector<1024x64xbf16>
    %c0_7 = arith.constant 0 : index
    %c0_8 = arith.constant 0 : index
    %12 = vector.load %arg4[%c0_7, %c0_8] : memref<1024x64xbf16, #tpu.memory_space<vmem>>, vector<1024x64xbf16>
    tpu.vector_store %arg4[%c0_7, %c0_8], %11 {strides = array<i32>} : memref<1024x64xbf16, #tpu.memory_space<vmem>>, vector<1024x64xbf16>,
    return
  }
  func.func @transform_0(%arg0: i32) -> (i32, i32) {
    %c0_i32 = arith.constant 0 : i32
    %c0_i32_0 = arith.constant 0 : i32
    return %arg0, %c0_i32 : i32, i32
  }
  func.func @transform_1(%arg0: i32) -> (i32, i32) {
    %c0_i32 = arith.constant 0 : i32
    %c0_i32_0 = arith.constant 0 : i32
    %c0_i32_1 = arith.constant 0 : i32
    return %c0_i32, %c0_i32_0 : i32, i32
  }
  func.func @transform_2(%arg0: i32) -> (i32, i32) {
    %c0_i32 = arith.constant 0 : i32
    %c0_i32_0 = arith.constant 0 : i32
    %c0_i32_1 = arith.constant 0 : i32
    return %c0_i32, %c0_i32_0 : i32, i32
  }
  func.func @transform_3(%arg0: i32) -> (i32, i32) {
    %c0_i32 = arith.constant 0 : i32
    %c0_i32_0 = arith.constant 0 : i32
    return %arg0, %c0_i32 : i32, i32
  }
}

module attributes {stable_mosaic.version = 11 : i64} {
  func.func @_conv_gemm_leaky_kernel(%arg0: i32, %arg1: memref<256x512xbf16, #tpu.memory_space<vmem>>, %arg2: memref<512x32xbf16, #tpu.memory_space<vmem>>, %arg3: memref<1x32xf32, #tpu.memory_space<vmem>>, %arg4: memref<256x32xbf16, #tpu.memory_space<vmem>>) attributes {dimension_semantics = [#tpu.dimension_semantics<parallel>], iteration_bounds = array<i64: 2>, scalar_prefetch = 0 : i64, scratch_operands = 0 : i64, tpu.core_type = #tpu.core_type<tc>, window_params = [{transform_indices = @transform_0, window_bounds = array<i64: 256, 512>}, {pipeline_mode = #tpu.pipeline_mode<synchronous>, transform_indices = @transform_1, window_bounds = array<i64: 512, 32>}, {pipeline_mode = #tpu.pipeline_mode<synchronous>, transform_indices = @transform_2, window_bounds = array<i64: 1, 32>}, {transform_indices = @transform_3, window_bounds = array<i64: 256, 32>}]} {
    %c0 = arith.constant 0 : index
    %c0_0 = arith.constant 0 : index
    %0 = vector.load %arg1[%c0, %c0_0] : memref<256x512xbf16, #tpu.memory_space<vmem>>, vector<256x512xbf16>
    %c0_1 = arith.constant 0 : index
    %c0_2 = arith.constant 0 : index
    %1 = vector.load %arg2[%c0_1, %c0_2] : memref<512x32xbf16, #tpu.memory_space<vmem>>, vector<512x32xbf16>
    %cst = arith.constant dense<0.000000e+00> : vector<256x32xf32>
    %2 = tpu.matmul %0, %1, %cst {dimension_numbers = #tpu.dot_dimension_numbers<[1], [0], [0], [1], [0, 0, 1, 1], [], []>} : vector<256x512xbf16>, vector<512x32xbf16>, vector<256x32xf32> -> vector<256x32xf32>
    %c0_3 = arith.constant 0 : index
    %c0_4 = arith.constant 0 : index
    %3 = vector.load %arg3[%c0_3, %c0_4] : memref<1x32xf32, #tpu.memory_space<vmem>>, vector<1x32xf32>
    %4 = vector.broadcast %3 : vector<1x32xf32> to vector<256x32xf32>
    %5 = arith.addf %2, %4 : vector<256x32xf32>
    %cst_5 = arith.constant 0.000000e+00 : f32
    %6 = vector.broadcast %cst_5 : f32 to vector<256x32xf32>
    %7 = arith.cmpf ogt, %5, %6 : vector<256x32xf32>
    %cst_6 = arith.constant 2.000000e-01 : f32
    %8 = vector.broadcast %cst_6 : f32 to vector<256x32xf32>
    %9 = arith.mulf %8, %5 : vector<256x32xf32>
    %10 = arith.select %7, %5, %9 : vector<256x32xi1>, vector<256x32xf32>
    %11 = arith.truncf %10 : vector<256x32xf32> to vector<256x32xbf16>
    %c0_7 = arith.constant 0 : index
    %c0_8 = arith.constant 0 : index
    %12 = vector.load %arg4[%c0_7, %c0_8] : memref<256x32xbf16, #tpu.memory_space<vmem>>, vector<256x32xbf16>
    tpu.vector_store %arg4[%c0_7, %c0_8], %11 {strides = array<i32>} : memref<256x32xbf16, #tpu.memory_space<vmem>>, vector<256x32xbf16>,
    return
  }
  func.func @transform_0(%arg0: i32) -> (i32, i32) {
    %c0_i32 = arith.constant 0 : i32
    %c0_i32_0 = arith.constant 0 : i32
    return %arg0, %c0_i32 : i32, i32
  }
  func.func @transform_1(%arg0: i32) -> (i32, i32) {
    %c0_i32 = arith.constant 0 : i32
    %c0_i32_0 = arith.constant 0 : i32
    %c0_i32_1 = arith.constant 0 : i32
    return %c0_i32, %c0_i32_0 : i32, i32
  }
  func.func @transform_2(%arg0: i32) -> (i32, i32) {
    %c0_i32 = arith.constant 0 : i32
    %c0_i32_0 = arith.constant 0 : i32
    %c0_i32_1 = arith.constant 0 : i32
    return %c0_i32, %c0_i32_0 : i32, i32
  }
  func.func @transform_3(%arg0: i32) -> (i32, i32) {
    %c0_i32 = arith.constant 0 : i32
    %c0_i32_0 = arith.constant 0 : i32
    return %arg0, %c0_i32 : i32, i32
  }
}

module attributes {stable_mosaic.version = 11 : i64} {
  func.func @_conv_gemm_leaky_kernel(%arg0: i32, %arg1: memref<64x1024xbf16, #tpu.memory_space<vmem>>, %arg2: memref<1024x192xbf16, #tpu.memory_space<vmem>>, %arg3: memref<1x192xf32, #tpu.memory_space<vmem>>, %arg4: memref<64x192xbf16, #tpu.memory_space<vmem>>) attributes {dimension_semantics = [#tpu.dimension_semantics<parallel>], iteration_bounds = array<i64: 2>, scalar_prefetch = 0 : i64, scratch_operands = 0 : i64, tpu.core_type = #tpu.core_type<tc>, window_params = [{transform_indices = @transform_0, window_bounds = array<i64: 64, 1024>}, {pipeline_mode = #tpu.pipeline_mode<synchronous>, transform_indices = @transform_1, window_bounds = array<i64: 1024, 192>}, {pipeline_mode = #tpu.pipeline_mode<synchronous>, transform_indices = @transform_2, window_bounds = array<i64: 1, 192>}, {transform_indices = @transform_3, window_bounds = array<i64: 64, 192>}]} {
    %c0 = arith.constant 0 : index
    %c0_0 = arith.constant 0 : index
    %0 = vector.load %arg1[%c0, %c0_0] : memref<64x1024xbf16, #tpu.memory_space<vmem>>, vector<64x1024xbf16>
    %c0_1 = arith.constant 0 : index
    %c0_2 = arith.constant 0 : index
    %1 = vector.load %arg2[%c0_1, %c0_2] : memref<1024x192xbf16, #tpu.memory_space<vmem>>, vector<1024x192xbf16>
    %cst = arith.constant dense<0.000000e+00> : vector<64x192xf32>
    %2 = tpu.matmul %0, %1, %cst {dimension_numbers = #tpu.dot_dimension_numbers<[1], [0], [0], [1], [0, 0, 1, 1], [], []>} : vector<64x1024xbf16>, vector<1024x192xbf16>, vector<64x192xf32> -> vector<64x192xf32>
    %c0_3 = arith.constant 0 : index
    %c0_4 = arith.constant 0 : index
    %3 = vector.load %arg3[%c0_3, %c0_4] : memref<1x192xf32, #tpu.memory_space<vmem>>, vector<1x192xf32>
    %4 = vector.broadcast %3 : vector<1x192xf32> to vector<64x192xf32>
    %5 = arith.addf %2, %4 : vector<64x192xf32>
    %cst_5 = arith.constant 0.000000e+00 : f32
    %6 = vector.broadcast %cst_5 : f32 to vector<64x192xf32>
    %7 = arith.cmpf ogt, %5, %6 : vector<64x192xf32>
    %cst_6 = arith.constant 2.000000e-01 : f32
    %8 = vector.broadcast %cst_6 : f32 to vector<64x192xf32>
    %9 = arith.mulf %8, %5 : vector<64x192xf32>
    %10 = arith.select %7, %5, %9 : vector<64x192xi1>, vector<64x192xf32>
    %11 = arith.truncf %10 : vector<64x192xf32> to vector<64x192xbf16>
    %c0_7 = arith.constant 0 : index
    %c0_8 = arith.constant 0 : index
    %12 = vector.load %arg4[%c0_7, %c0_8] : memref<64x192xbf16, #tpu.memory_space<vmem>>, vector<64x192xbf16>
    tpu.vector_store %arg4[%c0_7, %c0_8], %11 {strides = array<i32>} : memref<64x192xbf16, #tpu.memory_space<vmem>>, vector<64x192xbf16>,
    return
  }
  func.func @transform_0(%arg0: i32) -> (i32, i32) {
    %c0_i32 = arith.constant 0 : i32
    %c0_i32_0 = arith.constant 0 : i32
    return %arg0, %c0_i32 : i32, i32
  }
  func.func @transform_1(%arg0: i32) -> (i32, i32) {
    %c0_i32 = arith.constant 0 : i32
    %c0_i32_0 = arith.constant 0 : i32
    %c0_i32_1 = arith.constant 0 : i32
    return %c0_i32, %c0_i32_0 : i32, i32
  }
  func.func @transform_2(%arg0: i32) -> (i32, i32) {
    %c0_i32 = arith.constant 0 : i32
    %c0_i32_0 = arith.constant 0 : i32
    %c0_i32_1 = arith.constant 0 : i32
    return %c0_i32, %c0_i32_0 : i32, i32
  }
  func.func @transform_3(%arg0: i32) -> (i32, i32) {
    %c0_i32 = arith.constant 0 : i32
    %c0_i32_0 = arith.constant 0 : i32
    return %arg0, %c0_i32 : i32, i32
  }
}

module attributes {stable_mosaic.version = 11 : i64} {
  func.func @_conv_gemm_leaky_kernel(%arg0: i32, %arg1: memref<32x1024xbf16, #tpu.memory_space<vmem>>, %arg2: memref<1024x128xbf16, #tpu.memory_space<vmem>>, %arg3: memref<1x128xf32, #tpu.memory_space<vmem>>, %arg4: memref<32x128xbf16, #tpu.memory_space<vmem>>) attributes {dimension_semantics = [#tpu.dimension_semantics<parallel>], iteration_bounds = array<i64: 1>, scalar_prefetch = 0 : i64, scratch_operands = 0 : i64, tpu.core_type = #tpu.core_type<tc>, window_params = [{transform_indices = @transform_0, window_bounds = array<i64: 32, 1024>}, {pipeline_mode = #tpu.pipeline_mode<synchronous>, transform_indices = @transform_1, window_bounds = array<i64: 1024, 128>}, {pipeline_mode = #tpu.pipeline_mode<synchronous>, transform_indices = @transform_2, window_bounds = array<i64: 1, 128>}, {transform_indices = @transform_3, window_bounds = array<i64: 32, 128>}]} {
    %c0 = arith.constant 0 : index
    %c0_0 = arith.constant 0 : index
    %0 = vector.load %arg1[%c0, %c0_0] : memref<32x1024xbf16, #tpu.memory_space<vmem>>, vector<32x1024xbf16>
    %c0_1 = arith.constant 0 : index
    %c0_2 = arith.constant 0 : index
    %1 = vector.load %arg2[%c0_1, %c0_2] : memref<1024x128xbf16, #tpu.memory_space<vmem>>, vector<1024x128xbf16>
    %cst = arith.constant dense<0.000000e+00> : vector<32x128xf32>
    %2 = tpu.matmul %0, %1, %cst {dimension_numbers = #tpu.dot_dimension_numbers<[1], [0], [0], [1], [0, 0, 1, 1], [], []>} : vector<32x1024xbf16>, vector<1024x128xbf16>, vector<32x128xf32> -> vector<32x128xf32>
    %c0_3 = arith.constant 0 : index
    %c0_4 = arith.constant 0 : index
    %3 = vector.load %arg3[%c0_3, %c0_4] : memref<1x128xf32, #tpu.memory_space<vmem>>, vector<1x128xf32>
    %4 = vector.broadcast %3 : vector<1x128xf32> to vector<32x128xf32>
    %5 = arith.addf %2, %4 : vector<32x128xf32>
    %cst_5 = arith.constant 0.000000e+00 : f32
    %6 = vector.broadcast %cst_5 : f32 to vector<32x128xf32>
    %7 = arith.cmpf ogt, %5, %6 : vector<32x128xf32>
    %cst_6 = arith.constant 2.000000e-01 : f32
    %8 = vector.broadcast %cst_6 : f32 to vector<32x128xf32>
    %9 = arith.mulf %8, %5 : vector<32x128xf32>
    %10 = arith.select %7, %5, %9 : vector<32x128xi1>, vector<32x128xf32>
    %11 = arith.truncf %10 : vector<32x128xf32> to vector<32x128xbf16>
    %c0_7 = arith.constant 0 : index
    %c0_8 = arith.constant 0 : index
    %12 = vector.load %arg4[%c0_7, %c0_8] : memref<32x128xbf16, #tpu.memory_space<vmem>>, vector<32x128xbf16>
    tpu.vector_store %arg4[%c0_7, %c0_8], %11 {strides = array<i32>} : memref<32x128xbf16, #tpu.memory_space<vmem>>, vector<32x128xbf16>,
    return
  }
  func.func @transform_0(%arg0: i32) -> (i32, i32) {
    %c0_i32 = arith.constant 0 : i32
    %c0_i32_0 = arith.constant 0 : i32
    return %arg0, %c0_i32 : i32, i32
  }
  func.func @transform_1(%arg0: i32) -> (i32, i32) {
    %c0_i32 = arith.constant 0 : i32
    %c0_i32_0 = arith.constant 0 : i32
    %c0_i32_1 = arith.constant 0 : i32
    return %c0_i32, %c0_i32_0 : i32, i32
  }
  func.func @transform_2(%arg0: i32) -> (i32, i32) {
    %c0_i32 = arith.constant 0 : i32
    %c0_i32_0 = arith.constant 0 : i32
    %c0_i32_1 = arith.constant 0 : i32
    return %c0_i32, %c0_i32_0 : i32, i32
  }
  func.func @transform_3(%arg0: i32) -> (i32, i32) {
    %c0_i32 = arith.constant 0 : i32
    %c0_i32_0 = arith.constant 0 : i32
    return %arg0, %c0_i32 : i32, i32
  }
}

module attributes {stable_mosaic.version = 11 : i64} {
  func.func @_block3_tail_kernel(%arg0: i32, %arg1: memref<8x1024xbf16, #tpu.memory_space<vmem>>, %arg2: memref<1024x512xbf16, #tpu.memory_space<vmem>>, %arg3: memref<1x512xf32, #tpu.memory_space<vmem>>, %arg4: memref<2x8xf32, #tpu.memory_space<vmem>>, %arg5: memref<512x32xf32, #tpu.memory_space<vmem>>, %arg6: memref<1x32xf32, #tpu.memory_space<vmem>>, %arg7: memref<32x512xf32, #tpu.memory_space<vmem>>, %arg8: memref<1x512xf32, #tpu.memory_space<vmem>>, %arg9: memref<512x32xf32, #tpu.memory_space<vmem>>, %arg10: memref<1x32xf32, #tpu.memory_space<vmem>>, %arg11: memref<32x10xf32, #tpu.memory_space<vmem>>, %arg12: memref<1x10xf32, #tpu.memory_space<vmem>>, %arg13: memref<2x10xf32, #tpu.memory_space<vmem>>, %arg14: memref<8x512xf32, #tpu.memory_space<vmem>>) attributes {dimension_semantics = [#tpu.dimension_semantics<arbitrary>], iteration_bounds = array<i64: 4>, scalar_prefetch = 0 : i64, scratch_operands = 1 : i64, tpu.core_type = #tpu.core_type<tc>, window_params = [{transform_indices = @transform_0, window_bounds = array<i64: 8, 1024>}, {transform_indices = @transform_1, window_bounds = array<i64: 1024, 512>}, {pipeline_mode = #tpu.pipeline_mode<synchronous>, transform_indices = @transform_2, window_bounds = array<i64: 1, 512>}, {pipeline_mode = #tpu.pipeline_mode<synchronous>, transform_indices = @transform_3, window_bounds = array<i64: 2, 8>}, {pipeline_mode = #tpu.pipeline_mode<synchronous>, transform_indices = @transform_4, window_bounds = array<i64: 512, 32>}, {pipeline_mode = #tpu.pipeline_mode<synchronous>, transform_indices = @transform_5, window_bounds = array<i64: 1, 32>}, {pipeline_mode = #tpu.pipeline_mode<synchronous>, transform_indices = @transform_6, window_bounds = array<i64: 32, 512>}, {pipeline_mode = #tpu.pipeline_mode<synchronous>, transform_indices = @transform_7, window_bounds = array<i64: 1, 512>}, {pipeline_mode = #tpu.pipeline_mode<synchronous>, transform_indices = @transform_8, window_bounds = array<i64: 512, 32>}, {pipeline_mode = #tpu.pipeline_mode<synchronous>, transform_indices = @transform_9, window_bounds = array<i64: 1, 32>}, {pipeline_mode = #tpu.pipeline_mode<synchronous>, transform_indices = @transform_10, window_bounds = array<i64: 32, 10>}, {pipeline_mode = #tpu.pipeline_mode<synchronous>, transform_indices = @transform_11, window_bounds = array<i64: 1, 10>}, {pipeline_mode = #tpu.pipeline_mode<synchronous>, transform_indices = @transform_12, window_bounds = array<i64: 2, 10>}]} {
    %c0_i32 = arith.constant 0 : i32
    %0 = arith.cmpi eq, %arg0, %c0_i32 : i32
    %1 = arith.extui %0 : i1 to i32
    %c0_i32_0 = arith.constant 0 : i32
    %2 = arith.cmpi ne, %1, %c0_i32_0 : i32
    scf.if %2 {
      %cst_9 = arith.constant 0.000000e+00 : f32
      %12 = vector.broadcast %cst_9 : f32 to vector<8x512xf32>
      %c0_10 = arith.constant 0 : index
      %c0_11 = arith.constant 0 : index
      %13 = vector.load %arg14[%c0_10, %c0_11] : memref<8x512xf32, #tpu.memory_space<vmem>>, vector<8x512xf32>
      tpu.vector_store %arg14[%c0_10, %c0_11], %12 {strides = array<i32>} : memref<8x512xf32, #tpu.memory_space<vmem>>, vector<8x512xf32>,
    } else {
    }
    %c0 = arith.constant 0 : index
    %c0_1 = arith.constant 0 : index
    %3 = vector.load %arg14[%c0, %c0_1] : memref<8x512xf32, #tpu.memory_space<vmem>>, vector<8x512xf32>
    %c0_2 = arith.constant 0 : index
    %c0_3 = arith.constant 0 : index
    %4 = vector.load %arg1[%c0_2, %c0_3] : memref<8x1024xbf16, #tpu.memory_space<vmem>>, vector<8x1024xbf16>
    %c0_4 = arith.constant 0 : index
    %c0_5 = arith.constant 0 : index
    %5 = vector.load %arg2[%c0_4, %c0_5] : memref<1024x512xbf16, #tpu.memory_space<vmem>>, vector<1024x512xbf16>
    %cst = arith.constant dense<0.000000e+00> : vector<8x512xf32>
    %6 = tpu.matmul %4, %5, %cst {dimension_numbers = #tpu.dot_dimension_numbers<[1], [0], [0], [1], [0, 0, 1, 1], [], []>} : vector<8x1024xbf16>, vector<1024x512xbf16>, vector<8x512xf32> -> vector<8x512xf32>
    %7 = arith.addf %3, %6 : vector<8x512xf32>
    %c0_6 = arith.constant 0 : index
    %c0_7 = arith.constant 0 : index
    %8 = vector.load %arg14[%c0_6, %c0_7] : memref<8x512xf32, #tpu.memory_space<vmem>>, vector<8x512xf32>
    tpu.vector_store %arg14[%c0_6, %c0_7], %7 {strides = array<i32>} : memref<8x512xf32, #tpu.memory_space<vmem>>, vector<8x512xf32>,
    %c3_i32 = arith.constant 3 : i32
    %9 = arith.cmpi eq, %arg0, %c3_i32 : i32
    %10 = arith.extui %9 : i1 to i32
    %c0_i32_8 = arith.constant 0 : i32
    %11 = arith.cmpi ne, %10, %c0_i32_8 : i32
    scf.if %11 {
      %c0_9 = arith.constant 0 : index
      %c0_10 = arith.constant 0 : index
      %12 = vector.load %arg14[%c0_9, %c0_10] : memref<8x512xf32, #tpu.memory_space<vmem>>, vector<8x512xf32>
      %c0_11 = arith.constant 0 : index
      %c0_12 = arith.constant 0 : index
      %13 = vector.load %arg3[%c0_11, %c0_12] : memref<1x512xf32, #tpu.memory_space<vmem>>, vector<1x512xf32>
      %14 = vector.broadcast %13 : vector<1x512xf32> to vector<8x512xf32>
      %15 = arith.addf %12, %14 : vector<8x512xf32>
      %cst_13 = arith.constant 0.000000e+00 : f32
      %16 = vector.broadcast %cst_13 : f32 to vector<8x512xf32>
      %17 = arith.cmpf ogt, %15, %16 : vector<8x512xf32>
      %cst_14 = arith.constant 2.000000e-01 : f32
      %18 = vector.broadcast %cst_14 : f32 to vector<8x512xf32>
      %19 = arith.mulf %18, %15 : vector<8x512xf32>
      %20 = arith.select %17, %15, %19 : vector<8x512xi1>, vector<8x512xf32>
      %c0_15 = arith.constant 0 : index
      %c0_16 = arith.constant 0 : index
      %21 = vector.load %arg4[%c0_15, %c0_16] : memref<2x8xf32, #tpu.memory_space<vmem>>, vector<2x8xf32>
      %cst_17 = arith.constant dense<0.000000e+00> : vector<2x512xf32>
      %22 = tpu.matmul %21, %20, %cst_17 {dimension_numbers = #tpu.dot_dimension_numbers<[1], [0], [0], [1], [0, 0, 1, 1], [], []>} : vector<2x8xf32>, vector<8x512xf32>, vector<2x512xf32> -> vector<2x512xf32>
      %c0_18 = arith.constant 0 : index
      %c0_19 = arith.constant 0 : index
      %23 = vector.load %arg5[%c0_18, %c0_19] : memref<512x32xf32, #tpu.memory_space<vmem>>, vector<512x32xf32>
      %cst_20 = arith.constant dense<0.000000e+00> : vector<2x32xf32>
      %24 = tpu.matmul %22, %23, %cst_20 {dimension_numbers = #tpu.dot_dimension_numbers<[1], [0], [0], [1], [0, 0, 1, 1], [], []>} : vector<2x512xf32>, vector<512x32xf32>, vector<2x32xf32> -> vector<2x32xf32>
      %c0_21 = arith.constant 0 : index
      %c0_22 = arith.constant 0 : index
      %25 = vector.load %arg6[%c0_21, %c0_22] : memref<1x32xf32, #tpu.memory_space<vmem>>, vector<1x32xf32>
      %26 = vector.broadcast %25 : vector<1x32xf32> to vector<2x32xf32>
      %27 = arith.addf %24, %26 : vector<2x32xf32>
      %cst_23 = arith.constant 0.000000e+00 : f32
      %28 = vector.broadcast %cst_23 : f32 to vector<2x32xf32>
      %29 = arith.maximumf %27, %28 : vector<2x32xf32>
      %c0_24 = arith.constant 0 : index
      %c0_25 = arith.constant 0 : index
      %30 = vector.load %arg7[%c0_24, %c0_25] : memref<32x512xf32, #tpu.memory_space<vmem>>, vector<32x512xf32>
      %cst_26 = arith.constant dense<0.000000e+00> : vector<2x512xf32>
      %31 = tpu.matmul %29, %30, %cst_26 {dimension_numbers = #tpu.dot_dimension_numbers<[1], [0], [0], [1], [0, 0, 1, 1], [], []>} : vector<2x32xf32>, vector<32x512xf32>, vector<2x512xf32> -> vector<2x512xf32>
      %c0_27 = arith.constant 0 : index
      %c0_28 = arith.constant 0 : index
      %32 = vector.load %arg8[%c0_27, %c0_28] : memref<1x512xf32, #tpu.memory_space<vmem>>, vector<1x512xf32>
      %33 = vector.broadcast %32 : vector<1x512xf32> to vector<2x512xf32>
      %34 = arith.addf %31, %33 : vector<2x512xf32>
      %35 = arith.negf %34 : vector<2x512xf32>
      %36 = math.exp %35 : vector<2x512xf32>
      %cst_29 = arith.constant 1.000000e+00 : f32
      %37 = vector.broadcast %cst_29 : f32 to vector<2x512xf32>
      %38 = arith.addf %37, %36 : vector<2x512xf32>
      %39 = arith.divf %37, %38 : vector<2x512xf32>
      %40 = arith.mulf %22, %39 : vector<2x512xf32>
      %c0_30 = arith.constant 0 : index
      %c0_31 = arith.constant 0 : index
      %41 = vector.load %arg9[%c0_30, %c0_31] : memref<512x32xf32, #tpu.memory_space<vmem>>, vector<512x32xf32>
      %cst_32 = arith.constant dense<0.000000e+00> : vector<2x32xf32>
      %42 = tpu.matmul %40, %41, %cst_32 {dimension_numbers = #tpu.dot_dimension_numbers<[1], [0], [0], [1], [0, 0, 1, 1], [], []>} : vector<2x512xf32>, vector<512x32xf32>, vector<2x32xf32> -> vector<2x32xf32>
      %c0_33 = arith.constant 0 : index
      %c0_34 = arith.constant 0 : index
      %43 = vector.load %arg10[%c0_33, %c0_34] : memref<1x32xf32, #tpu.memory_space<vmem>>, vector<1x32xf32>
      %44 = vector.broadcast %43 : vector<1x32xf32> to vector<2x32xf32>
      %45 = arith.addf %42, %44 : vector<2x32xf32>
      %c0_35 = arith.constant 0 : index
      %c0_36 = arith.constant 0 : index
      %46 = vector.load %arg11[%c0_35, %c0_36] : memref<32x10xf32, #tpu.memory_space<vmem>>, vector<32x10xf32>
      %cst_37 = arith.constant dense<0.000000e+00> : vector<2x10xf32>
      %47 = tpu.matmul %45, %46, %cst_37 {dimension_numbers = #tpu.dot_dimension_numbers<[1], [0], [0], [1], [0, 0, 1, 1], [], []>} : vector<2x32xf32>, vector<32x10xf32>, vector<2x10xf32> -> vector<2x10xf32>
      %c0_38 = arith.constant 0 : index
      %c0_39 = arith.constant 0 : index
      %48 = vector.load %arg12[%c0_38, %c0_39] : memref<1x10xf32, #tpu.memory_space<vmem>>, vector<1x10xf32>
      %49 = vector.broadcast %48 : vector<1x10xf32> to vector<2x10xf32>
      %50 = arith.addf %47, %49 : vector<2x10xf32>
      %c0_40 = arith.constant 0 : index
      %c0_41 = arith.constant 0 : index
      %51 = vector.load %arg13[%c0_40, %c0_41] : memref<2x10xf32, #tpu.memory_space<vmem>>, vector<2x10xf32>
      tpu.vector_store %arg13[%c0_40, %c0_41], %50 {strides = array<i32>} : memref<2x10xf32, #tpu.memory_space<vmem>>, vector<2x10xf32>,
    } else {
    }
    return
  }
  func.func @transform_0(%arg0: i32) -> (i32, i32) {
    %c0_i32 = arith.constant 0 : i32
    %c0_i32_0 = arith.constant 0 : i32
    return %c0_i32, %arg0 : i32, i32
  }
  func.func @transform_1(%arg0: i32) -> (i32, i32) {
    %c0_i32 = arith.constant 0 : i32
    %c0_i32_0 = arith.constant 0 : i32
    return %arg0, %c0_i32 : i32, i32
  }
  func.func @transform_2(%arg0: i32) -> (i32, i32) {
    %c0_i32 = arith.constant 0 : i32
    %c0_i32_0 = arith.constant 0 : i32
    %c0_i32_1 = arith.constant 0 : i32
    return %c0_i32, %c0_i32_0 : i32, i32
  }
  func.func @transform_3(%arg0: i32) -> (i32, i32) {
    %c0_i32 = arith.constant 0 : i32
    %c0_i32_0 = arith.constant 0 : i32
    %c0_i32_1 = arith.constant 0 : i32
    return %c0_i32, %c0_i32_0 : i32, i32
  }
  func.func @transform_4(%arg0: i32) -> (i32, i32) {
    %c0_i32 = arith.constant 0 : i32
    %c0_i32_0 = arith.constant 0 : i32
    %c0_i32_1 = arith.constant 0 : i32
    return %c0_i32, %c0_i32_0 : i32, i32
  }
  func.func @transform_5(%arg0: i32) -> (i32, i32) {
    %c0_i32 = arith.constant 0 : i32
    %c0_i32_0 = arith.constant 0 : i32
    %c0_i32_1 = arith.constant 0 : i32
    return %c0_i32, %c0_i32_0 : i32, i32
  }
  func.func @transform_6(%arg0: i32) -> (i32, i32) {
    %c0_i32 = arith.constant 0 : i32
    %c0_i32_0 = arith.constant 0 : i32
    %c0_i32_1 = arith.constant 0 : i32
    return %c0_i32, %c0_i32_0 : i32, i32
  }
  func.func @transform_7(%arg0: i32) -> (i32, i32) {
    %c0_i32 = arith.constant 0 : i32
    %c0_i32_0 = arith.constant 0 : i32
    %c0_i32_1 = arith.constant 0 : i32
    return %c0_i32, %c0_i32_0 : i32, i32
  }
  func.func @transform_8(%arg0: i32) -> (i32, i32) {
    %c0_i32 = arith.constant 0 : i32
    %c0_i32_0 = arith.constant 0 : i32
    %c0_i32_1 = arith.constant 0 : i32
    return %c0_i32, %c0_i32_0 : i32, i32
  }
  func.func @transform_9(%arg0: i32) -> (i32, i32) {
    %c0_i32 = arith.constant 0 : i32
    %c0_i32_0 = arith.constant 0 : i32
    %c0_i32_1 = arith.constant 0 : i32
    return %c0_i32, %c0_i32_0 : i32, i32
  }
  func.func @transform_10(%arg0: i32) -> (i32, i32) {
    %c0_i32 = arith.constant 0 : i32
    %c0_i32_0 = arith.constant 0 : i32
    %c0_i32_1 = arith.constant 0 : i32
    return %c0_i32, %c0_i32_0 : i32, i32
  }
  func.func @transform_11(%arg0: i32) -> (i32, i32) {
    %c0_i32 = arith.constant 0 : i32
    %c0_i32_0 = arith.constant 0 : i32
    %c0_i32_1 = arith.constant 0 : i32
    return %c0_i32, %c0_i32_0 : i32, i32
  }
  func.func @transform_12(%arg0: i32) -> (i32, i32) {
    %c0_i32 = arith.constant 0 : i32
    %c0_i32_0 = arith.constant 0 : i32
    %c0_i32_1 = arith.constant 0 : i32
    return %c0_i32, %c0_i32_0 : i32, i32
  }
}

</mosaic_0001>

<llo_original>
// kernel: second_model_forward.5
$region0: #{second_model_forward.5}
  #allocation0 [shape = 'u32[]', space=smem, size = 0x4, offset = 0x4, fixed_abs, tag = 'smem constant byte address 0x4 - core index']
  #allocation1 [shape = 'u32[72,128]{1,0:T(1,128)}', space=vmem, size = 0x9000, scoped, tag = 'internal scratch']
  %s0 = inlined_call_operand.vmem [shape: bf16[2048,16], index: 0, kind: input, shape index: {}]
  %s1 = inlined_call_operand.hbm [shape: bf16[16,64], index: 1, kind: input, shape index: {}]
  %s2 = inlined_call_operand.hbm [shape: f32[1,64], index: 2, kind: input, shape index: {}]
  %s3 = inlined_call_operand.vmem [shape: bf16[2048,64], index: 3, kind: output, shape index: {}]
  %s4 = sld [smem:[#allocation0]]
  $region53: #{second_model_forward.5} parent=0
    _
  %s6 = ssub.s32 1, %s4
  %s7 = scalar_select 0, %s6, %s4
  $region1: #{second_model_forward.5} parent=0
    #allocation2 [shape = 'u8[4096]{0}', space=vmem, size = 0x1000, scoped, tag = 'input window, operand 1, single buffered']
    #allocation3 [shape = 's32[2]{0}', space=sflag, size = 0x8, scoped, tag = 'scoped memory for second_model_forward.5']
    #allocation4 [shape = 'u8[512]{0}', space=vmem, size = 0x400, scoped, tag = 'input window, operand 2, single buffered']
    #allocation5 [shape = 's32[1]{0}', space=sflag, size = 0x4, scoped, tag = 'scoped memory for second_model_forward.5']
    %8 = vsyncpa [#allocation3], 0
    %9 = vsyncpa [#allocation5], 0
    loop: start=0, step=1, limit=4
    $region2: #{second_model_forward.5} parent=1 // loop_pre_header
      _
    $region3: #{second_model_forward.5} parent=1 // loop_header
      %s11 = sphi 0, %s15
      %p12 = scmp.ge.s32.totalorder %s11, 4
      %s21 = sphi 0, %s23
      %s24 = sphi 0, %s21
      %s25 = sphi 0, %s24
      %s41 = sphi 0, %s25
      %s45 = sphi 0, %s45
      %s47 = sphi 0, %s45
      %s48 = sphi 0, %s47
      %s62 = sphi 0, %s48
      %s66 = sphi 0, %s66
      %s68 = sphi 0, %s66
      %s69 = sphi 0, %s68
      %s83 = sphi 0, %s69
      %s89 = sphi 0, %s91
      %s92 = sphi 0, %s89
      %s93 = sphi 0, %s92
      %s109 = sphi 0, %s93
    $region4: #{second_model_forward.5} parent=1 // loop_header_branch
      %14 = sbr.rel (%p12) target = $region8
    $region5: #{second_model_forward.5} parent=1 // loop_body
      %s16 = ssub.s32 %s11, 1
      %s17 = ssub.s32 %s11, 2
      %s18 = sadd.s32 %s11, 1
      %s19 = ssub.s32 %s11, %s18
      %p20 = scmp.eq.s32.totalorder %s19, 0
      %s22 = sadd.s32 %s21, 1
      %s23 = scalar_select %p20, %s21, %s22
      %p26 = pneg %p20
      %p27 = scmp.eq.s32.totalorder %s11, 1
      %p28 = por %p26, %p27
      %p29 = scmp.ne.s32.totalorder %s21, %s24
      %p30 = scmp.eq.s32.totalorder %s11, 0
      %p31 = por %p29, %p30
      %p32 = scmp.ne.s32.totalorder %s21, %s24
      %p33 = scmp.eq.s32.totalorder %s16, 1
      %p34 = por %p32, %p33
      %p35 = scmp.ne.s32.totalorder %s24, %s25
      %p36 = scmp.eq.s32.totalorder %s16, 0
      %p37 = por %p35, %p36
      %p38 = scmp.ne.s32.totalorder %s24, %s25
      %p39 = scmp.eq.s32.totalorder %s17, 1
      %p40 = por %p38, %p39
      %p42 = scmp.ne.s32.totalorder %s25, %s41
      %p43 = scmp.eq.s32.totalorder %s17, 0
      %p44 = por %p42, %p43
      %s46 = sadd.s32 %s45, 1
      %p49 = scmp.eq.s32.totalorder %s11, 1
      %p50 = scmp.ne.s32.totalorder %s45, %s47
      %p51 = scmp.eq.s32.totalorder %s11, 0
      %p52 = por %p50, %p51
      %p53 = scmp.ne.s32.totalorder %s45, %s47
      %p54 = scmp.eq.s32.totalorder %s16, 1
      %p55 = por %p53, %p54
      %p56 = scmp.ne.s32.totalorder %s47, %s48
      %p57 = scmp.eq.s32.totalorder %s16, 0
      %p58 = por %p56, %p57
      %p59 = scmp.ne.s32.totalorder %s47, %s48
      %p60 = scmp.eq.s32.totalorder %s17, 1
      %p61 = por %p59, %p60
      %p63 = scmp.ne.s32.totalorder %s48, %s62
      %p64 = scmp.eq.s32.totalorder %s17, 0
      %p65 = por %p63, %p64
      %s67 = sadd.s32 %s66, 1
      %p70 = scmp.eq.s32.totalorder %s11, 1
      %p71 = scmp.ne.s32.totalorder %s66, %s68
      %p72 = scmp.eq.s32.totalorder %s11, 0
      %p73 = por %p71, %p72
      %p74 = scmp.ne.s32.totalorder %s66, %s68
      %p75 = scmp.eq.s32.totalorder %s16, 1
      %p76 = por %p74, %p75
      %p77 = scmp.ne.s32.totalorder %s68, %s69
      %p78 = scmp.eq.s32.totalorder %s16, 0
      %p79 = por %p77, %p78
      %p80 = scmp.ne.s32.totalorder %s68, %s69
      %p81 = scmp.eq.s32.totalorder %s17, 1
      %p82 = por %p80, %p81
      %p84 = scmp.ne.s32.totalorder %s69, %s83
      %p85 = scmp.eq.s32.totalorder %s17, 0
      %p86 = por %p84, %p85
      %s87 = ssub.s32 %s11, %s18
      %p88 = scmp.eq.s32.totalorder %s87, 0
      %s90 = sadd.s32 %s89, 1
      %s91 = scalar_select %p88, %s89, %s90
      %p94 = pneg %p88
      %p95 = scmp.eq.s32.totalorder %s11, 1
      %p96 = por %p94, %p95
      %p97 = scmp.ne.s32.totalorder %s89, %s92
      %p98 = scmp.eq.s32.totalorder %s11, 0
      %p99 = por %p97, %p98
      %p100 = scmp.ne.s32.totalorder %s89, %s92
      %p101 = scmp.eq.s32.totalorder %s16, 1
      %p102 = por %p100, %p101
      %p103 = scmp.ne.s32.totalorder %s92, %s93
      %p104 = scmp.eq.s32.totalorder %s16, 0
      %p105 = por %p103, %p104
      %p106 = scmp.ne.s32.totalorder %s92, %s93
      %p107 = scmp.eq.s32.totalorder %s17, 1
      %p108 = por %p106, %p107
      %p110 = scmp.ne.s32.totalorder %s93, %s109
      %p111 = scmp.eq.s32.totalorder %s17, 0
      %p112 = por %p110, %p111
      %p113 = scmp.le.s32.totalorder 1, %s11
      %p114 = scmp.lt.s32.totalorder %s11, 3
      %p115 = pnand %p113, %p114
      %p116 = pneg %p115
      // Predicated region
      $region9: #{second_model_forward.5} parent=5 // pred_check
        _
      $region10: #{second_model_forward.5} parent=5 // pred_check_branch
        %118 = sbr.rel (%p115) target = $region12
      $region11: #{second_model_forward.5} parent=5 // pred_region
        %s119 = ssub.s32 %s11, 1
        // Predicated region
        $region13: #{second_model_forward.5} parent=11 // pred_check
          %p120 = pneg %p58
        $region14: #{second_model_forward.5} parent=11 // pred_check_branch
          %122 = sbr.rel (%p120) target = $region16
        $region15: #{second_model_forward.5} parent=11 // pred_region
          %124 = vsyncadd [#allocation3], 0
          %s125 = sshll.u32 %s1, 4
          %s126 = int_to_ptr.hbm [resolvable:$true] %s125
          %s127 = sshll.u32 [#allocation2], 4
          %s128 = int_to_ptr.vmem [resolvable:$true] %s127
          %133 = dma.hbm_to_vmem [thread:$0]  %s126, 128, %s128, [#allocation3], 64, 64, 4
        $region16: #{second_model_forward.5} parent=11 // pred_fallthru
          _
        // Predicated region
        $region17: #{second_model_forward.5} parent=11 // pred_check
          %p134 = pneg %p79
        $region18: #{second_model_forward.5} parent=11 // pred_check_branch
          %136 = sbr.rel (%p134) target = $region20
        $region19: #{second_model_forward.5} parent=11 // pred_region
          %138 = vsyncadd [#allocation5], 0
          %s140 = sshll.u32 %s2, 4
          %s141 = int_to_ptr.hbm [resolvable:$true] %s140
          %s142 = sshll.u32 [#allocation4], 4
          %s143 = int_to_ptr.vmem [resolvable:$true] %s142
          %145 = dma.hbm_to_vmem [thread:$0]  %s141, 16, %s143, [#allocation5]
        $region20: #{second_model_forward.5} parent=11 // pred_fallthru
          _
      $region12: #{second_model_forward.5} parent=5 // pred_fallthru
        _
      %p146 = scmp.lt.s32.totalorder %s11, 2
      // Predicated region
      $region21: #{second_model_forward.5} parent=5 // pred_check
        %p147 = pneg %p146
      $region22: #{second_model_forward.5} parent=5 // pred_check_branch
        %149 = sbr.rel (%p147) target = $region24
      $region23: #{second_model_forward.5} parent=5 // pred_region
        // Predicated region
        $region25: #{second_model_forward.5} parent=23 // pred_check
          %p150 = pneg %p31
        $region26: #{second_model_forward.5} parent=23 // pred_check_branch
          %152 = sbr.rel (%p150) target = $region28
        $region27: #{second_model_forward.5} parent=23 // pred_region
          %s153 = smul.u32 128, %s11
          %p154 = scmp.lt.s32.totalorder %s153, 255
          %s155 = scalar_select %p154, %s153, 255
          %s156 = smul.addr %s155, 4
          %s157 = scalar_lea.vmem %s0, %s156
          %s158 = smul.u32 128, %s11
        $region28: #{second_model_forward.5} parent=23 // pred_fallthru
          _
      $region24: #{second_model_forward.5} parent=5 // pred_fallthru
        _
      %p159 = scmp.le.s32.totalorder 1, %s11
      %p160 = scmp.lt.s32.totalorder %s11, 3
      %p161 = pnand %p159, %p160
      %p162 = pneg %p161
      // Predicated region
      $region29: #{second_model_forward.5} parent=5 // pred_check
        _
      $region30: #{second_model_forward.5} parent=5 // pred_check_branch
        %164 = sbr.rel (%p161) target = $region32
      $region31: #{second_model_forward.5} parent=5 // pred_region
        %s165 = ssub.s32 %s11, 1
        // Predicated region
        $region33: #{second_model_forward.5} parent=31 // pred_check
          %p166 = pneg %p58
        $region34: #{second_model_forward.5} parent=31 // pred_check_branch
          %168 = sbr.rel (%p166) target = $region36
        $region35: #{second_model_forward.5} parent=31 // pred_region
          %170 = dma.done [#allocation3], 128
        $region36: #{second_model_forward.5} parent=31 // pred_fallthru
          _
        // Predicated region
        $region37: #{second_model_forward.5} parent=31 // pred_check
          %p171 = pneg %p79
        $region38: #{second_model_forward.5} parent=31 // pred_check_branch
          %173 = sbr.rel (%p171) target = $region40
        $region39: #{second_model_forward.5} parent=31 // pred_region
          %175 = dma.done [#allocation5], 16
        $region40: #{second_model_forward.5} parent=31 // pred_fallthru
          _
        %s176 = smul.u32 128, %s16
        %p177 = scmp.lt.s32.totalorder %s176, 255
        %s178 = scalar_select %p177, %s176, 255
        %s179 = smul.addr %s178, 4
        %s180 = scalar_lea.vmem %s0, %s179
        %p181 = pneg %p37
        %p182 = pneg %p34
        %p183 = pneg %p58
        %p184 = pneg %p55
        %p185 = pneg %p79
        %p186 = pneg %p76
        %p187 = pneg %p105
        %p188 = pneg %p102
        %s189 = smul.u32 128, %s16
        %p190 = scmp.lt.s32.totalorder %s189, 255
        %s191 = scalar_select %p190, %s189, 255
        %s192 = smul.addr %s191, 4
        %s193 = scalar_lea.vmem %s3, %s192
        %s194 = smul.u32 128, %s16
        %p195 = scmp.lt.s32.totalorder %s194, 255
        %s196 = scalar_select %p195, %s194, 255
        %s197 = smul.addr %s196, 4
        %s198 = scalar_lea.vmem %s0, %s197
        %s199 = smul.u32 128, %s16
        %s200 = smul.u32 128, %s16
        %p201 = scmp.lt.s32.totalorder %s200, 255
        %s202 = scalar_select %p201, %s200, 255
        %s203 = smul.addr %s202, 4
        %s204 = scalar_lea.vmem %s3, %s203
        %s205 = smul.u32 128, %s16
        %v207 = vld [vmem:[%s198] sm:$0xf]
        %v208 = vld [vmem:[%s198 + $0x4] sm:$0xf]
        %v209 = vld [vmem:[%s198 + $0x8] sm:$0xf]
        %v210 = vld [vmem:[%s198 + $0xc] sm:$0xf]
        %v211 = vld [vmem:[%s198 + $0x10] sm:$0xf]
        %v212 = vld [vmem:[%s198 + $0x14] sm:$0xf]
        %v213 = vld [vmem:[%s198 + $0x18] sm:$0xf]
        %v214 = vld [vmem:[%s198 + $0x1c] sm:$0xf]
        %v215 = vld [vmem:[%s198 + $0x20] sm:$0xf]
        %v216 = vld [vmem:[%s198 + $0x24] sm:$0xf]
        %v217 = vld [vmem:[%s198 + $0x28] sm:$0xf]
        %v218 = vld [vmem:[%s198 + $0x2c] sm:$0xf]
        %v219 = vld [vmem:[%s198 + $0x30] sm:$0xf]
        %v220 = vld [vmem:[%s198 + $0x34] sm:$0xf]
        %v221 = vld [vmem:[%s198 + $0x38] sm:$0xf]
        %v222 = vld [vmem:[%s198 + $0x3c] sm:$0xf]
        %v223 = vld [vmem:[%s198 + $0x40] sm:$0xf]
        %v224 = vld [vmem:[%s198 + $0x44] sm:$0xf]
        %v225 = vld [vmem:[%s198 + $0x48] sm:$0xf]
        %v226 = vld [vmem:[%s198 + $0x4c] sm:$0xf]
        %v227 = vld [vmem:[%s198 + $0x50] sm:$0xf]
        %v228 = vld [vmem:[%s198 + $0x54] sm:$0xf]
        %v229 = vld [vmem:[%s198 + $0x58] sm:$0xf]
        %v230 = vld [vmem:[%s198 + $0x5c] sm:$0xf]
        %v231 = vld [vmem:[%s198 + $0x60] sm:$0xf]
        %v232 = vld [vmem:[%s198 + $0x64] sm:$0xf]
        %v233 = vld [vmem:[%s198 + $0x68] sm:$0xf]
        %v234 = vld [vmem:[%s198 + $0x6c] sm:$0xf]
        %v235 = vld [vmem:[%s198 + $0x70] sm:$0xf]
        %v236 = vld [vmem:[%s198 + $0x74] sm:$0xf]
        %v237 = vld [vmem:[%s198 + $0x78] sm:$0xf]
        %v238 = vld [vmem:[%s198 + $0x7c] sm:$0xf]
        %v239 = vld [vmem:[%s198 + $0x80] sm:$0xf]
        %v240 = vld [vmem:[%s198 + $0x84] sm:$0xf]
        %v241 = vld [vmem:[%s198 + $0x88] sm:$0xf]
        %v242 = vld [vmem:[%s198 + $0x8c] sm:$0xf]
        %v243 = vld [vmem:[%s198 + $0x90] sm:$0xf]
        %v244 = vld [vmem:[%s198 + $0x94] sm:$0xf]
        %v245 = vld [vmem:[%s198 + $0x98] sm:$0xf]
        %v246 = vld [vmem:[%s198 + $0x9c] sm:$0xf]
        %v247 = vld [vmem:[%s198 + $0xa0] sm:$0xf]
        %v248 = vld [vmem:[%s198 + $0xa4] sm:$0xf]
        %v249 = vld [vmem:[%s198 + $0xa8] sm:$0xf]
        %v250 = vld [vmem:[%s198 + $0xac] sm:$0xf]
        %v251 = vld [vmem:[%s198 + $0xb0] sm:$0xf]
        %v252 = vld [vmem:[%s198 + $0xb4] sm:$0xf]
        %v253 = vld [vmem:[%s198 + $0xb8] sm:$0xf]
        %v254 = vld [vmem:[%s198 + $0xbc] sm:$0xf]
        %v255 = vld [vmem:[%s198 + $0xc0] sm:$0xf]
        %v256 = vld [vmem:[%s198 + $0xc4] sm:$0xf]
        %v257 = vld [vmem:[%s198 + $0xc8] sm:$0xf]
        %v258 = vld [vmem:[%s198 + $0xcc] sm:$0xf]
        %v259 = vld [vmem:[%s198 + $0xd0] sm:$0xf]
        %v260 = vld [vmem:[%s198 + $0xd4] sm:$0xf]
        %v261 = vld [vmem:[%s198 + $0xd8] sm:$0xf]
        %v262 = vld [vmem:[%s198 + $0xdc] sm:$0xf]
        %v263 = vld [vmem:[%s198 + $0xe0] sm:$0xf]
        %v264 = vld [vmem:[%s198 + $0xe4] sm:$0xf]
        %v265 = vld [vmem:[%s198 + $0xe8] sm:$0xf]
        %v266 = vld [vmem:[%s198 + $0xec] sm:$0xf]
        %v267 = vld [vmem:[%s198 + $0xf0] sm:$0xf]
        %v268 = vld [vmem:[%s198 + $0xf4] sm:$0xf]
        %v269 = vld [vmem:[%s198 + $0xf8] sm:$0xf]
        %v270 = vld [vmem:[%s198 + $0xfc] sm:$0xf]
        %v271 = vld [vmem:[%s198 + $0x100] sm:$0xf]
        %v272 = vld [vmem:[%s198 + $0x104] sm:$0xf]
        %v273 = vld [vmem:[%s198 + $0x108] sm:$0xf]
        %v274 = vld [vmem:[%s198 + $0x10c] sm:$0xf]
        %v275 = vld [vmem:[%s198 + $0x110] sm:$0xf]
        %v276 = vld [vmem:[%s198 + $0x114] sm:$0xf]
        %v277 = vld [vmem:[%s198 + $0x118] sm:$0xf]
        %v278 = vld [vmem:[%s198 + $0x11c] sm:$0xf]
        %v279 = vld [vmem:[%s198 + $0x120] sm:$0xf]
        %v280 = vld [vmem:[%s198 + $0x124] sm:$0xf]
        %v281 = vld [vmem:[%s198 + $0x128] sm:$0xf]
        %v282 = vld [vmem:[%s198 + $0x12c] sm:$0xf]
        %v283 = vld [vmem:[%s198 + $0x130] sm:$0xf]
        %v284 = vld [vmem:[%s198 + $0x134] sm:$0xf]
        %v285 = vld [vmem:[%s198 + $0x138] sm:$0xf]
        %v286 = vld [vmem:[%s198 + $0x13c] sm:$0xf]
        %v287 = vld [vmem:[%s198 + $0x140] sm:$0xf]
        %v288 = vld [vmem:[%s198 + $0x144] sm:$0xf]
        %v289 = vld [vmem:[%s198 + $0x148] sm:$0xf]
        %v290 = vld [vmem:[%s198 + $0x14c] sm:$0xf]
        %v291 = vld [vmem:[%s198 + $0x150] sm:$0xf]
        %v292 = vld [vmem:[%s198 + $0x154] sm:$0xf]
        %v293 = vld [vmem:[%s198 + $0x158] sm:$0xf]
        %v294 = vld [vmem:[%s198 + $0x15c] sm:$0xf]
        %v295 = vld [vmem:[%s198 + $0x160] sm:$0xf]
        %v296 = vld [vmem:[%s198 + $0x164] sm:$0xf]
        %v297 = vld [vmem:[%s198 + $0x168] sm:$0xf]
        %v298 = vld [vmem:[%s198 + $0x16c] sm:$0xf]
        %v299 = vld [vmem:[%s198 + $0x170] sm:$0xf]
        %v300 = vld [vmem:[%s198 + $0x174] sm:$0xf]
        %v301 = vld [vmem:[%s198 + $0x178] sm:$0xf]
        %v302 = vld [vmem:[%s198 + $0x17c] sm:$0xf]
        %v303 = vld [vmem:[%s198 + $0x180] sm:$0xf]
        %v304 = vld [vmem:[%s198 + $0x184] sm:$0xf]
        %v305 = vld [vmem:[%s198 + $0x188] sm:$0xf]
        %v306 = vld [vmem:[%s198 + $0x18c] sm:$0xf]
        %v307 = vld [vmem:[%s198 + $0x190] sm:$0xf]
        %v308 = vld [vmem:[%s198 + $0x194] sm:$0xf]
        %v309 = vld [vmem:[%s198 + $0x198] sm:$0xf]
        %v310 = vld [vmem:[%s198 + $0x19c] sm:$0xf]
        %v311 = vld [vmem:[%s198 + $0x1a0] sm:$0xf]
        %v312 = vld [vmem:[%s198 + $0x1a4] sm:$0xf]
        %v313 = vld [vmem:[%s198 + $0x1a8] sm:$0xf]
        %v314 = vld [vmem:[%s198 + $0x1ac] sm:$0xf]
        %v315 = vld [vmem:[%s198 + $0x1b0] sm:$0xf]
        %v316 = vld [vmem:[%s198 + $0x1b4] sm:$0xf]
        %v317 = vld [vmem:[%s198 + $0x1b8] sm:$0xf]
        %v318 = vld [vmem:[%s198 + $0x1bc] sm:$0xf]
        %v319 = vld [vmem:[%s198 + $0x1c0] sm:$0xf]
        %v320 = vld [vmem:[%s198 + $0x1c4] sm:$0xf]
        %v321 = vld [vmem:[%s198 + $0x1c8] sm:$0xf]
        %v322 = vld [vmem:[%s198 + $0x1cc] sm:$0xf]
        %v323 = vld [vmem:[%s198 + $0x1d0] sm:$0xf]
        %v324 = vld [vmem:[%s198 + $0x1d4] sm:$0xf]
        %v325 = vld [vmem:[%s198 + $0x1d8] sm:$0xf]
        %v326 = vld [vmem:[%s198 + $0x1dc] sm:$0xf]
        %v327 = vld [vmem:[%s198 + $0x1e0] sm:$0xf]
        %v328 = vld [vmem:[%s198 + $0x1e4] sm:$0xf]
        %v329 = vld [vmem:[%s198 + $0x1e8] sm:$0xf]
        %v330 = vld [vmem:[%s198 + $0x1ec] sm:$0xf]
        %v331 = vld [vmem:[%s198 + $0x1f0] sm:$0xf]
        %v332 = vld [vmem:[%s198 + $0x1f4] sm:$0xf]
        %v333 = vld [vmem:[%s198 + $0x1f8] sm:$0xf]
        %v334 = vld [vmem:[%s198 + $0x1fc] sm:$0xf]
        %v335 = vld [vmem:[#allocation2] sm:$0xf]
        %v336 = vld [vmem:[#allocation2 + $0x4] sm:$0xf]
        %v337 = vld [vmem:[#allocation4] sm:$0x1]
        %v339 = vperm.slane %v337, 0
        %v469 = vunpack.c.l.b16 %v207
        %v470 = vunpack.c.l.b16 %v208
        %v471 = vunpack.c.l.b16 %v209
        %v472 = vunpack.c.l.b16 %v210
        %v473 = vunpack.c.l.b16 %v211
        %v474 = vunpack.c.l.b16 %v212
        %v475 = vunpack.c.l.b16 %v213
        %v476 = vunpack.c.l.b16 %v214
        %v477 = vunpack.c.l.b16 %v215
        %v478 = vunpack.c.l.b16 %v216
        %v479 = vunpack.c.l.b16 %v217
        %v480 = vunpack.c.l.b16 %v218
        %v481 = vunpack.c.l.b16 %v219
        %v482 = vunpack.c.l.b16 %v220
        %v483 = vunpack.c.l.b16 %v221
        %v484 = vunpack.c.l.b16 %v222
        %v485 = vunpack.c.l.b16 %v223
        %v486 = vunpack.c.l.b16 %v224
        %v487 = vunpack.c.l.b16 %v225
        %v488 = vunpack.c.l.b16 %v226
        %v489 = vunpack.c.l.b16 %v227
        %v490 = vunpack.c.l.b16 %v228
        %v491 = vunpack.c.l.b16 %v229
        %v492 = vunpack.c.l.b16 %v230
        %v493 = vunpack.c.l.b16 %v231
        %v494 = vunpack.c.l.b16 %v232
        %v495 = vunpack.c.l.b16 %v233
        %v496 = vunpack.c.l.b16 %v234
        %v497 = vunpack.c.l.b16 %v235
        %v498 = vunpack.c.l.b16 %v236
        %v499 = vunpack.c.l.b16 %v237
        %v500 = vunpack.c.l.b16 %v238
        %v501 = vunpack.c.l.b16 %v239
        %v502 = vunpack.c.l.b16 %v240
        %v503 = vunpack.c.l.b16 %v241
        %v504 = vunpack.c.l.b16 %v242
        %v505 = vunpack.c.l.b16 %v243
        %v506 = vunpack.c.l.b16 %v244
        %v507 = vunpack.c.l.b16 %v245
        %v508 = vunpack.c.l.b16 %v246
        %v509 = vunpack.c.l.b16 %v247
        %v510 = vunpack.c.l.b16 %v248
        %v511 = vunpack.c.l.b16 %v249
        %v512 = vunpack.c.l.b16 %v250
        %v513 = vunpack.c.l.b16 %v251
        %v514 = vunpack.c.l.b16 %v252
        %v515 = vunpack.c.l.b16 %v253
        %v516 = vunpack.c.l.b16 %v254
        %v517 = vunpack.c.l.b16 %v255
        %v518 = vunpack.c.l.b16 %v256
        %v519 = vunpack.c.l.b16 %v257
        %v520 = vunpack.c.l.b16 %v258
        %v521 = vunpack.c.l.b16 %v259
        %v522 = vunpack.c.l.b16 %v260
        %v523 = vunpack.c.l.b16 %v261
        %v524 = vunpack.c.l.b16 %v262
        %v525 = vunpack.c.l.b16 %v263
        %v526 = vunpack.c.l.b16 %v264
        %v527 = vunpack.c.l.b16 %v265
        %v528 = vunpack.c.l.b16 %v266
        %v529 = vunpack.c.l.b16 %v267
        %v530 = vunpack.c.l.b16 %v268
        %v531 = vunpack.c.l.b16 %v269
        %v532 = vunpack.c.l.b16 %v270
        %v533 = vunpack.c.l.b16 %v271
        %v534 = vunpack.c.l.b16 %v272
        %v535 = vunpack.c.l.b16 %v273
        %v536 = vunpack.c.l.b16 %v274
        %v537 = vunpack.c.l.b16 %v275
        %v538 = vunpack.c.l.b16 %v276
        %v539 = vunpack.c.l.b16 %v277
        %v540 = vunpack.c.l.b16 %v278
        %v541 = vunpack.c.l.b16 %v279
        %v542 = vunpack.c.l.b16 %v280
        %v543 = vunpack.c.l.b16 %v281
        %v544 = vunpack.c.l.b16 %v282
        %v545 = vunpack.c.l.b16 %v283
        %v546 = vunpack.c.l.b16 %v284
        %v547 = vunpack.c.l.b16 %v285
        %v548 = vunpack.c.l.b16 %v286
        %v549 = vunpack.c.l.b16 %v287
        %v550 = vunpack.c.l.b16 %v288
        %v551 = vunpack.c.l.b16 %v289
        %v552 = vunpack.c.l.b16 %v290
        %v553 = vunpack.c.l.b16 %v291
        %v554 = vunpack.c.l.b16 %v292
        %v555 = vunpack.c.l.b16 %v293
        %v556 = vunpack.c.l.b16 %v294
        %v557 = vunpack.c.l.b16 %v295
        %v558 = vunpack.c.l.b16 %v296
        %v559 = vunpack.c.l.b16 %v297
        %v560 = vunpack.c.l.b16 %v298
        %v561 = vunpack.c.l.b16 %v299
        %v562 = vunpack.c.l.b16 %v300
        %v563 = vunpack.c.l.b16 %v301
        %v564 = vunpack.c.l.b16 %v302
        %v565 = vunpack.c.l.b16 %v303
        %v566 = vunpack.c.l.b16 %v304
        %v567 = vunpack.c.l.b16 %v305
        %v568 = vunpack.c.l.b16 %v306
        %v569 = vunpack.c.l.b16 %v307
        %v570 = vunpack.c.l.b16 %v308
        %v571 = vunpack.c.l.b16 %v309
        %v572 = vunpack.c.l.b16 %v310
        %v573 = vunpack.c.l.b16 %v311
        %v574 = vunpack.c.l.b16 %v312
        %v575 = vunpack.c.l.b16 %v313
        %v576 = vunpack.c.l.b16 %v314
        %v577 = vunpack.c.l.b16 %v315
        %v578 = vunpack.c.l.b16 %v316
        %v579 = vunpack.c.l.b16 %v317
        %v580 = vunpack.c.l.b16 %v318
        %v581 = vunpack.c.l.b16 %v319
        %v582 = vunpack.c.l.b16 %v320
        %v583 = vunpack.c.l.b16 %v321
        %v584 = vunpack.c.l.b16 %v322
        %v585 = vunpack.c.l.b16 %v323
        %v586 = vunpack.c.l.b16 %v324
        %v587 = vunpack.c.l.b16 %v325
        %v588 = vunpack.c.l.b16 %v326
        %v589 = vunpack.c.l.b16 %v327
        %v590 = vunpack.c.l.b16 %v328
        %v591 = vunpack.c.l.b16 %v329
        %v592 = vunpack.c.l.b16 %v330
        %v593 = vunpack.c.l.b16 %v331
        %v594 = vunpack.c.l.b16 %v332
        %v595 = vunpack.c.l.b16 %v333
        %v596 = vunpack.c.l.b16 %v334
        %v597 = vpack.c.b16 %v470, %v469
        %v598 = vpack.c.b16 %v472, %v471
        %v599 = vpack.c.b16 %v474, %v473
        %v600 = vpack.c.b16 %v476, %v475
        %v601 = vpack.c.b16 %v478, %v477
        %v602 = vpack.c.b16 %v480, %v479
        %v603 = vpack.c.b16 %v482, %v481
        %v604 = vpack.c.b16 %v484, %v483
        %v605 = vpack.c.b16 %v486, %v485
        %v606 = vpack.c.b16 %v488, %v487
        %v607 = vpack.c.b16 %v490, %v489
        %v608 = vpack.c.b16 %v492, %v491
        %v609 = vpack.c.b16 %v494, %v493
        %v610 = vpack.c.b16 %v496, %v495
        %v611 = vpack.c.b16 %v498, %v497
        %v612 = vpack.c.b16 %v500, %v499
        %v613 = vpack.c.b16 %v502, %v501
        %v614 = vpack.c.b16 %v504, %v503
        %v615 = vpack.c.b16 %v506, %v505
        %v616 = vpack.c.b16 %v508, %v507
        %v617 = vpack.c.b16 %v510, %v509
        %v618 = vpack.c.b16 %v512, %v511
        %v619 = vpack.c.b16 %v514, %v513
        %v620 = vpack.c.b16 %v516, %v515
        %v621 = vpack.c.b16 %v518, %v517
        %v622 = vpack.c.b16 %v520, %v519
        %v623 = vpack.c.b16 %v522, %v521
        %v624 = vpack.c.b16 %v524, %v523
        %v625 = vpack.c.b16 %v526, %v525
        %v626 = vpack.c.b16 %v528, %v527
        %v627 = vpack.c.b16 %v530, %v529
        %v628 = vpack.c.b16 %v532, %v531
        %v629 = vpack.c.b16 %v534, %v533
        %v630 = vpack.c.b16 %v536, %v535
        %v631 = vpack.c.b16 %v538, %v537
        %v632 = vpack.c.b16 %v540, %v539
        %v633 = vpack.c.b16 %v542, %v541
        %v634 = vpack.c.b16 %v544, %v543
        %v635 = vpack.c.b16 %v546, %v545
        %v636 = vpack.c.b16 %v548, %v547
        %v637 = vpack.c.b16 %v550, %v549
        %v638 = vpack.c.b16 %v552, %v551
        %v639 = vpack.c.b16 %v554, %v553
        %v640 = vpack.c.b16 %v556, %v555
        %v641 = vpack.c.b16 %v558, %v557
        %v642 = vpack.c.b16 %v560, %v559
        %v643 = vpack.c.b16 %v562, %v561
        %v644 = vpack.c.b16 %v564, %v563
        %v645 = vpack.c.b16 %v566, %v565
        %v646 = vpack.c.b16 %v568, %v567
        %v647 = vpack.c.b16 %v570, %v569
        %v648 = vpack.c.b16 %v572, %v571
        %v649 = vpack.c.b16 %v574, %v573
        %v650 = vpack.c.b16 %v576, %v575
        %v651 = vpack.c.b16 %v578, %v577
        %v652 = vpack.c.b16 %v580, %v579
        %v653 = vpack.c.b16 %v582, %v581
        %v654 = vpack.c.b16 %v584, %v583
        %v655 = vpack.c.b16 %v586, %v585
        %v656 = vpack.c.b16 %v588, %v587
        %v657 = vpack.c.b16 %v590, %v589
        %v658 = vpack.c.b16 %v592, %v591
        %v659 = vpack.c.b16 %v594, %v593
        %v660 = vpack.c.b16 %v596, %v595
        %v663 = vunpack.c.l.b16 %v335
        %v664 = vunpack.c.l.b16 %v336
        %v665 = vpack.c.b16 %v664, %v663
        %vm667 = vcmask 130048
        %v669 = vsel %vm667, %v597, 0
        %v672 = vsel %vm667, %v598, 0
        %v675 = vsel %vm667, %v599, 0
        %v678 = vsel %vm667, %v600, 0
        %v681 = vsel %vm667, %v601, 0
        %v684 = vsel %vm667, %v602, 0
        %v687 = vsel %vm667, %v603, 0
        %v690 = vsel %vm667, %v604, 0
        %v693 = vsel %vm667, %v605, 0
        %v696 = vsel %vm667, %v606, 0
        %v699 = vsel %vm667, %v607, 0
        %v702 = vsel %vm667, %v608, 0
        %v705 = vsel %vm667, %v609, 0
        %v708 = vsel %vm667, %v610, 0
        %v711 = vsel %vm667, %v611, 0
        %v714 = vsel %vm667, %v612, 0
        %v717 = vsel %vm667, %v613, 0
        %v720 = vsel %vm667, %v614, 0
        %v723 = vsel %vm667, %v615, 0
        %v726 = vsel %vm667, %v616, 0
        %v729 = vsel %vm667, %v617, 0
        %v732 = vsel %vm667, %v618, 0
        %v735 = vsel %vm667, %v619, 0
        %v738 = vsel %vm667, %v620, 0
        %v741 = vsel %vm667, %v621, 0
        %v744 = vsel %vm667, %v622, 0
        %v747 = vsel %vm667, %v623, 0
        %v750 = vsel %vm667, %v624, 0
        %v753 = vsel %vm667, %v625, 0
        %v756 = vsel %vm667, %v626, 0
        %v759 = vsel %vm667, %v627, 0
        %v762 = vsel %vm667, %v628, 0
        %v765 = vsel %vm667, %v629, 0
        %v768 = vsel %vm667, %v630, 0
        %v771 = vsel %vm667, %v631, 0
        %v774 = vsel %vm667, %v632, 0
        %v777 = vsel %vm667, %v633, 0
        %v780 = vsel %vm667, %v634, 0
        %v783 = vsel %vm667, %v635, 0
        %v786 = vsel %vm667, %v636, 0
        %v789 = vsel %vm667, %v637, 0
        %v792 = vsel %vm667, %v638, 0
        %v795 = vsel %vm667, %v639, 0
        %v798 = vsel %vm667, %v640, 0
        %v801 = vsel %vm667, %v641, 0
        %v804 = vsel %vm667, %v642, 0
        %v807 = vsel %vm667, %v643, 0
        %v810 = vsel %vm667, %v644, 0
        %v813 = vsel %vm667, %v645, 0
        %v816 = vsel %vm667, %v646, 0
        %v819 = vsel %vm667, %v647, 0
        %v822 = vsel %vm667, %v648, 0
        %v825 = vsel %vm667, %v649, 0
        %v828 = vsel %vm667, %v650, 0
        %v831 = vsel %vm667, %v651, 0
        %v834 = vsel %vm667, %v652, 0
        %v837 = vsel %vm667, %v653, 0
        %v840 = vsel %vm667, %v654, 0
        %v843 = vsel %vm667, %v655, 0
        %v846 = vsel %vm667, %v656, 0
        %v849 = vsel %vm667, %v657, 0
        %v852 = vsel %vm667, %v658, 0
        %v855 = vsel %vm667, %v659, 0
        %v858 = vsel %vm667, %v660, 0
        %860 = vmatpush.bf16.msra.mxu0 0
        %861 = vmatpush.bf16.msra.mxu0 0
        %862 = vmatpush.bf16.msra.mxu0 0
        %863 = vmatpush.bf16.msra.mxu0 0
        %864 = vmatpush.bf16.msra.mxu0 0
        %865 = vmatpush.bf16.msra.mxu0 0
        %866 = vmatpush.bf16.msra.mxu0 0
        %867 = vmatpush.bf16.msra.mxu0 %v665
        %868 = vmatmul.bf16.gmra.mxu0 %v669
        %v869 = vpop.f32.mrf.mxu0
        %v870 = vadd.f32 %v339, %v869
        %v871 = vpop.f32.mrf.mxu0
        %v872 = vadd.f32 %v339, %v871
        %873 = vmatmul.bf16.gmra.mxu0 %v672
        %v874 = vpop.f32.mrf.mxu0
        %v875 = vadd.f32 %v339, %v874
        %v876 = vpop.f32.mrf.mxu0
        %v877 = vadd.f32 %v339, %v876
        %878 = vmatmul.bf16.gmra.mxu0 %v675
        %v879 = vpop.f32.mrf.mxu0
        %v880 = vadd.f32 %v339, %v879
        %v881 = vpop.f32.mrf.mxu0
        %v882 = vadd.f32 %v339, %v881
        %883 = vmatmul.bf16.gmra.mxu0 %v678
        %v884 = vpop.f32.mrf.mxu0
        %v885 = vadd.f32 %v339, %v884
        %v886 = vpop.f32.mrf.mxu0
        %v887 = vadd.f32 %v339, %v886
        %888 = vmatmul.bf16.gmra.mxu0 %v681
        %v889 = vpop.f32.mrf.mxu0
        %v890 = vadd.f32 %v339, %v889
        %v891 = vpop.f32.mrf.mxu0
        %v892 = vadd.f32 %v339, %v891
        %893 = vmatmul.bf16.gmra.mxu0 %v684
        %v894 = vpop.f32.mrf.mxu0
        %v895 = vadd.f32 %v339, %v894
        %v896 = vpop.f32.mrf.mxu0
        %v897 = vadd.f32 %v339, %v896
        %898 = vmatmul.bf16.gmra.mxu0 %v687
        %v899 = vpop.f32.mrf.mxu0
        %v900 = vadd.f32 %v339, %v899
        %v901 = vpop.f32.mrf.mxu0
        %v902 = vadd.f32 %v339, %v901
        %903 = vmatmul.bf16.gmra.mxu0 %v690
        %v904 = vpop.f32.mrf.mxu0
        %v905 = vadd.f32 %v339, %v904
        %v906 = vpop.f32.mrf.mxu0
        %v907 = vadd.f32 %v339, %v906
        %908 = vmatmul.bf16.gmra.mxu0 %v693
        %v909 = vpop.f32.mrf.mxu0
        %v910 = vadd.f32 %v339, %v909
        %v911 = vpop.f32.mrf.mxu0
        %v912 = vadd.f32 %v339, %v911
        %913 = vmatmul.bf16.gmra.mxu0 %v696
        %v914 = vpop.f32.mrf.mxu0
        %v915 = vadd.f32 %v339, %v914
        %v916 = vpop.f32.mrf.mxu0
        %v917 = vadd.f32 %v339, %v916
        %918 = vmatmul.bf16.gmra.mxu0 %v699
        %v919 = vpop.f32.mrf.mxu0
        %v920 = vadd.f32 %v339, %v919
        %v921 = vpop.f32.mrf.mxu0
        %v922 = vadd.f32 %v339, %v921
        %923 = vmatmul.bf16.gmra.mxu0 %v702
        %v924 = vpop.f32.mrf.mxu0
        %v925 = vadd.f32 %v339, %v924
        %v926 = vpop.f32.mrf.mxu0
        %v927 = vadd.f32 %v339, %v926
        %928 = vmatmul.bf16.gmra.mxu0 %v705
        %v929 = vpop.f32.mrf.mxu0
        %v930 = vadd.f32 %v339, %v929
        %v931 = vpop.f32.mrf.mxu0
        %v932 = vadd.f32 %v339, %v931
        %933 = vmatmul.bf16.gmra.mxu0 %v708
        %v934 = vpop.f32.mrf.mxu0
        %v935 = vadd.f32 %v339, %v934
        %v936 = vpop.f32.mrf.mxu0
        %v937 = vadd.f32 %v339, %v936
        %938 = vmatmul.bf16.gmra.mxu0 %v711
        %v939 = vpop.f32.mrf.mxu0
        %v940 = vadd.f32 %v339, %v939
        %v941 = vpop.f32.mrf.mxu0
        %v942 = vadd.f32 %v339, %v941
        %943 = vmatmul.bf16.gmra.mxu0 %v714
        %v944 = vpop.f32.mrf.mxu0
        %v945 = vadd.f32 %v339, %v944
        %v946 = vpop.f32.mrf.mxu0
        %v947 = vadd.f32 %v339, %v946
        %948 = vmatmul.bf16.gmra.mxu0 %v717
        %v949 = vpop.f32.mrf.mxu0
        %v950 = vadd.f32 %v339, %v949
        %v951 = vpop.f32.mrf.mxu0
        %v952 = vadd.f32 %v339, %v951
        %953 = vmatmul.bf16.gmra.mxu0 %v720
        %v954 = vpop.f32.mrf.mxu0
        %v955 = vadd.f32 %v339, %v954
        %v956 = vpop.f32.mrf.mxu0
        %v957 = vadd.f32 %v339, %v956
        %958 = vmatmul.bf16.gmra.mxu0 %v723
        %v959 = vpop.f32.mrf.mxu0
        %v960 = vadd.f32 %v339, %v959
        %v961 = vpop.f32.mrf.mxu0
        %v962 = vadd.f32 %v339, %v961
        %963 = vmatmul.bf16.gmra.mxu0 %v726
        %v964 = vpop.f32.mrf.mxu0
        %v965 = vadd.f32 %v339, %v964
        %v966 = vpop.f32.mrf.mxu0
        %v967 = vadd.f32 %v339, %v966
        %968 = vmatmul.bf16.gmra.mxu0 %v729
        %v969 = vpop.f32.mrf.mxu0
        %v970 = vadd.f32 %v339, %v969
        %v971 = vpop.f32.mrf.mxu0
        %v972 = vadd.f32 %v339, %v971
        %973 = vmatmul.bf16.gmra.mxu0 %v732
        %v974 = vpop.f32.mrf.mxu0
        %v975 = vadd.f32 %v339, %v974
        %v976 = vpop.f32.mrf.mxu0
        %v977 = vadd.f32 %v339, %v976
        %978 = vmatmul.bf16.gmra.mxu0 %v735
        %v979 = vpop.f32.mrf.mxu0
        %v980 = vadd.f32 %v339, %v979
        %v981 = vpop.f32.mrf.mxu0
        %v982 = vadd.f32 %v339, %v981
        %983 = vmatmul.bf16.gmra.mxu0 %v738
        %v984 = vpop.f32.mrf.mxu0
        %v985 = vadd.f32 %v339, %v984
        %v986 = vpop.f32.mrf.mxu0
        %v987 = vadd.f32 %v339, %v986
        %988 = vmatmul.bf16.gmra.mxu0 %v741
        %v989 = vpop.f32.mrf.mxu0
        %v990 = vadd.f32 %v339, %v989
        %v991 = vpop.f32.mrf.mxu0
        %v992 = vadd.f32 %v339, %v991
        %993 = vmatmul.bf16.gmra.mxu0 %v744
        %v994 = vpop.f32.mrf.mxu0
        %v995 = vadd.f32 %v339, %v994
        %v996 = vpop.f32.mrf.mxu0
        %v997 = vadd.f32 %v339, %v996
        %998 = vmatmul.bf16.gmra.mxu0 %v747
        %v999 = vpop.f32.mrf.mxu0
        %v1000 = vadd.f32 %v339, %v999
        %v1001 = vpop.f32.mrf.mxu0
        %v1002 = vadd.f32 %v339, %v1001
        %1003 = vmatmul.bf16.gmra.mxu0 %v750
        %v1004 = vpop.f32.mrf.mxu0
        %v1005 = vadd.f32 %v339, %v1004
        %v1006 = vpop.f32.mrf.mxu0
        %v1007 = vadd.f32 %v339, %v1006
        %1008 = vmatmul.bf16.gmra.mxu0 %v753
        %v1009 = vpop.f32.mrf.mxu0
        %v1010 = vadd.f32 %v339, %v1009
        %v1011 = vpop.f32.mrf.mxu0
        %v1012 = vadd.f32 %v339, %v1011
        %1013 = vmatmul.bf16.gmra.mxu0 %v756
        %v1014 = vpop.f32.mrf.mxu0
        %v1015 = vadd.f32 %v339, %v1014
        %v1016 = vpop.f32.mrf.mxu0
        %v1017 = vadd.f32 %v339, %v1016
        %1018 = vmatmul.bf16.gmra.mxu0 %v759
        %v1019 = vpop.f32.mrf.mxu0
        %v1020 = vadd.f32 %v339, %v1019
        %v1021 = vpop.f32.mrf.mxu0
        %v1022 = vadd.f32 %v339, %v1021
        %1023 = vmatmul.bf16.gmra.mxu0 %v762
        %v1024 = vpop.f32.mrf.mxu0
        %v1025 = vadd.f32 %v339, %v1024
        %v1026 = vpop.f32.mrf.mxu0
        %v1027 = vadd.f32 %v339, %v1026
        %1028 = vmatmul.bf16.gmra.mxu0 %v765
        %v1029 = vpop.f32.mrf.mxu0
        %v1030 = vadd.f32 %v339, %v1029
        %v1031 = vpop.f32.mrf.mxu0
        %v1032 = vadd.f32 %v339, %v1031
        %1033 = vmatmul.bf16.gmra.mxu0 %v768
        %v1034 = vpop.f32.mrf.mxu0
        %v1035 = vadd.f32 %v339, %v1034
        %v1036 = vpop.f32.mrf.mxu0
        %v1037 = vadd.f32 %v339, %v1036
        %1038 = vmatmul.bf16.gmra.mxu0 %v771
        %v1039 = vpop.f32.mrf.mxu0
        %v1040 = vadd.f32 %v339, %v1039
        %v1041 = vpop.f32.mrf.mxu0
        %v1042 = vadd.f32 %v339, %v1041
        %1043 = vmatmul.bf16.gmra.mxu0 %v774
        %v1044 = vpop.f32.mrf.mxu0
        %v1045 = vadd.f32 %v339, %v1044
        %v1046 = vpop.f32.mrf.mxu0
        %v1047 = vadd.f32 %v339, %v1046
        %1048 = vmatmul.bf16.gmra.mxu0 %v777
        %v1049 = vpop.f32.mrf.mxu0
        %v1050 = vadd.f32 %v339, %v1049
        %v1051 = vpop.f32.mrf.mxu0
        %v1052 = vadd.f32 %v339, %v1051
        %1053 = vmatmul.bf16.gmra.mxu0 %v780
        %v1054 = vpop.f32.mrf.mxu0
        %v1055 = vadd.f32 %v339, %v1054
        %v1056 = vpop.f32.mrf.mxu0
        %v1057 = vadd.f32 %v339, %v1056
        %1058 = vmatmul.bf16.gmra.mxu0 %v783
        %v1059 = vpop.f32.mrf.mxu0
        %v1060 = vadd.f32 %v339, %v1059
        %v1061 = vpop.f32.mrf.mxu0
        %v1062 = vadd.f32 %v339, %v1061
        %1063 = vmatmul.bf16.gmra.mxu0 %v786
        %v1064 = vpop.f32.mrf.mxu0
        %v1065 = vadd.f32 %v339, %v1064
        %v1066 = vpop.f32.mrf.mxu0
        %v1067 = vadd.f32 %v339, %v1066
        %1068 = vmatmul.bf16.gmra.mxu0 %v789
        %v1069 = vpop.f32.mrf.mxu0
        %v1070 = vadd.f32 %v339, %v1069
        %v1071 = vpop.f32.mrf.mxu0
        %v1072 = vadd.f32 %v339, %v1071
        %1073 = vmatmul.bf16.gmra.mxu0 %v792
        %v1074 = vpop.f32.mrf.mxu0
        %v1075 = vadd.f32 %v339, %v1074
        %v1076 = vpop.f32.mrf.mxu0
        %v1077 = vadd.f32 %v339, %v1076
        %1078 = vmatmul.bf16.gmra.mxu0 %v795
        %v1079 = vpop.f32.mrf.mxu0
        %v1080 = vadd.f32 %v339, %v1079
        %v1081 = vpop.f32.mrf.mxu0
        %v1082 = vadd.f32 %v339, %v1081
        %1083 = vmatmul.bf16.gmra.mxu0 %v798
        %v1084 = vpop.f32.mrf.mxu0
        %v1085 = vadd.f32 %v339, %v1084
        %v1086 = vpop.f32.mrf.mxu0
        %v1087 = vadd.f32 %v339, %v1086
        %1088 = vmatmul.bf16.gmra.mxu0 %v801
        %v1089 = vpop.f32.mrf.mxu0
        %v1090 = vadd.f32 %v339, %v1089
        %v1091 = vpop.f32.mrf.mxu0
        %v1092 = vadd.f32 %v339, %v1091
        %1093 = vmatmul.bf16.gmra.mxu0 %v804
        %v1094 = vpop.f32.mrf.mxu0
        %v1095 = vadd.f32 %v339, %v1094
        %v1096 = vpop.f32.mrf.mxu0
        %v1097 = vadd.f32 %v339, %v1096
        %1098 = vmatmul.bf16.gmra.mxu0 %v807
        %v1099 = vpop.f32.mrf.mxu0
        %v1100 = vadd.f32 %v339, %v1099
        %v1101 = vpop.f32.mrf.mxu0
        %v1102 = vadd.f32 %v339, %v1101
        %1103 = vmatmul.bf16.gmra.mxu0 %v810
        %v1104 = vpop.f32.mrf.mxu0
        %v1105 = vadd.f32 %v339, %v1104
        %v1106 = vpop.f32.mrf.mxu0
        %v1107 = vadd.f32 %v339, %v1106
        %1108 = vmatmul.bf16.gmra.mxu0 %v813
        %v1109 = vpop.f32.mrf.mxu0
        %v1110 = vadd.f32 %v339, %v1109
        %v1111 = vpop.f32.mrf.mxu0
        %v1112 = vadd.f32 %v339, %v1111
        %1113 = vmatmul.bf16.gmra.mxu0 %v816
        %v1114 = vpop.f32.mrf.mxu0
        %v1115 = vadd.f32 %v339, %v1114
        %v1116 = vpop.f32.mrf.mxu0
        %v1117 = vadd.f32 %v339, %v1116
        %1118 = vmatmul.bf16.gmra.mxu0 %v819
        %v1119 = vpop.f32.mrf.mxu0
        %v1120 = vadd.f32 %v339, %v1119
        %v1121 = vpop.f32.mrf.mxu0
        %v1122 = vadd.f32 %v339, %v1121
        %1123 = vmatmul.bf16.gmra.mxu0 %v822
        %v1124 = vpop.f32.mrf.mxu0
        %v1125 = vadd.f32 %v339, %v1124
        %v1126 = vpop.f32.mrf.mxu0
        %v1127 = vadd.f32 %v339, %v1126
        %1128 = vmatmul.bf16.gmra.mxu0 %v825
        %v1129 = vpop.f32.mrf.mxu0
        %v1130 = vadd.f32 %v339, %v1129
        %v1131 = vpop.f32.mrf.mxu0
        %v1132 = vadd.f32 %v339, %v1131
        %1133 = vmatmul.bf16.gmra.mxu0 %v828
        %v1134 = vpop.f32.mrf.mxu0
        %v1135 = vadd.f32 %v339, %v1134
        %v1136 = vpop.f32.mrf.mxu0
        %v1137 = vadd.f32 %v339, %v1136
        %1138 = vmatmul.bf16.gmra.mxu0 %v831
        %v1139 = vpop.f32.mrf.mxu0
        %v1140 = vadd.f32 %v339, %v1139
        %v1141 = vpop.f32.mrf.mxu0
        %v1142 = vadd.f32 %v339, %v1141
        %1143 = vmatmul.bf16.gmra.mxu0 %v834
        %v1144 = vpop.f32.mrf.mxu0
        %v1145 = vadd.f32 %v339, %v1144
        %v1146 = vpop.f32.mrf.mxu0
        %v1147 = vadd.f32 %v339, %v1146
        %1148 = vmatmul.bf16.gmra.mxu0 %v837
        %v1149 = vpop.f32.mrf.mxu0
        %v1150 = vadd.f32 %v339, %v1149
        %v1151 = vpop.f32.mrf.mxu0
        %v1152 = vadd.f32 %v339, %v1151
        %1153 = vmatmul.bf16.gmra.mxu0 %v840
        %v1154 = vpop.f32.mrf.mxu0
        %v1155 = vadd.f32 %v339, %v1154
        %v1156 = vpop.f32.mrf.mxu0
        %v1157 = vadd.f32 %v339, %v1156
        %1158 = vmatmul.bf16.gmra.mxu0 %v843
        %v1159 = vpop.f32.mrf.mxu0
        %v1160 = vadd.f32 %v339, %v1159
        %v1161 = vpop.f32.mrf.mxu0
        %v1162 = vadd.f32 %v339, %v1161
        %1163 = vmatmul.bf16.gmra.mxu0 %v846
        %v1164 = vpop.f32.mrf.mxu0
        %v1165 = vadd.f32 %v339, %v1164
        %v1166 = vpop.f32.mrf.mxu0
        %v1167 = vadd.f32 %v339, %v1166
        %1168 = vmatmul.bf16.gmra.mxu0 %v849
        %v1169 = vpop.f32.mrf.mxu0
        %v1170 = vadd.f32 %v339, %v1169
        %v1171 = vpop.f32.mrf.mxu0
        %v1172 = vadd.f32 %v339, %v1171
        %1173 = vmatmul.bf16.gmra.mxu0 %v852
        %v1174 = vpop.f32.mrf.mxu0
        %v1175 = vadd.f32 %v339, %v1174
        %v1176 = vpop.f32.mrf.mxu0
        %v1177 = vadd.f32 %v339, %v1176
        %1178 = vmatmul.bf16.gmra.mxu0 %v855
        %v1179 = vpop.f32.mrf.mxu0
        %v1180 = vadd.f32 %v339, %v1179
        %v1181 = vpop.f32.mrf.mxu0
        %v1182 = vadd.f32 %v339, %v1181
        %1183 = vmatmul.bf16.gmra.mxu0 %v858
        %v1184 = vpop.f32.mrf.mxu0
        %v1185 = vadd.f32 %v339, %v1184
        %v1186 = vpop.f32.mrf.mxu0
        %v1187 = vadd.f32 %v339, %v1186
        %1188 = vdwg.mxu0
        %vm1189 = vcmp.gt.f32.partialorder %v870, 0.0
        %vm1190 = vcmp.gt.f32.partialorder %v872, 0.0
        %vm1191 = vcmp.gt.f32.partialorder %v875, 0.0
        %vm1192 = vcmp.gt.f32.partialorder %v877, 0.0
        %vm1193 = vcmp.gt.f32.partialorder %v880, 0.0
        %vm1194 = vcmp.gt.f32.partialorder %v882, 0.0
        %vm1195 = vcmp.gt.f32.partialorder %v885, 0.0
        %vm1196 = vcmp.gt.f32.partialorder %v887, 0.0
        %vm1197 = vcmp.gt.f32.partialorder %v890, 0.0
        %vm1198 = vcmp.gt.f32.partialorder %v892, 0.0
        %vm1199 = vcmp.gt.f32.partialorder %v895, 0.0
        %vm1200 = vcmp.gt.f32.partialorder %v897, 0.0
        %vm1201 = vcmp.gt.f32.partialorder %v900, 0.0
        %vm1202 = vcmp.gt.f32.partialorder %v902, 0.0
        %vm1203 = vcmp.gt.f32.partialorder %v905, 0.0
        %vm1204 = vcmp.gt.f32.partialorder %v907, 0.0
        %vm1205 = vcmp.gt.f32.partialorder %v910, 0.0
        %vm1206 = vcmp.gt.f32.partialorder %v912, 0.0
        %vm1207 = vcmp.gt.f32.partialorder %v915, 0.0
        %vm1208 = vcmp.gt.f32.partialorder %v917, 0.0
        %vm1209 = vcmp.gt.f32.partialorder %v920, 0.0
        %vm1210 = vcmp.gt.f32.partialorder %v922, 0.0
        %vm1211 = vcmp.gt.f32.partialorder %v925, 0.0
        %vm1212 = vcmp.gt.f32.partialorder %v927, 0.0
        %vm1213 = vcmp.gt.f32.partialorder %v930, 0.0
        %vm1214 = vcmp.gt.f32.partialorder %v932, 0.0
        %vm1215 = vcmp.gt.f32.partialorder %v935, 0.0
        %vm1216 = vcmp.gt.f32.partialorder %v937, 0.0
        %vm1217 = vcmp.gt.f32.partialorder %v940, 0.0
        %vm1218 = vcmp.gt.f32.partialorder %v942, 0.0
        %vm1219 = vcmp.gt.f32.partialorder %v945, 0.0
        %vm1220 = vcmp.gt.f32.partialorder %v947, 0.0
        %vm1221 = vcmp.gt.f32.partialorder %v950, 0.0
        %vm1222 = vcmp.gt.f32.partialorder %v952, 0.0
        %vm1223 = vcmp.gt.f32.partialorder %v955, 0.0
        %vm1224 = vcmp.gt.f32.partialorder %v957, 0.0
        %vm1225 = vcmp.gt.f32.partialorder %v960, 0.0
        %vm1226 = vcmp.gt.f32.partialorder %v962, 0.0
        %vm1227 = vcmp.gt.f32.partialorder %v965, 0.0
        %vm1228 = vcmp.gt.f32.partialorder %v967, 0.0
        %vm1229 = vcmp.gt.f32.partialorder %v970, 0.0
        %vm1230 = vcmp.gt.f32.partialorder %v972, 0.0
        %vm1231 = vcmp.gt.f32.partialorder %v975, 0.0
        %vm1232 = vcmp.gt.f32.partialorder %v977, 0.0
        %vm1233 = vcmp.gt.f32.partialorder %v980, 0.0
        %vm1234 = vcmp.gt.f32.partialorder %v982, 0.0
        %vm1235 = vcmp.gt.f32.partialorder %v985, 0.0
        %vm1236 = vcmp.gt.f32.partialorder %v987, 0.0
        %vm1237 = vcmp.gt.f32.partialorder %v990, 0.0
        %vm1238 = vcmp.gt.f32.partialorder %v992, 0.0
        %vm1239 = vcmp.gt.f32.partialorder %v995, 0.0
        %vm1240 = vcmp.gt.f32.partialorder %v997, 0.0
        %vm1241 = vcmp.gt.f32.partialorder %v1000, 0.0
        %vm1242 = vcmp.gt.f32.partialorder %v1002, 0.0
        %vm1243 = vcmp.gt.f32.partialorder %v1005, 0.0
        %vm1244 = vcmp.gt.f32.partialorder %v1007, 0.0
        %vm1245 = vcmp.gt.f32.partialorder %v1010, 0.0
        %vm1246 = vcmp.gt.f32.partialorder %v1012, 0.0
        %vm1247 = vcmp.gt.f32.partialorder %v1015, 0.0
        %vm1248 = vcmp.gt.f32.partialorder %v1017, 0.0
        %vm1249 = vcmp.gt.f32.partialorder %v1020, 0.0
        %vm1250 = vcmp.gt.f32.partialorder %v1022, 0.0
        %vm1251 = vcmp.gt.f32.partialorder %v1025, 0.0
        %vm1252 = vcmp.gt.f32.partialorder %v1027, 0.0
        %vm1253 = vcmp.gt.f32.partialorder %v1030, 0.0
        %vm1254 = vcmp.gt.f32.partialorder %v1032, 0.0
        %vm1255 = vcmp.gt.f32.partialorder %v1035, 0.0
        %vm1256 = vcmp.gt.f32.partialorder %v1037, 0.0
        %vm1257 = vcmp.gt.f32.partialorder %v1040, 0.0
        %vm1258 = vcmp.gt.f32.partialorder %v1042, 0.0
        %vm1259 = vcmp.gt.f32.partialorder %v1045, 0.0
        %vm1260 = vcmp.gt.f32.partialorder %v1047, 0.0
        %vm1261 = vcmp.gt.f32.partialorder %v1050, 0.0
        %vm1262 = vcmp.gt.f32.partialorder %v1052, 0.0
        %vm1263 = vcmp.gt.f32.partialorder %v1055, 0.0
        %vm1264 = vcmp.gt.f32.partialorder %v1057, 0.0
        %vm1265 = vcmp.gt.f32.partialorder %v1060, 0.0
        %vm1266 = vcmp.gt.f32.partialorder %v1062, 0.0
        %vm1267 = vcmp.gt.f32.partialorder %v1065, 0.0
        %vm1268 = vcmp.gt.f32.partialorder %v1067, 0.0
        %vm1269 = vcmp.gt.f32.partialorder %v1070, 0.0
        %vm1270 = vcmp.gt.f32.partialorder %v1072, 0.0
        %vm1271 = vcmp.gt.f32.partialorder %v1075, 0.0
        %vm1272 = vcmp.gt.f32.partialorder %v1077, 0.0
        %vm1273 = vcmp.gt.f32.partialorder %v1080, 0.0
        %vm1274 = vcmp.gt.f32.partialorder %v1082, 0.0
        %vm1275 = vcmp.gt.f32.partialorder %v1085, 0.0
        %vm1276 = vcmp.gt.f32.partialorder %v1087, 0.0
        %vm1277 = vcmp.gt.f32.partialorder %v1090, 0.0
        %vm1278 = vcmp.gt.f32.partialorder %v1092, 0.0
        %vm1279 = vcmp.gt.f32.partialorder %v1095, 0.0
        %vm1280 = vcmp.gt.f32.partialorder %v1097, 0.0
        %vm1281 = vcmp.gt.f32.partialorder %v1100, 0.0
        %vm1282 = vcmp.gt.f32.partialorder %v1102, 0.0
        %vm1283 = vcmp.gt.f32.partialorder %v1105, 0.0
        %vm1284 = vcmp.gt.f32.partialorder %v1107, 0.0
        %vm1285 = vcmp.gt.f32.partialorder %v1110, 0.0
        %vm1286 = vcmp.gt.f32.partialorder %v1112, 0.0
        %vm1287 = vcmp.gt.f32.partialorder %v1115, 0.0
        %vm1288 = vcmp.gt.f32.partialorder %v1117, 0.0
        %vm1289 = vcmp.gt.f32.partialorder %v1120, 0.0
        %vm1290 = vcmp.gt.f32.partialorder %v1122, 0.0
        %vm1291 = vcmp.gt.f32.partialorder %v1125, 0.0
        %vm1292 = vcmp.gt.f32.partialorder %v1127, 0.0
        %vm1293 = vcmp.gt.f32.partialorder %v1130, 0.0
        %vm1294 = vcmp.gt.f32.partialorder %v1132, 0.0
        %vm1295 = vcmp.gt.f32.partialorder %v1135, 0.0
        %vm1296 = vcmp.gt.f32.partialorder %v1137, 0.0
        %vm1297 = vcmp.gt.f32.partialorder %v1140, 0.0
        %vm1298 = vcmp.gt.f32.partialorder %v1142, 0.0
        %vm1299 = vcmp.gt.f32.partialorder %v1145, 0.0
        %vm1300 = vcmp.gt.f32.partialorder %v1147, 0.0
        %vm1301 = vcmp.gt.f32.partialorder %v1150, 0.0
        %vm1302 = vcmp.gt.f32.partialorder %v1152, 0.0
        %vm1303 = vcmp.gt.f32.partialorder %v1155, 0.0
        %vm1304 = vcmp.gt.f32.partialorder %v1157, 0.0
        %vm1305 = vcmp.gt.f32.partialorder %v1160, 0.0
        %vm1306 = vcmp.gt.f32.partialorder %v1162, 0.0
        %vm1307 = vcmp.gt.f32.partialorder %v1165, 0.0
        %vm1308 = vcmp.gt.f32.partialorder %v1167, 0.0
        %vm1309 = vcmp.gt.f32.partialorder %v1170, 0.0
        %vm1310 = vcmp.gt.f32.partialorder %v1172, 0.0
        %vm1311 = vcmp.gt.f32.partialorder %v1175, 0.0
        %vm1312 = vcmp.gt.f32.partialorder %v1177, 0.0
        %vm1313 = vcmp.gt.f32.partialorder %v1180, 0.0
        %vm1314 = vcmp.gt.f32.partialorder %v1182, 0.0
        %vm1315 = vcmp.gt.f32.partialorder %v1185, 0.0
        %vm1316 = vcmp.gt.f32.partialorder %v1187, 0.0
        %v1317 = vmul.f32 %v870, 0.2
        %v1318 = vmul.f32 %v872, 0.2
        %v1319 = vmul.f32 %v875, 0.2
        %v1320 = vmul.f32 %v877, 0.2
        %v1321 = vmul.f32 %v880, 0.2
        %v1322 = vmul.f32 %v882, 0.2
        %v1323 = vmul.f32 %v885, 0.2
        %v1324 = vmul.f32 %v887, 0.2
        %v1325 = vmul.f32 %v890, 0.2
        %v1326 = vmul.f32 %v892, 0.2
        %v1327 = vmul.f32 %v895, 0.2
        %v1328 = vmul.f32 %v897, 0.2
        %v1329 = vmul.f32 %v900, 0.2
        %v1330 = vmul.f32 %v902, 0.2
        %v1331 = vmul.f32 %v905, 0.2
        %v1332 = vmul.f32 %v907, 0.2
        %v1333 = vmul.f32 %v910, 0.2
        %v1334 = vmul.f32 %v912, 0.2
        %v1335 = vmul.f32 %v915, 0.2
        %v1336 = vmul.f32 %v917, 0.2
        %v1337 = vmul.f32 %v920, 0.2
        %v1338 = vmul.f32 %v922, 0.2
        %v1339 = vmul.f32 %v925, 0.2
        %v1340 = vmul.f32 %v927, 0.2
        %v1341 = vmul.f32 %v930, 0.2
        %v1342 = vmul.f32 %v932, 0.2
        %v1343 = vmul.f32 %v935, 0.2
        %v1344 = vmul.f32 %v937, 0.2
        %v1345 = vmul.f32 %v940, 0.2
        %v1346 = vmul.f32 %v942, 0.2
        %v1347 = vmul.f32 %v945, 0.2
        %v1348 = vmul.f32 %v947, 0.2
        %v1349 = vmul.f32 %v950, 0.2
        %v1350 = vmul.f32 %v952, 0.2
        %v1351 = vmul.f32 %v955, 0.2
        %v1352 = vmul.f32 %v957, 0.2
        %v1353 = vmul.f32 %v960, 0.2
        %v1354 = vmul.f32 %v962, 0.2
        %v1355 = vmul.f32 %v965, 0.2
        %v1356 = vmul.f32 %v967, 0.2
        %v1357 = vmul.f32 %v970, 0.2
        %v1358 = vmul.f32 %v972, 0.2
        %v1359 = vmul.f32 %v975, 0.2
        %v1360 = vmul.f32 %v977, 0.2
        %v1361 = vmul.f32 %v980, 0.2
        %v1362 = vmul.f32 %v982, 0.2
        %v1363 = vmul.f32 %v985, 0.2
        %v1364 = vmul.f32 %v987, 0.2
        %v1365 = vmul.f32 %v990, 0.2
        %v1366 = vmul.f32 %v992, 0.2
        %v1367 = vmul.f32 %v995, 0.2
        %v1368 = vmul.f32 %v997, 0.2
        %v1369 = vmul.f32 %v1000, 0.2
        %v1370 = vmul.f32 %v1002, 0.2
        %v1371 = vmul.f32 %v1005, 0.2
        %v1372 = vmul.f32 %v1007, 0.2
        %v1373 = vmul.f32 %v1010, 0.2
        %v1374 = vmul.f32 %v1012, 0.2
        %v1375 = vmul.f32 %v1015, 0.2
        %v1376 = vmul.f32 %v1017, 0.2
        %v1377 = vmul.f32 %v1020, 0.2
        %v1378 = vmul.f32 %v1022, 0.2
        %v1379 = vmul.f32 %v1025, 0.2
        %v1380 = vmul.f32 %v1027, 0.2
        %v1381 = vmul.f32 %v1030, 0.2
        %v1382 = vmul.f32 %v1032, 0.2
        %v1383 = vmul.f32 %v1035, 0.2
        %v1384 = vmul.f32 %v1037, 0.2
        %v1385 = vmul.f32 %v1040, 0.2
        %v1386 = vmul.f32 %v1042, 0.2
        %v1387 = vmul.f32 %v1045, 0.2
        %v1388 = vmul.f32 %v1047, 0.2
        %v1389 = vmul.f32 %v1050, 0.2
        %v1390 = vmul.f32 %v1052, 0.2
        %v1391 = vmul.f32 %v1055, 0.2
        %v1392 = vmul.f32 %v1057, 0.2
        %v1393 = vmul.f32 %v1060, 0.2
        %v1394 = vmul.f32 %v1062, 0.2
        %v1395 = vmul.f32 %v1065, 0.2
        %v1396 = vmul.f32 %v1067, 0.2
        %v1397 = vmul.f32 %v1070, 0.2
        %v1398 = vmul.f32 %v1072, 0.2
        %v1399 = vmul.f32 %v1075, 0.2
        %v1400 = vmul.f32 %v1077, 0.2
        %v1401 = vmul.f32 %v1080, 0.2
        %v1402 = vmul.f32 %v1082, 0.2
        %v1403 = vmul.f32 %v1085, 0.2
        %v1404 = vmul.f32 %v1087, 0.2
        %v1405 = vmul.f32 %v1090, 0.2
        %v1406 = vmul.f32 %v1092, 0.2
        %v1407 = vmul.f32 %v1095, 0.2
        %v1408 = vmul.f32 %v1097, 0.2
        %v1409 = vmul.f32 %v1100, 0.2
        %v1410 = vmul.f32 %v1102, 0.2
        %v1411 = vmul.f32 %v1105, 0.2
        %v1412 = vmul.f32 %v1107, 0.2
        %v1413 = vmul.f32 %v1110, 0.2
        %v1414 = vmul.f32 %v1112, 0.2
        %v1415 = vmul.f32 %v1115, 0.2
        %v1416 = vmul.f32 %v1117, 0.2
        %v1417 = vmul.f32 %v1120, 0.2
        %v1418 = vmul.f32 %v1122, 0.2
        %v1419 = vmul.f32 %v1125, 0.2
        %v1420 = vmul.f32 %v1127, 0.2
        %v1421 = vmul.f32 %v1130, 0.2
        %v1422 = vmul.f32 %v1132, 0.2
        %v1423 = vmul.f32 %v1135, 0.2
        %v1424 = vmul.f32 %v1137, 0.2
        %v1425 = vmul.f32 %v1140, 0.2
        %v1426 = vmul.f32 %v1142, 0.2
        %v1427 = vmul.f32 %v1145, 0.2
        %v1428 = vmul.f32 %v1147, 0.2
        %v1429 = vmul.f32 %v1150, 0.2
        %v1430 = vmul.f32 %v1152, 0.2
        %v1431 = vmul.f32 %v1155, 0.2
        %v1432 = vmul.f32 %v1157, 0.2
        %v1433 = vmul.f32 %v1160, 0.2
        %v1434 = vmul.f32 %v1162, 0.2
        %v1435 = vmul.f32 %v1165, 0.2
        %v1436 = vmul.f32 %v1167, 0.2
        %v1437 = vmul.f32 %v1170, 0.2
        %v1438 = vmul.f32 %v1172, 0.2
        %v1439 = vmul.f32 %v1175, 0.2
        %v1440 = vmul.f32 %v1177, 0.2
        %v1441 = vmul.f32 %v1180, 0.2
        %v1442 = vmul.f32 %v1182, 0.2
        %v1443 = vmul.f32 %v1185, 0.2
        %v1444 = vmul.f32 %v1187, 0.2
        %v1445 = vsel %vm1189, %v870, %v1317
        %v1446 = vsel %vm1190, %v872, %v1318
        %v1447 = vsel %vm1191, %v875, %v1319
        %v1448 = vsel %vm1192, %v877, %v1320
        %v1449 = vsel %vm1193, %v880, %v1321
        %v1450 = vsel %vm1194, %v882, %v1322
        %v1451 = vsel %vm1195, %v885, %v1323
        %v1452 = vsel %vm1196, %v887, %v1324
        %v1453 = vsel %vm1197, %v890, %v1325
        %v1454 = vsel %vm1198, %v892, %v1326
        %v1455 = vsel %vm1199, %v895, %v1327
        %v1456 = vsel %vm1200, %v897, %v1328
        %v1457 = vsel %vm1201, %v900, %v1329
        %v1458 = vsel %vm1202, %v902, %v1330
        %v1459 = vsel %vm1203, %v905, %v1331
        %v1460 = vsel %vm1204, %v907, %v1332
        %v1461 = vsel %vm1205, %v910, %v1333
        %v1462 = vsel %vm1206, %v912, %v1334
        %v1463 = vsel %vm1207, %v915, %v1335
        %v1464 = vsel %vm1208, %v917, %v1336
        %v1465 = vsel %vm1209, %v920, %v1337
        %v1466 = vsel %vm1210, %v922, %v1338
        %v1467 = vsel %vm1211, %v925, %v1339
        %v1468 = vsel %vm1212, %v927, %v1340
        %v1469 = vsel %vm1213, %v930, %v1341
        %v1470 = vsel %vm1214, %v932, %v1342
        %v1471 = vsel %vm1215, %v935, %v1343
        %v1472 = vsel %vm1216, %v937, %v1344
        %v1473 = vsel %vm1217, %v940, %v1345
        %v1474 = vsel %vm1218, %v942, %v1346
        %v1475 = vsel %vm1219, %v945, %v1347
        %v1476 = vsel %vm1220, %v947, %v1348
        %v1477 = vsel %vm1221, %v950, %v1349
        %v1478 = vsel %vm1222, %v952, %v1350
        %v1479 = vsel %vm1223, %v955, %v1351
        %v1480 = vsel %vm1224, %v957, %v1352
        %v1481 = vsel %vm1225, %v960, %v1353
        %v1482 = vsel %vm1226, %v962, %v1354
        %v1483 = vsel %vm1227, %v965, %v1355
        %v1484 = vsel %vm1228, %v967, %v1356
        %v1485 = vsel %vm1229, %v970, %v1357
        %v1486 = vsel %vm1230, %v972, %v1358
        %v1487 = vsel %vm1231, %v975, %v1359
        %v1488 = vsel %vm1232, %v977, %v1360
        %v1489 = vsel %vm1233, %v980, %v1361
        %v1490 = vsel %vm1234, %v982, %v1362
        %v1491 = vsel %vm1235, %v985, %v1363
        %v1492 = vsel %vm1236, %v987, %v1364
        %v1493 = vsel %vm1237, %v990, %v1365
        %v1494 = vsel %vm1238, %v992, %v1366
        %v1495 = vsel %vm1239, %v995, %v1367
        %v1496 = vsel %vm1240, %v997, %v1368
        %v1497 = vsel %vm1241, %v1000, %v1369
        %v1498 = vsel %vm1242, %v1002, %v1370
        %v1499 = vsel %vm1243, %v1005, %v1371
        %v1500 = vsel %vm1244, %v1007, %v1372
        %v1501 = vsel %vm1245, %v1010, %v1373
        %v1502 = vsel %vm1246, %v1012, %v1374
        %v1503 = vsel %vm1247, %v1015, %v1375
        %v1504 = vsel %vm1248, %v1017, %v1376
        %v1505 = vsel %vm1249, %v1020, %v1377
        %v1506 = vsel %vm1250, %v1022, %v1378
        %v1507 = vsel %vm1251, %v1025, %v1379
        %v1508 = vsel %vm1252, %v1027, %v1380
        %v1509 = vsel %vm1253, %v1030, %v1381
        %v1510 = vsel %vm1254, %v1032, %v1382
        %v1511 = vsel %vm1255, %v1035, %v1383
        %v1512 = vsel %vm1256, %v1037, %v1384
        %v1513 = vsel %vm1257, %v1040, %v1385
        %v1514 = vsel %vm1258, %v1042, %v1386
        %v1515 = vsel %vm1259, %v1045, %v1387
        %v1516 = vsel %vm1260, %v1047, %v1388
        %v1517 = vsel %vm1261, %v1050, %v1389
        %v1518 = vsel %vm1262, %v1052, %v1390
        %v1519 = vsel %vm1263, %v1055, %v1391
        %v1520 = vsel %vm1264, %v1057, %v1392
        %v1521 = vsel %vm1265, %v1060, %v1393
        %v1522 = vsel %vm1266, %v1062, %v1394
        %v1523 = vsel %vm1267, %v1065, %v1395
        %v1524 = vsel %vm1268, %v1067, %v1396
        %v1525 = vsel %vm1269, %v1070, %v1397
        %v1526 = vsel %vm1270, %v1072, %v1398
        %v1527 = vsel %vm1271, %v1075, %v1399
        %v1528 = vsel %vm1272, %v1077, %v1400
        %v1529 = vsel %vm1273, %v1080, %v1401
        %v1530 = vsel %vm1274, %v1082, %v1402
        %v1531 = vsel %vm1275, %v1085, %v1403
        %v1532 = vsel %vm1276, %v1087, %v1404
        %v1533 = vsel %vm1277, %v1090, %v1405
        %v1534 = vsel %vm1278, %v1092, %v1406
        %v1535 = vsel %vm1279, %v1095, %v1407
        %v1536 = vsel %vm1280, %v1097, %v1408
        %v1537 = vsel %vm1281, %v1100, %v1409
        %v1538 = vsel %vm1282, %v1102, %v1410
        %v1539 = vsel %vm1283, %v1105, %v1411
        %v1540 = vsel %vm1284, %v1107, %v1412
        %v1541 = vsel %vm1285, %v1110, %v1413
        %v1542 = vsel %vm1286, %v1112, %v1414
        %v1543 = vsel %vm1287, %v1115, %v1415
        %v1544 = vsel %vm1288, %v1117, %v1416
        %v1545 = vsel %vm1289, %v1120, %v1417
        %v1546 = vsel %vm1290, %v1122, %v1418
        %v1547 = vsel %vm1291, %v1125, %v1419
        %v1548 = vsel %vm1292, %v1127, %v1420
        %v1549 = vsel %vm1293, %v1130, %v1421
        %v1550 = vsel %vm1294, %v1132, %v1422
        %v1551 = vsel %vm1295, %v1135, %v1423
        %v1552 = vsel %vm1296, %v1137, %v1424
        %v1553 = vsel %vm1297, %v1140, %v1425
        %v1554 = vsel %vm1298, %v1142, %v1426
        %v1555 = vsel %vm1299, %v1145, %v1427
        %v1556 = vsel %vm1300, %v1147, %v1428
        %v1557 = vsel %vm1301, %v1150, %v1429
        %v1558 = vsel %vm1302, %v1152, %v1430
        %v1559 = vsel %vm1303, %v1155, %v1431
        %v1560 = vsel %vm1304, %v1157, %v1432
        %v1561 = vsel %vm1305, %v1160, %v1433
        %v1562 = vsel %vm1306, %v1162, %v1434
        %v1563 = vsel %vm1307, %v1165, %v1435
        %v1564 = vsel %vm1308, %v1167, %v1436
        %v1565 = vsel %vm1309, %v1170, %v1437
        %v1566 = vsel %vm1310, %v1172, %v1438
        %v1567 = vsel %vm1311, %v1175, %v1439
        %v1568 = vsel %vm1312, %v1177, %v1440
        %v1569 = vsel %vm1313, %v1180, %v1441
        %v1570 = vsel %vm1314, %v1182, %v1442
        %v1571 = vsel %vm1315, %v1185, %v1443
        %v1572 = vsel %vm1316, %v1187, %v1444
        %v1573 = vpack.c.bf16 %v1445, %v1445
        %v1574 = vpack.c.bf16 %v1446, %v1446
        %v1575 = vpack.c.bf16 %v1447, %v1447
        %v1576 = vpack.c.bf16 %v1448, %v1448
        %v1577 = vpack.c.bf16 %v1449, %v1449
        %v1578 = vpack.c.bf16 %v1450, %v1450
        %v1579 = vpack.c.bf16 %v1451, %v1451
        %v1580 = vpack.c.bf16 %v1452, %v1452
        %v1581 = vpack.c.bf16 %v1453, %v1453
        %v1582 = vpack.c.bf16 %v1454, %v1454
        %v1583 = vpack.c.bf16 %v1455, %v1455
        %v1584 = vpack.c.bf16 %v1456, %v1456
        %v1585 = vpack.c.bf16 %v1457, %v1457
        %v1586 = vpack.c.bf16 %v1458, %v1458
        %v1587 = vpack.c.bf16 %v1459, %v1459
        %v1588 = vpack.c.bf16 %v1460, %v1460
        %v1589 = vpack.c.bf16 %v1461, %v1461
        %v1590 = vpack.c.bf16 %v1462, %v1462
        %v1591 = vpack.c.bf16 %v1463, %v1463
        %v1592 = vpack.c.bf16 %v1464, %v1464
        %v1593 = vpack.c.bf16 %v1465, %v1465
        %v1594 = vpack.c.bf16 %v1466, %v1466
        %v1595 = vpack.c.bf16 %v1467, %v1467
        %v1596 = vpack.c.bf16 %v1468, %v1468
        %v1597 = vpack.c.bf16 %v1469, %v1469
        %v1598 = vpack.c.bf16 %v1470, %v1470
        %v1599 = vpack.c.bf16 %v1471, %v1471
        %v1600 = vpack.c.bf16 %v1472, %v1472
        %v1601 = vpack.c.bf16 %v1473, %v1473
        %v1602 = vpack.c.bf16 %v1474, %v1474
        %v1603 = vpack.c.bf16 %v1475, %v1475
        %v1604 = vpack.c.bf16 %v1476, %v1476
        %v1605 = vpack.c.bf16 %v1477, %v1477
        %v1606 = vpack.c.bf16 %v1478, %v1478
        %v1607 = vpack.c.bf16 %v1479, %v1479
        %v1608 = vpack.c.bf16 %v1480, %v1480
        %v1609 = vpack.c.bf16 %v1481, %v1481
        %v1610 = vpack.c.bf16 %v1482, %v1482
        %v1611 = vpack.c.bf16 %v1483, %v1483
        %v1612 = vpack.c.bf16 %v1484, %v1484
        %v1613 = vpack.c.bf16 %v1485, %v1485
        %v1614 = vpack.c.bf16 %v1486, %v1486
        %v1615 = vpack.c.bf16 %v1487, %v1487
        %v1616 = vpack.c.bf16 %v1488, %v1488
        %v1617 = vpack.c.bf16 %v1489, %v1489
        %v1618 = vpack.c.bf16 %v1490, %v1490
        %v1619 = vpack.c.bf16 %v1491, %v1491
        %v1620 = vpack.c.bf16 %v1492, %v1492
        %v1621 = vpack.c.bf16 %v1493, %v1493
        %v1622 = vpack.c.bf16 %v1494, %v1494
        %v1623 = vpack.c.bf16 %v1495, %v1495
        %v1624 = vpack.c.bf16 %v1496, %v1496
        %v1625 = vpack.c.bf16 %v1497, %v1497
        %v1626 = vpack.c.bf16 %v1498, %v1498
        %v1627 = vpack.c.bf16 %v1499, %v1499
        %v1628 = vpack.c.bf16 %v1500, %v1500
        %v1629 = vpack.c.bf16 %v1501, %v1501
        %v1630 = vpack.c.bf16 %v1502, %v1502
        %v1631 = vpack.c.bf16 %v1503, %v1503
        %v1632 = vpack.c.bf16 %v1504, %v1504
        %v1633 = vpack.c.bf16 %v1505, %v1505
        %v1634 = vpack.c.bf16 %v1506, %v1506
        %v1635 = vpack.c.bf16 %v1507, %v1507
        %v1636 = vpack.c.bf16 %v1508, %v1508
        %v1637 = vpack.c.bf16 %v1509, %v1509
        %v1638 = vpack.c.bf16 %v1510, %v1510
        %v1639 = vpack.c.bf16 %v1511, %v1511
        %v1640 = vpack.c.bf16 %v1512, %v1512
        %v1641 = vpack.c.bf16 %v1513, %v1513
        %v1642 = vpack.c.bf16 %v1514, %v1514
        %v1643 = vpack.c.bf16 %v1515, %v1515
        %v1644 = vpack.c.bf16 %v1516, %v1516
        %v1645 = vpack.c.bf16 %v1517, %v1517
        %v1646 = vpack.c.bf16 %v1518, %v1518
        %v1647 = vpack.c.bf16 %v1519, %v1519
        %v1648 = vpack.c.bf16 %v1520, %v1520
        %v1649 = vpack.c.bf16 %v1521, %v1521
        %v1650 = vpack.c.bf16 %v1522, %v1522
        %v1651 = vpack.c.bf16 %v1523, %v1523
        %v1652 = vpack.c.bf16 %v1524, %v1524
        %v1653 = vpack.c.bf16 %v1525, %v1525
        %v1654 = vpack.c.bf16 %v1526, %v1526
        %v1655 = vpack.c.bf16 %v1527, %v1527
        %v1656 = vpack.c.bf16 %v1528, %v1528
        %v1657 = vpack.c.bf16 %v1529, %v1529
        %v1658 = vpack.c.bf16 %v1530, %v1530
        %v1659 = vpack.c.bf16 %v1531, %v1531
        %v1660 = vpack.c.bf16 %v1532, %v1532
        %v1661 = vpack.c.bf16 %v1533, %v1533
        %v1662 = vpack.c.bf16 %v1534, %v1534
        %v1663 = vpack.c.bf16 %v1535, %v1535
        %v1664 = vpack.c.bf16 %v1536, %v1536
        %v1665 = vpack.c.bf16 %v1537, %v1537
        %v1666 = vpack.c.bf16 %v1538, %v1538
        %v1667 = vpack.c.bf16 %v1539, %v1539
        %v1668 = vpack.c.bf16 %v1540, %v1540
        %v1669 = vpack.c.bf16 %v1541, %v1541
        %v1670 = vpack.c.bf16 %v1542, %v1542
        %v1671 = vpack.c.bf16 %v1543, %v1543
        %v1672 = vpack.c.bf16 %v1544, %v1544
        %v1673 = vpack.c.bf16 %v1545, %v1545
        %v1674 = vpack.c.bf16 %v1546, %v1546
        %v1675 = vpack.c.bf16 %v1547, %v1547
        %v1676 = vpack.c.bf16 %v1548, %v1548
        %v1677 = vpack.c.bf16 %v1549, %v1549
        %v1678 = vpack.c.bf16 %v1550, %v1550
        %v1679 = vpack.c.bf16 %v1551, %v1551
        %v1680 = vpack.c.bf16 %v1552, %v1552
        %v1681 = vpack.c.bf16 %v1553, %v1553
        %v1682 = vpack.c.bf16 %v1554, %v1554
        %v1683 = vpack.c.bf16 %v1555, %v1555
        %v1684 = vpack.c.bf16 %v1556, %v1556
        %v1685 = vpack.c.bf16 %v1557, %v1557
        %v1686 = vpack.c.bf16 %v1558, %v1558
        %v1687 = vpack.c.bf16 %v1559, %v1559
        %v1688 = vpack.c.bf16 %v1560, %v1560
        %v1689 = vpack.c.bf16 %v1561, %v1561
        %v1690 = vpack.c.bf16 %v1562, %v1562
        %v1691 = vpack.c.bf16 %v1563, %v1563
        %v1692 = vpack.c.bf16 %v1564, %v1564
        %v1693 = vpack.c.bf16 %v1565, %v1565
        %v1694 = vpack.c.bf16 %v1566, %v1566
        %v1695 = vpack.c.bf16 %v1567, %v1567
        %v1696 = vpack.c.bf16 %v1568, %v1568
        %v1697 = vpack.c.bf16 %v1569, %v1569
        %v1698 = vpack.c.bf16 %v1570, %v1570
        %v1699 = vpack.c.bf16 %v1571, %v1571
        %v1700 = vpack.c.bf16 %v1572, %v1572
        %vm1701 = vcmask 519168
        %1702 = vst.msk [vmem:[%s204] sm:$0xf] %vm1701, %v1573
        %1703 = vst.msk [vmem:[%s204 + $0x4] sm:$0xf] %vm1701, %v1574
        %1704 = vst.msk [vmem:[%s204 + $0x8] sm:$0xf] %vm1701, %v1575
        %1705 = vst.msk [vmem:[%s204 + $0xc] sm:$0xf] %vm1701, %v1576
        %1706 = vst.msk [vmem:[%s204 + $0x10] sm:$0xf] %vm1701, %v1577
        %1707 = vst.msk [vmem:[%s204 + $0x14] sm:$0xf] %vm1701, %v1578
        %1708 = vst.msk [vmem:[%s204 + $0x18] sm:$0xf] %vm1701, %v1579
        %1709 = vst.msk [vmem:[%s204 + $0x1c] sm:$0xf] %vm1701, %v1580
        %1710 = vst.msk [vmem:[%s204 + $0x20] sm:$0xf] %vm1701, %v1581
        %1711 = vst.msk [vmem:[%s204 + $0x24] sm:$0xf] %vm1701, %v1582
        %1712 = vst.msk [vmem:[%s204 + $0x28] sm:$0xf] %vm1701, %v1583
        %1713 = vst.msk [vmem:[%s204 + $0x2c] sm:$0xf] %vm1701, %v1584
        %1714 = vst.msk [vmem:[%s204 + $0x30] sm:$0xf] %vm1701, %v1585
        %1715 = vst.msk [vmem:[%s204 + $0x34] sm:$0xf] %vm1701, %v1586
        %1716 = vst.msk [vmem:[%s204 + $0x38] sm:$0xf] %vm1701, %v1587
        %1717 = vst.msk [vmem:[%s204 + $0x3c] sm:$0xf] %vm1701, %v1588
        %1718 = vst.msk [vmem:[%s204 + $0x40] sm:$0xf] %vm1701, %v1589
        %1719 = vst.msk [vmem:[%s204 + $0x44] sm:$0xf] %vm1701, %v1590
        %1720 = vst.msk [vmem:[%s204 + $0x48] sm:$0xf] %vm1701, %v1591
        %1721 = vst.msk [vmem:[%s204 + $0x4c] sm:$0xf] %vm1701, %v1592
        %1722 = vst.msk [vmem:[%s204 + $0x50] sm:$0xf] %vm1701, %v1593
        %1723 = vst.msk [vmem:[%s204 + $0x54] sm:$0xf] %vm1701, %v1594
        %1724 = vst.msk [vmem:[%s204 + $0x58] sm:$0xf] %vm1701, %v1595
        %1725 = vst.msk [vmem:[%s204 + $0x5c] sm:$0xf] %vm1701, %v1596
        %1726 = vst.msk [vmem:[%s204 + $0x60] sm:$0xf] %vm1701, %v1597
        %1727 = vst.msk [vmem:[%s204 + $0x64] sm:$0xf] %vm1701, %v1598
        %1728 = vst.msk [vmem:[%s204 + $0x68] sm:$0xf] %vm1701, %v1599
        %1729 = vst.msk [vmem:[%s204 + $0x6c] sm:$0xf] %vm1701, %v1600
        %1730 = vst.msk [vmem:[%s204 + $0x70] sm:$0xf] %vm1701, %v1601
        %1731 = vst.msk [vmem:[%s204 + $0x74] sm:$0xf] %vm1701, %v1602
        %1732 = vst.msk [vmem:[%s204 + $0x78] sm:$0xf] %vm1701, %v1603
        %1733 = vst.msk [vmem:[%s204 + $0x7c] sm:$0xf] %vm1701, %v1604
        %1734 = vst.msk [vmem:[%s204 + $0x80] sm:$0xf] %vm1701, %v1605
        %1735 = vst.msk [vmem:[%s204 + $0x84] sm:$0xf] %vm1701, %v1606
        %1736 = vst.msk [vmem:[%s204 + $0x88] sm:$0xf] %vm1701, %v1607
        %1737 = vst.msk [vmem:[%s204 + $0x8c] sm:$0xf] %vm1701, %v1608
        %1738 = vst.msk [vmem:[%s204 + $0x90] sm:$0xf] %vm1701, %v1609
        %1739 = vst.msk [vmem:[%s204 + $0x94] sm:$0xf] %vm1701, %v1610
        %1740 = vst.msk [vmem:[%s204 + $0x98] sm:$0xf] %vm1701, %v1611
        %1741 = vst.msk [vmem:[%s204 + $0x9c] sm:$0xf] %vm1701, %v1612
        %1742 = vst.msk [vmem:[%s204 + $0xa0] sm:$0xf] %vm1701, %v1613
        %1743 = vst.msk [vmem:[%s204 + $0xa4] sm:$0xf] %vm1701, %v1614
        %1744 = vst.msk [vmem:[%s204 + $0xa8] sm:$0xf] %vm1701, %v1615
        %1745 = vst.msk [vmem:[%s204 + $0xac] sm:$0xf] %vm1701, %v1616
        %1746 = vst.msk [vmem:[%s204 + $0xb0] sm:$0xf] %vm1701, %v1617
        %1747 = vst.msk [vmem:[%s204 + $0xb4] sm:$0xf] %vm1701, %v1618
        %1748 = vst.msk [vmem:[%s204 + $0xb8] sm:$0xf] %vm1701, %v1619
        %1749 = vst.msk [vmem:[%s204 + $0xbc] sm:$0xf] %vm1701, %v1620
        %1750 = vst.msk [vmem:[%s204 + $0xc0] sm:$0xf] %vm1701, %v1621
        %1751 = vst.msk [vmem:[%s204 + $0xc4] sm:$0xf] %vm1701, %v1622
        %1752 = vst.msk [vmem:[%s204 + $0xc8] sm:$0xf] %vm1701, %v1623
        %1753 = vst.msk [vmem:[%s204 + $0xcc] sm:$0xf] %vm1701, %v1624
        %1754 = vst.msk [vmem:[%s204 + $0xd0] sm:$0xf] %vm1701, %v1625
        %1755 = vst.msk [vmem:[%s204 + $0xd4] sm:$0xf] %vm1701, %v1626
        %1756 = vst.msk [vmem:[%s204 + $0xd8] sm:$0xf] %vm1701, %v1627
        %1757 = vst.msk [vmem:[%s204 + $0xdc] sm:$0xf] %vm1701, %v1628
        %1758 = vst.msk [vmem:[%s204 + $0xe0] sm:$0xf] %vm1701, %v1629
        %1759 = vst.msk [vmem:[%s204 + $0xe4] sm:$0xf] %vm1701, %v1630
        %1760 = vst.msk [vmem:[%s204 + $0xe8] sm:$0xf] %vm1701, %v1631
        %1761 = vst.msk [vmem:[%s204 + $0xec] sm:$0xf] %vm1701, %v1632
        %1762 = vst.msk [vmem:[%s204 + $0xf0] sm:$0xf] %vm1701, %v1633
        %1763 = vst.msk [vmem:[%s204 + $0xf4] sm:$0xf] %vm1701, %v1634
        %1764 = vst.msk [vmem:[%s204 + $0xf8] sm:$0xf] %vm1701, %v1635
        %1765 = vst.msk [vmem:[%s204 + $0xfc] sm:$0xf] %vm1701, %v1636
        %1766 = vst.msk [vmem:[%s204 + $0x100] sm:$0xf] %vm1701, %v1637
        %1767 = vst.msk [vmem:[%s204 + $0x104] sm:$0xf] %vm1701, %v1638
        %1768 = vst.msk [vmem:[%s204 + $0x108] sm:$0xf] %vm1701, %v1639
        %1769 = vst.msk [vmem:[%s204 + $0x10c] sm:$0xf] %vm1701, %v1640
        %1770 = vst.msk [vmem:[%s204 + $0x110] sm:$0xf] %vm1701, %v1641
        %1771 = vst.msk [vmem:[%s204 + $0x114] sm:$0xf] %vm1701, %v1642
        %1772 = vst.msk [vmem:[%s204 + $0x118] sm:$0xf] %vm1701, %v1643
        %1773 = vst.msk [vmem:[%s204 + $0x11c] sm:$0xf] %vm1701, %v1644
        %1774 = vst.msk [vmem:[%s204 + $0x120] sm:$0xf] %vm1701, %v1645
        %1775 = vst.msk [vmem:[%s204 + $0x124] sm:$0xf] %vm1701, %v1646
        %1776 = vst.msk [vmem:[%s204 + $0x128] sm:$0xf] %vm1701, %v1647
        %1777 = vst.msk [vmem:[%s204 + $0x12c] sm:$0xf] %vm1701, %v1648
        %1778 = vst.msk [vmem:[%s204 + $0x130] sm:$0xf] %vm1701, %v1649
        %1779 = vst.msk [vmem:[%s204 + $0x134] sm:$0xf] %vm1701, %v1650
        %1780 = vst.msk [vmem:[%s204 + $0x138] sm:$0xf] %vm1701, %v1651
        %1781 = vst.msk [vmem:[%s204 + $0x13c] sm:$0xf] %vm1701, %v1652
        %1782 = vst.msk [vmem:[%s204 + $0x140] sm:$0xf] %vm1701, %v1653
        %1783 = vst.msk [vmem:[%s204 + $0x144] sm:$0xf] %vm1701, %v1654
        %1784 = vst.msk [vmem:[%s204 + $0x148] sm:$0xf] %vm1701, %v1655
        %1785 = vst.msk [vmem:[%s204 + $0x14c] sm:$0xf] %vm1701, %v1656
        %1786 = vst.msk [vmem:[%s204 + $0x150] sm:$0xf] %vm1701, %v1657
        %1787 = vst.msk [vmem:[%s204 + $0x154] sm:$0xf] %vm1701, %v1658
        %1788 = vst.msk [vmem:[%s204 + $0x158] sm:$0xf] %vm1701, %v1659
        %1789 = vst.msk [vmem:[%s204 + $0x15c] sm:$0xf] %vm1701, %v1660
        %1790 = vst.msk [vmem:[%s204 + $0x160] sm:$0xf] %vm1701, %v1661
        %1791 = vst.msk [vmem:[%s204 + $0x164] sm:$0xf] %vm1701, %v1662
        %1792 = vst.msk [vmem:[%s204 + $0x168] sm:$0xf] %vm1701, %v1663
        %1793 = vst.msk [vmem:[%s204 + $0x16c] sm:$0xf] %vm1701, %v1664
        %1794 = vst.msk [vmem:[%s204 + $0x170] sm:$0xf] %vm1701, %v1665
        %1795 = vst.msk [vmem:[%s204 + $0x174] sm:$0xf] %vm1701, %v1666
        %1796 = vst.msk [vmem:[%s204 + $0x178] sm:$0xf] %vm1701, %v1667
        %1797 = vst.msk [vmem:[%s204 + $0x17c] sm:$0xf] %vm1701, %v1668
        %1798 = vst.msk [vmem:[%s204 + $0x180] sm:$0xf] %vm1701, %v1669
        %1799 = vst.msk [vmem:[%s204 + $0x184] sm:$0xf] %vm1701, %v1670
        %1800 = vst.msk [vmem:[%s204 + $0x188] sm:$0xf] %vm1701, %v1671
        %1801 = vst.msk [vmem:[%s204 + $0x18c] sm:$0xf] %vm1701, %v1672
        %1802 = vst.msk [vmem:[%s204 + $0x190] sm:$0xf] %vm1701, %v1673
        %1803 = vst.msk [vmem:[%s204 + $0x194] sm:$0xf] %vm1701, %v1674
        %1804 = vst.msk [vmem:[%s204 + $0x198] sm:$0xf] %vm1701, %v1675
        %1805 = vst.msk [vmem:[%s204 + $0x19c] sm:$0xf] %vm1701, %v1676
        %1806 = vst.msk [vmem:[%s204 + $0x1a0] sm:$0xf] %vm1701, %v1677
        %1807 = vst.msk [vmem:[%s204 + $0x1a4] sm:$0xf] %vm1701, %v1678
        %1808 = vst.msk [vmem:[%s204 + $0x1a8] sm:$0xf] %vm1701, %v1679
        %1809 = vst.msk [vmem:[%s204 + $0x1ac] sm:$0xf] %vm1701, %v1680
        %1810 = vst.msk [vmem:[%s204 + $0x1b0] sm:$0xf] %vm1701, %v1681
        %1811 = vst.msk [vmem:[%s204 + $0x1b4] sm:$0xf] %vm1701, %v1682
        %1812 = vst.msk [vmem:[%s204 + $0x1b8] sm:$0xf] %vm1701, %v1683
        %1813 = vst.msk [vmem:[%s204 + $0x1bc] sm:$0xf] %vm1701, %v1684
        %1814 = vst.msk [vmem:[%s204 + $0x1c0] sm:$0xf] %vm1701, %v1685
        %1815 = vst.msk [vmem:[%s204 + $0x1c4] sm:$0xf] %vm1701, %v1686
        %1816 = vst.msk [vmem:[%s204 + $0x1c8] sm:$0xf] %vm1701, %v1687
        %1817 = vst.msk [vmem:[%s204 + $0x1cc] sm:$0xf] %vm1701, %v1688
        %1818 = vst.msk [vmem:[%s204 + $0x1d0] sm:$0xf] %vm1701, %v1689
        %1819 = vst.msk [vmem:[%s204 + $0x1d4] sm:$0xf] %vm1701, %v1690
        %1820 = vst.msk [vmem:[%s204 + $0x1d8] sm:$0xf] %vm1701, %v1691
        %1821 = vst.msk [vmem:[%s204 + $0x1dc] sm:$0xf] %vm1701, %v1692
        %1822 = vst.msk [vmem:[%s204 + $0x1e0] sm:$0xf] %vm1701, %v1693
        %1823 = vst.msk [vmem:[%s204 + $0x1e4] sm:$0xf] %vm1701, %v1694
        %1824 = vst.msk [vmem:[%s204 + $0x1e8] sm:$0xf] %vm1701, %v1695
        %1825 = vst.msk [vmem:[%s204 + $0x1ec] sm:$0xf] %vm1701, %v1696
        %1826 = vst.msk [vmem:[%s204 + $0x1f0] sm:$0xf] %vm1701, %v1697
        %1827 = vst.msk [vmem:[%s204 + $0x1f4] sm:$0xf] %vm1701, %v1698
        %1828 = vst.msk [vmem:[%s204 + $0x1f8] sm:$0xf] %vm1701, %v1699
        %1829 = vst.msk [vmem:[%s204 + $0x1fc] sm:$0xf] %vm1701, %v1700
        %s1830 = smul.u32 128, %s16
        %p1831 = scmp.lt.s32.totalorder %s1830, 255
        %s1832 = scalar_select %p1831, %s1830, 255
        %s1833 = smul.addr %s1832, 4
        %s1834 = scalar_lea.vmem %s3, %s1833
        // Predicated region
        $region41: #{second_model_forward.5} parent=31 // pred_check
          %p1835 = pneg %p102
        $region42: #{second_model_forward.5} parent=31 // pred_check_branch
          %1837 = sbr.rel (%p1835) target = $region44
        $region43: #{second_model_forward.5} parent=31 // pred_region
          %s1838 = smul.u32 128, %s16
        $region44: #{second_model_forward.5} parent=31 // pred_fallthru
          _
      $region32: #{second_model_forward.5} parent=5 // pred_fallthru
        _
      %p1839 = scmp.le.s32.totalorder 2, %s11
      // Predicated region
      $region45: #{second_model_forward.5} parent=5 // pred_check
        %p1840 = pneg %p1839
      $region46: #{second_model_forward.5} parent=5 // pred_check_branch
        %1842 = sbr.rel (%p1840) target = $region48
      $region47: #{second_model_forward.5} parent=5 // pred_region
        %s1843 = ssub.s32 %s11, 2
        // Predicated region
        $region49: #{second_model_forward.5} parent=47 // pred_check
          %p1844 = pneg %p108
        $region50: #{second_model_forward.5} parent=47 // pred_check_branch
          %1846 = sbr.rel (%p1844) target = $region52
        $region51: #{second_model_forward.5} parent=47 // pred_region
          %s1847 = smul.u32 128, %s17
          %p1848 = scmp.lt.s32.totalorder %s1847, 255
          %s1849 = scalar_select %p1848, %s1847, 255
          %s1850 = smul.addr %s1849, 4
          %s1851 = scalar_lea.vmem %s3, %s1850
        $region52: #{second_model_forward.5} parent=47 // pred_fallthru
          _
      $region48: #{second_model_forward.5} parent=5 // pred_fallthru
        _
    $region6: #{second_model_forward.5} parent=1 // loop_footer
      %s15 = sadd.s32 1, %s11
    $region7: #{second_model_forward.5} parent=1 // loop_footer_branch
      %10 = sbr.rel target = $region3
    $region8: #{second_model_forward.5} parent=1 // loop_exit
      _
    %1852 = vsyncpa [#allocation3], 1
    %s1853 = scalar_lea.sflag [#allocation3], 1
    %1854 = vsyncpa %s1853, 1
    %1855 = vsyncpa [#allocation5], 1

// kernel: second_model_forward.6
$region0: #{second_model_forward.6}
  #allocation0 [shape = 'u32[]', space=smem, size = 0x4, offset = 0x4, fixed_abs, tag = 'smem constant byte address 0x4 - core index']
  #allocation1 [shape = 'u32[72,128]{1,0:T(1,128)}', space=vmem, size = 0x9000, scoped, tag = 'internal scratch']
  %s0 = inlined_call_operand.vmem [shape: bf16[512,512], index: 0, kind: input, shape index: {}]
  %s1 = inlined_call_operand.vmem [shape: bf16[512,32], index: 1, kind: input, shape index: {}]
  %s2 = inlined_call_operand.vmem [shape: f32[1,32], index: 2, kind: input, shape index: {}]
  %s3 = inlined_call_operand.vmem [shape: bf16[512,32], index: 3, kind: output, shape index: {}]
  %s4 = sld [smem:[#allocation0]]
  $region45: #{second_model_forward.6} parent=0
    _
  %s6 = ssub.s32 1, %s4
  %s7 = scalar_select 0, %s6, %s4
  loop: start=0, step=1, limit=4
  $region2: #{second_model_forward.6} parent=0 // loop_pre_header
    _
  $region3: #{second_model_forward.6} parent=0 // loop_header
    %s9 = sphi 0, %s13
    %p10 = scmp.ge.s32.totalorder %s9, 4
    %s19 = sphi 0, %s21
    %s22 = sphi 0, %s19
    %s23 = sphi 0, %s22
    %s39 = sphi 0, %s23
    %s43 = sphi 0, %s43
    %s45 = sphi 0, %s43
    %s46 = sphi 0, %s45
    %s60 = sphi 0, %s46
    %s64 = sphi 0, %s64
    %s66 = sphi 0, %s64
    %s67 = sphi 0, %s66
    %s81 = sphi 0, %s67
    %s87 = sphi 0, %s89
    %s90 = sphi 0, %s87
    %s91 = sphi 0, %s90
    %s107 = sphi 0, %s91
  $region4: #{second_model_forward.6} parent=0 // loop_header_branch
    %12 = sbr.rel (%p10) target = $region8
  $region5: #{second_model_forward.6} parent=0 // loop_body
    %s14 = ssub.s32 %s9, 1
    %s15 = ssub.s32 %s9, 2
    %s16 = sadd.s32 %s9, 1
    %s17 = ssub.s32 %s9, %s16
    %p18 = scmp.eq.s32.totalorder %s17, 0
    %s20 = sadd.s32 %s19, 1
    %s21 = scalar_select %p18, %s19, %s20
    %p24 = pneg %p18
    %p25 = scmp.eq.s32.totalorder %s9, 1
    %p26 = por %p24, %p25
    %p27 = scmp.ne.s32.totalorder %s19, %s22
    %p28 = scmp.eq.s32.totalorder %s9, 0
    %p29 = por %p27, %p28
    %p30 = scmp.ne.s32.totalorder %s19, %s22
    %p31 = scmp.eq.s32.totalorder %s14, 1
    %p32 = por %p30, %p31
    %p33 = scmp.ne.s32.totalorder %s22, %s23
    %p34 = scmp.eq.s32.totalorder %s14, 0
    %p35 = por %p33, %p34
    %p36 = scmp.ne.s32.totalorder %s22, %s23
    %p37 = scmp.eq.s32.totalorder %s15, 1
    %p38 = por %p36, %p37
    %p40 = scmp.ne.s32.totalorder %s23, %s39
    %p41 = scmp.eq.s32.totalorder %s15, 0
    %p42 = por %p40, %p41
    %s44 = sadd.s32 %s43, 1
    %p47 = scmp.eq.s32.totalorder %s9, 1
    %p48 = scmp.ne.s32.totalorder %s43, %s45
    %p49 = scmp.eq.s32.totalorder %s9, 0
    %p50 = por %p48, %p49
    %p51 = scmp.ne.s32.totalorder %s43, %s45
    %p52 = scmp.eq.s32.totalorder %s14, 1
    %p53 = por %p51, %p52
    %p54 = scmp.ne.s32.totalorder %s45, %s46
    %p55 = scmp.eq.s32.totalorder %s14, 0
    %p56 = por %p54, %p55
    %p57 = scmp.ne.s32.totalorder %s45, %s46
    %p58 = scmp.eq.s32.totalorder %s15, 1
    %p59 = por %p57, %p58
    %p61 = scmp.ne.s32.totalorder %s46, %s60
    %p62 = scmp.eq.s32.totalorder %s15, 0
    %p63 = por %p61, %p62
    %s65 = sadd.s32 %s64, 1
    %p68 = scmp.eq.s32.totalorder %s9, 1
    %p69 = scmp.ne.s32.totalorder %s64, %s66
    %p70 = scmp.eq.s32.totalorder %s9, 0
    %p71 = por %p69, %p70
    %p72 = scmp.ne.s32.totalorder %s64, %s66
    %p73 = scmp.eq.s32.totalorder %s14, 1
    %p74 = por %p72, %p73
    %p75 = scmp.ne.s32.totalorder %s66, %s67
    %p76 = scmp.eq.s32.totalorder %s14, 0
    %p77 = por %p75, %p76
    %p78 = scmp.ne.s32.totalorder %s66, %s67
    %p79 = scmp.eq.s32.totalorder %s15, 1
    %p80 = por %p78, %p79
    %p82 = scmp.ne.s32.totalorder %s67, %s81
    %p83 = scmp.eq.s32.totalorder %s15, 0
    %p84 = por %p82, %p83
    %s85 = ssub.s32 %s9, %s16
    %p86 = scmp.eq.s32.totalorder %s85, 0
    %s88 = sadd.s32 %s87, 1
    %s89 = scalar_select %p86, %s87, %s88
    %p92 = pneg %p86
    %p93 = scmp.eq.s32.totalorder %s9, 1
    %p94 = por %p92, %p93
    %p95 = scmp.ne.s32.totalorder %s87, %s90
    %p96 = scmp.eq.s32.totalorder %s9, 0
    %p97 = por %p95, %p96
    %p98 = scmp.ne.s32.totalorder %s87, %s90
    %p99 = scmp.eq.s32.totalorder %s14, 1
    %p100 = por %p98, %p99
    %p101 = scmp.ne.s32.totalorder %s90, %s91
    %p102 = scmp.eq.s32.totalorder %s14, 0
    %p103 = por %p101, %p102
    %p104 = scmp.ne.s32.totalorder %s90, %s91
    %p105 = scmp.eq.s32.totalorder %s15, 1
    %p106 = por %p104, %p105
    %p108 = scmp.ne.s32.totalorder %s91, %s107
    %p109 = scmp.eq.s32.totalorder %s15, 0
    %p110 = por %p108, %p109
    %p111 = scmp.le.s32.totalorder 1, %s9
    %p112 = scmp.lt.s32.totalorder %s9, 3
    %p113 = pnand %p111, %p112
    %p114 = pneg %p113
    // Predicated region
    $region9: #{second_model_forward.6} parent=5 // pred_check
      _
    $region10: #{second_model_forward.6} parent=5 // pred_check_branch
      %116 = sbr.rel (%p113) target = $region12
    $region11: #{second_model_forward.6} parent=5 // pred_region
      %s117 = ssub.s32 %s9, 1
      // Predicated region
      $region13: #{second_model_forward.6} parent=11 // pred_check
        %p118 = pneg %p56
      $region14: #{second_model_forward.6} parent=11 // pred_check_branch
        %120 = sbr.rel (%p118) target = $region16
      $region15: #{second_model_forward.6} parent=11 // pred_region
        _
      $region16: #{second_model_forward.6} parent=11 // pred_fallthru
        _
      // Predicated region
      $region17: #{second_model_forward.6} parent=11 // pred_check
        %p121 = pneg %p77
      $region18: #{second_model_forward.6} parent=11 // pred_check_branch
        %123 = sbr.rel (%p121) target = $region20
      $region19: #{second_model_forward.6} parent=11 // pred_region
        _
      $region20: #{second_model_forward.6} parent=11 // pred_fallthru
        _
    $region12: #{second_model_forward.6} parent=5 // pred_fallthru
      _
    %p124 = scmp.lt.s32.totalorder %s9, 2
    // Predicated region
    $region21: #{second_model_forward.6} parent=5 // pred_check
      %p125 = pneg %p124
    $region22: #{second_model_forward.6} parent=5 // pred_check_branch
      %127 = sbr.rel (%p125) target = $region24
    $region23: #{second_model_forward.6} parent=5 // pred_region
      // Predicated region
      $region25: #{second_model_forward.6} parent=23 // pred_check
        %p128 = pneg %p29
      $region26: #{second_model_forward.6} parent=23 // pred_check_branch
        %130 = sbr.rel (%p128) target = $region28
      $region27: #{second_model_forward.6} parent=23 // pred_region
        %s131 = smul.u32 32, %s9
        %p132 = scmp.lt.s32.totalorder %s131, 63
        %s133 = scalar_select %p132, %s131, 63
        %s134 = smul.addr %s133, 4
        %s135 = smul.addr %s134, 4
        %s136 = scalar_lea.vmem %s0, %s135
        %s137 = smul.u32 32, %s9
      $region28: #{second_model_forward.6} parent=23 // pred_fallthru
        _
    $region24: #{second_model_forward.6} parent=5 // pred_fallthru
      _
    %p138 = scmp.le.s32.totalorder 1, %s9
    %p139 = scmp.lt.s32.totalorder %s9, 3
    %p140 = pnand %p138, %p139
    %p141 = pneg %p140
    // Predicated region
    $region29: #{second_model_forward.6} parent=5 // pred_check
      _
    $region30: #{second_model_forward.6} parent=5 // pred_check_branch
      %143 = sbr.rel (%p140) target = $region32
    $region31: #{second_model_forward.6} parent=5 // pred_region
      %s144 = ssub.s32 %s9, 1
      %s145 = smul.u32 32, %s14
      %p146 = scmp.lt.s32.totalorder %s145, 63
      %s147 = scalar_select %p146, %s145, 63
      %s148 = smul.addr %s147, 4
      %s149 = smul.addr %s148, 4
      %s150 = scalar_lea.vmem %s0, %s149
      %p151 = pneg %p35
      %p152 = pneg %p32
      %p153 = pneg %p56
      %p154 = pneg %p53
      %p155 = pneg %p77
      %p156 = pneg %p74
      %p157 = pneg %p103
      %p158 = pneg %p100
      %s159 = smul.u32 32, %s14
      %p160 = scmp.lt.s32.totalorder %s159, 63
      %s161 = scalar_select %p160, %s159, 63
      %s162 = smul.addr %s161, 4
      %s163 = scalar_lea.vmem %s3, %s162
      %s164 = smul.u32 32, %s14
      %p165 = scmp.lt.s32.totalorder %s164, 63
      %s166 = scalar_select %p165, %s164, 63
      %s167 = smul.addr %s166, 4
      %s168 = smul.addr %s167, 4
      %s169 = scalar_lea.vmem %s0, %s168
      %s170 = smul.u32 32, %s14
      %s171 = smul.u32 32, %s14
      %p172 = scmp.lt.s32.totalorder %s171, 63
      %s173 = scalar_select %p172, %s171, 63
      %s174 = smul.addr %s173, 4
      %s175 = scalar_lea.vmem %s3, %s174
      %s176 = smul.u32 32, %s14
      %v177 = vld [vmem:[%s169] sm:$0xff]
      %v178 = vld [vmem:[%s169 + $0x8] sm:$0xff]
      %v179 = vld [vmem:[%s169 + $0x10] sm:$0xff]
      %v180 = vld [vmem:[%s169 + $0x18] sm:$0xff]
      %v181 = vld [vmem:[%s169 + $0x20] sm:$0xff]
      %v182 = vld [vmem:[%s169 + $0x28] sm:$0xff]
      %v183 = vld [vmem:[%s169 + $0x30] sm:$0xff]
      %v184 = vld [vmem:[%s169 + $0x38] sm:$0xff]
      %v185 = vld [vmem:[%s169 + $0x40] sm:$0xff]
      %v186 = vld [vmem:[%s169 + $0x48] sm:$0xff]
      %v187 = vld [vmem:[%s169 + $0x50] sm:$0xff]
      %v188 = vld [vmem:[%s169 + $0x58] sm:$0xff]
      %v189 = vld [vmem:[%s169 + $0x60] sm:$0xff]
      %v190 = vld [vmem:[%s169 + $0x68] sm:$0xff]
      %v191 = vld [vmem:[%s169 + $0x70] sm:$0xff]
      %v192 = vld [vmem:[%s169 + $0x78] sm:$0xff]
      %v193 = vld [vmem:[%s169 + $0x80] sm:$0xff]
      %v194 = vld [vmem:[%s169 + $0x88] sm:$0xff]
      %v195 = vld [vmem:[%s169 + $0x90] sm:$0xff]
      %v196 = vld [vmem:[%s169 + $0x98] sm:$0xff]
      %v197 = vld [vmem:[%s169 + $0xa0] sm:$0xff]
      %v198 = vld [vmem:[%s169 + $0xa8] sm:$0xff]
      %v199 = vld [vmem:[%s169 + $0xb0] sm:$0xff]
      %v200 = vld [vmem:[%s169 + $0xb8] sm:$0xff]
      %v201 = vld [vmem:[%s169 + $0xc0] sm:$0xff]
      %v202 = vld [vmem:[%s169 + $0xc8] sm:$0xff]
      %v203 = vld [vmem:[%s169 + $0xd0] sm:$0xff]
      %v204 = vld [vmem:[%s169 + $0xd8] sm:$0xff]
      %v205 = vld [vmem:[%s169 + $0xe0] sm:$0xff]
      %v206 = vld [vmem:[%s169 + $0xe8] sm:$0xff]
      %v207 = vld [vmem:[%s169 + $0xf0] sm:$0xff]
      %v208 = vld [vmem:[%s169 + $0xf8] sm:$0xff]
      %v209 = vld [vmem:[%s169 + $0x100] sm:$0xff]
      %v210 = vld [vmem:[%s169 + $0x108] sm:$0xff]
      %v211 = vld [vmem:[%s169 + $0x110] sm:$0xff]
      %v212 = vld [vmem:[%s169 + $0x118] sm:$0xff]
      %v213 = vld [vmem:[%s169 + $0x120] sm:$0xff]
      %v214 = vld [vmem:[%s169 + $0x128] sm:$0xff]
      %v215 = vld [vmem:[%s169 + $0x130] sm:$0xff]
      %v216 = vld [vmem:[%s169 + $0x138] sm:$0xff]
      %v217 = vld [vmem:[%s169 + $0x140] sm:$0xff]
      %v218 = vld [vmem:[%s169 + $0x148] sm:$0xff]
      %v219 = vld [vmem:[%s169 + $0x150] sm:$0xff]
      %v220 = vld [vmem:[%s169 + $0x158] sm:$0xff]
      %v221 = vld [vmem:[%s169 + $0x160] sm:$0xff]
      %v222 = vld [vmem:[%s169 + $0x168] sm:$0xff]
      %v223 = vld [vmem:[%s169 + $0x170] sm:$0xff]
      %v224 = vld [vmem:[%s169 + $0x178] sm:$0xff]
      %v225 = vld [vmem:[%s169 + $0x180] sm:$0xff]
      %v226 = vld [vmem:[%s169 + $0x188] sm:$0xff]
      %v227 = vld [vmem:[%s169 + $0x190] sm:$0xff]
      %v228 = vld [vmem:[%s169 + $0x198] sm:$0xff]
      %v229 = vld [vmem:[%s169 + $0x1a0] sm:$0xff]
      %v230 = vld [vmem:[%s169 + $0x1a8] sm:$0xff]
      %v231 = vld [vmem:[%s169 + $0x1b0] sm:$0xff]
      %v232 = vld [vmem:[%s169 + $0x1b8] sm:$0xff]
      %v233 = vld [vmem:[%s169 + $0x1c0] sm:$0xff]
      %v234 = vld [vmem:[%s169 + $0x1c8] sm:$0xff]
      %v235 = vld [vmem:[%s169 + $0x1d0] sm:$0xff]
      %v236 = vld [vmem:[%s169 + $0x1d8] sm:$0xff]
      %v237 = vld [vmem:[%s169 + $0x1e0] sm:$0xff]
      %v238 = vld [vmem:[%s169 + $0x1e8] sm:$0xff]
      %v239 = vld [vmem:[%s169 + $0x1f0] sm:$0xff]
      %v240 = vld [vmem:[%s169 + $0x1f8] sm:$0xff]
      %v241 = vld [vmem:[%s1] sm:$0xf]
      %v242 = vld [vmem:[%s1 + $0x4] sm:$0xf]
      %v243 = vld [vmem:[%s1 + $0x8] sm:$0xf]
      %v244 = vld [vmem:[%s1 + $0xc] sm:$0xf]
      %v245 = vld [vmem:[%s1 + $0x10] sm:$0xf]
      %v246 = vld [vmem:[%s1 + $0x14] sm:$0xf]
      %v247 = vld [vmem:[%s1 + $0x18] sm:$0xf]
      %v248 = vld [vmem:[%s1 + $0x1c] sm:$0xf]
      %v249 = vld [vmem:[%s1 + $0x20] sm:$0xf]
      %v250 = vld [vmem:[%s1 + $0x24] sm:$0xf]
      %v251 = vld [vmem:[%s1 + $0x28] sm:$0xf]
      %v252 = vld [vmem:[%s1 + $0x2c] sm:$0xf]
      %v253 = vld [vmem:[%s1 + $0x30] sm:$0xf]
      %v254 = vld [vmem:[%s1 + $0x34] sm:$0xf]
      %v255 = vld [vmem:[%s1 + $0x38] sm:$0xf]
      %v256 = vld [vmem:[%s1 + $0x3c] sm:$0xf]
      %v257 = vld [vmem:[%s1 + $0x40] sm:$0xf]
      %v258 = vld [vmem:[%s1 + $0x44] sm:$0xf]
      %v259 = vld [vmem:[%s1 + $0x48] sm:$0xf]
      %v260 = vld [vmem:[%s1 + $0x4c] sm:$0xf]
      %v261 = vld [vmem:[%s1 + $0x50] sm:$0xf]
      %v262 = vld [vmem:[%s1 + $0x54] sm:$0xf]
      %v263 = vld [vmem:[%s1 + $0x58] sm:$0xf]
      %v264 = vld [vmem:[%s1 + $0x5c] sm:$0xf]
      %v265 = vld [vmem:[%s1 + $0x60] sm:$0xf]
      %v266 = vld [vmem:[%s1 + $0x64] sm:$0xf]
      %v267 = vld [vmem:[%s1 + $0x68] sm:$0xf]
      %v268 = vld [vmem:[%s1 + $0x6c] sm:$0xf]
      %v269 = vld [vmem:[%s1 + $0x70] sm:$0xf]
      %v270 = vld [vmem:[%s1 + $0x74] sm:$0xf]
      %v271 = vld [vmem:[%s1 + $0x78] sm:$0xf]
      %v272 = vld [vmem:[%s1 + $0x7c] sm:$0xf]
      %v273 = vld [vmem:[%s1 + $0x80] sm:$0xf]
      %v274 = vld [vmem:[%s1 + $0x84] sm:$0xf]
      %v275 = vld [vmem:[%s1 + $0x88] sm:$0xf]
      %v276 = vld [vmem:[%s1 + $0x8c] sm:$0xf]
      %v277 = vld [vmem:[%s1 + $0x90] sm:$0xf]
      %v278 = vld [vmem:[%s1 + $0x94] sm:$0xf]
      %v279 = vld [vmem:[%s1 + $0x98] sm:$0xf]
      %v280 = vld [vmem:[%s1 + $0x9c] sm:$0xf]
      %v281 = vld [vmem:[%s1 + $0xa0] sm:$0xf]
      %v282 = vld [vmem:[%s1 + $0xa4] sm:$0xf]
      %v283 = vld [vmem:[%s1 + $0xa8] sm:$0xf]
      %v284 = vld [vmem:[%s1 + $0xac] sm:$0xf]
      %v285 = vld [vmem:[%s1 + $0xb0] sm:$0xf]
      %v286 = vld [vmem:[%s1 + $0xb4] sm:$0xf]
      %v287 = vld [vmem:[%s1 + $0xb8] sm:$0xf]
      %v288 = vld [vmem:[%s1 + $0xbc] sm:$0xf]
      %v289 = vld [vmem:[%s1 + $0xc0] sm:$0xf]
      %v290 = vld [vmem:[%s1 + $0xc4] sm:$0xf]
      %v291 = vld [vmem:[%s1 + $0xc8] sm:$0xf]
      %v292 = vld [vmem:[%s1 + $0xcc] sm:$0xf]
      %v293 = vld [vmem:[%s1 + $0xd0] sm:$0xf]
      %v294 = vld [vmem:[%s1 + $0xd4] sm:$0xf]
      %v295 = vld [vmem:[%s1 + $0xd8] sm:$0xf]
      %v296 = vld [vmem:[%s1 + $0xdc] sm:$0xf]
      %v297 = vld [vmem:[%s1 + $0xe0] sm:$0xf]
      %v298 = vld [vmem:[%s1 + $0xe4] sm:$0xf]
      %v299 = vld [vmem:[%s1 + $0xe8] sm:$0xf]
      %v300 = vld [vmem:[%s1 + $0xec] sm:$0xf]
      %v301 = vld [vmem:[%s1 + $0xf0] sm:$0xf]
      %v302 = vld [vmem:[%s1 + $0xf4] sm:$0xf]
      %v303 = vld [vmem:[%s1 + $0xf8] sm:$0xf]
      %v304 = vld [vmem:[%s1 + $0xfc] sm:$0xf]
      %v305 = vld [vmem:[%s2] sm:$0x1]
      %v307 = vperm.slane %v305, 0
      %v373 = vunpack.c.l.b16 %v177
      %v374 = vunpack.c.h.b16 %v177
      %v375 = vunpack.c.l.b16 %v178
      %v376 = vunpack.c.h.b16 %v178
      %v377 = vunpack.c.l.b16 %v179
      %v378 = vunpack.c.h.b16 %v179
      %v379 = vunpack.c.l.b16 %v180
      %v380 = vunpack.c.h.b16 %v180
      %v381 = vunpack.c.l.b16 %v181
      %v382 = vunpack.c.h.b16 %v181
      %v383 = vunpack.c.l.b16 %v182
      %v384 = vunpack.c.h.b16 %v182
      %v385 = vunpack.c.l.b16 %v183
      %v386 = vunpack.c.h.b16 %v183
      %v387 = vunpack.c.l.b16 %v184
      %v388 = vunpack.c.h.b16 %v184
      %v389 = vunpack.c.l.b16 %v185
      %v390 = vunpack.c.h.b16 %v185
      %v391 = vunpack.c.l.b16 %v186
      %v392 = vunpack.c.h.b16 %v186
      %v393 = vunpack.c.l.b16 %v187
      %v394 = vunpack.c.h.b16 %v187
      %v395 = vunpack.c.l.b16 %v188
      %v396 = vunpack.c.h.b16 %v188
      %v397 = vunpack.c.l.b16 %v189
      %v398 = vunpack.c.h.b16 %v189
      %v399 = vunpack.c.l.b16 %v190
      %v400 = vunpack.c.h.b16 %v190
      %v401 = vunpack.c.l.b16 %v191
      %v402 = vunpack.c.h.b16 %v191
      %v403 = vunpack.c.l.b16 %v192
      %v404 = vunpack.c.h.b16 %v192
      %v405 = vunpack.c.l.b16 %v193
      %v406 = vunpack.c.h.b16 %v193
      %v407 = vunpack.c.l.b16 %v194
      %v408 = vunpack.c.h.b16 %v194
      %v409 = vunpack.c.l.b16 %v195
      %v410 = vunpack.c.h.b16 %v195
      %v411 = vunpack.c.l.b16 %v196
      %v412 = vunpack.c.h.b16 %v196
      %v413 = vunpack.c.l.b16 %v197
      %v414 = vunpack.c.h.b16 %v197
      %v415 = vunpack.c.l.b16 %v198
      %v416 = vunpack.c.h.b16 %v198
      %v417 = vunpack.c.l.b16 %v199
      %v418 = vunpack.c.h.b16 %v199
      %v419 = vunpack.c.l.b16 %v200
      %v420 = vunpack.c.h.b16 %v200
      %v421 = vunpack.c.l.b16 %v201
      %v422 = vunpack.c.h.b16 %v201
      %v423 = vunpack.c.l.b16 %v202
      %v424 = vunpack.c.h.b16 %v202
      %v425 = vunpack.c.l.b16 %v203
      %v426 = vunpack.c.h.b16 %v203
      %v427 = vunpack.c.l.b16 %v204
      %v428 = vunpack.c.h.b16 %v204
      %v429 = vunpack.c.l.b16 %v205
      %v430 = vunpack.c.h.b16 %v205
      %v431 = vunpack.c.l.b16 %v206
      %v432 = vunpack.c.h.b16 %v206
      %v433 = vunpack.c.l.b16 %v207
      %v434 = vunpack.c.h.b16 %v207
      %v435 = vunpack.c.l.b16 %v208
      %v436 = vunpack.c.h.b16 %v208
      %v437 = vunpack.c.l.b16 %v209
      %v438 = vunpack.c.h.b16 %v209
      %v439 = vunpack.c.l.b16 %v210
      %v440 = vunpack.c.h.b16 %v210
      %v441 = vunpack.c.l.b16 %v211
      %v442 = vunpack.c.h.b16 %v211
      %v443 = vunpack.c.l.b16 %v212
      %v444 = vunpack.c.h.b16 %v212
      %v445 = vunpack.c.l.b16 %v213
      %v446 = vunpack.c.h.b16 %v213
      %v447 = vunpack.c.l.b16 %v214
      %v448 = vunpack.c.h.b16 %v214
      %v449 = vunpack.c.l.b16 %v215
      %v450 = vunpack.c.h.b16 %v215
      %v451 = vunpack.c.l.b16 %v216
      %v452 = vunpack.c.h.b16 %v216
      %v453 = vunpack.c.l.b16 %v217
      %v454 = vunpack.c.h.b16 %v217
      %v455 = vunpack.c.l.b16 %v218
      %v456 = vunpack.c.h.b16 %v218
      %v457 = vunpack.c.l.b16 %v219
      %v458 = vunpack.c.h.b16 %v219
      %v459 = vunpack.c.l.b16 %v220
      %v460 = vunpack.c.h.b16 %v220
      %v461 = vunpack.c.l.b16 %v221
      %v462 = vunpack.c.h.b16 %v221
      %v463 = vunpack.c.l.b16 %v222
      %v464 = vunpack.c.h.b16 %v222
      %v465 = vunpack.c.l.b16 %v223
      %v466 = vunpack.c.h.b16 %v223
      %v467 = vunpack.c.l.b16 %v224
      %v468 = vunpack.c.h.b16 %v224
      %v469 = vunpack.c.l.b16 %v225
      %v470 = vunpack.c.h.b16 %v225
      %v471 = vunpack.c.l.b16 %v226
      %v472 = vunpack.c.h.b16 %v226
      %v473 = vunpack.c.l.b16 %v227
      %v474 = vunpack.c.h.b16 %v227
      %v475 = vunpack.c.l.b16 %v228
      %v476 = vunpack.c.h.b16 %v228
      %v477 = vunpack.c.l.b16 %v229
      %v478 = vunpack.c.h.b16 %v229
      %v479 = vunpack.c.l.b16 %v230
      %v480 = vunpack.c.h.b16 %v230
      %v481 = vunpack.c.l.b16 %v231
      %v482 = vunpack.c.h.b16 %v231
      %v483 = vunpack.c.l.b16 %v232
      %v484 = vunpack.c.h.b16 %v232
      %v485 = vunpack.c.l.b16 %v233
      %v486 = vunpack.c.h.b16 %v233
      %v487 = vunpack.c.l.b16 %v234
      %v488 = vunpack.c.h.b16 %v234
      %v489 = vunpack.c.l.b16 %v235
      %v490 = vunpack.c.h.b16 %v235
      %v491 = vunpack.c.l.b16 %v236
      %v492 = vunpack.c.h.b16 %v236
      %v493 = vunpack.c.l.b16 %v237
      %v494 = vunpack.c.h.b16 %v237
      %v495 = vunpack.c.l.b16 %v238
      %v496 = vunpack.c.h.b16 %v238
      %v497 = vunpack.c.l.b16 %v239
      %v498 = vunpack.c.h.b16 %v239
      %v499 = vunpack.c.l.b16 %v240
      %v500 = vunpack.c.h.b16 %v240
      %v501 = vpack.c.b16 %v377, %v373
      %v502 = vpack.c.b16 %v378, %v374
      %v503 = vpack.c.b16 %v379, %v375
      %v504 = vpack.c.b16 %v380, %v376
      %v505 = vpack.c.b16 %v385, %v381
      %v506 = vpack.c.b16 %v386, %v382
      %v507 = vpack.c.b16 %v387, %v383
      %v508 = vpack.c.b16 %v388, %v384
      %v509 = vpack.c.b16 %v393, %v389
      %v510 = vpack.c.b16 %v394, %v390
      %v511 = vpack.c.b16 %v395, %v391
      %v512 = vpack.c.b16 %v396, %v392
      %v513 = vpack.c.b16 %v401, %v397
      %v514 = vpack.c.b16 %v402, %v398
      %v515 = vpack.c.b16 %v403, %v399
      %v516 = vpack.c.b16 %v404, %v400
      %v517 = vpack.c.b16 %v409, %v405
      %v518 = vpack.c.b16 %v410, %v406
      %v519 = vpack.c.b16 %v411, %v407
      %v520 = vpack.c.b16 %v412, %v408
      %v521 = vpack.c.b16 %v417, %v413
      %v522 = vpack.c.b16 %v418, %v414
      %v523 = vpack.c.b16 %v419, %v415
      %v524 = vpack.c.b16 %v420, %v416
      %v525 = vpack.c.b16 %v425, %v421
      %v526 = vpack.c.b16 %v426, %v422
      %v527 = vpack.c.b16 %v427, %v423
      %v528 = vpack.c.b16 %v428, %v424
      %v529 = vpack.c.b16 %v433, %v429
      %v530 = vpack.c.b16 %v434, %v430
      %v531 = vpack.c.b16 %v435, %v431
      %v532 = vpack.c.b16 %v436, %v432
      %v533 = vpack.c.b16 %v441, %v437
      %v534 = vpack.c.b16 %v442, %v438
      %v535 = vpack.c.b16 %v443, %v439
      %v536 = vpack.c.b16 %v444, %v440
      %v537 = vpack.c.b16 %v449, %v445
      %v538 = vpack.c.b16 %v450, %v446
      %v539 = vpack.c.b16 %v451, %v447
      %v540 = vpack.c.b16 %v452, %v448
      %v541 = vpack.c.b16 %v457, %v453
      %v542 = vpack.c.b16 %v458, %v454
      %v543 = vpack.c.b16 %v459, %v455
      %v544 = vpack.c.b16 %v460, %v456
      %v545 = vpack.c.b16 %v465, %v461
      %v546 = vpack.c.b16 %v466, %v462
      %v547 = vpack.c.b16 %v467, %v463
      %v548 = vpack.c.b16 %v468, %v464
      %v549 = vpack.c.b16 %v473, %v469
      %v550 = vpack.c.b16 %v474, %v470
      %v551 = vpack.c.b16 %v475, %v471
      %v552 = vpack.c.b16 %v476, %v472
      %v553 = vpack.c.b16 %v481, %v477
      %v554 = vpack.c.b16 %v482, %v478
      %v555 = vpack.c.b16 %v483, %v479
      %v556 = vpack.c.b16 %v484, %v480
      %v557 = vpack.c.b16 %v489, %v485
      %v558 = vpack.c.b16 %v490, %v486
      %v559 = vpack.c.b16 %v491, %v487
      %v560 = vpack.c.b16 %v492, %v488
      %v561 = vpack.c.b16 %v497, %v493
      %v562 = vpack.c.b16 %v498, %v494
      %v563 = vpack.c.b16 %v499, %v495
      %v564 = vpack.c.b16 %v500, %v496
      %v693 = vunpack.c.l.b16 %v241
      %v694 = vunpack.c.l.b16 %v242
      %v695 = vunpack.c.l.b16 %v243
      %v696 = vunpack.c.l.b16 %v244
      %v697 = vunpack.c.l.b16 %v245
      %v698 = vunpack.c.l.b16 %v246
      %v699 = vunpack.c.l.b16 %v247
      %v700 = vunpack.c.l.b16 %v248
      %v701 = vunpack.c.l.b16 %v249
      %v702 = vunpack.c.l.b16 %v250
      %v703 = vunpack.c.l.b16 %v251
      %v704 = vunpack.c.l.b16 %v252
      %v705 = vunpack.c.l.b16 %v253
      %v706 = vunpack.c.l.b16 %v254
      %v707 = vunpack.c.l.b16 %v255
      %v708 = vunpack.c.l.b16 %v256
      %v709 = vunpack.c.l.b16 %v257
      %v710 = vunpack.c.l.b16 %v258
      %v711 = vunpack.c.l.b16 %v259
      %v712 = vunpack.c.l.b16 %v260
      %v713 = vunpack.c.l.b16 %v261
      %v714 = vunpack.c.l.b16 %v262
      %v715 = vunpack.c.l.b16 %v263
      %v716 = vunpack.c.l.b16 %v264
      %v717 = vunpack.c.l.b16 %v265
      %v718 = vunpack.c.l.b16 %v266
      %v719 = vunpack.c.l.b16 %v267
      %v720 = vunpack.c.l.b16 %v268
      %v721 = vunpack.c.l.b16 %v269
      %v722 = vunpack.c.l.b16 %v270
      %v723 = vunpack.c.l.b16 %v271
      %v724 = vunpack.c.l.b16 %v272
      %v725 = vunpack.c.l.b16 %v273
      %v726 = vunpack.c.l.b16 %v274
      %v727 = vunpack.c.l.b16 %v275
      %v728 = vunpack.c.l.b16 %v276
      %v729 = vunpack.c.l.b16 %v277
      %v730 = vunpack.c.l.b16 %v278
      %v731 = vunpack.c.l.b16 %v279
      %v732 = vunpack.c.l.b16 %v280
      %v733 = vunpack.c.l.b16 %v281
      %v734 = vunpack.c.l.b16 %v282
      %v735 = vunpack.c.l.b16 %v283
      %v736 = vunpack.c.l.b16 %v284
      %v737 = vunpack.c.l.b16 %v285
      %v738 = vunpack.c.l.b16 %v286
      %v739 = vunpack.c.l.b16 %v287
      %v740 = vunpack.c.l.b16 %v288
      %v741 = vunpack.c.l.b16 %v289
      %v742 = vunpack.c.l.b16 %v290
      %v743 = vunpack.c.l.b16 %v291
      %v744 = vunpack.c.l.b16 %v292
      %v745 = vunpack.c.l.b16 %v293
      %v746 = vunpack.c.l.b16 %v294
      %v747 = vunpack.c.l.b16 %v295
      %v748 = vunpack.c.l.b16 %v296
      %v749 = vunpack.c.l.b16 %v297
      %v750 = vunpack.c.l.b16 %v298
      %v751 = vunpack.c.l.b16 %v299
      %v752 = vunpack.c.l.b16 %v300
      %v753 = vunpack.c.l.b16 %v301
      %v754 = vunpack.c.l.b16 %v302
      %v755 = vunpack.c.l.b16 %v303
      %v756 = vunpack.c.l.b16 %v304
      %v757 = vpack.c.b16 %v694, %v693
      %v758 = vpack.c.b16 %v696, %v695
      %v759 = vpack.c.b16 %v698, %v697
      %v760 = vpack.c.b16 %v700, %v699
      %v761 = vpack.c.b16 %v702, %v701
      %v762 = vpack.c.b16 %v704, %v703
      %v763 = vpack.c.b16 %v706, %v705
      %v764 = vpack.c.b16 %v708, %v707
      %v765 = vpack.c.b16 %v710, %v709
      %v766 = vpack.c.b16 %v712, %v711
      %v767 = vpack.c.b16 %v714, %v713
      %v768 = vpack.c.b16 %v716, %v715
      %v769 = vpack.c.b16 %v718, %v717
      %v770 = vpack.c.b16 %v720, %v719
      %v771 = vpack.c.b16 %v722, %v721
      %v772 = vpack.c.b16 %v724, %v723
      %v773 = vpack.c.b16 %v726, %v725
      %v774 = vpack.c.b16 %v728, %v727
      %v775 = vpack.c.b16 %v730, %v729
      %v776 = vpack.c.b16 %v732, %v731
      %v777 = vpack.c.b16 %v734, %v733
      %v778 = vpack.c.b16 %v736, %v735
      %v779 = vpack.c.b16 %v738, %v737
      %v780 = vpack.c.b16 %v740, %v739
      %v781 = vpack.c.b16 %v742, %v741
      %v782 = vpack.c.b16 %v744, %v743
      %v783 = vpack.c.b16 %v746, %v745
      %v784 = vpack.c.b16 %v748, %v747
      %v785 = vpack.c.b16 %v750, %v749
      %v786 = vpack.c.b16 %v752, %v751
      %v787 = vpack.c.b16 %v754, %v753
      %v788 = vpack.c.b16 %v756, %v755
      %821 = vmatpush.bf16.msra.mxu0 %v764
      %822 = vmatpush.bf16.msra.mxu0 %v763
      %823 = vmatpush.bf16.msra.mxu0 %v762
      %824 = vmatpush.bf16.msra.mxu0 %v761
      %825 = vmatpush.bf16.msra.mxu0 %v760
      %826 = vmatpush.bf16.msra.mxu0 %v759
      %827 = vmatpush.bf16.msra.mxu0 %v758
      %828 = vmatpush.bf16.msra.mxu0 %v757
      %829 = vmatmul.bf16.gmra.mxu0 %v501
      %v830 = vpop.f32.mrf.mxu0
      %v831 = vadd.f32 %v307, %v830
      %v832 = vpop.f32.mrf.mxu0
      %v833 = vadd.f32 %v307, %v832
      %834 = vmatmul.bf16.gmra.mxu0 %v505
      %v835 = vpop.f32.mrf.mxu0
      %v836 = vadd.f32 %v307, %v835
      %v837 = vpop.f32.mrf.mxu0
      %v838 = vadd.f32 %v307, %v837
      %839 = vmatmul.bf16.gmra.mxu0 %v509
      %v840 = vpop.f32.mrf.mxu0
      %v841 = vadd.f32 %v307, %v840
      %v842 = vpop.f32.mrf.mxu0
      %v843 = vadd.f32 %v307, %v842
      %844 = vmatmul.bf16.gmra.mxu0 %v513
      %v845 = vpop.f32.mrf.mxu0
      %v846 = vadd.f32 %v307, %v845
      %v847 = vpop.f32.mrf.mxu0
      %v848 = vadd.f32 %v307, %v847
      %849 = vmatmul.bf16.gmra.mxu0 %v517
      %v850 = vpop.f32.mrf.mxu0
      %v851 = vadd.f32 %v307, %v850
      %v852 = vpop.f32.mrf.mxu0
      %v853 = vadd.f32 %v307, %v852
      %854 = vmatmul.bf16.gmra.mxu0 %v521
      %v855 = vpop.f32.mrf.mxu0
      %v856 = vadd.f32 %v307, %v855
      %v857 = vpop.f32.mrf.mxu0
      %v858 = vadd.f32 %v307, %v857
      %859 = vmatmul.bf16.gmra.mxu0 %v525
      %v860 = vpop.f32.mrf.mxu0
      %v861 = vadd.f32 %v307, %v860
      %v862 = vpop.f32.mrf.mxu0
      %v863 = vadd.f32 %v307, %v862
      %864 = vmatmul.bf16.gmra.mxu0 %v529
      %v865 = vpop.f32.mrf.mxu0
      %v866 = vadd.f32 %v307, %v865
      %v867 = vpop.f32.mrf.mxu0
      %v868 = vadd.f32 %v307, %v867
      %869 = vmatmul.bf16.gmra.mxu0 %v533
      %v870 = vpop.f32.mrf.mxu0
      %v871 = vadd.f32 %v307, %v870
      %v872 = vpop.f32.mrf.mxu0
      %v873 = vadd.f32 %v307, %v872
      %874 = vmatmul.bf16.gmra.mxu0 %v537
      %v875 = vpop.f32.mrf.mxu0
      %v876 = vadd.f32 %v307, %v875
      %v877 = vpop.f32.mrf.mxu0
      %v878 = vadd.f32 %v307, %v877
      %879 = vmatmul.bf16.gmra.mxu0 %v541
      %v880 = vpop.f32.mrf.mxu0
      %v881 = vadd.f32 %v307, %v880
      %v882 = vpop.f32.mrf.mxu0
      %v883 = vadd.f32 %v307, %v882
      %884 = vmatmul.bf16.gmra.mxu0 %v545
      %v885 = vpop.f32.mrf.mxu0
      %v886 = vadd.f32 %v307, %v885
      %v887 = vpop.f32.mrf.mxu0
      %v888 = vadd.f32 %v307, %v887
      %889 = vmatmul.bf16.gmra.mxu0 %v549
      %v890 = vpop.f32.mrf.mxu0
      %v891 = vadd.f32 %v307, %v890
      %v892 = vpop.f32.mrf.mxu0
      %v893 = vadd.f32 %v307, %v892
      %894 = vmatmul.bf16.gmra.mxu0 %v553
      %v895 = vpop.f32.mrf.mxu0
      %v896 = vadd.f32 %v307, %v895
      %v897 = vpop.f32.mrf.mxu0
      %v898 = vadd.f32 %v307, %v897
      %899 = vmatmul.bf16.gmra.mxu0 %v557
      %v900 = vpop.f32.mrf.mxu0
      %v901 = vadd.f32 %v307, %v900
      %v902 = vpop.f32.mrf.mxu0
      %v903 = vadd.f32 %v307, %v902
      %904 = vmatmul.bf16.gmra.mxu0 %v561
      %v905 = vpop.f32.mrf.mxu0
      %v906 = vadd.f32 %v307, %v905
      %v907 = vpop.f32.mrf.mxu0
      %v908 = vadd.f32 %v307, %v907
      %909 = vdwg.mxu0
      %910 = vmatpush.bf16.msra.mxu0 %v772
      %911 = vmatpush.bf16.msra.mxu0 %v771
      %912 = vmatpush.bf16.msra.mxu0 %v770
      %913 = vmatpush.bf16.msra.mxu0 %v769
      %914 = vmatpush.bf16.msra.mxu0 %v768
      %915 = vmatpush.bf16.msra.mxu0 %v767
      %916 = vmatpush.bf16.msra.mxu0 %v766
      %917 = vmatpush.bf16.msra.mxu0 %v765
      %918 = vmatmul.bf16.gmra.mxu0 %v502
      %v919 = vpop.f32.mrf.mxu0
      %v920 = vadd.f32 %v831, %v919
      %v921 = vpop.f32.mrf.mxu0
      %v922 = vadd.f32 %v833, %v921
      %923 = vmatmul.bf16.gmra.mxu0 %v506
      %v924 = vpop.f32.mrf.mxu0
      %v925 = vadd.f32 %v836, %v924
      %v926 = vpop.f32.mrf.mxu0
      %v927 = vadd.f32 %v838, %v926
      %928 = vmatmul.bf16.gmra.mxu0 %v510
      %v929 = vpop.f32.mrf.mxu0
      %v930 = vadd.f32 %v841, %v929
      %v931 = vpop.f32.mrf.mxu0
      %v932 = vadd.f32 %v843, %v931
      %933 = vmatmul.bf16.gmra.mxu0 %v514
      %v934 = vpop.f32.mrf.mxu0
      %v935 = vadd.f32 %v846, %v934
      %v936 = vpop.f32.mrf.mxu0
      %v937 = vadd.f32 %v848, %v936
      %938 = vmatmul.bf16.gmra.mxu0 %v518
      %v939 = vpop.f32.mrf.mxu0
      %v940 = vadd.f32 %v851, %v939
      %v941 = vpop.f32.mrf.mxu0
      %v942 = vadd.f32 %v853, %v941
      %943 = vmatmul.bf16.gmra.mxu0 %v522
      %v944 = vpop.f32.mrf.mxu0
      %v945 = vadd.f32 %v856, %v944
      %v946 = vpop.f32.mrf.mxu0
      %v947 = vadd.f32 %v858, %v946
      %948 = vmatmul.bf16.gmra.mxu0 %v526
      %v949 = vpop.f32.mrf.mxu0
      %v950 = vadd.f32 %v861, %v949
      %v951 = vpop.f32.mrf.mxu0
      %v952 = vadd.f32 %v863, %v951
      %953 = vmatmul.bf16.gmra.mxu0 %v530
      %v954 = vpop.f32.mrf.mxu0
      %v955 = vadd.f32 %v866, %v954
      %v956 = vpop.f32.mrf.mxu0
      %v957 = vadd.f32 %v868, %v956
      %958 = vmatmul.bf16.gmra.mxu0 %v534
      %v959 = vpop.f32.mrf.mxu0
      %v960 = vadd.f32 %v871, %v959
      %v961 = vpop.f32.mrf.mxu0
      %v962 = vadd.f32 %v873, %v961
      %963 = vmatmul.bf16.gmra.mxu0 %v538
      %v964 = vpop.f32.mrf.mxu0
      %v965 = vadd.f32 %v876, %v964
      %v966 = vpop.f32.mrf.mxu0
      %v967 = vadd.f32 %v878, %v966
      %968 = vmatmul.bf16.gmra.mxu0 %v542
      %v969 = vpop.f32.mrf.mxu0
      %v970 = vadd.f32 %v881, %v969
      %v971 = vpop.f32.mrf.mxu0
      %v972 = vadd.f32 %v883, %v971
      %973 = vmatmul.bf16.gmra.mxu0 %v546
      %v974 = vpop.f32.mrf.mxu0
      %v975 = vadd.f32 %v886, %v974
      %v976 = vpop.f32.mrf.mxu0
      %v977 = vadd.f32 %v888, %v976
      %978 = vmatmul.bf16.gmra.mxu0 %v550
      %v979 = vpop.f32.mrf.mxu0
      %v980 = vadd.f32 %v891, %v979
      %v981 = vpop.f32.mrf.mxu0
      %v982 = vadd.f32 %v893, %v981
      %983 = vmatmul.bf16.gmra.mxu0 %v554
      %v984 = vpop.f32.mrf.mxu0
      %v985 = vadd.f32 %v896, %v984
      %v986 = vpop.f32.mrf.mxu0
      %v987 = vadd.f32 %v898, %v986
      %988 = vmatmul.bf16.gmra.mxu0 %v558
      %v989 = vpop.f32.mrf.mxu0
      %v990 = vadd.f32 %v901, %v989
      %v991 = vpop.f32.mrf.mxu0
      %v992 = vadd.f32 %v903, %v991
      %993 = vmatmul.bf16.gmra.mxu0 %v562
      %v994 = vpop.f32.mrf.mxu0
      %v995 = vadd.f32 %v906, %v994
      %v996 = vpop.f32.mrf.mxu0
      %v997 = vadd.f32 %v908, %v996
      %998 = vdwg.mxu0
      %999 = vmatpush.bf16.msra.mxu0 %v780
      %1000 = vmatpush.bf16.msra.mxu0 %v779
      %1001 = vmatpush.bf16.msra.mxu0 %v778
      %1002 = vmatpush.bf16.msra.mxu0 %v777
      %1003 = vmatpush.bf16.msra.mxu0 %v776
      %1004 = vmatpush.bf16.msra.mxu0 %v775
      %1005 = vmatpush.bf16.msra.mxu0 %v774
      %1006 = vmatpush.bf16.msra.mxu0 %v773
      %1007 = vmatmul.bf16.gmra.mxu0 %v503
      %v1008 = vpop.f32.mrf.mxu0
      %v1009 = vadd.f32 %v920, %v1008
      %v1010 = vpop.f32.mrf.mxu0
      %v1011 = vadd.f32 %v922, %v1010
      %1012 = vmatmul.bf16.gmra.mxu0 %v507
      %v1013 = vpop.f32.mrf.mxu0
      %v1014 = vadd.f32 %v925, %v1013
      %v1015 = vpop.f32.mrf.mxu0
      %v1016 = vadd.f32 %v927, %v1015
      %1017 = vmatmul.bf16.gmra.mxu0 %v511
      %v1018 = vpop.f32.mrf.mxu0
      %v1019 = vadd.f32 %v930, %v1018
      %v1020 = vpop.f32.mrf.mxu0
      %v1021 = vadd.f32 %v932, %v1020
      %1022 = vmatmul.bf16.gmra.mxu0 %v515
      %v1023 = vpop.f32.mrf.mxu0
      %v1024 = vadd.f32 %v935, %v1023
      %v1025 = vpop.f32.mrf.mxu0
      %v1026 = vadd.f32 %v937, %v1025
      %1027 = vmatmul.bf16.gmra.mxu0 %v519
      %v1028 = vpop.f32.mrf.mxu0
      %v1029 = vadd.f32 %v940, %v1028
      %v1030 = vpop.f32.mrf.mxu0
      %v1031 = vadd.f32 %v942, %v1030
      %1032 = vmatmul.bf16.gmra.mxu0 %v523
      %v1033 = vpop.f32.mrf.mxu0
      %v1034 = vadd.f32 %v945, %v1033
      %v1035 = vpop.f32.mrf.mxu0
      %v1036 = vadd.f32 %v947, %v1035
      %1037 = vmatmul.bf16.gmra.mxu0 %v527
      %v1038 = vpop.f32.mrf.mxu0
      %v1039 = vadd.f32 %v950, %v1038
      %v1040 = vpop.f32.mrf.mxu0
      %v1041 = vadd.f32 %v952, %v1040
      %1042 = vmatmul.bf16.gmra.mxu0 %v531
      %v1043 = vpop.f32.mrf.mxu0
      %v1044 = vadd.f32 %v955, %v1043
      %v1045 = vpop.f32.mrf.mxu0
      %v1046 = vadd.f32 %v957, %v1045
      %1047 = vmatmul.bf16.gmra.mxu0 %v535
      %v1048 = vpop.f32.mrf.mxu0
      %v1049 = vadd.f32 %v960, %v1048
      %v1050 = vpop.f32.mrf.mxu0
      %v1051 = vadd.f32 %v962, %v1050
      %1052 = vmatmul.bf16.gmra.mxu0 %v539
      %v1053 = vpop.f32.mrf.mxu0
      %v1054 = vadd.f32 %v965, %v1053
      %v1055 = vpop.f32.mrf.mxu0
      %v1056 = vadd.f32 %v967, %v1055
      %1057 = vmatmul.bf16.gmra.mxu0 %v543
      %v1058 = vpop.f32.mrf.mxu0
      %v1059 = vadd.f32 %v970, %v1058
      %v1060 = vpop.f32.mrf.mxu0
      %v1061 = vadd.f32 %v972, %v1060
      %1062 = vmatmul.bf16.gmra.mxu0 %v547
      %v1063 = vpop.f32.mrf.mxu0
      %v1064 = vadd.f32 %v975, %v1063
      %v1065 = vpop.f32.mrf.mxu0
      %v1066 = vadd.f32 %v977, %v1065
      %1067 = vmatmul.bf16.gmra.mxu0 %v551
      %v1068 = vpop.f32.mrf.mxu0
      %v1069 = vadd.f32 %v980, %v1068
      %v1070 = vpop.f32.mrf.mxu0
      %v1071 = vadd.f32 %v982, %v1070
      %1072 = vmatmul.bf16.gmra.mxu0 %v555
      %v1073 = vpop.f32.mrf.mxu0
      %v1074 = vadd.f32 %v985, %v1073
      %v1075 = vpop.f32.mrf.mxu0
      %v1076 = vadd.f32 %v987, %v1075
      %1077 = vmatmul.bf16.gmra.mxu0 %v559
      %v1078 = vpop.f32.mrf.mxu0
      %v1079 = vadd.f32 %v990, %v1078
      %v1080 = vpop.f32.mrf.mxu0
      %v1081 = vadd.f32 %v992, %v1080
      %1082 = vmatmul.bf16.gmra.mxu0 %v563
      %v1083 = vpop.f32.mrf.mxu0
      %v1084 = vadd.f32 %v995, %v1083
      %v1085 = vpop.f32.mrf.mxu0
      %v1086 = vadd.f32 %v997, %v1085
      %1087 = vdwg.mxu0
      %1088 = vmatpush.bf16.msra.mxu0 %v788
      %1089 = vmatpush.bf16.msra.mxu0 %v787
      %1090 = vmatpush.bf16.msra.mxu0 %v786
      %1091 = vmatpush.bf16.msra.mxu0 %v785
      %1092 = vmatpush.bf16.msra.mxu0 %v784
      %1093 = vmatpush.bf16.msra.mxu0 %v783
      %1094 = vmatpush.bf16.msra.mxu0 %v782
      %1095 = vmatpush.bf16.msra.mxu0 %v781
      %1096 = vmatmul.bf16.gmra.mxu0 %v504
      %v1097 = vpop.f32.mrf.mxu0
      %v1098 = vadd.f32 %v1009, %v1097
      %v1099 = vpop.f32.mrf.mxu0
      %v1100 = vadd.f32 %v1011, %v1099
      %1101 = vmatmul.bf16.gmra.mxu0 %v508
      %v1102 = vpop.f32.mrf.mxu0
      %v1103 = vadd.f32 %v1014, %v1102
      %v1104 = vpop.f32.mrf.mxu0
      %v1105 = vadd.f32 %v1016, %v1104
      %1106 = vmatmul.bf16.gmra.mxu0 %v512
      %v1107 = vpop.f32.mrf.mxu0
      %v1108 = vadd.f32 %v1019, %v1107
      %v1109 = vpop.f32.mrf.mxu0
      %v1110 = vadd.f32 %v1021, %v1109
      %1111 = vmatmul.bf16.gmra.mxu0 %v516
      %v1112 = vpop.f32.mrf.mxu0
      %v1113 = vadd.f32 %v1024, %v1112
      %v1114 = vpop.f32.mrf.mxu0
      %v1115 = vadd.f32 %v1026, %v1114
      %1116 = vmatmul.bf16.gmra.mxu0 %v520
      %v1117 = vpop.f32.mrf.mxu0
      %v1118 = vadd.f32 %v1029, %v1117
      %v1119 = vpop.f32.mrf.mxu0
      %v1120 = vadd.f32 %v1031, %v1119
      %1121 = vmatmul.bf16.gmra.mxu0 %v524
      %v1122 = vpop.f32.mrf.mxu0
      %v1123 = vadd.f32 %v1034, %v1122
      %v1124 = vpop.f32.mrf.mxu0
      %v1125 = vadd.f32 %v1036, %v1124
      %1126 = vmatmul.bf16.gmra.mxu0 %v528
      %v1127 = vpop.f32.mrf.mxu0
      %v1128 = vadd.f32 %v1039, %v1127
      %v1129 = vpop.f32.mrf.mxu0
      %v1130 = vadd.f32 %v1041, %v1129
      %1131 = vmatmul.bf16.gmra.mxu0 %v532
      %v1132 = vpop.f32.mrf.mxu0
      %v1133 = vadd.f32 %v1044, %v1132
      %v1134 = vpop.f32.mrf.mxu0
      %v1135 = vadd.f32 %v1046, %v1134
      %1136 = vmatmul.bf16.gmra.mxu0 %v536
      %v1137 = vpop.f32.mrf.mxu0
      %v1138 = vadd.f32 %v1049, %v1137
      %v1139 = vpop.f32.mrf.mxu0
      %v1140 = vadd.f32 %v1051, %v1139
      %1141 = vmatmul.bf16.gmra.mxu0 %v540
      %v1142 = vpop.f32.mrf.mxu0
      %v1143 = vadd.f32 %v1054, %v1142
      %v1144 = vpop.f32.mrf.mxu0
      %v1145 = vadd.f32 %v1056, %v1144
      %1146 = vmatmul.bf16.gmra.mxu0 %v544
      %v1147 = vpop.f32.mrf.mxu0
      %v1148 = vadd.f32 %v1059, %v1147
      %v1149 = vpop.f32.mrf.mxu0
      %v1150 = vadd.f32 %v1061, %v1149
      %1151 = vmatmul.bf16.gmra.mxu0 %v548
      %v1152 = vpop.f32.mrf.mxu0
      %v1153 = vadd.f32 %v1064, %v1152
      %v1154 = vpop.f32.mrf.mxu0
      %v1155 = vadd.f32 %v1066, %v1154
      %1156 = vmatmul.bf16.gmra.mxu0 %v552
      %v1157 = vpop.f32.mrf.mxu0
      %v1158 = vadd.f32 %v1069, %v1157
      %v1159 = vpop.f32.mrf.mxu0
      %v1160 = vadd.f32 %v1071, %v1159
      %1161 = vmatmul.bf16.gmra.mxu0 %v556
      %v1162 = vpop.f32.mrf.mxu0
      %v1163 = vadd.f32 %v1074, %v1162
      %v1164 = vpop.f32.mrf.mxu0
      %v1165 = vadd.f32 %v1076, %v1164
      %1166 = vmatmul.bf16.gmra.mxu0 %v560
      %v1167 = vpop.f32.mrf.mxu0
      %v1168 = vadd.f32 %v1079, %v1167
      %v1169 = vpop.f32.mrf.mxu0
      %v1170 = vadd.f32 %v1081, %v1169
      %1171 = vmatmul.bf16.gmra.mxu0 %v564
      %v1172 = vpop.f32.mrf.mxu0
      %v1173 = vadd.f32 %v1084, %v1172
      %v1174 = vpop.f32.mrf.mxu0
      %v1175 = vadd.f32 %v1086, %v1174
      %1176 = vdwg.mxu0
      %vm1177 = vcmp.gt.f32.partialorder %v1098, 0.0
      %vm1178 = vcmp.gt.f32.partialorder %v1100, 0.0
      %vm1179 = vcmp.gt.f32.partialorder %v1103, 0.0
      %vm1180 = vcmp.gt.f32.partialorder %v1105, 0.0
      %vm1181 = vcmp.gt.f32.partialorder %v1108, 0.0
      %vm1182 = vcmp.gt.f32.partialorder %v1110, 0.0
      %vm1183 = vcmp.gt.f32.partialorder %v1113, 0.0
      %vm1184 = vcmp.gt.f32.partialorder %v1115, 0.0
      %vm1185 = vcmp.gt.f32.partialorder %v1118, 0.0
      %vm1186 = vcmp.gt.f32.partialorder %v1120, 0.0
      %vm1187 = vcmp.gt.f32.partialorder %v1123, 0.0
      %vm1188 = vcmp.gt.f32.partialorder %v1125, 0.0
      %vm1189 = vcmp.gt.f32.partialorder %v1128, 0.0
      %vm1190 = vcmp.gt.f32.partialorder %v1130, 0.0
      %vm1191 = vcmp.gt.f32.partialorder %v1133, 0.0
      %vm1192 = vcmp.gt.f32.partialorder %v1135, 0.0
      %vm1193 = vcmp.gt.f32.partialorder %v1138, 0.0
      %vm1194 = vcmp.gt.f32.partialorder %v1140, 0.0
      %vm1195 = vcmp.gt.f32.partialorder %v1143, 0.0
      %vm1196 = vcmp.gt.f32.partialorder %v1145, 0.0
      %vm1197 = vcmp.gt.f32.partialorder %v1148, 0.0
      %vm1198 = vcmp.gt.f32.partialorder %v1150, 0.0
      %vm1199 = vcmp.gt.f32.partialorder %v1153, 0.0
      %vm1200 = vcmp.gt.f32.partialorder %v1155, 0.0
      %vm1201 = vcmp.gt.f32.partialorder %v1158, 0.0
      %vm1202 = vcmp.gt.f32.partialorder %v1160, 0.0
      %vm1203 = vcmp.gt.f32.partialorder %v1163, 0.0
      %vm1204 = vcmp.gt.f32.partialorder %v1165, 0.0
      %vm1205 = vcmp.gt.f32.partialorder %v1168, 0.0
      %vm1206 = vcmp.gt.f32.partialorder %v1170, 0.0
      %vm1207 = vcmp.gt.f32.partialorder %v1173, 0.0
      %vm1208 = vcmp.gt.f32.partialorder %v1175, 0.0
      %v1209 = vmul.f32 %v1098, 0.2
      %v1210 = vmul.f32 %v1100, 0.2
      %v1211 = vmul.f32 %v1103, 0.2
      %v1212 = vmul.f32 %v1105, 0.2
      %v1213 = vmul.f32 %v1108, 0.2
      %v1214 = vmul.f32 %v1110, 0.2
      %v1215 = vmul.f32 %v1113, 0.2
      %v1216 = vmul.f32 %v1115, 0.2
      %v1217 = vmul.f32 %v1118, 0.2
      %v1218 = vmul.f32 %v1120, 0.2
      %v1219 = vmul.f32 %v1123, 0.2
      %v1220 = vmul.f32 %v1125, 0.2
      %v1221 = vmul.f32 %v1128, 0.2
      %v1222 = vmul.f32 %v1130, 0.2
      %v1223 = vmul.f32 %v1133, 0.2
      %v1224 = vmul.f32 %v1135, 0.2
      %v1225 = vmul.f32 %v1138, 0.2
      %v1226 = vmul.f32 %v1140, 0.2
      %v1227 = vmul.f32 %v1143, 0.2
      %v1228 = vmul.f32 %v1145, 0.2
      %v1229 = vmul.f32 %v1148, 0.2
      %v1230 = vmul.f32 %v1150, 0.2
      %v1231 = vmul.f32 %v1153, 0.2
      %v1232 = vmul.f32 %v1155, 0.2
      %v1233 = vmul.f32 %v1158, 0.2
      %v1234 = vmul.f32 %v1160, 0.2
      %v1235 = vmul.f32 %v1163, 0.2
      %v1236 = vmul.f32 %v1165, 0.2
      %v1237 = vmul.f32 %v1168, 0.2
      %v1238 = vmul.f32 %v1170, 0.2
      %v1239 = vmul.f32 %v1173, 0.2
      %v1240 = vmul.f32 %v1175, 0.2
      %v1241 = vsel %vm1177, %v1098, %v1209
      %v1242 = vsel %vm1178, %v1100, %v1210
      %v1243 = vsel %vm1179, %v1103, %v1211
      %v1244 = vsel %vm1180, %v1105, %v1212
      %v1245 = vsel %vm1181, %v1108, %v1213
      %v1246 = vsel %vm1182, %v1110, %v1214
      %v1247 = vsel %vm1183, %v1113, %v1215
      %v1248 = vsel %vm1184, %v1115, %v1216
      %v1249 = vsel %vm1185, %v1118, %v1217
      %v1250 = vsel %vm1186, %v1120, %v1218
      %v1251 = vsel %vm1187, %v1123, %v1219
      %v1252 = vsel %vm1188, %v1125, %v1220
      %v1253 = vsel %vm1189, %v1128, %v1221
      %v1254 = vsel %vm1190, %v1130, %v1222
      %v1255 = vsel %vm1191, %v1133, %v1223
      %v1256 = vsel %vm1192, %v1135, %v1224
      %v1257 = vsel %vm1193, %v1138, %v1225
      %v1258 = vsel %vm1194, %v1140, %v1226
      %v1259 = vsel %vm1195, %v1143, %v1227
      %v1260 = vsel %vm1196, %v1145, %v1228
      %v1261 = vsel %vm1197, %v1148, %v1229
      %v1262 = vsel %vm1198, %v1150, %v1230
      %v1263 = vsel %vm1199, %v1153, %v1231
      %v1264 = vsel %vm1200, %v1155, %v1232
      %v1265 = vsel %vm1201, %v1158, %v1233
      %v1266 = vsel %vm1202, %v1160, %v1234
      %v1267 = vsel %vm1203, %v1163, %v1235
      %v1268 = vsel %vm1204, %v1165, %v1236
      %v1269 = vsel %vm1205, %v1168, %v1237
      %v1270 = vsel %vm1206, %v1170, %v1238
      %v1271 = vsel %vm1207, %v1173, %v1239
      %v1272 = vsel %vm1208, %v1175, %v1240
      %v1273 = vpack.c.bf16 %v1241, %v1241
      %v1274 = vpack.c.bf16 %v1242, %v1242
      %v1275 = vpack.c.bf16 %v1243, %v1243
      %v1276 = vpack.c.bf16 %v1244, %v1244
      %v1277 = vpack.c.bf16 %v1245, %v1245
      %v1278 = vpack.c.bf16 %v1246, %v1246
      %v1279 = vpack.c.bf16 %v1247, %v1247
      %v1280 = vpack.c.bf16 %v1248, %v1248
      %v1281 = vpack.c.bf16 %v1249, %v1249
      %v1282 = vpack.c.bf16 %v1250, %v1250
      %v1283 = vpack.c.bf16 %v1251, %v1251
      %v1284 = vpack.c.bf16 %v1252, %v1252
      %v1285 = vpack.c.bf16 %v1253, %v1253
      %v1286 = vpack.c.bf16 %v1254, %v1254
      %v1287 = vpack.c.bf16 %v1255, %v1255
      %v1288 = vpack.c.bf16 %v1256, %v1256
      %v1289 = vpack.c.bf16 %v1257, %v1257
      %v1290 = vpack.c.bf16 %v1258, %v1258
      %v1291 = vpack.c.bf16 %v1259, %v1259
      %v1292 = vpack.c.bf16 %v1260, %v1260
      %v1293 = vpack.c.bf16 %v1261, %v1261
      %v1294 = vpack.c.bf16 %v1262, %v1262
      %v1295 = vpack.c.bf16 %v1263, %v1263
      %v1296 = vpack.c.bf16 %v1264, %v1264
      %v1297 = vpack.c.bf16 %v1265, %v1265
      %v1298 = vpack.c.bf16 %v1266, %v1266
      %v1299 = vpack.c.bf16 %v1267, %v1267
      %v1300 = vpack.c.bf16 %v1268, %v1268
      %v1301 = vpack.c.bf16 %v1269, %v1269
      %v1302 = vpack.c.bf16 %v1270, %v1270
      %v1303 = vpack.c.bf16 %v1271, %v1271
      %v1304 = vpack.c.bf16 %v1272, %v1272
      %vm1305 = vcmask 257024
      %1306 = vst.msk [vmem:[%s175] sm:$0xf] %vm1305, %v1273
      %1307 = vst.msk [vmem:[%s175 + $0x4] sm:$0xf] %vm1305, %v1274
      %1308 = vst.msk [vmem:[%s175 + $0x8] sm:$0xf] %vm1305, %v1275
      %1309 = vst.msk [vmem:[%s175 + $0xc] sm:$0xf] %vm1305, %v1276
      %1310 = vst.msk [vmem:[%s175 + $0x10] sm:$0xf] %vm1305, %v1277
      %1311 = vst.msk [vmem:[%s175 + $0x14] sm:$0xf] %vm1305, %v1278
      %1312 = vst.msk [vmem:[%s175 + $0x18] sm:$0xf] %vm1305, %v1279
      %1313 = vst.msk [vmem:[%s175 + $0x1c] sm:$0xf] %vm1305, %v1280
      %1314 = vst.msk [vmem:[%s175 + $0x20] sm:$0xf] %vm1305, %v1281
      %1315 = vst.msk [vmem:[%s175 + $0x24] sm:$0xf] %vm1305, %v1282
      %1316 = vst.msk [vmem:[%s175 + $0x28] sm:$0xf] %vm1305, %v1283
      %1317 = vst.msk [vmem:[%s175 + $0x2c] sm:$0xf] %vm1305, %v1284
      %1318 = vst.msk [vmem:[%s175 + $0x30] sm:$0xf] %vm1305, %v1285
      %1319 = vst.msk [vmem:[%s175 + $0x34] sm:$0xf] %vm1305, %v1286
      %1320 = vst.msk [vmem:[%s175 + $0x38] sm:$0xf] %vm1305, %v1287
      %1321 = vst.msk [vmem:[%s175 + $0x3c] sm:$0xf] %vm1305, %v1288
      %1322 = vst.msk [vmem:[%s175 + $0x40] sm:$0xf] %vm1305, %v1289
      %1323 = vst.msk [vmem:[%s175 + $0x44] sm:$0xf] %vm1305, %v1290
      %1324 = vst.msk [vmem:[%s175 + $0x48] sm:$0xf] %vm1305, %v1291
      %1325 = vst.msk [vmem:[%s175 + $0x4c] sm:$0xf] %vm1305, %v1292
      %1326 = vst.msk [vmem:[%s175 + $0x50] sm:$0xf] %vm1305, %v1293
      %1327 = vst.msk [vmem:[%s175 + $0x54] sm:$0xf] %vm1305, %v1294
      %1328 = vst.msk [vmem:[%s175 + $0x58] sm:$0xf] %vm1305, %v1295
      %1329 = vst.msk [vmem:[%s175 + $0x5c] sm:$0xf] %vm1305, %v1296
      %1330 = vst.msk [vmem:[%s175 + $0x60] sm:$0xf] %vm1305, %v1297
      %1331 = vst.msk [vmem:[%s175 + $0x64] sm:$0xf] %vm1305, %v1298
      %1332 = vst.msk [vmem:[%s175 + $0x68] sm:$0xf] %vm1305, %v1299
      %1333 = vst.msk [vmem:[%s175 + $0x6c] sm:$0xf] %vm1305, %v1300
      %1334 = vst.msk [vmem:[%s175 + $0x70] sm:$0xf] %vm1305, %v1301
      %1335 = vst.msk [vmem:[%s175 + $0x74] sm:$0xf] %vm1305, %v1302
      %1336 = vst.msk [vmem:[%s175 + $0x78] sm:$0xf] %vm1305, %v1303
      %1337 = vst.msk [vmem:[%s175 + $0x7c] sm:$0xf] %vm1305, %v1304
      %s1338 = smul.u32 32, %s14
      %p1339 = scmp.lt.s32.totalorder %s1338, 63
      %s1340 = scalar_select %p1339, %s1338, 63
      %s1341 = smul.addr %s1340, 4
      %s1342 = scalar_lea.vmem %s3, %s1341
      // Predicated region
      $region33: #{second_model_forward.6} parent=31 // pred_check
        %p1343 = pneg %p100
      $region34: #{second_model_forward.6} parent=31 // pred_check_branch
        %1345 = sbr.rel (%p1343) target = $region36
      $region35: #{second_model_forward.6} parent=31 // pred_region
        %s1346 = smul.u32 32, %s14
      $region36: #{second_model_forward.6} parent=31 // pred_fallthru
        _
    $region32: #{second_model_forward.6} parent=5 // pred_fallthru
      _
    %p1347 = scmp.le.s32.totalorder 2, %s9
    // Predicated region
    $region37: #{second_model_forward.6} parent=5 // pred_check
      %p1348 = pneg %p1347
    $region38: #{second_model_forward.6} parent=5 // pred_check_branch
      %1350 = sbr.rel (%p1348) target = $region40
    $region39: #{second_model_forward.6} parent=5 // pred_region
      %s1351 = ssub.s32 %s9, 2
      // Predicated region
      $region41: #{second_model_forward.6} parent=39 // pred_check
        %p1352 = pneg %p106
      $region42: #{second_model_forward.6} parent=39 // pred_check_branch
        %1354 = sbr.rel (%p1352) target = $region44
      $region43: #{second_model_forward.6} parent=39 // pred_region
        %s1355 = smul.u32 32, %s15
        %p1356 = scmp.lt.s32.totalorder %s1355, 63
        %s1357 = scalar_select %p1356, %s1355, 63
        %s1358 = smul.addr %s1357, 4
        %s1359 = scalar_lea.vmem %s3, %s1358
      $region44: #{second_model_forward.6} parent=39 // pred_fallthru
        _
    $region40: #{second_model_forward.6} parent=5 // pred_fallthru
      _
  $region6: #{second_model_forward.6} parent=0 // loop_footer
    %s13 = sadd.s32 1, %s9
  $region7: #{second_model_forward.6} parent=0 // loop_footer_branch
    %8 = sbr.rel target = $region3
  $region8: #{second_model_forward.6} parent=0 // loop_exit
    _

// kernel: second_model_forward.7
$region0: #{second_model_forward.7}
  #allocation0 [shape = 'u32[]', space=smem, size = 0x4, offset = 0x4, fixed_abs, tag = 'smem constant byte address 0x4 - core index']
  #allocation1 [shape = 'u32[72,128]{1,0:T(1,128)}', space=vmem, size = 0x9000, scoped, tag = 'internal scratch']
  %s0 = inlined_call_operand.vmem [shape: bf16[128,1024], index: 0, kind: input, shape index: {}]
  %s1 = inlined_call_operand.vmem [shape: bf16[1024,192], index: 1, kind: input, shape index: {}]
  %s2 = inlined_call_operand.vmem [shape: f32[1,192], index: 2, kind: input, shape index: {}]
  %s3 = inlined_call_operand.vmem [shape: bf16[128,192], index: 3, kind: output, shape index: {}]
  %s4 = sld [smem:[#allocation0]]
  $region45: #{second_model_forward.7} parent=0
    _
  %s6 = ssub.s32 1, %s4
  %s7 = scalar_select 0, %s6, %s4
  loop: start=0, step=1, limit=4
  $region2: #{second_model_forward.7} parent=0 // loop_pre_header
    _
  $region3: #{second_model_forward.7} parent=0 // loop_header
    %s9 = sphi 0, %s13
    %p10 = scmp.ge.s32.totalorder %s9, 4
    %s19 = sphi 0, %s21
    %s22 = sphi 0, %s19
    %s23 = sphi 0, %s22
    %s39 = sphi 0, %s23
    %s43 = sphi 0, %s43
    %s45 = sphi 0, %s43
    %s46 = sphi 0, %s45
    %s60 = sphi 0, %s46
    %s64 = sphi 0, %s64
    %s66 = sphi 0, %s64
    %s67 = sphi 0, %s66
    %s81 = sphi 0, %s67
    %s87 = sphi 0, %s89
    %s90 = sphi 0, %s87
    %s91 = sphi 0, %s90
    %s107 = sphi 0, %s91
  $region4: #{second_model_forward.7} parent=0 // loop_header_branch
    %12 = sbr.rel (%p10) target = $region8
  $region5: #{second_model_forward.7} parent=0 // loop_body
    %s14 = ssub.s32 %s9, 1
    %s15 = ssub.s32 %s9, 2
    %s16 = sadd.s32 %s9, 1
    %s17 = ssub.s32 %s9, %s16
    %p18 = scmp.eq.s32.totalorder %s17, 0
    %s20 = sadd.s32 %s19, 1
    %s21 = scalar_select %p18, %s19, %s20
    %p24 = pneg %p18
    %p25 = scmp.eq.s32.totalorder %s9, 1
    %p26 = por %p24, %p25
    %p27 = scmp.ne.s32.totalorder %s19, %s22
    %p28 = scmp.eq.s32.totalorder %s9, 0
    %p29 = por %p27, %p28
    %p30 = scmp.ne.s32.totalorder %s19, %s22
    %p31 = scmp.eq.s32.totalorder %s14, 1
    %p32 = por %p30, %p31
    %p33 = scmp.ne.s32.totalorder %s22, %s23
    %p34 = scmp.eq.s32.totalorder %s14, 0
    %p35 = por %p33, %p34
    %p36 = scmp.ne.s32.totalorder %s22, %s23
    %p37 = scmp.eq.s32.totalorder %s15, 1
    %p38 = por %p36, %p37
    %p40 = scmp.ne.s32.totalorder %s23, %s39
    %p41 = scmp.eq.s32.totalorder %s15, 0
    %p42 = por %p40, %p41
    %s44 = sadd.s32 %s43, 1
    %p47 = scmp.eq.s32.totalorder %s9, 1
    %p48 = scmp.ne.s32.totalorder %s43, %s45
    %p49 = scmp.eq.s32.totalorder %s9, 0
    %p50 = por %p48, %p49
    %p51 = scmp.ne.s32.totalorder %s43, %s45
    %p52 = scmp.eq.s32.totalorder %s14, 1
    %p53 = por %p51, %p52
    %p54 = scmp.ne.s32.totalorder %s45, %s46
    %p55 = scmp.eq.s32.totalorder %s14, 0
    %p56 = por %p54, %p55
    %p57 = scmp.ne.s32.totalorder %s45, %s46
    %p58 = scmp.eq.s32.totalorder %s15, 1
    %p59 = por %p57, %p58
    %p61 = scmp.ne.s32.totalorder %s46, %s60
    %p62 = scmp.eq.s32.totalorder %s15, 0
    %p63 = por %p61, %p62
    %s65 = sadd.s32 %s64, 1
    %p68 = scmp.eq.s32.totalorder %s9, 1
    %p69 = scmp.ne.s32.totalorder %s64, %s66
    %p70 = scmp.eq.s32.totalorder %s9, 0
    %p71 = por %p69, %p70
    %p72 = scmp.ne.s32.totalorder %s64, %s66
    %p73 = scmp.eq.s32.totalorder %s14, 1
    %p74 = por %p72, %p73
    %p75 = scmp.ne.s32.totalorder %s66, %s67
    %p76 = scmp.eq.s32.totalorder %s14, 0
    %p77 = por %p75, %p76
    %p78 = scmp.ne.s32.totalorder %s66, %s67
    %p79 = scmp.eq.s32.totalorder %s15, 1
    %p80 = por %p78, %p79
    %p82 = scmp.ne.s32.totalorder %s67, %s81
    %p83 = scmp.eq.s32.totalorder %s15, 0
    %p84 = por %p82, %p83
    %s85 = ssub.s32 %s9, %s16
    %p86 = scmp.eq.s32.totalorder %s85, 0
    %s88 = sadd.s32 %s87, 1
    %s89 = scalar_select %p86, %s87, %s88
    %p92 = pneg %p86
    %p93 = scmp.eq.s32.totalorder %s9, 1
    %p94 = por %p92, %p93
    %p95 = scmp.ne.s32.totalorder %s87, %s90
    %p96 = scmp.eq.s32.totalorder %s9, 0
    %p97 = por %p95, %p96
    %p98 = scmp.ne.s32.totalorder %s87, %s90
    %p99 = scmp.eq.s32.totalorder %s14, 1
    %p100 = por %p98, %p99
    %p101 = scmp.ne.s32.totalorder %s90, %s91
    %p102 = scmp.eq.s32.totalorder %s14, 0
    %p103 = por %p101, %p102
    %p104 = scmp.ne.s32.totalorder %s90, %s91
    %p105 = scmp.eq.s32.totalorder %s15, 1
    %p106 = por %p104, %p105
    %p108 = scmp.ne.s32.totalorder %s91, %s107
    %p109 = scmp.eq.s32.totalorder %s15, 0
    %p110 = por %p108, %p109
    %p111 = scmp.le.s32.totalorder 1, %s9
    %p112 = scmp.lt.s32.totalorder %s9, 3
    %p113 = pnand %p111, %p112
    %p114 = pneg %p113
    // Predicated region
    $region9: #{second_model_forward.7} parent=5 // pred_check
      _
    $region10: #{second_model_forward.7} parent=5 // pred_check_branch
      %116 = sbr.rel (%p113) target = $region12
    $region11: #{second_model_forward.7} parent=5 // pred_region
      %s117 = ssub.s32 %s9, 1
      // Predicated region
      $region13: #{second_model_forward.7} parent=11 // pred_check
        %p118 = pneg %p56
      $region14: #{second_model_forward.7} parent=11 // pred_check_branch
        %120 = sbr.rel (%p118) target = $region16
      $region15: #{second_model_forward.7} parent=11 // pred_region
        _
      $region16: #{second_model_forward.7} parent=11 // pred_fallthru
        _
      // Predicated region
      $region17: #{second_model_forward.7} parent=11 // pred_check
        %p121 = pneg %p77
      $region18: #{second_model_forward.7} parent=11 // pred_check_branch
        %123 = sbr.rel (%p121) target = $region20
      $region19: #{second_model_forward.7} parent=11 // pred_region
        _
      $region20: #{second_model_forward.7} parent=11 // pred_fallthru
        _
    $region12: #{second_model_forward.7} parent=5 // pred_fallthru
      _
    %p124 = scmp.lt.s32.totalorder %s9, 2
    // Predicated region
    $region21: #{second_model_forward.7} parent=5 // pred_check
      %p125 = pneg %p124
    $region22: #{second_model_forward.7} parent=5 // pred_check_branch
      %127 = sbr.rel (%p125) target = $region24
    $region23: #{second_model_forward.7} parent=5 // pred_region
      // Predicated region
      $region25: #{second_model_forward.7} parent=23 // pred_check
        %p128 = pneg %p29
      $region26: #{second_model_forward.7} parent=23 // pred_check_branch
        %130 = sbr.rel (%p128) target = $region28
      $region27: #{second_model_forward.7} parent=23 // pred_region
        %s131 = smul.u32 8, %s9
        %p132 = scmp.lt.s32.totalorder %s131, 15
        %s133 = scalar_select %p132, %s131, 15
        %s134 = smul.addr %s133, 8
        %s135 = smul.addr %s134, 4
        %s136 = scalar_lea.vmem %s0, %s135
        %s137 = smul.u32 8, %s9
      $region28: #{second_model_forward.7} parent=23 // pred_fallthru
        _
    $region24: #{second_model_forward.7} parent=5 // pred_fallthru
      _
    %p138 = scmp.le.s32.totalorder 1, %s9
    %p139 = scmp.lt.s32.totalorder %s9, 3
    %p140 = pnand %p138, %p139
    %p141 = pneg %p140
    // Predicated region
    $region29: #{second_model_forward.7} parent=5 // pred_check
      _
    $region30: #{second_model_forward.7} parent=5 // pred_check_branch
      %143 = sbr.rel (%p140) target = $region32
    $region31: #{second_model_forward.7} parent=5 // pred_region
      %s144 = ssub.s32 %s9, 1
      %s145 = smul.u32 8, %s14
      %p146 = scmp.lt.s32.totalorder %s145, 15
      %s147 = scalar_select %p146, %s145, 15
      %s148 = smul.addr %s147, 8
      %s149 = smul.addr %s148, 4
      %s150 = scalar_lea.vmem %s0, %s149
      %p151 = pneg %p35
      %p152 = pneg %p32
      %p153 = pneg %p56
      %p154 = pneg %p53
      %p155 = pneg %p77
      %p156 = pneg %p74
      %p157 = pneg %p103
      %p158 = pneg %p100
      %s159 = smul.u32 8, %s14
      %p160 = scmp.lt.s32.totalorder %s159, 15
      %s161 = scalar_select %p160, %s159, 15
      %s162 = smul.addr %s161, 2
      %s163 = smul.addr %s162, 4
      %s164 = scalar_lea.vmem %s3, %s163
      %s165 = smul.u32 8, %s14
      %p166 = scmp.lt.s32.totalorder %s165, 15
      %s167 = scalar_select %p166, %s165, 15
      %s168 = smul.addr %s167, 8
      %s169 = smul.addr %s168, 4
      %s170 = scalar_lea.vmem %s0, %s169
      %s171 = smul.u32 8, %s14
      %s172 = smul.u32 8, %s14
      %p173 = scmp.lt.s32.totalorder %s172, 15
      %s174 = scalar_select %p173, %s172, 15
      %s175 = smul.addr %s174, 2
      %s176 = smul.addr %s175, 4
      %s177 = scalar_lea.vmem %s3, %s176
      %s178 = smul.u32 8, %s14
      %v179 = vld [vmem:[%s170] sm:$0xff]
      %v180 = vld [vmem:[%s170 + $0x8] sm:$0xff]
      %v181 = vld [vmem:[%s170 + $0x10] sm:$0xff]
      %v182 = vld [vmem:[%s170 + $0x18] sm:$0xff]
      %v183 = vld [vmem:[%s170 + $0x20] sm:$0xff]
      %v184 = vld [vmem:[%s170 + $0x28] sm:$0xff]
      %v185 = vld [vmem:[%s170 + $0x30] sm:$0xff]
      %v186 = vld [vmem:[%s170 + $0x38] sm:$0xff]
      %v187 = vld [vmem:[%s170 + $0x40] sm:$0xff]
      %v188 = vld [vmem:[%s170 + $0x48] sm:$0xff]
      %v189 = vld [vmem:[%s170 + $0x50] sm:$0xff]
      %v190 = vld [vmem:[%s170 + $0x58] sm:$0xff]
      %v191 = vld [vmem:[%s170 + $0x60] sm:$0xff]
      %v192 = vld [vmem:[%s170 + $0x68] sm:$0xff]
      %v193 = vld [vmem:[%s170 + $0x70] sm:$0xff]
      %v194 = vld [vmem:[%s170 + $0x78] sm:$0xff]
      %v195 = vld [vmem:[%s170 + $0x80] sm:$0xff]
      %v196 = vld [vmem:[%s170 + $0x88] sm:$0xff]
      %v197 = vld [vmem:[%s170 + $0x90] sm:$0xff]
      %v198 = vld [vmem:[%s170 + $0x98] sm:$0xff]
      %v199 = vld [vmem:[%s170 + $0xa0] sm:$0xff]
      %v200 = vld [vmem:[%s170 + $0xa8] sm:$0xff]
      %v201 = vld [vmem:[%s170 + $0xb0] sm:$0xff]
      %v202 = vld [vmem:[%s170 + $0xb8] sm:$0xff]
      %v203 = vld [vmem:[%s170 + $0xc0] sm:$0xff]
      %v204 = vld [vmem:[%s170 + $0xc8] sm:$0xff]
      %v205 = vld [vmem:[%s170 + $0xd0] sm:$0xff]
      %v206 = vld [vmem:[%s170 + $0xd8] sm:$0xff]
      %v207 = vld [vmem:[%s170 + $0xe0] sm:$0xff]
      %v208 = vld [vmem:[%s170 + $0xe8] sm:$0xff]
      %v209 = vld [vmem:[%s170 + $0xf0] sm:$0xff]
      %v210 = vld [vmem:[%s170 + $0xf8] sm:$0xff]
      %v211 = vld [vmem:[%s1] sm:$0xff]
      %v212 = vld [vmem:[%s1 + $0x8] sm:$0xff]
      %v213 = vld [vmem:[%s1 + $0x10] sm:$0xff]
      %v214 = vld [vmem:[%s1 + $0x18] sm:$0xff]
      %v215 = vld [vmem:[%s1 + $0x20] sm:$0xff]
      %v216 = vld [vmem:[%s1 + $0x28] sm:$0xff]
      %v217 = vld [vmem:[%s1 + $0x30] sm:$0xff]
      %v218 = vld [vmem:[%s1 + $0x38] sm:$0xff]
      %v219 = vld [vmem:[%s1 + $0x40] sm:$0xff]
      %v220 = vld [vmem:[%s1 + $0x48] sm:$0xff]
      %v221 = vld [vmem:[%s1 + $0x50] sm:$0xff]
      %v222 = vld [vmem:[%s1 + $0x58] sm:$0xff]
      %v223 = vld [vmem:[%s1 + $0x60] sm:$0xff]
      %v224 = vld [vmem:[%s1 + $0x68] sm:$0xff]
      %v225 = vld [vmem:[%s1 + $0x70] sm:$0xff]
      %v226 = vld [vmem:[%s1 + $0x78] sm:$0xff]
      %v227 = vld [vmem:[%s1 + $0x80] sm:$0xff]
      %v228 = vld [vmem:[%s1 + $0x88] sm:$0xff]
      %v229 = vld [vmem:[%s1 + $0x90] sm:$0xff]
      %v230 = vld [vmem:[%s1 + $0x98] sm:$0xff]
      %v231 = vld [vmem:[%s1 + $0xa0] sm:$0xff]
      %v232 = vld [vmem:[%s1 + $0xa8] sm:$0xff]
      %v233 = vld [vmem:[%s1 + $0xb0] sm:$0xff]
      %v234 = vld [vmem:[%s1 + $0xb8] sm:$0xff]
      %v235 = vld [vmem:[%s1 + $0xc0] sm:$0xff]
      %v236 = vld [vmem:[%s1 + $0xc8] sm:$0xff]
      %v237 = vld [vmem:[%s1 + $0xd0] sm:$0xff]
      %v238 = vld [vmem:[%s1 + $0xd8] sm:$0xff]
      %v239 = vld [vmem:[%s1 + $0xe0] sm:$0xff]
      %v240 = vld [vmem:[%s1 + $0xe8] sm:$0xff]
      %v241 = vld [vmem:[%s1 + $0xf0] sm:$0xff]
      %v242 = vld [vmem:[%s1 + $0xf8] sm:$0xff]
      %v243 = vld [vmem:[%s1 + $0x100] sm:$0xff]
      %v244 = vld [vmem:[%s1 + $0x108] sm:$0xff]
      %v245 = vld [vmem:[%s1 + $0x110] sm:$0xff]
      %v246 = vld [vmem:[%s1 + $0x118] sm:$0xff]
      %v247 = vld [vmem:[%s1 + $0x120] sm:$0xff]
      %v248 = vld [vmem:[%s1 + $0x128] sm:$0xff]
      %v249 = vld [vmem:[%s1 + $0x130] sm:$0xff]
      %v250 = vld [vmem:[%s1 + $0x138] sm:$0xff]
      %v251 = vld [vmem:[%s1 + $0x140] sm:$0xff]
      %v252 = vld [vmem:[%s1 + $0x148] sm:$0xff]
      %v253 = vld [vmem:[%s1 + $0x150] sm:$0xff]
      %v254 = vld [vmem:[%s1 + $0x158] sm:$0xff]
      %v255 = vld [vmem:[%s1 + $0x160] sm:$0xff]
      %v256 = vld [vmem:[%s1 + $0x168] sm:$0xff]
      %v257 = vld [vmem:[%s1 + $0x170] sm:$0xff]
      %v258 = vld [vmem:[%s1 + $0x178] sm:$0xff]
      %v259 = vld [vmem:[%s1 + $0x180] sm:$0xff]
      %v260 = vld [vmem:[%s1 + $0x188] sm:$0xff]
      %v261 = vld [vmem:[%s1 + $0x190] sm:$0xff]
      %v262 = vld [vmem:[%s1 + $0x198] sm:$0xff]
      %v263 = vld [vmem:[%s1 + $0x1a0] sm:$0xff]
      %v264 = vld [vmem:[%s1 + $0x1a8] sm:$0xff]
      %v265 = vld [vmem:[%s1 + $0x1b0] sm:$0xff]
      %v266 = vld [vmem:[%s1 + $0x1b8] sm:$0xff]
      %v267 = vld [vmem:[%s1 + $0x1c0] sm:$0xff]
      %v268 = vld [vmem:[%s1 + $0x1c8] sm:$0xff]
      %v269 = vld [vmem:[%s1 + $0x1d0] sm:$0xff]
      %v270 = vld [vmem:[%s1 + $0x1d8] sm:$0xff]
      %v271 = vld [vmem:[%s1 + $0x1e0] sm:$0xff]
      %v272 = vld [vmem:[%s1 + $0x1e8] sm:$0xff]
      %v273 = vld [vmem:[%s1 + $0x1f0] sm:$0xff]
      %v274 = vld [vmem:[%s1 + $0x1f8] sm:$0xff]
      %v275 = vld [vmem:[%s1 + $0x200] sm:$0xff]
      %v276 = vld [vmem:[%s1 + $0x208] sm:$0xff]
      %v277 = vld [vmem:[%s1 + $0x210] sm:$0xff]
      %v278 = vld [vmem:[%s1 + $0x218] sm:$0xff]
      %v279 = vld [vmem:[%s1 + $0x220] sm:$0xff]
      %v280 = vld [vmem:[%s1 + $0x228] sm:$0xff]
      %v281 = vld [vmem:[%s1 + $0x230] sm:$0xff]
      %v282 = vld [vmem:[%s1 + $0x238] sm:$0xff]
      %v283 = vld [vmem:[%s1 + $0x240] sm:$0xff]
      %v284 = vld [vmem:[%s1 + $0x248] sm:$0xff]
      %v285 = vld [vmem:[%s1 + $0x250] sm:$0xff]
      %v286 = vld [vmem:[%s1 + $0x258] sm:$0xff]
      %v287 = vld [vmem:[%s1 + $0x260] sm:$0xff]
      %v288 = vld [vmem:[%s1 + $0x268] sm:$0xff]
      %v289 = vld [vmem:[%s1 + $0x270] sm:$0xff]
      %v290 = vld [vmem:[%s1 + $0x278] sm:$0xff]
      %v291 = vld [vmem:[%s1 + $0x280] sm:$0xff]
      %v292 = vld [vmem:[%s1 + $0x288] sm:$0xff]
      %v293 = vld [vmem:[%s1 + $0x290] sm:$0xff]
      %v294 = vld [vmem:[%s1 + $0x298] sm:$0xff]
      %v295 = vld [vmem:[%s1 + $0x2a0] sm:$0xff]
      %v296 = vld [vmem:[%s1 + $0x2a8] sm:$0xff]
      %v297 = vld [vmem:[%s1 + $0x2b0] sm:$0xff]
      %v298 = vld [vmem:[%s1 + $0x2b8] sm:$0xff]
      %v299 = vld [vmem:[%s1 + $0x2c0] sm:$0xff]
      %v300 = vld [vmem:[%s1 + $0x2c8] sm:$0xff]
      %v301 = vld [vmem:[%s1 + $0x2d0] sm:$0xff]
      %v302 = vld [vmem:[%s1 + $0x2d8] sm:$0xff]
      %v303 = vld [vmem:[%s1 + $0x2e0] sm:$0xff]
      %v304 = vld [vmem:[%s1 + $0x2e8] sm:$0xff]
      %v305 = vld [vmem:[%s1 + $0x2f0] sm:$0xff]
      %v306 = vld [vmem:[%s1 + $0x2f8] sm:$0xff]
      %v307 = vld [vmem:[%s1 + $0x300] sm:$0xff]
      %v308 = vld [vmem:[%s1 + $0x308] sm:$0xff]
      %v309 = vld [vmem:[%s1 + $0x310] sm:$0xff]
      %v310 = vld [vmem:[%s1 + $0x318] sm:$0xff]
      %v311 = vld [vmem:[%s1 + $0x320] sm:$0xff]
      %v312 = vld [vmem:[%s1 + $0x328] sm:$0xff]
      %v313 = vld [vmem:[%s1 + $0x330] sm:$0xff]
      %v314 = vld [vmem:[%s1 + $0x338] sm:$0xff]
      %v315 = vld [vmem:[%s1 + $0x340] sm:$0xff]
      %v316 = vld [vmem:[%s1 + $0x348] sm:$0xff]
      %v317 = vld [vmem:[%s1 + $0x350] sm:$0xff]
      %v318 = vld [vmem:[%s1 + $0x358] sm:$0xff]
      %v319 = vld [vmem:[%s1 + $0x360] sm:$0xff]
      %v320 = vld [vmem:[%s1 + $0x368] sm:$0xff]
      %v321 = vld [vmem:[%s1 + $0x370] sm:$0xff]
      %v322 = vld [vmem:[%s1 + $0x378] sm:$0xff]
      %v323 = vld [vmem:[%s1 + $0x380] sm:$0xff]
      %v324 = vld [vmem:[%s1 + $0x388] sm:$0xff]
      %v325 = vld [vmem:[%s1 + $0x390] sm:$0xff]
      %v326 = vld [vmem:[%s1 + $0x398] sm:$0xff]
      %v327 = vld [vmem:[%s1 + $0x3a0] sm:$0xff]
      %v328 = vld [vmem:[%s1 + $0x3a8] sm:$0xff]
      %v329 = vld [vmem:[%s1 + $0x3b0] sm:$0xff]
      %v330 = vld [vmem:[%s1 + $0x3b8] sm:$0xff]
      %v331 = vld [vmem:[%s1 + $0x3c0] sm:$0xff]
      %v332 = vld [vmem:[%s1 + $0x3c8] sm:$0xff]
      %v333 = vld [vmem:[%s1 + $0x3d0] sm:$0xff]
      %v334 = vld [vmem:[%s1 + $0x3d8] sm:$0xff]
      %v335 = vld [vmem:[%s1 + $0x3e0] sm:$0xff]
      %v336 = vld [vmem:[%s1 + $0x3e8] sm:$0xff]
      %v337 = vld [vmem:[%s1 + $0x3f0] sm:$0xff]
      %v338 = vld [vmem:[%s1 + $0x3f8] sm:$0xff]
      %v339 = vld [vmem:[%s2] sm:$0x3]
      %v341 = vperm.slane %v339, 0
      %v342 = vperm.slane %v339, 1
      %v377 = vunpack.c.l.b16 %v179
      %v378 = vunpack.c.h.b16 %v179
      %v379 = vunpack.c.l.b16 %v180
      %v380 = vunpack.c.h.b16 %v180
      %v381 = vunpack.c.l.b16 %v181
      %v382 = vunpack.c.h.b16 %v181
      %v383 = vunpack.c.l.b16 %v182
      %v384 = vunpack.c.h.b16 %v182
      %v385 = vunpack.c.l.b16 %v183
      %v386 = vunpack.c.h.b16 %v183
      %v387 = vunpack.c.l.b16 %v184
      %v388 = vunpack.c.h.b16 %v184
      %v389 = vunpack.c.l.b16 %v185
      %v390 = vunpack.c.h.b16 %v185
      %v391 = vunpack.c.l.b16 %v186
      %v392 = vunpack.c.h.b16 %v186
      %v393 = vunpack.c.l.b16 %v187
      %v394 = vunpack.c.h.b16 %v187
      %v395 = vunpack.c.l.b16 %v188
      %v396 = vunpack.c.h.b16 %v188
      %v397 = vunpack.c.l.b16 %v189
      %v398 = vunpack.c.h.b16 %v189
      %v399 = vunpack.c.l.b16 %v190
      %v400 = vunpack.c.h.b16 %v190
      %v401 = vunpack.c.l.b16 %v191
      %v402 = vunpack.c.h.b16 %v191
      %v403 = vunpack.c.l.b16 %v192
      %v404 = vunpack.c.h.b16 %v192
      %v405 = vunpack.c.l.b16 %v193
      %v406 = vunpack.c.h.b16 %v193
      %v407 = vunpack.c.l.b16 %v194
      %v408 = vunpack.c.h.b16 %v194
      %v409 = vunpack.c.l.b16 %v195
      %v410 = vunpack.c.h.b16 %v195
      %v411 = vunpack.c.l.b16 %v196
      %v412 = vunpack.c.h.b16 %v196
      %v413 = vunpack.c.l.b16 %v197
      %v414 = vunpack.c.h.b16 %v197
      %v415 = vunpack.c.l.b16 %v198
      %v416 = vunpack.c.h.b16 %v198
      %v417 = vunpack.c.l.b16 %v199
      %v418 = vunpack.c.h.b16 %v199
      %v419 = vunpack.c.l.b16 %v200
      %v420 = vunpack.c.h.b16 %v200
      %v421 = vunpack.c.l.b16 %v201
      %v422 = vunpack.c.h.b16 %v201
      %v423 = vunpack.c.l.b16 %v202
      %v424 = vunpack.c.h.b16 %v202
      %v425 = vunpack.c.l.b16 %v203
      %v426 = vunpack.c.h.b16 %v203
      %v427 = vunpack.c.l.b16 %v204
      %v428 = vunpack.c.h.b16 %v204
      %v429 = vunpack.c.l.b16 %v205
      %v430 = vunpack.c.h.b16 %v205
      %v431 = vunpack.c.l.b16 %v206
      %v432 = vunpack.c.h.b16 %v206
      %v433 = vunpack.c.l.b16 %v207
      %v434 = vunpack.c.h.b16 %v207
      %v435 = vunpack.c.l.b16 %v208
      %v436 = vunpack.c.h.b16 %v208
      %v437 = vunpack.c.l.b16 %v209
      %v438 = vunpack.c.h.b16 %v209
      %v439 = vunpack.c.l.b16 %v210
      %v440 = vunpack.c.h.b16 %v210
      %v441 = vpack.c.b16 %v385, %v377
      %v442 = vpack.c.b16 %v386, %v378
      %v443 = vpack.c.b16 %v387, %v379
      %v444 = vpack.c.b16 %v388, %v380
      %v445 = vpack.c.b16 %v389, %v381
      %v446 = vpack.c.b16 %v390, %v382
      %v447 = vpack.c.b16 %v391, %v383
      %v448 = vpack.c.b16 %v392, %v384
      %v449 = vpack.c.b16 %v401, %v393
      %v450 = vpack.c.b16 %v402, %v394
      %v451 = vpack.c.b16 %v403, %v395
      %v452 = vpack.c.b16 %v404, %v396
      %v453 = vpack.c.b16 %v405, %v397
      %v454 = vpack.c.b16 %v406, %v398
      %v455 = vpack.c.b16 %v407, %v399
      %v456 = vpack.c.b16 %v408, %v400
      %v457 = vpack.c.b16 %v417, %v409
      %v458 = vpack.c.b16 %v418, %v410
      %v459 = vpack.c.b16 %v419, %v411
      %v460 = vpack.c.b16 %v420, %v412
      %v461 = vpack.c.b16 %v421, %v413
      %v462 = vpack.c.b16 %v422, %v414
      %v463 = vpack.c.b16 %v423, %v415
      %v464 = vpack.c.b16 %v424, %v416
      %v465 = vpack.c.b16 %v433, %v425
      %v466 = vpack.c.b16 %v434, %v426
      %v467 = vpack.c.b16 %v435, %v427
      %v468 = vpack.c.b16 %v436, %v428
      %v469 = vpack.c.b16 %v437, %v429
      %v470 = vpack.c.b16 %v438, %v430
      %v471 = vpack.c.b16 %v439, %v431
      %v472 = vpack.c.b16 %v440, %v432
      %v633 = vunpack.c.l.b16 %v211
      %v634 = vunpack.c.h.b16 %v211
      %v635 = vunpack.c.l.b16 %v212
      %v636 = vunpack.c.h.b16 %v212
      %v637 = vunpack.c.l.b16 %v213
      %v638 = vunpack.c.h.b16 %v213
      %v639 = vunpack.c.l.b16 %v214
      %v640 = vunpack.c.h.b16 %v214
      %v641 = vunpack.c.l.b16 %v215
      %v642 = vunpack.c.h.b16 %v215
      %v643 = vunpack.c.l.b16 %v216
      %v644 = vunpack.c.h.b16 %v216
      %v645 = vunpack.c.l.b16 %v217
      %v646 = vunpack.c.h.b16 %v217
      %v647 = vunpack.c.l.b16 %v218
      %v648 = vunpack.c.h.b16 %v218
      %v649 = vunpack.c.l.b16 %v219
      %v650 = vunpack.c.h.b16 %v219
      %v651 = vunpack.c.l.b16 %v220
      %v652 = vunpack.c.h.b16 %v220
      %v653 = vunpack.c.l.b16 %v221
      %v654 = vunpack.c.h.b16 %v221
      %v655 = vunpack.c.l.b16 %v222
      %v656 = vunpack.c.h.b16 %v222
      %v657 = vunpack.c.l.b16 %v223
      %v658 = vunpack.c.h.b16 %v223
      %v659 = vunpack.c.l.b16 %v224
      %v660 = vunpack.c.h.b16 %v224
      %v661 = vunpack.c.l.b16 %v225
      %v662 = vunpack.c.h.b16 %v225
      %v663 = vunpack.c.l.b16 %v226
      %v664 = vunpack.c.h.b16 %v226
      %v665 = vunpack.c.l.b16 %v227
      %v666 = vunpack.c.h.b16 %v227
      %v667 = vunpack.c.l.b16 %v228
      %v668 = vunpack.c.h.b16 %v228
      %v669 = vunpack.c.l.b16 %v229
      %v670 = vunpack.c.h.b16 %v229
      %v671 = vunpack.c.l.b16 %v230
      %v672 = vunpack.c.h.b16 %v230
      %v673 = vunpack.c.l.b16 %v231
      %v674 = vunpack.c.h.b16 %v231
      %v675 = vunpack.c.l.b16 %v232
      %v676 = vunpack.c.h.b16 %v232
      %v677 = vunpack.c.l.b16 %v233
      %v678 = vunpack.c.h.b16 %v233
      %v679 = vunpack.c.l.b16 %v234
      %v680 = vunpack.c.h.b16 %v234
      %v681 = vunpack.c.l.b16 %v235
      %v682 = vunpack.c.h.b16 %v235
      %v683 = vunpack.c.l.b16 %v236
      %v684 = vunpack.c.h.b16 %v236
      %v685 = vunpack.c.l.b16 %v237
      %v686 = vunpack.c.h.b16 %v237
      %v687 = vunpack.c.l.b16 %v238
      %v688 = vunpack.c.h.b16 %v238
      %v689 = vunpack.c.l.b16 %v239
      %v690 = vunpack.c.h.b16 %v239
      %v691 = vunpack.c.l.b16 %v240
      %v692 = vunpack.c.h.b16 %v240
      %v693 = vunpack.c.l.b16 %v241
      %v694 = vunpack.c.h.b16 %v241
      %v695 = vunpack.c.l.b16 %v242
      %v696 = vunpack.c.h.b16 %v242
      %v697 = vunpack.c.l.b16 %v243
      %v698 = vunpack.c.h.b16 %v243
      %v699 = vunpack.c.l.b16 %v244
      %v700 = vunpack.c.h.b16 %v244
      %v701 = vunpack.c.l.b16 %v245
      %v702 = vunpack.c.h.b16 %v245
      %v703 = vunpack.c.l.b16 %v246
      %v704 = vunpack.c.h.b16 %v246
      %v705 = vunpack.c.l.b16 %v247
      %v706 = vunpack.c.h.b16 %v247
      %v707 = vunpack.c.l.b16 %v248
      %v708 = vunpack.c.h.b16 %v248
      %v709 = vunpack.c.l.b16 %v249
      %v710 = vunpack.c.h.b16 %v249
      %v711 = vunpack.c.l.b16 %v250
      %v712 = vunpack.c.h.b16 %v250
      %v713 = vunpack.c.l.b16 %v251
      %v714 = vunpack.c.h.b16 %v251
      %v715 = vunpack.c.l.b16 %v252
      %v716 = vunpack.c.h.b16 %v252
      %v717 = vunpack.c.l.b16 %v253
      %v718 = vunpack.c.h.b16 %v253
      %v719 = vunpack.c.l.b16 %v254
      %v720 = vunpack.c.h.b16 %v254
      %v721 = vunpack.c.l.b16 %v255
      %v722 = vunpack.c.h.b16 %v255
      %v723 = vunpack.c.l.b16 %v256
      %v724 = vunpack.c.h.b16 %v256
      %v725 = vunpack.c.l.b16 %v257
      %v726 = vunpack.c.h.b16 %v257
      %v727 = vunpack.c.l.b16 %v258
      %v728 = vunpack.c.h.b16 %v258
      %v729 = vunpack.c.l.b16 %v259
      %v730 = vunpack.c.h.b16 %v259
      %v731 = vunpack.c.l.b16 %v260
      %v732 = vunpack.c.h.b16 %v260
      %v733 = vunpack.c.l.b16 %v261
      %v734 = vunpack.c.h.b16 %v261
      %v735 = vunpack.c.l.b16 %v262
      %v736 = vunpack.c.h.b16 %v262
      %v737 = vunpack.c.l.b16 %v263
      %v738 = vunpack.c.h.b16 %v263
      %v739 = vunpack.c.l.b16 %v264
      %v740 = vunpack.c.h.b16 %v264
      %v741 = vunpack.c.l.b16 %v265
      %v742 = vunpack.c.h.b16 %v265
      %v743 = vunpack.c.l.b16 %v266
      %v744 = vunpack.c.h.b16 %v266
      %v745 = vunpack.c.l.b16 %v267
      %v746 = vunpack.c.h.b16 %v267
      %v747 = vunpack.c.l.b16 %v268
      %v748 = vunpack.c.h.b16 %v268
      %v749 = vunpack.c.l.b16 %v269
      %v750 = vunpack.c.h.b16 %v269
      %v751 = vunpack.c.l.b16 %v270
      %v752 = vunpack.c.h.b16 %v270
      %v753 = vunpack.c.l.b16 %v271
      %v754 = vunpack.c.h.b16 %v271
      %v755 = vunpack.c.l.b16 %v272
      %v756 = vunpack.c.h.b16 %v272
      %v757 = vunpack.c.l.b16 %v273
      %v758 = vunpack.c.h.b16 %v273
      %v759 = vunpack.c.l.b16 %v274
      %v760 = vunpack.c.h.b16 %v274
      %v761 = vunpack.c.l.b16 %v275
      %v762 = vunpack.c.h.b16 %v275
      %v763 = vunpack.c.l.b16 %v276
      %v764 = vunpack.c.h.b16 %v276
      %v765 = vunpack.c.l.b16 %v277
      %v766 = vunpack.c.h.b16 %v277
      %v767 = vunpack.c.l.b16 %v278
      %v768 = vunpack.c.h.b16 %v278
      %v769 = vunpack.c.l.b16 %v279
      %v770 = vunpack.c.h.b16 %v279
      %v771 = vunpack.c.l.b16 %v280
      %v772 = vunpack.c.h.b16 %v280
      %v773 = vunpack.c.l.b16 %v281
      %v774 = vunpack.c.h.b16 %v281
      %v775 = vunpack.c.l.b16 %v282
      %v776 = vunpack.c.h.b16 %v282
      %v777 = vunpack.c.l.b16 %v283
      %v778 = vunpack.c.h.b16 %v283
      %v779 = vunpack.c.l.b16 %v284
      %v780 = vunpack.c.h.b16 %v284
      %v781 = vunpack.c.l.b16 %v285
      %v782 = vunpack.c.h.b16 %v285
      %v783 = vunpack.c.l.b16 %v286
      %v784 = vunpack.c.h.b16 %v286
      %v785 = vunpack.c.l.b16 %v287
      %v786 = vunpack.c.h.b16 %v287
      %v787 = vunpack.c.l.b16 %v288
      %v788 = vunpack.c.h.b16 %v288
      %v789 = vunpack.c.l.b16 %v289
      %v790 = vunpack.c.h.b16 %v289
      %v791 = vunpack.c.l.b16 %v290
      %v792 = vunpack.c.h.b16 %v290
      %v793 = vunpack.c.l.b16 %v291
      %v794 = vunpack.c.h.b16 %v291
      %v795 = vunpack.c.l.b16 %v292
      %v796 = vunpack.c.h.b16 %v292
      %v797 = vunpack.c.l.b16 %v293
      %v798 = vunpack.c.h.b16 %v293
      %v799 = vunpack.c.l.b16 %v294
      %v800 = vunpack.c.h.b16 %v294
      %v801 = vunpack.c.l.b16 %v295
      %v802 = vunpack.c.h.b16 %v295
      %v803 = vunpack.c.l.b16 %v296
      %v804 = vunpack.c.h.b16 %v296
      %v805 = vunpack.c.l.b16 %v297
      %v806 = vunpack.c.h.b16 %v297
      %v807 = vunpack.c.l.b16 %v298
      %v808 = vunpack.c.h.b16 %v298
      %v809 = vunpack.c.l.b16 %v299
      %v810 = vunpack.c.h.b16 %v299
      %v811 = vunpack.c.l.b16 %v300
      %v812 = vunpack.c.h.b16 %v300
      %v813 = vunpack.c.l.b16 %v301
      %v814 = vunpack.c.h.b16 %v301
      %v815 = vunpack.c.l.b16 %v302
      %v816 = vunpack.c.h.b16 %v302
      %v817 = vunpack.c.l.b16 %v303
      %v818 = vunpack.c.h.b16 %v303
      %v819 = vunpack.c.l.b16 %v304
      %v820 = vunpack.c.h.b16 %v304
      %v821 = vunpack.c.l.b16 %v305
      %v822 = vunpack.c.h.b16 %v305
      %v823 = vunpack.c.l.b16 %v306
      %v824 = vunpack.c.h.b16 %v306
      %v825 = vunpack.c.l.b16 %v307
      %v826 = vunpack.c.h.b16 %v307
      %v827 = vunpack.c.l.b16 %v308
      %v828 = vunpack.c.h.b16 %v308
      %v829 = vunpack.c.l.b16 %v309
      %v830 = vunpack.c.h.b16 %v309
      %v831 = vunpack.c.l.b16 %v310
      %v832 = vunpack.c.h.b16 %v310
      %v833 = vunpack.c.l.b16 %v311
      %v834 = vunpack.c.h.b16 %v311
      %v835 = vunpack.c.l.b16 %v312
      %v836 = vunpack.c.h.b16 %v312
      %v837 = vunpack.c.l.b16 %v313
      %v838 = vunpack.c.h.b16 %v313
      %v839 = vunpack.c.l.b16 %v314
      %v840 = vunpack.c.h.b16 %v314
      %v841 = vunpack.c.l.b16 %v315
      %v842 = vunpack.c.h.b16 %v315
      %v843 = vunpack.c.l.b16 %v316
      %v844 = vunpack.c.h.b16 %v316
      %v845 = vunpack.c.l.b16 %v317
      %v846 = vunpack.c.h.b16 %v317
      %v847 = vunpack.c.l.b16 %v318
      %v848 = vunpack.c.h.b16 %v318
      %v849 = vunpack.c.l.b16 %v319
      %v850 = vunpack.c.h.b16 %v319
      %v851 = vunpack.c.l.b16 %v320
      %v852 = vunpack.c.h.b16 %v320
      %v853 = vunpack.c.l.b16 %v321
      %v854 = vunpack.c.h.b16 %v321
      %v855 = vunpack.c.l.b16 %v322
      %v856 = vunpack.c.h.b16 %v322
      %v857 = vunpack.c.l.b16 %v323
      %v858 = vunpack.c.h.b16 %v323
      %v859 = vunpack.c.l.b16 %v324
      %v860 = vunpack.c.h.b16 %v324
      %v861 = vunpack.c.l.b16 %v325
      %v862 = vunpack.c.h.b16 %v325
      %v863 = vunpack.c.l.b16 %v326
      %v864 = vunpack.c.h.b16 %v326
      %v865 = vunpack.c.l.b16 %v327
      %v866 = vunpack.c.h.b16 %v327
      %v867 = vunpack.c.l.b16 %v328
      %v868 = vunpack.c.h.b16 %v328
      %v869 = vunpack.c.l.b16 %v329
      %v870 = vunpack.c.h.b16 %v329
      %v871 = vunpack.c.l.b16 %v330
      %v872 = vunpack.c.h.b16 %v330
      %v873 = vunpack.c.l.b16 %v331
      %v874 = vunpack.c.h.b16 %v331
      %v875 = vunpack.c.l.b16 %v332
      %v876 = vunpack.c.h.b16 %v332
      %v877 = vunpack.c.l.b16 %v333
      %v878 = vunpack.c.h.b16 %v333
      %v879 = vunpack.c.l.b16 %v334
      %v880 = vunpack.c.h.b16 %v334
      %v881 = vunpack.c.l.b16 %v335
      %v882 = vunpack.c.h.b16 %v335
      %v883 = vunpack.c.l.b16 %v336
      %v884 = vunpack.c.h.b16 %v336
      %v885 = vunpack.c.l.b16 %v337
      %v886 = vunpack.c.h.b16 %v337
      %v887 = vunpack.c.l.b16 %v338
      %v888 = vunpack.c.h.b16 %v338
      %v889 = vpack.c.b16 %v635, %v633
      %v890 = vpack.c.b16 %v636, %v634
      %v891 = vpack.c.b16 %v639, %v637
      %v892 = vpack.c.b16 %v640, %v638
      %v893 = vpack.c.b16 %v643, %v641
      %v894 = vpack.c.b16 %v644, %v642
      %v895 = vpack.c.b16 %v647, %v645
      %v896 = vpack.c.b16 %v648, %v646
      %v897 = vpack.c.b16 %v651, %v649
      %v898 = vpack.c.b16 %v652, %v650
      %v899 = vpack.c.b16 %v655, %v653
      %v900 = vpack.c.b16 %v656, %v654
      %v901 = vpack.c.b16 %v659, %v657
      %v902 = vpack.c.b16 %v660, %v658
      %v903 = vpack.c.b16 %v663, %v661
      %v904 = vpack.c.b16 %v664, %v662
      %v905 = vpack.c.b16 %v667, %v665
      %v906 = vpack.c.b16 %v668, %v666
      %v907 = vpack.c.b16 %v671, %v669
      %v908 = vpack.c.b16 %v672, %v670
      %v909 = vpack.c.b16 %v675, %v673
      %v910 = vpack.c.b16 %v676, %v674
      %v911 = vpack.c.b16 %v679, %v677
      %v912 = vpack.c.b16 %v680, %v678
      %v913 = vpack.c.b16 %v683, %v681
      %v914 = vpack.c.b16 %v684, %v682
      %v915 = vpack.c.b16 %v687, %v685
      %v916 = vpack.c.b16 %v688, %v686
      %v917 = vpack.c.b16 %v691, %v689
      %v918 = vpack.c.b16 %v692, %v690
      %v919 = vpack.c.b16 %v695, %v693
      %v920 = vpack.c.b16 %v696, %v694
      %v921 = vpack.c.b16 %v699, %v697
      %v922 = vpack.c.b16 %v700, %v698
      %v923 = vpack.c.b16 %v703, %v701
      %v924 = vpack.c.b16 %v704, %v702
      %v925 = vpack.c.b16 %v707, %v705
      %v926 = vpack.c.b16 %v708, %v706
      %v927 = vpack.c.b16 %v711, %v709
      %v928 = vpack.c.b16 %v712, %v710
      %v929 = vpack.c.b16 %v715, %v713
      %v930 = vpack.c.b16 %v716, %v714
      %v931 = vpack.c.b16 %v719, %v717
      %v932 = vpack.c.b16 %v720, %v718
      %v933 = vpack.c.b16 %v723, %v721
      %v934 = vpack.c.b16 %v724, %v722
      %v935 = vpack.c.b16 %v727, %v725
      %v936 = vpack.c.b16 %v728, %v726
      %v937 = vpack.c.b16 %v731, %v729
      %v938 = vpack.c.b16 %v732, %v730
      %v939 = vpack.c.b16 %v735, %v733
      %v940 = vpack.c.b16 %v736, %v734
      %v941 = vpack.c.b16 %v739, %v737
      %v942 = vpack.c.b16 %v740, %v738
      %v943 = vpack.c.b16 %v743, %v741
      %v944 = vpack.c.b16 %v744, %v742
      %v945 = vpack.c.b16 %v747, %v745
      %v946 = vpack.c.b16 %v748, %v746
      %v947 = vpack.c.b16 %v751, %v749
      %v948 = vpack.c.b16 %v752, %v750
      %v949 = vpack.c.b16 %v755, %v753
      %v950 = vpack.c.b16 %v756, %v754
      %v951 = vpack.c.b16 %v759, %v757
      %v952 = vpack.c.b16 %v760, %v758
      %v953 = vpack.c.b16 %v763, %v761
      %v954 = vpack.c.b16 %v764, %v762
      %v955 = vpack.c.b16 %v767, %v765
      %v956 = vpack.c.b16 %v768, %v766
      %v957 = vpack.c.b16 %v771, %v769
      %v958 = vpack.c.b16 %v772, %v770
      %v959 = vpack.c.b16 %v775, %v773
      %v960 = vpack.c.b16 %v776, %v774
      %v961 = vpack.c.b16 %v779, %v777
      %v962 = vpack.c.b16 %v780, %v778
      %v963 = vpack.c.b16 %v783, %v781
      %v964 = vpack.c.b16 %v784, %v782
      %v965 = vpack.c.b16 %v787, %v785
      %v966 = vpack.c.b16 %v788, %v786
      %v967 = vpack.c.b16 %v791, %v789
      %v968 = vpack.c.b16 %v792, %v790
      %v969 = vpack.c.b16 %v795, %v793
      %v970 = vpack.c.b16 %v796, %v794
      %v971 = vpack.c.b16 %v799, %v797
      %v972 = vpack.c.b16 %v800, %v798
      %v973 = vpack.c.b16 %v803, %v801
      %v974 = vpack.c.b16 %v804, %v802
      %v975 = vpack.c.b16 %v807, %v805
      %v976 = vpack.c.b16 %v808, %v806
      %v977 = vpack.c.b16 %v811, %v809
      %v978 = vpack.c.b16 %v812, %v810
      %v979 = vpack.c.b16 %v815, %v813
      %v980 = vpack.c.b16 %v816, %v814
      %v981 = vpack.c.b16 %v819, %v817
      %v982 = vpack.c.b16 %v820, %v818
      %v983 = vpack.c.b16 %v823, %v821
      %v984 = vpack.c.b16 %v824, %v822
      %v985 = vpack.c.b16 %v827, %v825
      %v986 = vpack.c.b16 %v828, %v826
      %v987 = vpack.c.b16 %v831, %v829
      %v988 = vpack.c.b16 %v832, %v830
      %v989 = vpack.c.b16 %v835, %v833
      %v990 = vpack.c.b16 %v836, %v834
      %v991 = vpack.c.b16 %v839, %v837
      %v992 = vpack.c.b16 %v840, %v838
      %v993 = vpack.c.b16 %v843, %v841
      %v994 = vpack.c.b16 %v844, %v842
      %v995 = vpack.c.b16 %v847, %v845
      %v996 = vpack.c.b16 %v848, %v846
      %v997 = vpack.c.b16 %v851, %v849
      %v998 = vpack.c.b16 %v852, %v850
      %v999 = vpack.c.b16 %v855, %v853
      %v1000 = vpack.c.b16 %v856, %v854
      %v1001 = vpack.c.b16 %v859, %v857
      %v1002 = vpack.c.b16 %v860, %v858
      %v1003 = vpack.c.b16 %v863, %v861
      %v1004 = vpack.c.b16 %v864, %v862
      %v1005 = vpack.c.b16 %v867, %v865
      %v1006 = vpack.c.b16 %v868, %v866
      %v1007 = vpack.c.b16 %v871, %v869
      %v1008 = vpack.c.b16 %v872, %v870
      %v1009 = vpack.c.b16 %v875, %v873
      %v1010 = vpack.c.b16 %v876, %v874
      %v1011 = vpack.c.b16 %v879, %v877
      %v1012 = vpack.c.b16 %v880, %v878
      %v1013 = vpack.c.b16 %v883, %v881
      %v1014 = vpack.c.b16 %v884, %v882
      %v1015 = vpack.c.b16 %v887, %v885
      %v1016 = vpack.c.b16 %v888, %v886
      %1145 = vmatpush.bf16.msra.mxu0 %v903
      %1146 = vmatpush.bf16.msra.mxu0 %v901
      %1147 = vmatpush.bf16.msra.mxu0 %v899
      %1148 = vmatpush.bf16.msra.mxu0 %v897
      %1149 = vmatpush.bf16.msra.mxu0 %v895
      %1150 = vmatpush.bf16.msra.mxu0 %v893
      %1151 = vmatpush.bf16.msra.mxu0 %v891
      %1152 = vmatpush.bf16.msra.mxu0 %v889
      %1153 = vmatmul.bf16.gmra.mxu0 %v441
      %v1154 = vpop.f32.mrf.mxu0
      %v1155 = vadd.f32 %v341, %v1154
      %v1156 = vpop.f32.mrf.mxu0
      %v1157 = vadd.f32 %v341, %v1156
      %1158 = vmatmul.bf16.gmra.mxu0 %v449
      %v1159 = vpop.f32.mrf.mxu0
      %v1160 = vadd.f32 %v341, %v1159
      %v1161 = vpop.f32.mrf.mxu0
      %v1162 = vadd.f32 %v341, %v1161
      %1163 = vmatmul.bf16.gmra.mxu0 %v457
      %v1164 = vpop.f32.mrf.mxu0
      %v1165 = vadd.f32 %v341, %v1164
      %v1166 = vpop.f32.mrf.mxu0
      %v1167 = vadd.f32 %v341, %v1166
      %1168 = vmatmul.bf16.gmra.mxu0 %v465
      %v1169 = vpop.f32.mrf.mxu0
      %v1170 = vadd.f32 %v341, %v1169
      %v1171 = vpop.f32.mrf.mxu0
      %v1172 = vadd.f32 %v341, %v1171
      %1173 = vdwg.mxu0
      %1174 = vmatpush.bf16.msra.mxu0 %v919
      %1175 = vmatpush.bf16.msra.mxu0 %v917
      %1176 = vmatpush.bf16.msra.mxu0 %v915
      %1177 = vmatpush.bf16.msra.mxu0 %v913
      %1178 = vmatpush.bf16.msra.mxu0 %v911
      %1179 = vmatpush.bf16.msra.mxu0 %v909
      %1180 = vmatpush.bf16.msra.mxu0 %v907
      %1181 = vmatpush.bf16.msra.mxu0 %v905
      %1182 = vmatmul.bf16.gmra.mxu0 %v442
      %v1183 = vpop.f32.mrf.mxu0
      %v1184 = vadd.f32 %v1155, %v1183
      %v1185 = vpop.f32.mrf.mxu0
      %v1186 = vadd.f32 %v1157, %v1185
      %1187 = vmatmul.bf16.gmra.mxu0 %v450
      %v1188 = vpop.f32.mrf.mxu0
      %v1189 = vadd.f32 %v1160, %v1188
      %v1190 = vpop.f32.mrf.mxu0
      %v1191 = vadd.f32 %v1162, %v1190
      %1192 = vmatmul.bf16.gmra.mxu0 %v458
      %v1193 = vpop.f32.mrf.mxu0
      %v1194 = vadd.f32 %v1165, %v1193
      %v1195 = vpop.f32.mrf.mxu0
      %v1196 = vadd.f32 %v1167, %v1195
      %1197 = vmatmul.bf16.gmra.mxu0 %v466
      %v1198 = vpop.f32.mrf.mxu0
      %v1199 = vadd.f32 %v1170, %v1198
      %v1200 = vpop.f32.mrf.mxu0
      %v1201 = vadd.f32 %v1172, %v1200
      %1202 = vdwg.mxu0
      %1203 = vmatpush.bf16.msra.mxu0 %v935
      %1204 = vmatpush.bf16.msra.mxu0 %v933
      %1205 = vmatpush.bf16.msra.mxu0 %v931
      %1206 = vmatpush.bf16.msra.mxu0 %v929
      %1207 = vmatpush.bf16.msra.mxu0 %v927
      %1208 = vmatpush.bf16.msra.mxu0 %v925
      %1209 = vmatpush.bf16.msra.mxu0 %v923
      %1210 = vmatpush.bf16.msra.mxu0 %v921
      %1211 = vmatmul.bf16.gmra.mxu0 %v443
      %v1212 = vpop.f32.mrf.mxu0
      %v1213 = vadd.f32 %v1184, %v1212
      %v1214 = vpop.f32.mrf.mxu0
      %v1215 = vadd.f32 %v1186, %v1214
      %1216 = vmatmul.bf16.gmra.mxu0 %v451
      %v1217 = vpop.f32.mrf.mxu0
      %v1218 = vadd.f32 %v1189, %v1217
      %v1219 = vpop.f32.mrf.mxu0
      %v1220 = vadd.f32 %v1191, %v1219
      %1221 = vmatmul.bf16.gmra.mxu0 %v459
      %v1222 = vpop.f32.mrf.mxu0
      %v1223 = vadd.f32 %v1194, %v1222
      %v1224 = vpop.f32.mrf.mxu0
      %v1225 = vadd.f32 %v1196, %v1224
      %1226 = vmatmul.bf16.gmra.mxu0 %v467
      %v1227 = vpop.f32.mrf.mxu0
      %v1228 = vadd.f32 %v1199, %v1227
      %v1229 = vpop.f32.mrf.mxu0
      %v1230 = vadd.f32 %v1201, %v1229
      %1231 = vdwg.mxu0
      %1232 = vmatpush.bf16.msra.mxu0 %v951
      %1233 = vmatpush.bf16.msra.mxu0 %v949
      %1234 = vmatpush.bf16.msra.mxu0 %v947
      %1235 = vmatpush.bf16.msra.mxu0 %v945
      %1236 = vmatpush.bf16.msra.mxu0 %v943
      %1237 = vmatpush.bf16.msra.mxu0 %v941
      %1238 = vmatpush.bf16.msra.mxu0 %v939
      %1239 = vmatpush.bf16.msra.mxu0 %v937
      %1240 = vmatmul.bf16.gmra.mxu0 %v444
      %v1241 = vpop.f32.mrf.mxu0
      %v1242 = vadd.f32 %v1213, %v1241
      %v1243 = vpop.f32.mrf.mxu0
      %v1244 = vadd.f32 %v1215, %v1243
      %1245 = vmatmul.bf16.gmra.mxu0 %v452
      %v1246 = vpop.f32.mrf.mxu0
      %v1247 = vadd.f32 %v1218, %v1246
      %v1248 = vpop.f32.mrf.mxu0
      %v1249 = vadd.f32 %v1220, %v1248
      %1250 = vmatmul.bf16.gmra.mxu0 %v460
      %v1251 = vpop.f32.mrf.mxu0
      %v1252 = vadd.f32 %v1223, %v1251
      %v1253 = vpop.f32.mrf.mxu0
      %v1254 = vadd.f32 %v1225, %v1253
      %1255 = vmatmul.bf16.gmra.mxu0 %v468
      %v1256 = vpop.f32.mrf.mxu0
      %v1257 = vadd.f32 %v1228, %v1256
      %v1258 = vpop.f32.mrf.mxu0
      %v1259 = vadd.f32 %v1230, %v1258
      %1260 = vdwg.mxu0
      %1261 = vmatpush.bf16.msra.mxu0 %v967
      %1262 = vmatpush.bf16.msra.mxu0 %v965
      %1263 = vmatpush.bf16.msra.mxu0 %v963
      %1264 = vmatpush.bf16.msra.mxu0 %v961
      %1265 = vmatpush.bf16.msra.mxu0 %v959
      %1266 = vmatpush.bf16.msra.mxu0 %v957
      %1267 = vmatpush.bf16.msra.mxu0 %v955
      %1268 = vmatpush.bf16.msra.mxu0 %v953
      %1269 = vmatmul.bf16.gmra.mxu0 %v445
      %v1270 = vpop.f32.mrf.mxu0
      %v1271 = vadd.f32 %v1242, %v1270
      %v1272 = vpop.f32.mrf.mxu0
      %v1273 = vadd.f32 %v1244, %v1272
      %1274 = vmatmul.bf16.gmra.mxu0 %v453
      %v1275 = vpop.f32.mrf.mxu0
      %v1276 = vadd.f32 %v1247, %v1275
      %v1277 = vpop.f32.mrf.mxu0
      %v1278 = vadd.f32 %v1249, %v1277
      %1279 = vmatmul.bf16.gmra.mxu0 %v461
      %v1280 = vpop.f32.mrf.mxu0
      %v1281 = vadd.f32 %v1252, %v1280
      %v1282 = vpop.f32.mrf.mxu0
      %v1283 = vadd.f32 %v1254, %v1282
      %1284 = vmatmul.bf16.gmra.mxu0 %v469
      %v1285 = vpop.f32.mrf.mxu0
      %v1286 = vadd.f32 %v1257, %v1285
      %v1287 = vpop.f32.mrf.mxu0
      %v1288 = vadd.f32 %v1259, %v1287
      %1289 = vdwg.mxu0
      %1290 = vmatpush.bf16.msra.mxu0 %v983
      %1291 = vmatpush.bf16.msra.mxu0 %v981
      %1292 = vmatpush.bf16.msra.mxu0 %v979
      %1293 = vmatpush.bf16.msra.mxu0 %v977
      %1294 = vmatpush.bf16.msra.mxu0 %v975
      %1295 = vmatpush.bf16.msra.mxu0 %v973
      %1296 = vmatpush.bf16.msra.mxu0 %v971
      %1297 = vmatpush.bf16.msra.mxu0 %v969
      %1298 = vmatmul.bf16.gmra.mxu0 %v446
      %v1299 = vpop.f32.mrf.mxu0
      %v1300 = vadd.f32 %v1271, %v1299
      %v1301 = vpop.f32.mrf.mxu0
      %v1302 = vadd.f32 %v1273, %v1301
      %1303 = vmatmul.bf16.gmra.mxu0 %v454
      %v1304 = vpop.f32.mrf.mxu0
      %v1305 = vadd.f32 %v1276, %v1304
      %v1306 = vpop.f32.mrf.mxu0
      %v1307 = vadd.f32 %v1278, %v1306
      %1308 = vmatmul.bf16.gmra.mxu0 %v462
      %v1309 = vpop.f32.mrf.mxu0
      %v1310 = vadd.f32 %v1281, %v1309
      %v1311 = vpop.f32.mrf.mxu0
      %v1312 = vadd.f32 %v1283, %v1311
      %1313 = vmatmul.bf16.gmra.mxu0 %v470
      %v1314 = vpop.f32.mrf.mxu0
      %v1315 = vadd.f32 %v1286, %v1314
      %v1316 = vpop.f32.mrf.mxu0
      %v1317 = vadd.f32 %v1288, %v1316
      %1318 = vdwg.mxu0
      %1319 = vmatpush.bf16.msra.mxu0 %v999
      %1320 = vmatpush.bf16.msra.mxu0 %v997
      %1321 = vmatpush.bf16.msra.mxu0 %v995
      %1322 = vmatpush.bf16.msra.mxu0 %v993
      %1323 = vmatpush.bf16.msra.mxu0 %v991
      %1324 = vmatpush.bf16.msra.mxu0 %v989
      %1325 = vmatpush.bf16.msra.mxu0 %v987
      %1326 = vmatpush.bf16.msra.mxu0 %v985
      %1327 = vmatmul.bf16.gmra.mxu0 %v447
      %v1328 = vpop.f32.mrf.mxu0
      %v1329 = vadd.f32 %v1300, %v1328
      %v1330 = vpop.f32.mrf.mxu0
      %v1331 = vadd.f32 %v1302, %v1330
      %1332 = vmatmul.bf16.gmra.mxu0 %v455
      %v1333 = vpop.f32.mrf.mxu0
      %v1334 = vadd.f32 %v1305, %v1333
      %v1335 = vpop.f32.mrf.mxu0
      %v1336 = vadd.f32 %v1307, %v1335
      %1337 = vmatmul.bf16.gmra.mxu0 %v463
      %v1338 = vpop.f32.mrf.mxu0
      %v1339 = vadd.f32 %v1310, %v1338
      %v1340 = vpop.f32.mrf.mxu0
      %v1341 = vadd.f32 %v1312, %v1340
      %1342 = vmatmul.bf16.gmra.mxu0 %v471
      %v1343 = vpop.f32.mrf.mxu0
      %v1344 = vadd.f32 %v1315, %v1343
      %v1345 = vpop.f32.mrf.mxu0
      %v1346 = vadd.f32 %v1317, %v1345
      %1347 = vdwg.mxu0
      %1348 = vmatpush.bf16.msra.mxu0 %v1015
      %1349 = vmatpush.bf16.msra.mxu0 %v1013
      %1350 = vmatpush.bf16.msra.mxu0 %v1011
      %1351 = vmatpush.bf16.msra.mxu0 %v1009
      %1352 = vmatpush.bf16.msra.mxu0 %v1007
      %1353 = vmatpush.bf16.msra.mxu0 %v1005
      %1354 = vmatpush.bf16.msra.mxu0 %v1003
      %1355 = vmatpush.bf16.msra.mxu0 %v1001
      %1356 = vmatmul.bf16.gmra.mxu0 %v448
      %v1357 = vpop.f32.mrf.mxu0
      %v1358 = vadd.f32 %v1329, %v1357
      %v1359 = vpop.f32.mrf.mxu0
      %v1360 = vadd.f32 %v1331, %v1359
      %1361 = vmatmul.bf16.gmra.mxu0 %v456
      %v1362 = vpop.f32.mrf.mxu0
      %v1363 = vadd.f32 %v1334, %v1362
      %v1364 = vpop.f32.mrf.mxu0
      %v1365 = vadd.f32 %v1336, %v1364
      %1366 = vmatmul.bf16.gmra.mxu0 %v464
      %v1367 = vpop.f32.mrf.mxu0
      %v1368 = vadd.f32 %v1339, %v1367
      %v1369 = vpop.f32.mrf.mxu0
      %v1370 = vadd.f32 %v1341, %v1369
      %1371 = vmatmul.bf16.gmra.mxu0 %v472
      %v1372 = vpop.f32.mrf.mxu0
      %v1373 = vadd.f32 %v1344, %v1372
      %v1374 = vpop.f32.mrf.mxu0
      %v1375 = vadd.f32 %v1346, %v1374
      %1376 = vdwg.mxu0
      %1377 = vmatpush.bf16.msra.mxu0 %v904
      %1378 = vmatpush.bf16.msra.mxu0 %v902
      %1379 = vmatpush.bf16.msra.mxu0 %v900
      %1380 = vmatpush.bf16.msra.mxu0 %v898
      %1381 = vmatpush.bf16.msra.mxu0 %v896
      %1382 = vmatpush.bf16.msra.mxu0 %v894
      %1383 = vmatpush.bf16.msra.mxu0 %v892
      %1384 = vmatpush.bf16.msra.mxu0 %v890
      %1385 = vmatmul.bf16.gmra.mxu0 %v441
      %v1386 = vpop.f32.mrf.mxu0
      %v1387 = vadd.f32 %v342, %v1386
      %v1388 = vpop.f32.mrf.mxu0
      %v1389 = vadd.f32 %v342, %v1388
      %1390 = vmatmul.bf16.gmra.mxu0 %v449
      %v1391 = vpop.f32.mrf.mxu0
      %v1392 = vadd.f32 %v342, %v1391
      %v1393 = vpop.f32.mrf.mxu0
      %v1394 = vadd.f32 %v342, %v1393
      %1395 = vmatmul.bf16.gmra.mxu0 %v457
      %v1396 = vpop.f32.mrf.mxu0
      %v1397 = vadd.f32 %v342, %v1396
      %v1398 = vpop.f32.mrf.mxu0
      %v1399 = vadd.f32 %v342, %v1398
      %1400 = vmatmul.bf16.gmra.mxu0 %v465
      %v1401 = vpop.f32.mrf.mxu0
      %v1402 = vadd.f32 %v342, %v1401
      %v1403 = vpop.f32.mrf.mxu0
      %v1404 = vadd.f32 %v342, %v1403
      %1405 = vdwg.mxu0
      %1406 = vmatpush.bf16.msra.mxu0 %v920
      %1407 = vmatpush.bf16.msra.mxu0 %v918
      %1408 = vmatpush.bf16.msra.mxu0 %v916
      %1409 = vmatpush.bf16.msra.mxu0 %v914
      %1410 = vmatpush.bf16.msra.mxu0 %v912
      %1411 = vmatpush.bf16.msra.mxu0 %v910
      %1412 = vmatpush.bf16.msra.mxu0 %v908
      %1413 = vmatpush.bf16.msra.mxu0 %v906
      %1414 = vmatmul.bf16.gmra.mxu0 %v442
      %v1415 = vpop.f32.mrf.mxu0
      %v1416 = vadd.f32 %v1387, %v1415
      %v1417 = vpop.f32.mrf.mxu0
      %v1418 = vadd.f32 %v1389, %v1417
      %1419 = vmatmul.bf16.gmra.mxu0 %v450
      %v1420 = vpop.f32.mrf.mxu0
      %v1421 = vadd.f32 %v1392, %v1420
      %v1422 = vpop.f32.mrf.mxu0
      %v1423 = vadd.f32 %v1394, %v1422
      %1424 = vmatmul.bf16.gmra.mxu0 %v458
      %v1425 = vpop.f32.mrf.mxu0
      %v1426 = vadd.f32 %v1397, %v1425
      %v1427 = vpop.f32.mrf.mxu0
      %v1428 = vadd.f32 %v1399, %v1427
      %1429 = vmatmul.bf16.gmra.mxu0 %v466
      %v1430 = vpop.f32.mrf.mxu0
      %v1431 = vadd.f32 %v1402, %v1430
      %v1432 = vpop.f32.mrf.mxu0
      %v1433 = vadd.f32 %v1404, %v1432
      %1434 = vdwg.mxu0
      %1435 = vmatpush.bf16.msra.mxu0 %v936
      %1436 = vmatpush.bf16.msra.mxu0 %v934
      %1437 = vmatpush.bf16.msra.mxu0 %v932
      %1438 = vmatpush.bf16.msra.mxu0 %v930
      %1439 = vmatpush.bf16.msra.mxu0 %v928
      %1440 = vmatpush.bf16.msra.mxu0 %v926
      %1441 = vmatpush.bf16.msra.mxu0 %v924
      %1442 = vmatpush.bf16.msra.mxu0 %v922
      %1443 = vmatmul.bf16.gmra.mxu0 %v443
      %v1444 = vpop.f32.mrf.mxu0
      %v1445 = vadd.f32 %v1416, %v1444
      %v1446 = vpop.f32.mrf.mxu0
      %v1447 = vadd.f32 %v1418, %v1446
      %1448 = vmatmul.bf16.gmra.mxu0 %v451
      %v1449 = vpop.f32.mrf.mxu0
      %v1450 = vadd.f32 %v1421, %v1449
      %v1451 = vpop.f32.mrf.mxu0
      %v1452 = vadd.f32 %v1423, %v1451
      %1453 = vmatmul.bf16.gmra.mxu0 %v459
      %v1454 = vpop.f32.mrf.mxu0
      %v1455 = vadd.f32 %v1426, %v1454
      %v1456 = vpop.f32.mrf.mxu0
      %v1457 = vadd.f32 %v1428, %v1456
      %1458 = vmatmul.bf16.gmra.mxu0 %v467
      %v1459 = vpop.f32.mrf.mxu0
      %v1460 = vadd.f32 %v1431, %v1459
      %v1461 = vpop.f32.mrf.mxu0
      %v1462 = vadd.f32 %v1433, %v1461
      %1463 = vdwg.mxu0
      %1464 = vmatpush.bf16.msra.mxu0 %v952
      %1465 = vmatpush.bf16.msra.mxu0 %v950
      %1466 = vmatpush.bf16.msra.mxu0 %v948
      %1467 = vmatpush.bf16.msra.mxu0 %v946
      %1468 = vmatpush.bf16.msra.mxu0 %v944
      %1469 = vmatpush.bf16.msra.mxu0 %v942
      %1470 = vmatpush.bf16.msra.mxu0 %v940
      %1471 = vmatpush.bf16.msra.mxu0 %v938
      %1472 = vmatmul.bf16.gmra.mxu0 %v444
      %v1473 = vpop.f32.mrf.mxu0
      %v1474 = vadd.f32 %v1445, %v1473
      %v1475 = vpop.f32.mrf.mxu0
      %v1476 = vadd.f32 %v1447, %v1475
      %1477 = vmatmul.bf16.gmra.mxu0 %v452
      %v1478 = vpop.f32.mrf.mxu0
      %v1479 = vadd.f32 %v1450, %v1478
      %v1480 = vpop.f32.mrf.mxu0
      %v1481 = vadd.f32 %v1452, %v1480
      %1482 = vmatmul.bf16.gmra.mxu0 %v460
      %v1483 = vpop.f32.mrf.mxu0
      %v1484 = vadd.f32 %v1455, %v1483
      %v1485 = vpop.f32.mrf.mxu0
      %v1486 = vadd.f32 %v1457, %v1485
      %1487 = vmatmul.bf16.gmra.mxu0 %v468
      %v1488 = vpop.f32.mrf.mxu0
      %v1489 = vadd.f32 %v1460, %v1488
      %v1490 = vpop.f32.mrf.mxu0
      %v1491 = vadd.f32 %v1462, %v1490
      %1492 = vdwg.mxu0
      %1493 = vmatpush.bf16.msra.mxu0 %v968
      %1494 = vmatpush.bf16.msra.mxu0 %v966
      %1495 = vmatpush.bf16.msra.mxu0 %v964
      %1496 = vmatpush.bf16.msra.mxu0 %v962
      %1497 = vmatpush.bf16.msra.mxu0 %v960
      %1498 = vmatpush.bf16.msra.mxu0 %v958
      %1499 = vmatpush.bf16.msra.mxu0 %v956
      %1500 = vmatpush.bf16.msra.mxu0 %v954
      %1501 = vmatmul.bf16.gmra.mxu0 %v445
      %v1502 = vpop.f32.mrf.mxu0
      %v1503 = vadd.f32 %v1474, %v1502
      %v1504 = vpop.f32.mrf.mxu0
      %v1505 = vadd.f32 %v1476, %v1504
      %1506 = vmatmul.bf16.gmra.mxu0 %v453
      %v1507 = vpop.f32.mrf.mxu0
      %v1508 = vadd.f32 %v1479, %v1507
      %v1509 = vpop.f32.mrf.mxu0
      %v1510 = vadd.f32 %v1481, %v1509
      %1511 = vmatmul.bf16.gmra.mxu0 %v461
      %v1512 = vpop.f32.mrf.mxu0
      %v1513 = vadd.f32 %v1484, %v1512
      %v1514 = vpop.f32.mrf.mxu0
      %v1515 = vadd.f32 %v1486, %v1514
      %1516 = vmatmul.bf16.gmra.mxu0 %v469
      %v1517 = vpop.f32.mrf.mxu0
      %v1518 = vadd.f32 %v1489, %v1517
      %v1519 = vpop.f32.mrf.mxu0
      %v1520 = vadd.f32 %v1491, %v1519
      %1521 = vdwg.mxu0
      %1522 = vmatpush.bf16.msra.mxu0 %v984
      %1523 = vmatpush.bf16.msra.mxu0 %v982
      %1524 = vmatpush.bf16.msra.mxu0 %v980
      %1525 = vmatpush.bf16.msra.mxu0 %v978
      %1526 = vmatpush.bf16.msra.mxu0 %v976
      %1527 = vmatpush.bf16.msra.mxu0 %v974
      %1528 = vmatpush.bf16.msra.mxu0 %v972
      %1529 = vmatpush.bf16.msra.mxu0 %v970
      %1530 = vmatmul.bf16.gmra.mxu0 %v446
      %v1531 = vpop.f32.mrf.mxu0
      %v1532 = vadd.f32 %v1503, %v1531
      %v1533 = vpop.f32.mrf.mxu0
      %v1534 = vadd.f32 %v1505, %v1533
      %1535 = vmatmul.bf16.gmra.mxu0 %v454
      %v1536 = vpop.f32.mrf.mxu0
      %v1537 = vadd.f32 %v1508, %v1536
      %v1538 = vpop.f32.mrf.mxu0
      %v1539 = vadd.f32 %v1510, %v1538
      %1540 = vmatmul.bf16.gmra.mxu0 %v462
      %v1541 = vpop.f32.mrf.mxu0
      %v1542 = vadd.f32 %v1513, %v1541
      %v1543 = vpop.f32.mrf.mxu0
      %v1544 = vadd.f32 %v1515, %v1543
      %1545 = vmatmul.bf16.gmra.mxu0 %v470
      %v1546 = vpop.f32.mrf.mxu0
      %v1547 = vadd.f32 %v1518, %v1546
      %v1548 = vpop.f32.mrf.mxu0
      %v1549 = vadd.f32 %v1520, %v1548
      %1550 = vdwg.mxu0
      %1551 = vmatpush.bf16.msra.mxu0 %v1000
      %1552 = vmatpush.bf16.msra.mxu0 %v998
      %1553 = vmatpush.bf16.msra.mxu0 %v996
      %1554 = vmatpush.bf16.msra.mxu0 %v994
      %1555 = vmatpush.bf16.msra.mxu0 %v992
      %1556 = vmatpush.bf16.msra.mxu0 %v990
      %1557 = vmatpush.bf16.msra.mxu0 %v988
      %1558 = vmatpush.bf16.msra.mxu0 %v986
      %1559 = vmatmul.bf16.gmra.mxu0 %v447
      %v1560 = vpop.f32.mrf.mxu0
      %v1561 = vadd.f32 %v1532, %v1560
      %v1562 = vpop.f32.mrf.mxu0
      %v1563 = vadd.f32 %v1534, %v1562
      %1564 = vmatmul.bf16.gmra.mxu0 %v455
      %v1565 = vpop.f32.mrf.mxu0
      %v1566 = vadd.f32 %v1537, %v1565
      %v1567 = vpop.f32.mrf.mxu0
      %v1568 = vadd.f32 %v1539, %v1567
      %1569 = vmatmul.bf16.gmra.mxu0 %v463
      %v1570 = vpop.f32.mrf.mxu0
      %v1571 = vadd.f32 %v1542, %v1570
      %v1572 = vpop.f32.mrf.mxu0
      %v1573 = vadd.f32 %v1544, %v1572
      %1574 = vmatmul.bf16.gmra.mxu0 %v471
      %v1575 = vpop.f32.mrf.mxu0
      %v1576 = vadd.f32 %v1547, %v1575
      %v1577 = vpop.f32.mrf.mxu0
      %v1578 = vadd.f32 %v1549, %v1577
      %1579 = vdwg.mxu0
      %1580 = vmatpush.bf16.msra.mxu0 %v1016
      %1581 = vmatpush.bf16.msra.mxu0 %v1014
      %1582 = vmatpush.bf16.msra.mxu0 %v1012
      %1583 = vmatpush.bf16.msra.mxu0 %v1010
      %1584 = vmatpush.bf16.msra.mxu0 %v1008
      %1585 = vmatpush.bf16.msra.mxu0 %v1006
      %1586 = vmatpush.bf16.msra.mxu0 %v1004
      %1587 = vmatpush.bf16.msra.mxu0 %v1002
      %1588 = vmatmul.bf16.gmra.mxu0 %v448
      %v1589 = vpop.f32.mrf.mxu0
      %v1590 = vadd.f32 %v1561, %v1589
      %v1591 = vpop.f32.mrf.mxu0
      %v1592 = vadd.f32 %v1563, %v1591
      %1593 = vmatmul.bf16.gmra.mxu0 %v456
      %v1594 = vpop.f32.mrf.mxu0
      %v1595 = vadd.f32 %v1566, %v1594
      %v1596 = vpop.f32.mrf.mxu0
      %v1597 = vadd.f32 %v1568, %v1596
      %1598 = vmatmul.bf16.gmra.mxu0 %v464
      %v1599 = vpop.f32.mrf.mxu0
      %v1600 = vadd.f32 %v1571, %v1599
      %v1601 = vpop.f32.mrf.mxu0
      %v1602 = vadd.f32 %v1573, %v1601
      %1603 = vmatmul.bf16.gmra.mxu0 %v472
      %v1604 = vpop.f32.mrf.mxu0
      %v1605 = vadd.f32 %v1576, %v1604
      %v1606 = vpop.f32.mrf.mxu0
      %v1607 = vadd.f32 %v1578, %v1606
      %1608 = vdwg.mxu0
      %vm1609 = vcmp.gt.f32.partialorder %v1358, 0.0
      %vm1610 = vcmp.gt.f32.partialorder %v1590, 0.0
      %vm1611 = vcmp.gt.f32.partialorder %v1360, 0.0
      %vm1612 = vcmp.gt.f32.partialorder %v1592, 0.0
      %vm1613 = vcmp.gt.f32.partialorder %v1363, 0.0
      %vm1614 = vcmp.gt.f32.partialorder %v1595, 0.0
      %vm1615 = vcmp.gt.f32.partialorder %v1365, 0.0
      %vm1616 = vcmp.gt.f32.partialorder %v1597, 0.0
      %vm1617 = vcmp.gt.f32.partialorder %v1368, 0.0
      %vm1618 = vcmp.gt.f32.partialorder %v1600, 0.0
      %vm1619 = vcmp.gt.f32.partialorder %v1370, 0.0
      %vm1620 = vcmp.gt.f32.partialorder %v1602, 0.0
      %vm1621 = vcmp.gt.f32.partialorder %v1373, 0.0
      %vm1622 = vcmp.gt.f32.partialorder %v1605, 0.0
      %vm1623 = vcmp.gt.f32.partialorder %v1375, 0.0
      %vm1624 = vcmp.gt.f32.partialorder %v1607, 0.0
      %v1625 = vmul.f32 %v1358, 0.2
      %v1626 = vmul.f32 %v1590, 0.2
      %v1627 = vmul.f32 %v1360, 0.2
      %v1628 = vmul.f32 %v1592, 0.2
      %v1629 = vmul.f32 %v1363, 0.2
      %v1630 = vmul.f32 %v1595, 0.2
      %v1631 = vmul.f32 %v1365, 0.2
      %v1632 = vmul.f32 %v1597, 0.2
      %v1633 = vmul.f32 %v1368, 0.2
      %v1634 = vmul.f32 %v1600, 0.2
      %v1635 = vmul.f32 %v1370, 0.2
      %v1636 = vmul.f32 %v1602, 0.2
      %v1637 = vmul.f32 %v1373, 0.2
      %v1638 = vmul.f32 %v1605, 0.2
      %v1639 = vmul.f32 %v1375, 0.2
      %v1640 = vmul.f32 %v1607, 0.2
      %v1641 = vsel %vm1609, %v1358, %v1625
      %v1642 = vsel %vm1610, %v1590, %v1626
      %v1643 = vsel %vm1611, %v1360, %v1627
      %v1644 = vsel %vm1612, %v1592, %v1628
      %v1645 = vsel %vm1613, %v1363, %v1629
      %v1646 = vsel %vm1614, %v1595, %v1630
      %v1647 = vsel %vm1615, %v1365, %v1631
      %v1648 = vsel %vm1616, %v1597, %v1632
      %v1649 = vsel %vm1617, %v1368, %v1633
      %v1650 = vsel %vm1618, %v1600, %v1634
      %v1651 = vsel %vm1619, %v1370, %v1635
      %v1652 = vsel %vm1620, %v1602, %v1636
      %v1653 = vsel %vm1621, %v1373, %v1637
      %v1654 = vsel %vm1622, %v1605, %v1638
      %v1655 = vsel %vm1623, %v1375, %v1639
      %v1656 = vsel %vm1624, %v1607, %v1640
      %v1657 = vpack.c.bf16 %v1642, %v1641
      %v1658 = vpack.c.bf16 %v1644, %v1643
      %v1659 = vpack.c.bf16 %v1646, %v1645
      %v1660 = vpack.c.bf16 %v1648, %v1647
      %v1661 = vpack.c.bf16 %v1650, %v1649
      %v1662 = vpack.c.bf16 %v1652, %v1651
      %v1663 = vpack.c.bf16 %v1654, %v1653
      %v1664 = vpack.c.bf16 %v1656, %v1655
      %vm1665 = vcmask 1043456
      %vm1666 = vcmask 523268
      %vm1667 = vmor %vm1666, %vm1665
      %1668 = vst.msk [vmem:[%s177] sm:$0xff] %vm1667, %v1657
      %1669 = vst.msk [vmem:[%s177 + $0x8] sm:$0xff] %vm1667, %v1658
      %1670 = vst.msk [vmem:[%s177 + $0x10] sm:$0xff] %vm1667, %v1659
      %1671 = vst.msk [vmem:[%s177 + $0x18] sm:$0xff] %vm1667, %v1660
      %1672 = vst.msk [vmem:[%s177 + $0x20] sm:$0xff] %vm1667, %v1661
      %1673 = vst.msk [vmem:[%s177 + $0x28] sm:$0xff] %vm1667, %v1662
      %1674 = vst.msk [vmem:[%s177 + $0x30] sm:$0xff] %vm1667, %v1663
      %1675 = vst.msk [vmem:[%s177 + $0x38] sm:$0xff] %vm1667, %v1664
      %s1676 = smul.u32 8, %s14
      %p1677 = scmp.lt.s32.totalorder %s1676, 15
      %s1678 = scalar_select %p1677, %s1676, 15
      %s1679 = smul.addr %s1678, 2
      %s1680 = smul.addr %s1679, 4
      %s1681 = scalar_lea.vmem %s3, %s1680
      // Predicated region
      $region33: #{second_model_forward.7} parent=31 // pred_check
        %p1682 = pneg %p100
      $region34: #{second_model_forward.7} parent=31 // pred_check_branch
        %1684 = sbr.rel (%p1682) target = $region36
      $region35: #{second_model_forward.7} parent=31 // pred_region
        %s1685 = smul.u32 8, %s14
      $region36: #{second_model_forward.7} parent=31 // pred_fallthru
        _
    $region32: #{second_model_forward.7} parent=5 // pred_fallthru
      _
    %p1686 = scmp.le.s32.totalorder 2, %s9
    // Predicated region
    $region37: #{second_model_forward.7} parent=5 // pred_check
      %p1687 = pneg %p1686
    $region38: #{second_model_forward.7} parent=5 // pred_check_branch
      %1689 = sbr.rel (%p1687) target = $region40
    $region39: #{second_model_forward.7} parent=5 // pred_region
      %s1690 = ssub.s32 %s9, 2
      // Predicated region
      $region41: #{second_model_forward.7} parent=39 // pred_check
        %p1691 = pneg %p106
      $region42: #{second_model_forward.7} parent=39 // pred_check_branch
        %1693 = sbr.rel (%p1691) target = $region44
      $region43: #{second_model_forward.7} parent=39 // pred_region
        %s1694 = smul.u32 8, %s15
        %p1695 = scmp.lt.s32.totalorder %s1694, 15
        %s1696 = scalar_select %p1695, %s1694, 15
        %s1697 = smul.addr %s1696, 2
        %s1698 = smul.addr %s1697, 4
        %s1699 = scalar_lea.vmem %s3, %s1698
      $region44: #{second_model_forward.7} parent=39 // pred_fallthru
        _
    $region40: #{second_model_forward.7} parent=5 // pred_fallthru
      _
  $region6: #{second_model_forward.7} parent=0 // loop_footer
    %s13 = sadd.s32 1, %s9
  $region7: #{second_model_forward.7} parent=0 // loop_footer_branch
    %8 = sbr.rel target = $region3
  $region8: #{second_model_forward.7} parent=0 // loop_exit
    _

// kernel: second_model_forward.8
$region0: #{second_model_forward.8}
  #allocation0 [shape = 'u32[]', space=smem, size = 0x4, offset = 0x4, fixed_abs, tag = 'smem constant byte address 0x4 - core index']
  #allocation1 [shape = 'u32[72,128]{1,0:T(1,128)}', space=vmem, size = 0x9000, scoped, tag = 'internal scratch']
  %s0 = inlined_call_operand.vmem [shape: bf16[32,1024], index: 0, kind: input, shape index: {}]
  %s1 = inlined_call_operand.vmem [shape: bf16[1024,128], index: 1, kind: input, shape index: {}]
  %s2 = inlined_call_operand.vmem [shape: f32[1,128], index: 2, kind: input, shape index: {}]
  %s3 = inlined_call_operand.vmem [shape: bf16[32,128], index: 3, kind: output, shape index: {}]
  %s4 = sld [smem:[#allocation0]]
  $region22: #{second_model_forward.8} parent=0
    _
  %s6 = ssub.s32 1, %s4
  %s7 = scalar_select 0, %s6, %s4
  // Predicated region
  $region2: #{second_model_forward.8} parent=0 // pred_check
    _
  $region3: #{second_model_forward.8} parent=0 // pred_check_branch
    %9 = sbr.rel (0) target = $region5
  $region4: #{second_model_forward.8} parent=0 // pred_region
    _
  $region5: #{second_model_forward.8} parent=0 // pred_fallthru
    _
  // Predicated region
  $region6: #{second_model_forward.8} parent=0 // pred_check
    _
  $region7: #{second_model_forward.8} parent=0 // pred_check_branch
    %11 = sbr.rel (0) target = $region9
  $region8: #{second_model_forward.8} parent=0 // pred_region
    _
  $region9: #{second_model_forward.8} parent=0 // pred_fallthru
    _
  // Predicated region
  $region10: #{second_model_forward.8} parent=0 // pred_check
    _
  $region11: #{second_model_forward.8} parent=0 // pred_check_branch
    %13 = sbr.rel (0) target = $region13
  $region12: #{second_model_forward.8} parent=0 // pred_region
    _
  $region13: #{second_model_forward.8} parent=0 // pred_fallthru
    _
  %v14 = vld [vmem:[%s0] sm:$0xff]
  %v15 = vld [vmem:[%s0 + $0x8] sm:$0xff]
  %v16 = vld [vmem:[%s0 + $0x10] sm:$0xff]
  %v17 = vld [vmem:[%s0 + $0x18] sm:$0xff]
  %v18 = vld [vmem:[%s0 + $0x20] sm:$0xff]
  %v19 = vld [vmem:[%s0 + $0x28] sm:$0xff]
  %v20 = vld [vmem:[%s0 + $0x30] sm:$0xff]
  %v21 = vld [vmem:[%s0 + $0x38] sm:$0xff]
  %v22 = vld [vmem:[%s0 + $0x40] sm:$0xff]
  %v23 = vld [vmem:[%s0 + $0x48] sm:$0xff]
  %v24 = vld [vmem:[%s0 + $0x50] sm:$0xff]
  %v25 = vld [vmem:[%s0 + $0x58] sm:$0xff]
  %v26 = vld [vmem:[%s0 + $0x60] sm:$0xff]
  %v27 = vld [vmem:[%s0 + $0x68] sm:$0xff]
  %v28 = vld [vmem:[%s0 + $0x70] sm:$0xff]
  %v29 = vld [vmem:[%s0 + $0x78] sm:$0xff]
  %v30 = vld [vmem:[%s1] sm:$0xf]
  %v31 = vld [vmem:[%s1 + $0x4] sm:$0xf]
  %v32 = vld [vmem:[%s1 + $0x8] sm:$0xf]
  %v33 = vld [vmem:[%s1 + $0xc] sm:$0xf]
  %v34 = vld [vmem:[%s1 + $0x10] sm:$0xf]
  %v35 = vld [vmem:[%s1 + $0x14] sm:$0xf]
  %v36 = vld [vmem:[%s1 + $0x18] sm:$0xf]
  %v37 = vld [vmem:[%s1 + $0x1c] sm:$0xf]
  %v38 = vld [vmem:[%s1 + $0x20] sm:$0xf]
  %v39 = vld [vmem:[%s1 + $0x24] sm:$0xf]
  %v40 = vld [vmem:[%s1 + $0x28] sm:$0xf]
  %v41 = vld [vmem:[%s1 + $0x2c] sm:$0xf]
  %v42 = vld [vmem:[%s1 + $0x30] sm:$0xf]
  %v43 = vld [vmem:[%s1 + $0x34] sm:$0xf]
  %v44 = vld [vmem:[%s1 + $0x38] sm:$0xf]
  %v45 = vld [vmem:[%s1 + $0x3c] sm:$0xf]
  %v46 = vld [vmem:[%s1 + $0x40] sm:$0xf]
  %v47 = vld [vmem:[%s1 + $0x44] sm:$0xf]
  %v48 = vld [vmem:[%s1 + $0x48] sm:$0xf]
  %v49 = vld [vmem:[%s1 + $0x4c] sm:$0xf]
  %v50 = vld [vmem:[%s1 + $0x50] sm:$0xf]
  %v51 = vld [vmem:[%s1 + $0x54] sm:$0xf]
  %v52 = vld [vmem:[%s1 + $0x58] sm:$0xf]
  %v53 = vld [vmem:[%s1 + $0x5c] sm:$0xf]
  %v54 = vld [vmem:[%s1 + $0x60] sm:$0xf]
  %v55 = vld [vmem:[%s1 + $0x64] sm:$0xf]
  %v56 = vld [vmem:[%s1 + $0x68] sm:$0xf]
  %v57 = vld [vmem:[%s1 + $0x6c] sm:$0xf]
  %v58 = vld [vmem:[%s1 + $0x70] sm:$0xf]
  %v59 = vld [vmem:[%s1 + $0x74] sm:$0xf]
  %v60 = vld [vmem:[%s1 + $0x78] sm:$0xf]
  %v61 = vld [vmem:[%s1 + $0x7c] sm:$0xf]
  %v62 = vld [vmem:[%s1 + $0x80] sm:$0xf]
  %v63 = vld [vmem:[%s1 + $0x84] sm:$0xf]
  %v64 = vld [vmem:[%s1 + $0x88] sm:$0xf]
  %v65 = vld [vmem:[%s1 + $0x8c] sm:$0xf]
  %v66 = vld [vmem:[%s1 + $0x90] sm:$0xf]
  %v67 = vld [vmem:[%s1 + $0x94] sm:$0xf]
  %v68 = vld [vmem:[%s1 + $0x98] sm:$0xf]
  %v69 = vld [vmem:[%s1 + $0x9c] sm:$0xf]
  %v70 = vld [vmem:[%s1 + $0xa0] sm:$0xf]
  %v71 = vld [vmem:[%s1 + $0xa4] sm:$0xf]
  %v72 = vld [vmem:[%s1 + $0xa8] sm:$0xf]
  %v73 = vld [vmem:[%s1 + $0xac] sm:$0xf]
  %v74 = vld [vmem:[%s1 + $0xb0] sm:$0xf]
  %v75 = vld [vmem:[%s1 + $0xb4] sm:$0xf]
  %v76 = vld [vmem:[%s1 + $0xb8] sm:$0xf]
  %v77 = vld [vmem:[%s1 + $0xbc] sm:$0xf]
  %v78 = vld [vmem:[%s1 + $0xc0] sm:$0xf]
  %v79 = vld [vmem:[%s1 + $0xc4] sm:$0xf]
  %v80 = vld [vmem:[%s1 + $0xc8] sm:$0xf]
  %v81 = vld [vmem:[%s1 + $0xcc] sm:$0xf]
  %v82 = vld [vmem:[%s1 + $0xd0] sm:$0xf]
  %v83 = vld [vmem:[%s1 + $0xd4] sm:$0xf]
  %v84 = vld [vmem:[%s1 + $0xd8] sm:$0xf]
  %v85 = vld [vmem:[%s1 + $0xdc] sm:$0xf]
  %v86 = vld [vmem:[%s1 + $0xe0] sm:$0xf]
  %v87 = vld [vmem:[%s1 + $0xe4] sm:$0xf]
  %v88 = vld [vmem:[%s1 + $0xe8] sm:$0xf]
  %v89 = vld [vmem:[%s1 + $0xec] sm:$0xf]
  %v90 = vld [vmem:[%s1 + $0xf0] sm:$0xf]
  %v91 = vld [vmem:[%s1 + $0xf4] sm:$0xf]
  %v92 = vld [vmem:[%s1 + $0xf8] sm:$0xf]
  %v93 = vld [vmem:[%s1 + $0xfc] sm:$0xf]
  %v94 = vld [vmem:[%s1 + $0x100] sm:$0xf]
  %v95 = vld [vmem:[%s1 + $0x104] sm:$0xf]
  %v96 = vld [vmem:[%s1 + $0x108] sm:$0xf]
  %v97 = vld [vmem:[%s1 + $0x10c] sm:$0xf]
  %v98 = vld [vmem:[%s1 + $0x110] sm:$0xf]
  %v99 = vld [vmem:[%s1 + $0x114] sm:$0xf]
  %v100 = vld [vmem:[%s1 + $0x118] sm:$0xf]
  %v101 = vld [vmem:[%s1 + $0x11c] sm:$0xf]
  %v102 = vld [vmem:[%s1 + $0x120] sm:$0xf]
  %v103 = vld [vmem:[%s1 + $0x124] sm:$0xf]
  %v104 = vld [vmem:[%s1 + $0x128] sm:$0xf]
  %v105 = vld [vmem:[%s1 + $0x12c] sm:$0xf]
  %v106 = vld [vmem:[%s1 + $0x130] sm:$0xf]
  %v107 = vld [vmem:[%s1 + $0x134] sm:$0xf]
  %v108 = vld [vmem:[%s1 + $0x138] sm:$0xf]
  %v109 = vld [vmem:[%s1 + $0x13c] sm:$0xf]
  %v110 = vld [vmem:[%s1 + $0x140] sm:$0xf]
  %v111 = vld [vmem:[%s1 + $0x144] sm:$0xf]
  %v112 = vld [vmem:[%s1 + $0x148] sm:$0xf]
  %v113 = vld [vmem:[%s1 + $0x14c] sm:$0xf]
  %v114 = vld [vmem:[%s1 + $0x150] sm:$0xf]
  %v115 = vld [vmem:[%s1 + $0x154] sm:$0xf]
  %v116 = vld [vmem:[%s1 + $0x158] sm:$0xf]
  %v117 = vld [vmem:[%s1 + $0x15c] sm:$0xf]
  %v118 = vld [vmem:[%s1 + $0x160] sm:$0xf]
  %v119 = vld [vmem:[%s1 + $0x164] sm:$0xf]
  %v120 = vld [vmem:[%s1 + $0x168] sm:$0xf]
  %v121 = vld [vmem:[%s1 + $0x16c] sm:$0xf]
  %v122 = vld [vmem:[%s1 + $0x170] sm:$0xf]
  %v123 = vld [vmem:[%s1 + $0x174] sm:$0xf]
  %v124 = vld [vmem:[%s1 + $0x178] sm:$0xf]
  %v125 = vld [vmem:[%s1 + $0x17c] sm:$0xf]
  %v126 = vld [vmem:[%s1 + $0x180] sm:$0xf]
  %v127 = vld [vmem:[%s1 + $0x184] sm:$0xf]
  %v128 = vld [vmem:[%s1 + $0x188] sm:$0xf]
  %v129 = vld [vmem:[%s1 + $0x18c] sm:$0xf]
  %v130 = vld [vmem:[%s1 + $0x190] sm:$0xf]
  %v131 = vld [vmem:[%s1 + $0x194] sm:$0xf]
  %v132 = vld [vmem:[%s1 + $0x198] sm:$0xf]
  %v133 = vld [vmem:[%s1 + $0x19c] sm:$0xf]
  %v134 = vld [vmem:[%s1 + $0x1a0] sm:$0xf]
  %v135 = vld [vmem:[%s1 + $0x1a4] sm:$0xf]
  %v136 = vld [vmem:[%s1 + $0x1a8] sm:$0xf]
  %v137 = vld [vmem:[%s1 + $0x1ac] sm:$0xf]
  %v138 = vld [vmem:[%s1 + $0x1b0] sm:$0xf]
  %v139 = vld [vmem:[%s1 + $0x1b4] sm:$0xf]
  %v140 = vld [vmem:[%s1 + $0x1b8] sm:$0xf]
  %v141 = vld [vmem:[%s1 + $0x1bc] sm:$0xf]
  %v142 = vld [vmem:[%s1 + $0x1c0] sm:$0xf]
  %v143 = vld [vmem:[%s1 + $0x1c4] sm:$0xf]
  %v144 = vld [vmem:[%s1 + $0x1c8] sm:$0xf]
  %v145 = vld [vmem:[%s1 + $0x1cc] sm:$0xf]
  %v146 = vld [vmem:[%s1 + $0x1d0] sm:$0xf]
  %v147 = vld [vmem:[%s1 + $0x1d4] sm:$0xf]
  %v148 = vld [vmem:[%s1 + $0x1d8] sm:$0xf]
  %v149 = vld [vmem:[%s1 + $0x1dc] sm:$0xf]
  %v150 = vld [vmem:[%s1 + $0x1e0] sm:$0xf]
  %v151 = vld [vmem:[%s1 + $0x1e4] sm:$0xf]
  %v152 = vld [vmem:[%s1 + $0x1e8] sm:$0xf]
  %v153 = vld [vmem:[%s1 + $0x1ec] sm:$0xf]
  %v154 = vld [vmem:[%s1 + $0x1f0] sm:$0xf]
  %v155 = vld [vmem:[%s1 + $0x1f4] sm:$0xf]
  %v156 = vld [vmem:[%s1 + $0x1f8] sm:$0xf]
  %v157 = vld [vmem:[%s1 + $0x1fc] sm:$0xf]
  %v158 = vld [vmem:[%s2] sm:$0x1]
  %v160 = vperm.slane %v158, 0
  %v178 = vunpack.c.l.b16 %v14
  %v179 = vunpack.c.h.b16 %v14
  %v180 = vunpack.c.l.b16 %v15
  %v181 = vunpack.c.h.b16 %v15
  %v182 = vunpack.c.l.b16 %v16
  %v183 = vunpack.c.h.b16 %v16
  %v184 = vunpack.c.l.b16 %v17
  %v185 = vunpack.c.h.b16 %v17
  %v186 = vunpack.c.l.b16 %v18
  %v187 = vunpack.c.h.b16 %v18
  %v188 = vunpack.c.l.b16 %v19
  %v189 = vunpack.c.h.b16 %v19
  %v190 = vunpack.c.l.b16 %v20
  %v191 = vunpack.c.h.b16 %v20
  %v192 = vunpack.c.l.b16 %v21
  %v193 = vunpack.c.h.b16 %v21
  %v194 = vunpack.c.l.b16 %v22
  %v195 = vunpack.c.h.b16 %v22
  %v196 = vunpack.c.l.b16 %v23
  %v197 = vunpack.c.h.b16 %v23
  %v198 = vunpack.c.l.b16 %v24
  %v199 = vunpack.c.h.b16 %v24
  %v200 = vunpack.c.l.b16 %v25
  %v201 = vunpack.c.h.b16 %v25
  %v202 = vunpack.c.l.b16 %v26
  %v203 = vunpack.c.h.b16 %v26
  %v204 = vunpack.c.l.b16 %v27
  %v205 = vunpack.c.h.b16 %v27
  %v206 = vunpack.c.l.b16 %v28
  %v207 = vunpack.c.h.b16 %v28
  %v208 = vunpack.c.l.b16 %v29
  %v209 = vunpack.c.h.b16 %v29
  %v210 = vpack.c.b16 %v186, %v178
  %v211 = vpack.c.b16 %v187, %v179
  %v212 = vpack.c.b16 %v188, %v180
  %v213 = vpack.c.b16 %v189, %v181
  %v214 = vpack.c.b16 %v190, %v182
  %v215 = vpack.c.b16 %v191, %v183
  %v216 = vpack.c.b16 %v192, %v184
  %v217 = vpack.c.b16 %v193, %v185
  %v218 = vpack.c.b16 %v202, %v194
  %v219 = vpack.c.b16 %v203, %v195
  %v220 = vpack.c.b16 %v204, %v196
  %v221 = vpack.c.b16 %v205, %v197
  %v222 = vpack.c.b16 %v206, %v198
  %v223 = vpack.c.b16 %v207, %v199
  %v224 = vpack.c.b16 %v208, %v200
  %v225 = vpack.c.b16 %v209, %v201
  %v370 = vunpack.c.l.b16 %v30
  %v371 = vunpack.c.l.b16 %v31
  %v372 = vunpack.c.l.b16 %v32
  %v373 = vunpack.c.l.b16 %v33
  %v374 = vunpack.c.l.b16 %v34
  %v375 = vunpack.c.l.b16 %v35
  %v376 = vunpack.c.l.b16 %v36
  %v377 = vunpack.c.l.b16 %v37
  %v378 = vunpack.c.l.b16 %v38
  %v379 = vunpack.c.l.b16 %v39
  %v380 = vunpack.c.l.b16 %v40
  %v381 = vunpack.c.l.b16 %v41
  %v382 = vunpack.c.l.b16 %v42
  %v383 = vunpack.c.l.b16 %v43
  %v384 = vunpack.c.l.b16 %v44
  %v385 = vunpack.c.l.b16 %v45
  %v386 = vunpack.c.l.b16 %v46
  %v387 = vunpack.c.l.b16 %v47
  %v388 = vunpack.c.l.b16 %v48
  %v389 = vunpack.c.l.b16 %v49
  %v390 = vunpack.c.l.b16 %v50
  %v391 = vunpack.c.l.b16 %v51
  %v392 = vunpack.c.l.b16 %v52
  %v393 = vunpack.c.l.b16 %v53
  %v394 = vunpack.c.l.b16 %v54
  %v395 = vunpack.c.l.b16 %v55
  %v396 = vunpack.c.l.b16 %v56
  %v397 = vunpack.c.l.b16 %v57
  %v398 = vunpack.c.l.b16 %v58
  %v399 = vunpack.c.l.b16 %v59
  %v400 = vunpack.c.l.b16 %v60
  %v401 = vunpack.c.l.b16 %v61
  %v402 = vunpack.c.l.b16 %v62
  %v403 = vunpack.c.l.b16 %v63
  %v404 = vunpack.c.l.b16 %v64
  %v405 = vunpack.c.l.b16 %v65
  %v406 = vunpack.c.l.b16 %v66
  %v407 = vunpack.c.l.b16 %v67
  %v408 = vunpack.c.l.b16 %v68
  %v409 = vunpack.c.l.b16 %v69
  %v410 = vunpack.c.l.b16 %v70
  %v411 = vunpack.c.l.b16 %v71
  %v412 = vunpack.c.l.b16 %v72
  %v413 = vunpack.c.l.b16 %v73
  %v414 = vunpack.c.l.b16 %v74
  %v415 = vunpack.c.l.b16 %v75
  %v416 = vunpack.c.l.b16 %v76
  %v417 = vunpack.c.l.b16 %v77
  %v418 = vunpack.c.l.b16 %v78
  %v419 = vunpack.c.l.b16 %v79
  %v420 = vunpack.c.l.b16 %v80
  %v421 = vunpack.c.l.b16 %v81
  %v422 = vunpack.c.l.b16 %v82
  %v423 = vunpack.c.l.b16 %v83
  %v424 = vunpack.c.l.b16 %v84
  %v425 = vunpack.c.l.b16 %v85
  %v426 = vunpack.c.l.b16 %v86
  %v427 = vunpack.c.l.b16 %v87
  %v428 = vunpack.c.l.b16 %v88
  %v429 = vunpack.c.l.b16 %v89
  %v430 = vunpack.c.l.b16 %v90
  %v431 = vunpack.c.l.b16 %v91
  %v432 = vunpack.c.l.b16 %v92
  %v433 = vunpack.c.l.b16 %v93
  %v434 = vunpack.c.l.b16 %v94
  %v435 = vunpack.c.l.b16 %v95
  %v436 = vunpack.c.l.b16 %v96
  %v437 = vunpack.c.l.b16 %v97
  %v438 = vunpack.c.l.b16 %v98
  %v439 = vunpack.c.l.b16 %v99
  %v440 = vunpack.c.l.b16 %v100
  %v441 = vunpack.c.l.b16 %v101
  %v442 = vunpack.c.l.b16 %v102
  %v443 = vunpack.c.l.b16 %v103
  %v444 = vunpack.c.l.b16 %v104
  %v445 = vunpack.c.l.b16 %v105
  %v446 = vunpack.c.l.b16 %v106
  %v447 = vunpack.c.l.b16 %v107
  %v448 = vunpack.c.l.b16 %v108
  %v449 = vunpack.c.l.b16 %v109
  %v450 = vunpack.c.l.b16 %v110
  %v451 = vunpack.c.l.b16 %v111
  %v452 = vunpack.c.l.b16 %v112
  %v453 = vunpack.c.l.b16 %v113
  %v454 = vunpack.c.l.b16 %v114
  %v455 = vunpack.c.l.b16 %v115
  %v456 = vunpack.c.l.b16 %v116
  %v457 = vunpack.c.l.b16 %v117
  %v458 = vunpack.c.l.b16 %v118
  %v459 = vunpack.c.l.b16 %v119
  %v460 = vunpack.c.l.b16 %v120
  %v461 = vunpack.c.l.b16 %v121
  %v462 = vunpack.c.l.b16 %v122
  %v463 = vunpack.c.l.b16 %v123
  %v464 = vunpack.c.l.b16 %v124
  %v465 = vunpack.c.l.b16 %v125
  %v466 = vunpack.c.l.b16 %v126
  %v467 = vunpack.c.l.b16 %v127
  %v468 = vunpack.c.l.b16 %v128
  %v469 = vunpack.c.l.b16 %v129
  %v470 = vunpack.c.l.b16 %v130
  %v471 = vunpack.c.l.b16 %v131
  %v472 = vunpack.c.l.b16 %v132
  %v473 = vunpack.c.l.b16 %v133
  %v474 = vunpack.c.l.b16 %v134
  %v475 = vunpack.c.l.b16 %v135
  %v476 = vunpack.c.l.b16 %v136
  %v477 = vunpack.c.l.b16 %v137
  %v478 = vunpack.c.l.b16 %v138
  %v479 = vunpack.c.l.b16 %v139
  %v480 = vunpack.c.l.b16 %v140
  %v481 = vunpack.c.l.b16 %v141
  %v482 = vunpack.c.l.b16 %v142
  %v483 = vunpack.c.l.b16 %v143
  %v484 = vunpack.c.l.b16 %v144
  %v485 = vunpack.c.l.b16 %v145
  %v486 = vunpack.c.l.b16 %v146
  %v487 = vunpack.c.l.b16 %v147
  %v488 = vunpack.c.l.b16 %v148
  %v489 = vunpack.c.l.b16 %v149
  %v490 = vunpack.c.l.b16 %v150
  %v491 = vunpack.c.l.b16 %v151
  %v492 = vunpack.c.l.b16 %v152
  %v493 = vunpack.c.l.b16 %v153
  %v494 = vunpack.c.l.b16 %v154
  %v495 = vunpack.c.l.b16 %v155
  %v496 = vunpack.c.l.b16 %v156
  %v497 = vunpack.c.l.b16 %v157
  %v498 = vpack.c.b16 %v371, %v370
  %v499 = vpack.c.b16 %v373, %v372
  %v500 = vpack.c.b16 %v375, %v374
  %v501 = vpack.c.b16 %v377, %v376
  %v502 = vpack.c.b16 %v379, %v378
  %v503 = vpack.c.b16 %v381, %v380
  %v504 = vpack.c.b16 %v383, %v382
  %v505 = vpack.c.b16 %v385, %v384
  %v506 = vpack.c.b16 %v387, %v386
  %v507 = vpack.c.b16 %v389, %v388
  %v508 = vpack.c.b16 %v391, %v390
  %v509 = vpack.c.b16 %v393, %v392
  %v510 = vpack.c.b16 %v395, %v394
  %v511 = vpack.c.b16 %v397, %v396
  %v512 = vpack.c.b16 %v399, %v398
  %v513 = vpack.c.b16 %v401, %v400
  %v514 = vpack.c.b16 %v403, %v402
  %v515 = vpack.c.b16 %v405, %v404
  %v516 = vpack.c.b16 %v407, %v406
  %v517 = vpack.c.b16 %v409, %v408
  %v518 = vpack.c.b16 %v411, %v410
  %v519 = vpack.c.b16 %v413, %v412
  %v520 = vpack.c.b16 %v415, %v414
  %v521 = vpack.c.b16 %v417, %v416
  %v522 = vpack.c.b16 %v419, %v418
  %v523 = vpack.c.b16 %v421, %v420
  %v524 = vpack.c.b16 %v423, %v422
  %v525 = vpack.c.b16 %v425, %v424
  %v526 = vpack.c.b16 %v427, %v426
  %v527 = vpack.c.b16 %v429, %v428
  %v528 = vpack.c.b16 %v431, %v430
  %v529 = vpack.c.b16 %v433, %v432
  %v530 = vpack.c.b16 %v435, %v434
  %v531 = vpack.c.b16 %v437, %v436
  %v532 = vpack.c.b16 %v439, %v438
  %v533 = vpack.c.b16 %v441, %v440
  %v534 = vpack.c.b16 %v443, %v442
  %v535 = vpack.c.b16 %v445, %v444
  %v536 = vpack.c.b16 %v447, %v446
  %v537 = vpack.c.b16 %v449, %v448
  %v538 = vpack.c.b16 %v451, %v450
  %v539 = vpack.c.b16 %v453, %v452
  %v540 = vpack.c.b16 %v455, %v454
  %v541 = vpack.c.b16 %v457, %v456
  %v542 = vpack.c.b16 %v459, %v458
  %v543 = vpack.c.b16 %v461, %v460
  %v544 = vpack.c.b16 %v463, %v462
  %v545 = vpack.c.b16 %v465, %v464
  %v546 = vpack.c.b16 %v467, %v466
  %v547 = vpack.c.b16 %v469, %v468
  %v548 = vpack.c.b16 %v471, %v470
  %v549 = vpack.c.b16 %v473, %v472
  %v550 = vpack.c.b16 %v475, %v474
  %v551 = vpack.c.b16 %v477, %v476
  %v552 = vpack.c.b16 %v479, %v478
  %v553 = vpack.c.b16 %v481, %v480
  %v554 = vpack.c.b16 %v483, %v482
  %v555 = vpack.c.b16 %v485, %v484
  %v556 = vpack.c.b16 %v487, %v486
  %v557 = vpack.c.b16 %v489, %v488
  %v558 = vpack.c.b16 %v491, %v490
  %v559 = vpack.c.b16 %v493, %v492
  %v560 = vpack.c.b16 %v495, %v494
  %v561 = vpack.c.b16 %v497, %v496
  %626 = vmatpush.bf16.msra.mxu0 %v505
  %627 = vmatpush.bf16.msra.mxu0 %v504
  %628 = vmatpush.bf16.msra.mxu0 %v503
  %629 = vmatpush.bf16.msra.mxu0 %v502
  %630 = vmatpush.bf16.msra.mxu0 %v501
  %631 = vmatpush.bf16.msra.mxu0 %v500
  %632 = vmatpush.bf16.msra.mxu0 %v499
  %633 = vmatpush.bf16.msra.mxu0 %v498
  %634 = vmatmul.bf16.gmra.mxu0 %v210
  %v635 = vpop.f32.mrf.mxu0
  %v636 = vadd.f32 %v160, %v635
  %v637 = vpop.f32.mrf.mxu0
  %v638 = vadd.f32 %v160, %v637
  %639 = vmatmul.bf16.gmra.mxu0 %v218
  %v640 = vpop.f32.mrf.mxu0
  %v641 = vadd.f32 %v160, %v640
  %v642 = vpop.f32.mrf.mxu0
  %v643 = vadd.f32 %v160, %v642
  %644 = vdwg.mxu0
  %645 = vmatpush.bf16.msra.mxu0 %v513
  %646 = vmatpush.bf16.msra.mxu0 %v512
  %647 = vmatpush.bf16.msra.mxu0 %v511
  %648 = vmatpush.bf16.msra.mxu0 %v510
  %649 = vmatpush.bf16.msra.mxu0 %v509
  %650 = vmatpush.bf16.msra.mxu0 %v508
  %651 = vmatpush.bf16.msra.mxu0 %v507
  %652 = vmatpush.bf16.msra.mxu0 %v506
  %653 = vmatmul.bf16.gmra.mxu0 %v211
  %v654 = vpop.f32.mrf.mxu0
  %v655 = vadd.f32 %v636, %v654
  %v656 = vpop.f32.mrf.mxu0
  %v657 = vadd.f32 %v638, %v656
  %658 = vmatmul.bf16.gmra.mxu0 %v219
  %v659 = vpop.f32.mrf.mxu0
  %v660 = vadd.f32 %v641, %v659
  %v661 = vpop.f32.mrf.mxu0
  %v662 = vadd.f32 %v643, %v661
  %663 = vdwg.mxu0
  %664 = vmatpush.bf16.msra.mxu0 %v521
  %665 = vmatpush.bf16.msra.mxu0 %v520
  %666 = vmatpush.bf16.msra.mxu0 %v519
  %667 = vmatpush.bf16.msra.mxu0 %v518
  %668 = vmatpush.bf16.msra.mxu0 %v517
  %669 = vmatpush.bf16.msra.mxu0 %v516
  %670 = vmatpush.bf16.msra.mxu0 %v515
  %671 = vmatpush.bf16.msra.mxu0 %v514
  %672 = vmatmul.bf16.gmra.mxu0 %v212
  %v673 = vpop.f32.mrf.mxu0
  %v674 = vadd.f32 %v655, %v673
  %v675 = vpop.f32.mrf.mxu0
  %v676 = vadd.f32 %v657, %v675
  %677 = vmatmul.bf16.gmra.mxu0 %v220
  %v678 = vpop.f32.mrf.mxu0
  %v679 = vadd.f32 %v660, %v678
  %v680 = vpop.f32.mrf.mxu0
  %v681 = vadd.f32 %v662, %v680
  %682 = vdwg.mxu0
  %683 = vmatpush.bf16.msra.mxu0 %v529
  %684 = vmatpush.bf16.msra.mxu0 %v528
  %685 = vmatpush.bf16.msra.mxu0 %v527
  %686 = vmatpush.bf16.msra.mxu0 %v526
  %687 = vmatpush.bf16.msra.mxu0 %v525
  %688 = vmatpush.bf16.msra.mxu0 %v524
  %689 = vmatpush.bf16.msra.mxu0 %v523
  %690 = vmatpush.bf16.msra.mxu0 %v522
  %691 = vmatmul.bf16.gmra.mxu0 %v213
  %v692 = vpop.f32.mrf.mxu0
  %v693 = vadd.f32 %v674, %v692
  %v694 = vpop.f32.mrf.mxu0
  %v695 = vadd.f32 %v676, %v694
  %696 = vmatmul.bf16.gmra.mxu0 %v221
  %v697 = vpop.f32.mrf.mxu0
  %v698 = vadd.f32 %v679, %v697
  %v699 = vpop.f32.mrf.mxu0
  %v700 = vadd.f32 %v681, %v699
  %701 = vdwg.mxu0
  %702 = vmatpush.bf16.msra.mxu0 %v537
  %703 = vmatpush.bf16.msra.mxu0 %v536
  %704 = vmatpush.bf16.msra.mxu0 %v535
  %705 = vmatpush.bf16.msra.mxu0 %v534
  %706 = vmatpush.bf16.msra.mxu0 %v533
  %707 = vmatpush.bf16.msra.mxu0 %v532
  %708 = vmatpush.bf16.msra.mxu0 %v531
  %709 = vmatpush.bf16.msra.mxu0 %v530
  %710 = vmatmul.bf16.gmra.mxu0 %v214
  %v711 = vpop.f32.mrf.mxu0
  %v712 = vadd.f32 %v693, %v711
  %v713 = vpop.f32.mrf.mxu0
  %v714 = vadd.f32 %v695, %v713
  %715 = vmatmul.bf16.gmra.mxu0 %v222
  %v716 = vpop.f32.mrf.mxu0
  %v717 = vadd.f32 %v698, %v716
  %v718 = vpop.f32.mrf.mxu0
  %v719 = vadd.f32 %v700, %v718
  %720 = vdwg.mxu0
  %721 = vmatpush.bf16.msra.mxu0 %v545
  %722 = vmatpush.bf16.msra.mxu0 %v544
  %723 = vmatpush.bf16.msra.mxu0 %v543
  %724 = vmatpush.bf16.msra.mxu0 %v542
  %725 = vmatpush.bf16.msra.mxu0 %v541
  %726 = vmatpush.bf16.msra.mxu0 %v540
  %727 = vmatpush.bf16.msra.mxu0 %v539
  %728 = vmatpush.bf16.msra.mxu0 %v538
  %729 = vmatmul.bf16.gmra.mxu0 %v215
  %v730 = vpop.f32.mrf.mxu0
  %v731 = vadd.f32 %v712, %v730
  %v732 = vpop.f32.mrf.mxu0
  %v733 = vadd.f32 %v714, %v732
  %734 = vmatmul.bf16.gmra.mxu0 %v223
  %v735 = vpop.f32.mrf.mxu0
  %v736 = vadd.f32 %v717, %v735
  %v737 = vpop.f32.mrf.mxu0
  %v738 = vadd.f32 %v719, %v737
  %739 = vdwg.mxu0
  %740 = vmatpush.bf16.msra.mxu0 %v553
  %741 = vmatpush.bf16.msra.mxu0 %v552
  %742 = vmatpush.bf16.msra.mxu0 %v551
  %743 = vmatpush.bf16.msra.mxu0 %v550
  %744 = vmatpush.bf16.msra.mxu0 %v549
  %745 = vmatpush.bf16.msra.mxu0 %v548
  %746 = vmatpush.bf16.msra.mxu0 %v547
  %747 = vmatpush.bf16.msra.mxu0 %v546
  %748 = vmatmul.bf16.gmra.mxu0 %v216
  %v749 = vpop.f32.mrf.mxu0
  %v750 = vadd.f32 %v731, %v749
  %v751 = vpop.f32.mrf.mxu0
  %v752 = vadd.f32 %v733, %v751
  %753 = vmatmul.bf16.gmra.mxu0 %v224
  %v754 = vpop.f32.mrf.mxu0
  %v755 = vadd.f32 %v736, %v754
  %v756 = vpop.f32.mrf.mxu0
  %v757 = vadd.f32 %v738, %v756
  %758 = vdwg.mxu0
  %759 = vmatpush.bf16.msra.mxu0 %v561
  %760 = vmatpush.bf16.msra.mxu0 %v560
  %761 = vmatpush.bf16.msra.mxu0 %v559
  %762 = vmatpush.bf16.msra.mxu0 %v558
  %763 = vmatpush.bf16.msra.mxu0 %v557
  %764 = vmatpush.bf16.msra.mxu0 %v556
  %765 = vmatpush.bf16.msra.mxu0 %v555
  %766 = vmatpush.bf16.msra.mxu0 %v554
  %767 = vmatmul.bf16.gmra.mxu0 %v217
  %v768 = vpop.f32.mrf.mxu0
  %v769 = vadd.f32 %v750, %v768
  %v770 = vpop.f32.mrf.mxu0
  %v771 = vadd.f32 %v752, %v770
  %772 = vmatmul.bf16.gmra.mxu0 %v225
  %v773 = vpop.f32.mrf.mxu0
  %v774 = vadd.f32 %v755, %v773
  %v775 = vpop.f32.mrf.mxu0
  %v776 = vadd.f32 %v757, %v775
  %777 = vdwg.mxu0
  %vm778 = vcmp.gt.f32.partialorder %v769, 0.0
  %vm779 = vcmp.gt.f32.partialorder %v771, 0.0
  %vm780 = vcmp.gt.f32.partialorder %v774, 0.0
  %vm781 = vcmp.gt.f32.partialorder %v776, 0.0
  %v782 = vmul.f32 %v769, 0.2
  %v783 = vmul.f32 %v771, 0.2
  %v784 = vmul.f32 %v774, 0.2
  %v785 = vmul.f32 %v776, 0.2
  %v786 = vsel %vm778, %v769, %v782
  %v787 = vsel %vm779, %v771, %v783
  %v788 = vsel %vm780, %v774, %v784
  %v789 = vsel %vm781, %v776, %v785
  %v790 = vpack.c.bf16 %v786, %v786
  %v791 = vpack.c.bf16 %v787, %v787
  %v792 = vpack.c.bf16 %v788, %v788
  %v793 = vpack.c.bf16 %v789, %v789
  %794 = vst [vmem:[%s3] sm:$0xf] %v790
  %795 = vst [vmem:[%s3 + $0x4] sm:$0xf] %v791
  %796 = vst [vmem:[%s3 + $0x8] sm:$0xf] %v792
  %797 = vst [vmem:[%s3 + $0xc] sm:$0xf] %v793
  // Predicated region
  $region14: #{second_model_forward.8} parent=0 // pred_check
    _
  $region15: #{second_model_forward.8} parent=0 // pred_check_branch
    %799 = sbr.rel (0) target = $region17
  $region16: #{second_model_forward.8} parent=0 // pred_region
    _
  $region17: #{second_model_forward.8} parent=0 // pred_fallthru
    _
  // Predicated region
  $region18: #{second_model_forward.8} parent=0 // pred_check
    _
  $region19: #{second_model_forward.8} parent=0 // pred_check_branch
    %801 = sbr.rel (0) target = $region21
  $region20: #{second_model_forward.8} parent=0 // pred_region
    _
  $region21: #{second_model_forward.8} parent=0 // pred_fallthru
    _

// kernel: second_model_forward.9
$region0: #{second_model_forward.9}
  #allocation0 [shape = 'u32[]', space=smem, size = 0x4, offset = 0x4, fixed_abs, tag = 'smem constant byte address 0x4 - core index']
  #allocation1 [shape = 'u32[72,128]{1,0:T(1,128)}', space=vmem, size = 0x9000, scoped, tag = 'internal scratch']
  #allocation2 [shape = 'f32[8,512]{1,0:T(8,128)}', space=vmem, size = 0x4000, scoped, tag = 'scratch operand']
  %s0 = inlined_call_operand.vmem [shape: bf16[8,4096], index: 0, kind: input, shape index: {}]
  %s1 = inlined_call_operand.vmem [shape: bf16[4096,512], index: 1, kind: input, shape index: {}]
  %s2 = inlined_call_operand.vmem [shape: f32[1,512], index: 2, kind: input, shape index: {}]
  %s3 = inlined_call_operand.vmem [shape: f32[2,8], index: 3, kind: input, shape index: {}]
  %s4 = inlined_call_operand.vmem [shape: f32[512,32], index: 4, kind: input, shape index: {}]
  %s5 = inlined_call_operand.vmem [shape: f32[1,32], index: 5, kind: input, shape index: {}]
  %s6 = inlined_call_operand.vmem [shape: f32[32,512], index: 6, kind: input, shape index: {}]
  %s7 = inlined_call_operand.vmem [shape: f32[1,512], index: 7, kind: input, shape index: {}]
  %s8 = inlined_call_operand.vmem [shape: f32[512,32], index: 8, kind: input, shape index: {}]
  %s9 = inlined_call_operand.vmem [shape: f32[1,32], index: 9, kind: input, shape index: {}]
  %s10 = inlined_call_operand.vmem [shape: f32[32,10], index: 10, kind: input, shape index: {}]
  %s11 = inlined_call_operand.vmem [shape: f32[1,10], index: 11, kind: input, shape index: {}]
  %s12 = inlined_call_operand.vmem [shape: f32[2,10], index: 12, kind: output, shape index: {}]
  %s13 = sld [smem:[#allocation0]]
  $region89: #{second_model_forward.9} parent=0
    _
  %s15 = ssub.s32 1, %s13
  %s16 = scalar_select 0, %s15, %s13
  loop: start=0, step=1, limit=6
  $region2: #{second_model_forward.9} parent=0 // loop_pre_header
    _
  $region3: #{second_model_forward.9} parent=0 // loop_header
    %s18 = sphi 0, %s22
    %p19 = scmp.ge.s32.totalorder %s18, 6
    %s28 = sphi 0, %s30
    %s31 = sphi 0, %s28
    %s32 = sphi 0, %s31
    %s48 = sphi 0, %s32
    %s54 = sphi 0, %s56
    %s57 = sphi 0, %s54
    %s58 = sphi 0, %s57
    %s74 = sphi 0, %s58
    %s78 = sphi 0, %s78
    %s80 = sphi 0, %s78
    %s81 = sphi 0, %s80
    %s95 = sphi 0, %s81
    %s99 = sphi 0, %s99
    %s101 = sphi 0, %s99
    %s102 = sphi 0, %s101
    %s116 = sphi 0, %s102
    %s120 = sphi 0, %s120
    %s122 = sphi 0, %s120
    %s123 = sphi 0, %s122
    %s137 = sphi 0, %s123
    %s141 = sphi 0, %s141
    %s143 = sphi 0, %s141
    %s144 = sphi 0, %s143
    %s158 = sphi 0, %s144
    %s162 = sphi 0, %s162
    %s164 = sphi 0, %s162
    %s165 = sphi 0, %s164
    %s179 = sphi 0, %s165
    %s183 = sphi 0, %s183
    %s185 = sphi 0, %s183
    %s186 = sphi 0, %s185
    %s200 = sphi 0, %s186
    %s204 = sphi 0, %s204
    %s206 = sphi 0, %s204
    %s207 = sphi 0, %s206
    %s221 = sphi 0, %s207
    %s225 = sphi 0, %s225
    %s227 = sphi 0, %s225
    %s228 = sphi 0, %s227
    %s242 = sphi 0, %s228
    %s246 = sphi 0, %s246
    %s248 = sphi 0, %s246
    %s249 = sphi 0, %s248
    %s263 = sphi 0, %s249
    %s267 = sphi 0, %s267
    %s269 = sphi 0, %s267
    %s270 = sphi 0, %s269
    %s284 = sphi 0, %s270
    %s288 = sphi 0, %s288
    %s290 = sphi 0, %s288
    %s291 = sphi 0, %s290
    %s305 = sphi 0, %s291
  $region4: #{second_model_forward.9} parent=0 // loop_header_branch
    %21 = sbr.rel (%p19) target = $region8
  $region5: #{second_model_forward.9} parent=0 // loop_body
    %s23 = ssub.s32 %s18, 1
    %s24 = ssub.s32 %s18, 2
    %s25 = sadd.s32 %s18, 1
    %s26 = ssub.s32 %s18, %s25
    %p27 = scmp.eq.s32.totalorder %s26, 0
    %s29 = sadd.s32 %s28, 1
    %s30 = scalar_select %p27, %s28, %s29
    %p33 = pneg %p27
    %p34 = scmp.eq.s32.totalorder %s18, 3
    %p35 = por %p33, %p34
    %p36 = scmp.ne.s32.totalorder %s28, %s31
    %p37 = scmp.eq.s32.totalorder %s18, 0
    %p38 = por %p36, %p37
    %p39 = scmp.ne.s32.totalorder %s28, %s31
    %p40 = scmp.eq.s32.totalorder %s23, 3
    %p41 = por %p39, %p40
    %p42 = scmp.ne.s32.totalorder %s31, %s32
    %p43 = scmp.eq.s32.totalorder %s23, 0
    %p44 = por %p42, %p43
    %p45 = scmp.ne.s32.totalorder %s31, %s32
    %p46 = scmp.eq.s32.totalorder %s24, 3
    %p47 = por %p45, %p46
    %p49 = scmp.ne.s32.totalorder %s32, %s48
    %p50 = scmp.eq.s32.totalorder %s24, 0
    %p51 = por %p49, %p50
    %s52 = ssub.s32 %s18, %s25
    %p53 = scmp.eq.s32.totalorder %s52, 0
    %s55 = sadd.s32 %s54, 1
    %s56 = scalar_select %p53, %s54, %s55
    %p59 = pneg %p53
    %p60 = scmp.eq.s32.totalorder %s18, 3
    %p61 = por %p59, %p60
    %p62 = scmp.ne.s32.totalorder %s54, %s57
    %p63 = scmp.eq.s32.totalorder %s18, 0
    %p64 = por %p62, %p63
    %p65 = scmp.ne.s32.totalorder %s54, %s57
    %p66 = scmp.eq.s32.totalorder %s23, 3
    %p67 = por %p65, %p66
    %p68 = scmp.ne.s32.totalorder %s57, %s58
    %p69 = scmp.eq.s32.totalorder %s23, 0
    %p70 = por %p68, %p69
    %p71 = scmp.ne.s32.totalorder %s57, %s58
    %p72 = scmp.eq.s32.totalorder %s24, 3
    %p73 = por %p71, %p72
    %p75 = scmp.ne.s32.totalorder %s58, %s74
    %p76 = scmp.eq.s32.totalorder %s24, 0
    %p77 = por %p75, %p76
    %s79 = sadd.s32 %s78, 1
    %p82 = scmp.eq.s32.totalorder %s18, 3
    %p83 = scmp.ne.s32.totalorder %s78, %s80
    %p84 = scmp.eq.s32.totalorder %s18, 0
    %p85 = por %p83, %p84
    %p86 = scmp.ne.s32.totalorder %s78, %s80
    %p87 = scmp.eq.s32.totalorder %s23, 3
    %p88 = por %p86, %p87
    %p89 = scmp.ne.s32.totalorder %s80, %s81
    %p90 = scmp.eq.s32.totalorder %s23, 0
    %p91 = por %p89, %p90
    %p92 = scmp.ne.s32.totalorder %s80, %s81
    %p93 = scmp.eq.s32.totalorder %s24, 3
    %p94 = por %p92, %p93
    %p96 = scmp.ne.s32.totalorder %s81, %s95
    %p97 = scmp.eq.s32.totalorder %s24, 0
    %p98 = por %p96, %p97
    %s100 = sadd.s32 %s99, 1
    %p103 = scmp.eq.s32.totalorder %s18, 3
    %p104 = scmp.ne.s32.totalorder %s99, %s101
    %p105 = scmp.eq.s32.totalorder %s18, 0
    %p106 = por %p104, %p105
    %p107 = scmp.ne.s32.totalorder %s99, %s101
    %p108 = scmp.eq.s32.totalorder %s23, 3
    %p109 = por %p107, %p108
    %p110 = scmp.ne.s32.totalorder %s101, %s102
    %p111 = scmp.eq.s32.totalorder %s23, 0
    %p112 = por %p110, %p111
    %p113 = scmp.ne.s32.totalorder %s101, %s102
    %p114 = scmp.eq.s32.totalorder %s24, 3
    %p115 = por %p113, %p114
    %p117 = scmp.ne.s32.totalorder %s102, %s116
    %p118 = scmp.eq.s32.totalorder %s24, 0
    %p119 = por %p117, %p118
    %s121 = sadd.s32 %s120, 1
    %p124 = scmp.eq.s32.totalorder %s18, 3
    %p125 = scmp.ne.s32.totalorder %s120, %s122
    %p126 = scmp.eq.s32.totalorder %s18, 0
    %p127 = por %p125, %p126
    %p128 = scmp.ne.s32.totalorder %s120, %s122
    %p129 = scmp.eq.s32.totalorder %s23, 3
    %p130 = por %p128, %p129
    %p131 = scmp.ne.s32.totalorder %s122, %s123
    %p132 = scmp.eq.s32.totalorder %s23, 0
    %p133 = por %p131, %p132
    %p134 = scmp.ne.s32.totalorder %s122, %s123
    %p135 = scmp.eq.s32.totalorder %s24, 3
    %p136 = por %p134, %p135
    %p138 = scmp.ne.s32.totalorder %s123, %s137
    %p139 = scmp.eq.s32.totalorder %s24, 0
    %p140 = por %p138, %p139
    %s142 = sadd.s32 %s141, 1
    %p145 = scmp.eq.s32.totalorder %s18, 3
    %p146 = scmp.ne.s32.totalorder %s141, %s143
    %p147 = scmp.eq.s32.totalorder %s18, 0
    %p148 = por %p146, %p147
    %p149 = scmp.ne.s32.totalorder %s141, %s143
    %p150 = scmp.eq.s32.totalorder %s23, 3
    %p151 = por %p149, %p150
    %p152 = scmp.ne.s32.totalorder %s143, %s144
    %p153 = scmp.eq.s32.totalorder %s23, 0
    %p154 = por %p152, %p153
    %p155 = scmp.ne.s32.totalorder %s143, %s144
    %p156 = scmp.eq.s32.totalorder %s24, 3
    %p157 = por %p155, %p156
    %p159 = scmp.ne.s32.totalorder %s144, %s158
    %p160 = scmp.eq.s32.totalorder %s24, 0
    %p161 = por %p159, %p160
    %s163 = sadd.s32 %s162, 1
    %p166 = scmp.eq.s32.totalorder %s18, 3
    %p167 = scmp.ne.s32.totalorder %s162, %s164
    %p168 = scmp.eq.s32.totalorder %s18, 0
    %p169 = por %p167, %p168
    %p170 = scmp.ne.s32.totalorder %s162, %s164
    %p171 = scmp.eq.s32.totalorder %s23, 3
    %p172 = por %p170, %p171
    %p173 = scmp.ne.s32.totalorder %s164, %s165
    %p174 = scmp.eq.s32.totalorder %s23, 0
    %p175 = por %p173, %p174
    %p176 = scmp.ne.s32.totalorder %s164, %s165
    %p177 = scmp.eq.s32.totalorder %s24, 3
    %p178 = por %p176, %p177
    %p180 = scmp.ne.s32.totalorder %s165, %s179
    %p181 = scmp.eq.s32.totalorder %s24, 0
    %p182 = por %p180, %p181
    %s184 = sadd.s32 %s183, 1
    %p187 = scmp.eq.s32.totalorder %s18, 3
    %p188 = scmp.ne.s32.totalorder %s183, %s185
    %p189 = scmp.eq.s32.totalorder %s18, 0
    %p190 = por %p188, %p189
    %p191 = scmp.ne.s32.totalorder %s183, %s185
    %p192 = scmp.eq.s32.totalorder %s23, 3
    %p193 = por %p191, %p192
    %p194 = scmp.ne.s32.totalorder %s185, %s186
    %p195 = scmp.eq.s32.totalorder %s23, 0
    %p196 = por %p194, %p195
    %p197 = scmp.ne.s32.totalorder %s185, %s186
    %p198 = scmp.eq.s32.totalorder %s24, 3
    %p199 = por %p197, %p198
    %p201 = scmp.ne.s32.totalorder %s186, %s200
    %p202 = scmp.eq.s32.totalorder %s24, 0
    %p203 = por %p201, %p202
    %s205 = sadd.s32 %s204, 1
    %p208 = scmp.eq.s32.totalorder %s18, 3
    %p209 = scmp.ne.s32.totalorder %s204, %s206
    %p210 = scmp.eq.s32.totalorder %s18, 0
    %p211 = por %p209, %p210
    %p212 = scmp.ne.s32.totalorder %s204, %s206
    %p213 = scmp.eq.s32.totalorder %s23, 3
    %p214 = por %p212, %p213
    %p215 = scmp.ne.s32.totalorder %s206, %s207
    %p216 = scmp.eq.s32.totalorder %s23, 0
    %p217 = por %p215, %p216
    %p218 = scmp.ne.s32.totalorder %s206, %s207
    %p219 = scmp.eq.s32.totalorder %s24, 3
    %p220 = por %p218, %p219
    %p222 = scmp.ne.s32.totalorder %s207, %s221
    %p223 = scmp.eq.s32.totalorder %s24, 0
    %p224 = por %p222, %p223
    %s226 = sadd.s32 %s225, 1
    %p229 = scmp.eq.s32.totalorder %s18, 3
    %p230 = scmp.ne.s32.totalorder %s225, %s227
    %p231 = scmp.eq.s32.totalorder %s18, 0
    %p232 = por %p230, %p231
    %p233 = scmp.ne.s32.totalorder %s225, %s227
    %p234 = scmp.eq.s32.totalorder %s23, 3
    %p235 = por %p233, %p234
    %p236 = scmp.ne.s32.totalorder %s227, %s228
    %p237 = scmp.eq.s32.totalorder %s23, 0
    %p238 = por %p236, %p237
    %p239 = scmp.ne.s32.totalorder %s227, %s228
    %p240 = scmp.eq.s32.totalorder %s24, 3
    %p241 = por %p239, %p240
    %p243 = scmp.ne.s32.totalorder %s228, %s242
    %p244 = scmp.eq.s32.totalorder %s24, 0
    %p245 = por %p243, %p244
    %s247 = sadd.s32 %s246, 1
    %p250 = scmp.eq.s32.totalorder %s18, 3
    %p251 = scmp.ne.s32.totalorder %s246, %s248
    %p252 = scmp.eq.s32.totalorder %s18, 0
    %p253 = por %p251, %p252
    %p254 = scmp.ne.s32.totalorder %s246, %s248
    %p255 = scmp.eq.s32.totalorder %s23, 3
    %p256 = por %p254, %p255
    %p257 = scmp.ne.s32.totalorder %s248, %s249
    %p258 = scmp.eq.s32.totalorder %s23, 0
    %p259 = por %p257, %p258
    %p260 = scmp.ne.s32.totalorder %s248, %s249
    %p261 = scmp.eq.s32.totalorder %s24, 3
    %p262 = por %p260, %p261
    %p264 = scmp.ne.s32.totalorder %s249, %s263
    %p265 = scmp.eq.s32.totalorder %s24, 0
    %p266 = por %p264, %p265
    %s268 = sadd.s32 %s267, 1
    %p271 = scmp.eq.s32.totalorder %s18, 3
    %p272 = scmp.ne.s32.totalorder %s267, %s269
    %p273 = scmp.eq.s32.totalorder %s18, 0
    %p274 = por %p272, %p273
    %p275 = scmp.ne.s32.totalorder %s267, %s269
    %p276 = scmp.eq.s32.totalorder %s23, 3
    %p277 = por %p275, %p276
    %p278 = scmp.ne.s32.totalorder %s269, %s270
    %p279 = scmp.eq.s32.totalorder %s23, 0
    %p280 = por %p278, %p279
    %p281 = scmp.ne.s32.totalorder %s269, %s270
    %p282 = scmp.eq.s32.totalorder %s24, 3
    %p283 = por %p281, %p282
    %p285 = scmp.ne.s32.totalorder %s270, %s284
    %p286 = scmp.eq.s32.totalorder %s24, 0
    %p287 = por %p285, %p286
    %s289 = sadd.s32 %s288, 1
    %p292 = scmp.eq.s32.totalorder %s18, 3
    %p293 = scmp.ne.s32.totalorder %s288, %s290
    %p294 = scmp.eq.s32.totalorder %s18, 0
    %p295 = por %p293, %p294
    %p296 = scmp.ne.s32.totalorder %s288, %s290
    %p297 = scmp.eq.s32.totalorder %s23, 3
    %p298 = por %p296, %p297
    %p299 = scmp.ne.s32.totalorder %s290, %s291
    %p300 = scmp.eq.s32.totalorder %s23, 0
    %p301 = por %p299, %p300
    %p302 = scmp.ne.s32.totalorder %s290, %s291
    %p303 = scmp.eq.s32.totalorder %s24, 3
    %p304 = por %p302, %p303
    %p306 = scmp.ne.s32.totalorder %s291, %s305
    %p307 = scmp.eq.s32.totalorder %s24, 0
    %p308 = por %p306, %p307
    %p309 = scmp.le.s32.totalorder 1, %s18
    %p310 = scmp.lt.s32.totalorder %s18, 5
    %p311 = pnand %p309, %p310
    %p312 = pneg %p311
    // Predicated region
    $region9: #{second_model_forward.9} parent=5 // pred_check
      _
    $region10: #{second_model_forward.9} parent=5 // pred_check_branch
      %314 = sbr.rel (%p311) target = $region12
    $region11: #{second_model_forward.9} parent=5 // pred_region
      %s315 = ssub.s32 %s18, 1
      // Predicated region
      $region13: #{second_model_forward.9} parent=11 // pred_check
        %p316 = pneg %p91
      $region14: #{second_model_forward.9} parent=11 // pred_check_branch
        %318 = sbr.rel (%p316) target = $region16
      $region15: #{second_model_forward.9} parent=11 // pred_region
        _
      $region16: #{second_model_forward.9} parent=11 // pred_fallthru
        _
      // Predicated region
      $region17: #{second_model_forward.9} parent=11 // pred_check
        %p319 = pneg %p112
      $region18: #{second_model_forward.9} parent=11 // pred_check_branch
        %321 = sbr.rel (%p319) target = $region20
      $region19: #{second_model_forward.9} parent=11 // pred_region
        _
      $region20: #{second_model_forward.9} parent=11 // pred_fallthru
        _
      // Predicated region
      $region21: #{second_model_forward.9} parent=11 // pred_check
        %p322 = pneg %p133
      $region22: #{second_model_forward.9} parent=11 // pred_check_branch
        %324 = sbr.rel (%p322) target = $region24
      $region23: #{second_model_forward.9} parent=11 // pred_region
        _
      $region24: #{second_model_forward.9} parent=11 // pred_fallthru
        _
      // Predicated region
      $region25: #{second_model_forward.9} parent=11 // pred_check
        %p325 = pneg %p154
      $region26: #{second_model_forward.9} parent=11 // pred_check_branch
        %327 = sbr.rel (%p325) target = $region28
      $region27: #{second_model_forward.9} parent=11 // pred_region
        _
      $region28: #{second_model_forward.9} parent=11 // pred_fallthru
        _
      // Predicated region
      $region29: #{second_model_forward.9} parent=11 // pred_check
        %p328 = pneg %p175
      $region30: #{second_model_forward.9} parent=11 // pred_check_branch
        %330 = sbr.rel (%p328) target = $region32
      $region31: #{second_model_forward.9} parent=11 // pred_region
        _
      $region32: #{second_model_forward.9} parent=11 // pred_fallthru
        _
      // Predicated region
      $region33: #{second_model_forward.9} parent=11 // pred_check
        %p331 = pneg %p196
      $region34: #{second_model_forward.9} parent=11 // pred_check_branch
        %333 = sbr.rel (%p331) target = $region36
      $region35: #{second_model_forward.9} parent=11 // pred_region
        _
      $region36: #{second_model_forward.9} parent=11 // pred_fallthru
        _
      // Predicated region
      $region37: #{second_model_forward.9} parent=11 // pred_check
        %p334 = pneg %p217
      $region38: #{second_model_forward.9} parent=11 // pred_check_branch
        %336 = sbr.rel (%p334) target = $region40
      $region39: #{second_model_forward.9} parent=11 // pred_region
        _
      $region40: #{second_model_forward.9} parent=11 // pred_fallthru
        _
      // Predicated region
      $region41: #{second_model_forward.9} parent=11 // pred_check
        %p337 = pneg %p238
      $region42: #{second_model_forward.9} parent=11 // pred_check_branch
        %339 = sbr.rel (%p337) target = $region44
      $region43: #{second_model_forward.9} parent=11 // pred_region
        _
      $region44: #{second_model_forward.9} parent=11 // pred_fallthru
        _
      // Predicated region
      $region45: #{second_model_forward.9} parent=11 // pred_check
        %p340 = pneg %p259
      $region46: #{second_model_forward.9} parent=11 // pred_check_branch
        %342 = sbr.rel (%p340) target = $region48
      $region47: #{second_model_forward.9} parent=11 // pred_region
        _
      $region48: #{second_model_forward.9} parent=11 // pred_fallthru
        _
      // Predicated region
      $region49: #{second_model_forward.9} parent=11 // pred_check
        %p343 = pneg %p280
      $region50: #{second_model_forward.9} parent=11 // pred_check_branch
        %345 = sbr.rel (%p343) target = $region52
      $region51: #{second_model_forward.9} parent=11 // pred_region
        _
      $region52: #{second_model_forward.9} parent=11 // pred_fallthru
        _
    $region12: #{second_model_forward.9} parent=5 // pred_fallthru
      _
    %p346 = scmp.lt.s32.totalorder %s18, 4
    // Predicated region
    $region53: #{second_model_forward.9} parent=5 // pred_check
      %p347 = pneg %p346
    $region54: #{second_model_forward.9} parent=5 // pred_check_branch
      %349 = sbr.rel (%p347) target = $region56
    $region55: #{second_model_forward.9} parent=5 // pred_region
      // Predicated region
      $region57: #{second_model_forward.9} parent=55 // pred_check
        %p350 = pneg %p38
      $region58: #{second_model_forward.9} parent=55 // pred_check_branch
        %352 = sbr.rel (%p350) target = $region60
      $region59: #{second_model_forward.9} parent=55 // pred_region
        %s353 = smul.u32 8, %s18
        %p354 = scmp.lt.s32.totalorder %s353, 31
        %s355 = scalar_select %p354, %s353, 31
        %s356 = smul.addr %s355, 4
        %s357 = scalar_lea.vmem %s0, %s356
        %s358 = smul.u32 8, %s18
      $region60: #{second_model_forward.9} parent=55 // pred_fallthru
        _
      // Predicated region
      $region61: #{second_model_forward.9} parent=55 // pred_check
        %p359 = pneg %p64
      $region62: #{second_model_forward.9} parent=55 // pred_check_branch
        %361 = sbr.rel (%p359) target = $region64
      $region63: #{second_model_forward.9} parent=55 // pred_region
        %s362 = smul.u32 128, %s18
        %p363 = scmp.lt.s32.totalorder %s362, 511
        %s364 = scalar_select %p363, %s362, 511
        %s365 = smul.addr %s364, 4
        %s366 = smul.addr %s365, 4
        %s367 = scalar_lea.vmem %s1, %s366
        %s368 = smul.u32 128, %s18
      $region64: #{second_model_forward.9} parent=55 // pred_fallthru
        _
    $region56: #{second_model_forward.9} parent=5 // pred_fallthru
      _
    %p369 = scmp.le.s32.totalorder 1, %s18
    %p370 = scmp.lt.s32.totalorder %s18, 5
    %p371 = pnand %p369, %p370
    %p372 = pneg %p371
    // Predicated region
    $region65: #{second_model_forward.9} parent=5 // pred_check
      _
    $region66: #{second_model_forward.9} parent=5 // pred_check_branch
      %374 = sbr.rel (%p371) target = $region68
    $region67: #{second_model_forward.9} parent=5 // pred_region
      %s375 = ssub.s32 %s18, 1
      %s376 = smul.u32 8, %s23
      %p377 = scmp.lt.s32.totalorder %s376, 31
      %s378 = scalar_select %p377, %s376, 31
      %s379 = smul.addr %s378, 4
      %s380 = scalar_lea.vmem %s0, %s379
      %p381 = pneg %p44
      %p382 = pneg %p41
      %s383 = smul.u32 128, %s23
      %p384 = scmp.lt.s32.totalorder %s383, 511
      %s385 = scalar_select %p384, %s383, 511
      %s386 = smul.addr %s385, 4
      %s387 = smul.addr %s386, 4
      %s388 = scalar_lea.vmem %s1, %s387
      %p389 = pneg %p70
      %p390 = pneg %p67
      %p391 = pneg %p91
      %p392 = pneg %p88
      %p393 = pneg %p112
      %p394 = pneg %p109
      %p395 = pneg %p133
      %p396 = pneg %p130
      %p397 = pneg %p154
      %p398 = pneg %p151
      %p399 = pneg %p175
      %p400 = pneg %p172
      %p401 = pneg %p196
      %p402 = pneg %p193
      %p403 = pneg %p217
      %p404 = pneg %p214
      %p405 = pneg %p238
      %p406 = pneg %p235
      %p407 = pneg %p259
      %p408 = pneg %p256
      %p409 = pneg %p280
      %p410 = pneg %p277
      %p411 = pneg %p301
      %p412 = pneg %p298
      %s413 = smul.u32 8, %s23
      %p414 = scmp.lt.s32.totalorder %s413, 31
      %s415 = scalar_select %p414, %s413, 31
      %s416 = smul.addr %s415, 4
      %s417 = scalar_lea.vmem %s0, %s416
      %s418 = smul.u32 8, %s23
      %s419 = smul.u32 128, %s23
      %p420 = scmp.lt.s32.totalorder %s419, 511
      %s421 = scalar_select %p420, %s419, 511
      %s422 = smul.addr %s421, 4
      %s423 = smul.addr %s422, 4
      %s424 = scalar_lea.vmem %s1, %s423
      %s425 = smul.u32 128, %s23
      %p426 = scmp.eq.s32.totalorder %s23, 0
      // Predicated region
      $region69: #{second_model_forward.9} parent=67 // pred_check
        %p427 = pneg %p426
      $region70: #{second_model_forward.9} parent=67 // pred_check_branch
        %429 = sbr.rel (%p427) target = $region72
      $region71: #{second_model_forward.9} parent=67 // pred_region
        %430 = vst [vmem:[#allocation2] sm:$0xff] 0.0
        %431 = vst [vmem:[#allocation2 + $0x8] sm:$0xff] 0.0
        %432 = vst [vmem:[#allocation2 + $0x10] sm:$0xff] 0.0
        %433 = vst [vmem:[#allocation2 + $0x18] sm:$0xff] 0.0
      $region72: #{second_model_forward.9} parent=67 // pred_fallthru
        _
      %v434 = vld [vmem:[#allocation2] sm:$0xff]
      %v435 = vld [vmem:[#allocation2 + $0x8] sm:$0xff]
      %v436 = vld [vmem:[#allocation2 + $0x10] sm:$0xff]
      %v437 = vld [vmem:[#allocation2 + $0x18] sm:$0xff]
      %v438 = vld [vmem:[%s417] sm:$0xff]
      %v439 = vld [vmem:[%s417 + $0x8] sm:$0xff]
      %v440 = vld [vmem:[%s417 + $0x10] sm:$0xff]
      %v441 = vld [vmem:[%s417 + $0x18] sm:$0xff]
      %v442 = vld [vmem:[%s424] sm:$0xff]
      %v443 = vld [vmem:[%s424 + $0x8] sm:$0xff]
      %v444 = vld [vmem:[%s424 + $0x10] sm:$0xff]
      %v445 = vld [vmem:[%s424 + $0x18] sm:$0xff]
      %v446 = vld [vmem:[%s424 + $0x20] sm:$0xff]
      %v447 = vld [vmem:[%s424 + $0x28] sm:$0xff]
      %v448 = vld [vmem:[%s424 + $0x30] sm:$0xff]
      %v449 = vld [vmem:[%s424 + $0x38] sm:$0xff]
      %v450 = vld [vmem:[%s424 + $0x40] sm:$0xff]
      %v451 = vld [vmem:[%s424 + $0x48] sm:$0xff]
      %v452 = vld [vmem:[%s424 + $0x50] sm:$0xff]
      %v453 = vld [vmem:[%s424 + $0x58] sm:$0xff]
      %v454 = vld [vmem:[%s424 + $0x60] sm:$0xff]
      %v455 = vld [vmem:[%s424 + $0x68] sm:$0xff]
      %v456 = vld [vmem:[%s424 + $0x70] sm:$0xff]
      %v457 = vld [vmem:[%s424 + $0x78] sm:$0xff]
      %v458 = vld [vmem:[%s424 + $0x80] sm:$0xff]
      %v459 = vld [vmem:[%s424 + $0x88] sm:$0xff]
      %v460 = vld [vmem:[%s424 + $0x90] sm:$0xff]
      %v461 = vld [vmem:[%s424 + $0x98] sm:$0xff]
      %v462 = vld [vmem:[%s424 + $0xa0] sm:$0xff]
      %v463 = vld [vmem:[%s424 + $0xa8] sm:$0xff]
      %v464 = vld [vmem:[%s424 + $0xb0] sm:$0xff]
      %v465 = vld [vmem:[%s424 + $0xb8] sm:$0xff]
      %v466 = vld [vmem:[%s424 + $0xc0] sm:$0xff]
      %v467 = vld [vmem:[%s424 + $0xc8] sm:$0xff]
      %v468 = vld [vmem:[%s424 + $0xd0] sm:$0xff]
      %v469 = vld [vmem:[%s424 + $0xd8] sm:$0xff]
      %v470 = vld [vmem:[%s424 + $0xe0] sm:$0xff]
      %v471 = vld [vmem:[%s424 + $0xe8] sm:$0xff]
      %v472 = vld [vmem:[%s424 + $0xf0] sm:$0xff]
      %v473 = vld [vmem:[%s424 + $0xf8] sm:$0xff]
      %v474 = vld [vmem:[%s424 + $0x100] sm:$0xff]
      %v475 = vld [vmem:[%s424 + $0x108] sm:$0xff]
      %v476 = vld [vmem:[%s424 + $0x110] sm:$0xff]
      %v477 = vld [vmem:[%s424 + $0x118] sm:$0xff]
      %v478 = vld [vmem:[%s424 + $0x120] sm:$0xff]
      %v479 = vld [vmem:[%s424 + $0x128] sm:$0xff]
      %v480 = vld [vmem:[%s424 + $0x130] sm:$0xff]
      %v481 = vld [vmem:[%s424 + $0x138] sm:$0xff]
      %v482 = vld [vmem:[%s424 + $0x140] sm:$0xff]
      %v483 = vld [vmem:[%s424 + $0x148] sm:$0xff]
      %v484 = vld [vmem:[%s424 + $0x150] sm:$0xff]
      %v485 = vld [vmem:[%s424 + $0x158] sm:$0xff]
      %v486 = vld [vmem:[%s424 + $0x160] sm:$0xff]
      %v487 = vld [vmem:[%s424 + $0x168] sm:$0xff]
      %v488 = vld [vmem:[%s424 + $0x170] sm:$0xff]
      %v489 = vld [vmem:[%s424 + $0x178] sm:$0xff]
      %v490 = vld [vmem:[%s424 + $0x180] sm:$0xff]
      %v491 = vld [vmem:[%s424 + $0x188] sm:$0xff]
      %v492 = vld [vmem:[%s424 + $0x190] sm:$0xff]
      %v493 = vld [vmem:[%s424 + $0x198] sm:$0xff]
      %v494 = vld [vmem:[%s424 + $0x1a0] sm:$0xff]
      %v495 = vld [vmem:[%s424 + $0x1a8] sm:$0xff]
      %v496 = vld [vmem:[%s424 + $0x1b0] sm:$0xff]
      %v497 = vld [vmem:[%s424 + $0x1b8] sm:$0xff]
      %v498 = vld [vmem:[%s424 + $0x1c0] sm:$0xff]
      %v499 = vld [vmem:[%s424 + $0x1c8] sm:$0xff]
      %v500 = vld [vmem:[%s424 + $0x1d0] sm:$0xff]
      %v501 = vld [vmem:[%s424 + $0x1d8] sm:$0xff]
      %v502 = vld [vmem:[%s424 + $0x1e0] sm:$0xff]
      %v503 = vld [vmem:[%s424 + $0x1e8] sm:$0xff]
      %v504 = vld [vmem:[%s424 + $0x1f0] sm:$0xff]
      %v505 = vld [vmem:[%s424 + $0x1f8] sm:$0xff]
      %v506 = vld [vmem:[%s424 + $0x200] sm:$0xff]
      %v507 = vld [vmem:[%s424 + $0x208] sm:$0xff]
      %v508 = vld [vmem:[%s424 + $0x210] sm:$0xff]
      %v509 = vld [vmem:[%s424 + $0x218] sm:$0xff]
      %v510 = vld [vmem:[%s424 + $0x220] sm:$0xff]
      %v511 = vld [vmem:[%s424 + $0x228] sm:$0xff]
      %v512 = vld [vmem:[%s424 + $0x230] sm:$0xff]
      %v513 = vld [vmem:[%s424 + $0x238] sm:$0xff]
      %v514 = vld [vmem:[%s424 + $0x240] sm:$0xff]
      %v515 = vld [vmem:[%s424 + $0x248] sm:$0xff]
      %v516 = vld [vmem:[%s424 + $0x250] sm:$0xff]
      %v517 = vld [vmem:[%s424 + $0x258] sm:$0xff]
      %v518 = vld [vmem:[%s424 + $0x260] sm:$0xff]
      %v519 = vld [vmem:[%s424 + $0x268] sm:$0xff]
      %v520 = vld [vmem:[%s424 + $0x270] sm:$0xff]
      %v521 = vld [vmem:[%s424 + $0x278] sm:$0xff]
      %v522 = vld [vmem:[%s424 + $0x280] sm:$0xff]
      %v523 = vld [vmem:[%s424 + $0x288] sm:$0xff]
      %v524 = vld [vmem:[%s424 + $0x290] sm:$0xff]
      %v525 = vld [vmem:[%s424 + $0x298] sm:$0xff]
      %v526 = vld [vmem:[%s424 + $0x2a0] sm:$0xff]
      %v527 = vld [vmem:[%s424 + $0x2a8] sm:$0xff]
      %v528 = vld [vmem:[%s424 + $0x2b0] sm:$0xff]
      %v529 = vld [vmem:[%s424 + $0x2b8] sm:$0xff]
      %v530 = vld [vmem:[%s424 + $0x2c0] sm:$0xff]
      %v531 = vld [vmem:[%s424 + $0x2c8] sm:$0xff]
      %v532 = vld [vmem:[%s424 + $0x2d0] sm:$0xff]
      %v533 = vld [vmem:[%s424 + $0x2d8] sm:$0xff]
      %v534 = vld [vmem:[%s424 + $0x2e0] sm:$0xff]
      %v535 = vld [vmem:[%s424 + $0x2e8] sm:$0xff]
      %v536 = vld [vmem:[%s424 + $0x2f0] sm:$0xff]
      %v537 = vld [vmem:[%s424 + $0x2f8] sm:$0xff]
      %v538 = vld [vmem:[%s424 + $0x300] sm:$0xff]
      %v539 = vld [vmem:[%s424 + $0x308] sm:$0xff]
      %v540 = vld [vmem:[%s424 + $0x310] sm:$0xff]
      %v541 = vld [vmem:[%s424 + $0x318] sm:$0xff]
      %v542 = vld [vmem:[%s424 + $0x320] sm:$0xff]
      %v543 = vld [vmem:[%s424 + $0x328] sm:$0xff]
      %v544 = vld [vmem:[%s424 + $0x330] sm:$0xff]
      %v545 = vld [vmem:[%s424 + $0x338] sm:$0xff]
      %v546 = vld [vmem:[%s424 + $0x340] sm:$0xff]
      %v547 = vld [vmem:[%s424 + $0x348] sm:$0xff]
      %v548 = vld [vmem:[%s424 + $0x350] sm:$0xff]
      %v549 = vld [vmem:[%s424 + $0x358] sm:$0xff]
      %v550 = vld [vmem:[%s424 + $0x360] sm:$0xff]
      %v551 = vld [vmem:[%s424 + $0x368] sm:$0xff]
      %v552 = vld [vmem:[%s424 + $0x370] sm:$0xff]
      %v553 = vld [vmem:[%s424 + $0x378] sm:$0xff]
      %v554 = vld [vmem:[%s424 + $0x380] sm:$0xff]
      %v555 = vld [vmem:[%s424 + $0x388] sm:$0xff]
      %v556 = vld [vmem:[%s424 + $0x390] sm:$0xff]
      %v557 = vld [vmem:[%s424 + $0x398] sm:$0xff]
      %v558 = vld [vmem:[%s424 + $0x3a0] sm:$0xff]
      %v559 = vld [vmem:[%s424 + $0x3a8] sm:$0xff]
      %v560 = vld [vmem:[%s424 + $0x3b0] sm:$0xff]
      %v561 = vld [vmem:[%s424 + $0x3b8] sm:$0xff]
      %v562 = vld [vmem:[%s424 + $0x3c0] sm:$0xff]
      %v563 = vld [vmem:[%s424 + $0x3c8] sm:$0xff]
      %v564 = vld [vmem:[%s424 + $0x3d0] sm:$0xff]
      %v565 = vld [vmem:[%s424 + $0x3d8] sm:$0xff]
      %v566 = vld [vmem:[%s424 + $0x3e0] sm:$0xff]
      %v567 = vld [vmem:[%s424 + $0x3e8] sm:$0xff]
      %v568 = vld [vmem:[%s424 + $0x3f0] sm:$0xff]
      %v569 = vld [vmem:[%s424 + $0x3f8] sm:$0xff]
      %v570 = vld [vmem:[%s424 + $0x400] sm:$0xff]
      %v571 = vld [vmem:[%s424 + $0x408] sm:$0xff]
      %v572 = vld [vmem:[%s424 + $0x410] sm:$0xff]
      %v573 = vld [vmem:[%s424 + $0x418] sm:$0xff]
      %v574 = vld [vmem:[%s424 + $0x420] sm:$0xff]
      %v575 = vld [vmem:[%s424 + $0x428] sm:$0xff]
      %v576 = vld [vmem:[%s424 + $0x430] sm:$0xff]
      %v577 = vld [vmem:[%s424 + $0x438] sm:$0xff]
      %v578 = vld [vmem:[%s424 + $0x440] sm:$0xff]
      %v579 = vld [vmem:[%s424 + $0x448] sm:$0xff]
      %v580 = vld [vmem:[%s424 + $0x450] sm:$0xff]
      %v581 = vld [vmem:[%s424 + $0x458] sm:$0xff]
      %v582 = vld [vmem:[%s424 + $0x460] sm:$0xff]
      %v583 = vld [vmem:[%s424 + $0x468] sm:$0xff]
      %v584 = vld [vmem:[%s424 + $0x470] sm:$0xff]
      %v585 = vld [vmem:[%s424 + $0x478] sm:$0xff]
      %v586 = vld [vmem:[%s424 + $0x480] sm:$0xff]
      %v587 = vld [vmem:[%s424 + $0x488] sm:$0xff]
      %v588 = vld [vmem:[%s424 + $0x490] sm:$0xff]
      %v589 = vld [vmem:[%s424 + $0x498] sm:$0xff]
      %v590 = vld [vmem:[%s424 + $0x4a0] sm:$0xff]
      %v591 = vld [vmem:[%s424 + $0x4a8] sm:$0xff]
      %v592 = vld [vmem:[%s424 + $0x4b0] sm:$0xff]
      %v593 = vld [vmem:[%s424 + $0x4b8] sm:$0xff]
      %v594 = vld [vmem:[%s424 + $0x4c0] sm:$0xff]
      %v595 = vld [vmem:[%s424 + $0x4c8] sm:$0xff]
      %v596 = vld [vmem:[%s424 + $0x4d0] sm:$0xff]
      %v597 = vld [vmem:[%s424 + $0x4d8] sm:$0xff]
      %v598 = vld [vmem:[%s424 + $0x4e0] sm:$0xff]
      %v599 = vld [vmem:[%s424 + $0x4e8] sm:$0xff]
      %v600 = vld [vmem:[%s424 + $0x4f0] sm:$0xff]
      %v601 = vld [vmem:[%s424 + $0x4f8] sm:$0xff]
      %v602 = vld [vmem:[%s424 + $0x500] sm:$0xff]
      %v603 = vld [vmem:[%s424 + $0x508] sm:$0xff]
      %v604 = vld [vmem:[%s424 + $0x510] sm:$0xff]
      %v605 = vld [vmem:[%s424 + $0x518] sm:$0xff]
      %v606 = vld [vmem:[%s424 + $0x520] sm:$0xff]
      %v607 = vld [vmem:[%s424 + $0x528] sm:$0xff]
      %v608 = vld [vmem:[%s424 + $0x530] sm:$0xff]
      %v609 = vld [vmem:[%s424 + $0x538] sm:$0xff]
      %v610 = vld [vmem:[%s424 + $0x540] sm:$0xff]
      %v611 = vld [vmem:[%s424 + $0x548] sm:$0xff]
      %v612 = vld [vmem:[%s424 + $0x550] sm:$0xff]
      %v613 = vld [vmem:[%s424 + $0x558] sm:$0xff]
      %v614 = vld [vmem:[%s424 + $0x560] sm:$0xff]
      %v615 = vld [vmem:[%s424 + $0x568] sm:$0xff]
      %v616 = vld [vmem:[%s424 + $0x570] sm:$0xff]
      %v617 = vld [vmem:[%s424 + $0x578] sm:$0xff]
      %v618 = vld [vmem:[%s424 + $0x580] sm:$0xff]
      %v619 = vld [vmem:[%s424 + $0x588] sm:$0xff]
      %v620 = vld [vmem:[%s424 + $0x590] sm:$0xff]
      %v621 = vld [vmem:[%s424 + $0x598] sm:$0xff]
      %v622 = vld [vmem:[%s424 + $0x5a0] sm:$0xff]
      %v623 = vld [vmem:[%s424 + $0x5a8] sm:$0xff]
      %v624 = vld [vmem:[%s424 + $0x5b0] sm:$0xff]
      %v625 = vld [vmem:[%s424 + $0x5b8] sm:$0xff]
      %v626 = vld [vmem:[%s424 + $0x5c0] sm:$0xff]
      %v627 = vld [vmem:[%s424 + $0x5c8] sm:$0xff]
      %v628 = vld [vmem:[%s424 + $0x5d0] sm:$0xff]
      %v629 = vld [vmem:[%s424 + $0x5d8] sm:$0xff]
      %v630 = vld [vmem:[%s424 + $0x5e0] sm:$0xff]
      %v631 = vld [vmem:[%s424 + $0x5e8] sm:$0xff]
      %v632 = vld [vmem:[%s424 + $0x5f0] sm:$0xff]
      %v633 = vld [vmem:[%s424 + $0x5f8] sm:$0xff]
      %v634 = vld [vmem:[%s424 + $0x600] sm:$0xff]
      %v635 = vld [vmem:[%s424 + $0x608] sm:$0xff]
      %v636 = vld [vmem:[%s424 + $0x610] sm:$0xff]
      %v637 = vld [vmem:[%s424 + $0x618] sm:$0xff]
      %v638 = vld [vmem:[%s424 + $0x620] sm:$0xff]
      %v639 = vld [vmem:[%s424 + $0x628] sm:$0xff]
      %v640 = vld [vmem:[%s424 + $0x630] sm:$0xff]
      %v641 = vld [vmem:[%s424 + $0x638] sm:$0xff]
      %v642 = vld [vmem:[%s424 + $0x640] sm:$0xff]
      %v643 = vld [vmem:[%s424 + $0x648] sm:$0xff]
      %v644 = vld [vmem:[%s424 + $0x650] sm:$0xff]
      %v645 = vld [vmem:[%s424 + $0x658] sm:$0xff]
      %v646 = vld [vmem:[%s424 + $0x660] sm:$0xff]
      %v647 = vld [vmem:[%s424 + $0x668] sm:$0xff]
      %v648 = vld [vmem:[%s424 + $0x670] sm:$0xff]
      %v649 = vld [vmem:[%s424 + $0x678] sm:$0xff]
      %v650 = vld [vmem:[%s424 + $0x680] sm:$0xff]
      %v651 = vld [vmem:[%s424 + $0x688] sm:$0xff]
      %v652 = vld [vmem:[%s424 + $0x690] sm:$0xff]
      %v653 = vld [vmem:[%s424 + $0x698] sm:$0xff]
      %v654 = vld [vmem:[%s424 + $0x6a0] sm:$0xff]
      %v655 = vld [vmem:[%s424 + $0x6a8] sm:$0xff]
      %v656 = vld [vmem:[%s424 + $0x6b0] sm:$0xff]
      %v657 = vld [vmem:[%s424 + $0x6b8] sm:$0xff]
      %v658 = vld [vmem:[%s424 + $0x6c0] sm:$0xff]
      %v659 = vld [vmem:[%s424 + $0x6c8] sm:$0xff]
      %v660 = vld [vmem:[%s424 + $0x6d0] sm:$0xff]
      %v661 = vld [vmem:[%s424 + $0x6d8] sm:$0xff]
      %v662 = vld [vmem:[%s424 + $0x6e0] sm:$0xff]
      %v663 = vld [vmem:[%s424 + $0x6e8] sm:$0xff]
      %v664 = vld [vmem:[%s424 + $0x6f0] sm:$0xff]
      %v665 = vld [vmem:[%s424 + $0x6f8] sm:$0xff]
      %v666 = vld [vmem:[%s424 + $0x700] sm:$0xff]
      %v667 = vld [vmem:[%s424 + $0x708] sm:$0xff]
      %v668 = vld [vmem:[%s424 + $0x710] sm:$0xff]
      %v669 = vld [vmem:[%s424 + $0x718] sm:$0xff]
      %v670 = vld [vmem:[%s424 + $0x720] sm:$0xff]
      %v671 = vld [vmem:[%s424 + $0x728] sm:$0xff]
      %v672 = vld [vmem:[%s424 + $0x730] sm:$0xff]
      %v673 = vld [vmem:[%s424 + $0x738] sm:$0xff]
      %v674 = vld [vmem:[%s424 + $0x740] sm:$0xff]
      %v675 = vld [vmem:[%s424 + $0x748] sm:$0xff]
      %v676 = vld [vmem:[%s424 + $0x750] sm:$0xff]
      %v677 = vld [vmem:[%s424 + $0x758] sm:$0xff]
      %v678 = vld [vmem:[%s424 + $0x760] sm:$0xff]
      %v679 = vld [vmem:[%s424 + $0x768] sm:$0xff]
      %v680 = vld [vmem:[%s424 + $0x770] sm:$0xff]
      %v681 = vld [vmem:[%s424 + $0x778] sm:$0xff]
      %v682 = vld [vmem:[%s424 + $0x780] sm:$0xff]
      %v683 = vld [vmem:[%s424 + $0x788] sm:$0xff]
      %v684 = vld [vmem:[%s424 + $0x790] sm:$0xff]
      %v685 = vld [vmem:[%s424 + $0x798] sm:$0xff]
      %v686 = vld [vmem:[%s424 + $0x7a0] sm:$0xff]
      %v687 = vld [vmem:[%s424 + $0x7a8] sm:$0xff]
      %v688 = vld [vmem:[%s424 + $0x7b0] sm:$0xff]
      %v689 = vld [vmem:[%s424 + $0x7b8] sm:$0xff]
      %v690 = vld [vmem:[%s424 + $0x7c0] sm:$0xff]
      %v691 = vld [vmem:[%s424 + $0x7c8] sm:$0xff]
      %v692 = vld [vmem:[%s424 + $0x7d0] sm:$0xff]
      %v693 = vld [vmem:[%s424 + $0x7d8] sm:$0xff]
      %v694 = vld [vmem:[%s424 + $0x7e0] sm:$0xff]
      %v695 = vld [vmem:[%s424 + $0x7e8] sm:$0xff]
      %v696 = vld [vmem:[%s424 + $0x7f0] sm:$0xff]
      %v697 = vld [vmem:[%s424 + $0x7f8] sm:$0xff]
      %v702 = vunpack.c.l.b16 %v438
      %v703 = vunpack.c.h.b16 %v438
      %v704 = vunpack.c.l.b16 %v439
      %v705 = vunpack.c.h.b16 %v439
      %v706 = vunpack.c.l.b16 %v440
      %v707 = vunpack.c.h.b16 %v440
      %v708 = vunpack.c.l.b16 %v441
      %v709 = vunpack.c.h.b16 %v441
      %v710 = vpack.c.b16 %v702, %v702
      %v711 = vpack.c.b16 %v703, %v703
      %v712 = vpack.c.b16 %v704, %v704
      %v713 = vpack.c.b16 %v705, %v705
      %v714 = vpack.c.b16 %v706, %v706
      %v715 = vpack.c.b16 %v707, %v707
      %v716 = vpack.c.b16 %v708, %v708
      %v717 = vpack.c.b16 %v709, %v709
      %v982 = vunpack.c.l.b16 %v442
      %v983 = vunpack.c.h.b16 %v442
      %v984 = vunpack.c.l.b16 %v443
      %v985 = vunpack.c.h.b16 %v443
      %v986 = vunpack.c.l.b16 %v444
      %v987 = vunpack.c.h.b16 %v444
      %v988 = vunpack.c.l.b16 %v445
      %v989 = vunpack.c.h.b16 %v445
      %v990 = vunpack.c.l.b16 %v446
      %v991 = vunpack.c.h.b16 %v446
      %v992 = vunpack.c.l.b16 %v447
      %v993 = vunpack.c.h.b16 %v447
      %v994 = vunpack.c.l.b16 %v448
      %v995 = vunpack.c.h.b16 %v448
      %v996 = vunpack.c.l.b16 %v449
      %v997 = vunpack.c.h.b16 %v449
      %v998 = vunpack.c.l.b16 %v450
      %v999 = vunpack.c.h.b16 %v450
      %v1000 = vunpack.c.l.b16 %v451
      %v1001 = vunpack.c.h.b16 %v451
      %v1002 = vunpack.c.l.b16 %v452
      %v1003 = vunpack.c.h.b16 %v452
      %v1004 = vunpack.c.l.b16 %v453
      %v1005 = vunpack.c.h.b16 %v453
      %v1006 = vunpack.c.l.b16 %v454
      %v1007 = vunpack.c.h.b16 %v454
      %v1008 = vunpack.c.l.b16 %v455
      %v1009 = vunpack.c.h.b16 %v455
      %v1010 = vunpack.c.l.b16 %v456
      %v1011 = vunpack.c.h.b16 %v456
      %v1012 = vunpack.c.l.b16 %v457
      %v1013 = vunpack.c.h.b16 %v457
      %v1014 = vunpack.c.l.b16 %v458
      %v1015 = vunpack.c.h.b16 %v458
      %v1016 = vunpack.c.l.b16 %v459
      %v1017 = vunpack.c.h.b16 %v459
      %v1018 = vunpack.c.l.b16 %v460
      %v1019 = vunpack.c.h.b16 %v460
      %v1020 = vunpack.c.l.b16 %v461
      %v1021 = vunpack.c.h.b16 %v461
      %v1022 = vunpack.c.l.b16 %v462
      %v1023 = vunpack.c.h.b16 %v462
      %v1024 = vunpack.c.l.b16 %v463
      %v1025 = vunpack.c.h.b16 %v463
      %v1026 = vunpack.c.l.b16 %v464
      %v1027 = vunpack.c.h.b16 %v464
      %v1028 = vunpack.c.l.b16 %v465
      %v1029 = vunpack.c.h.b16 %v465
      %v1030 = vunpack.c.l.b16 %v466
      %v1031 = vunpack.c.h.b16 %v466
      %v1032 = vunpack.c.l.b16 %v467
      %v1033 = vunpack.c.h.b16 %v467
      %v1034 = vunpack.c.l.b16 %v468
      %v1035 = vunpack.c.h.b16 %v468
      %v1036 = vunpack.c.l.b16 %v469
      %v1037 = vunpack.c.h.b16 %v469
      %v1038 = vunpack.c.l.b16 %v470
      %v1039 = vunpack.c.h.b16 %v470
      %v1040 = vunpack.c.l.b16 %v471
      %v1041 = vunpack.c.h.b16 %v471
      %v1042 = vunpack.c.l.b16 %v472
      %v1043 = vunpack.c.h.b16 %v472
      %v1044 = vunpack.c.l.b16 %v473
      %v1045 = vunpack.c.h.b16 %v473
      %v1046 = vunpack.c.l.b16 %v474
      %v1047 = vunpack.c.h.b16 %v474
      %v1048 = vunpack.c.l.b16 %v475
      %v1049 = vunpack.c.h.b16 %v475
      %v1050 = vunpack.c.l.b16 %v476
      %v1051 = vunpack.c.h.b16 %v476
      %v1052 = vunpack.c.l.b16 %v477
      %v1053 = vunpack.c.h.b16 %v477
      %v1054 = vunpack.c.l.b16 %v478
      %v1055 = vunpack.c.h.b16 %v478
      %v1056 = vunpack.c.l.b16 %v479
      %v1057 = vunpack.c.h.b16 %v479
      %v1058 = vunpack.c.l.b16 %v480
      %v1059 = vunpack.c.h.b16 %v480
      %v1060 = vunpack.c.l.b16 %v481
      %v1061 = vunpack.c.h.b16 %v481
      %v1062 = vunpack.c.l.b16 %v482
      %v1063 = vunpack.c.h.b16 %v482
      %v1064 = vunpack.c.l.b16 %v483
      %v1065 = vunpack.c.h.b16 %v483
      %v1066 = vunpack.c.l.b16 %v484
      %v1067 = vunpack.c.h.b16 %v484
      %v1068 = vunpack.c.l.b16 %v485
      %v1069 = vunpack.c.h.b16 %v485
      %v1070 = vunpack.c.l.b16 %v486
      %v1071 = vunpack.c.h.b16 %v486
      %v1072 = vunpack.c.l.b16 %v487
      %v1073 = vunpack.c.h.b16 %v487
      %v1074 = vunpack.c.l.b16 %v488
      %v1075 = vunpack.c.h.b16 %v488
      %v1076 = vunpack.c.l.b16 %v489
      %v1077 = vunpack.c.h.b16 %v489
      %v1078 = vunpack.c.l.b16 %v490
      %v1079 = vunpack.c.h.b16 %v490
      %v1080 = vunpack.c.l.b16 %v491
      %v1081 = vunpack.c.h.b16 %v491
      %v1082 = vunpack.c.l.b16 %v492
      %v1083 = vunpack.c.h.b16 %v492
      %v1084 = vunpack.c.l.b16 %v493
      %v1085 = vunpack.c.h.b16 %v493
      %v1086 = vunpack.c.l.b16 %v494
      %v1087 = vunpack.c.h.b16 %v494
      %v1088 = vunpack.c.l.b16 %v495
      %v1089 = vunpack.c.h.b16 %v495
      %v1090 = vunpack.c.l.b16 %v496
      %v1091 = vunpack.c.h.b16 %v496
      %v1092 = vunpack.c.l.b16 %v497
      %v1093 = vunpack.c.h.b16 %v497
      %v1094 = vunpack.c.l.b16 %v498
      %v1095 = vunpack.c.h.b16 %v498
      %v1096 = vunpack.c.l.b16 %v499
      %v1097 = vunpack.c.h.b16 %v499
      %v1098 = vunpack.c.l.b16 %v500
      %v1099 = vunpack.c.h.b16 %v500
      %v1100 = vunpack.c.l.b16 %v501
      %v1101 = vunpack.c.h.b16 %v501
      %v1102 = vunpack.c.l.b16 %v502
      %v1103 = vunpack.c.h.b16 %v502
      %v1104 = vunpack.c.l.b16 %v503
      %v1105 = vunpack.c.h.b16 %v503
      %v1106 = vunpack.c.l.b16 %v504
      %v1107 = vunpack.c.h.b16 %v504
      %v1108 = vunpack.c.l.b16 %v505
      %v1109 = vunpack.c.h.b16 %v505
      %v1110 = vunpack.c.l.b16 %v506
      %v1111 = vunpack.c.h.b16 %v506
      %v1112 = vunpack.c.l.b16 %v507
      %v1113 = vunpack.c.h.b16 %v507
      %v1114 = vunpack.c.l.b16 %v508
      %v1115 = vunpack.c.h.b16 %v508
      %v1116 = vunpack.c.l.b16 %v509
      %v1117 = vunpack.c.h.b16 %v509
      %v1118 = vunpack.c.l.b16 %v510
      %v1119 = vunpack.c.h.b16 %v510
      %v1120 = vunpack.c.l.b16 %v511
      %v1121 = vunpack.c.h.b16 %v511
      %v1122 = vunpack.c.l.b16 %v512
      %v1123 = vunpack.c.h.b16 %v512
      %v1124 = vunpack.c.l.b16 %v513
      %v1125 = vunpack.c.h.b16 %v513
      %v1126 = vunpack.c.l.b16 %v514
      %v1127 = vunpack.c.h.b16 %v514
      %v1128 = vunpack.c.l.b16 %v515
      %v1129 = vunpack.c.h.b16 %v515
      %v1130 = vunpack.c.l.b16 %v516
      %v1131 = vunpack.c.h.b16 %v516
      %v1132 = vunpack.c.l.b16 %v517
      %v1133 = vunpack.c.h.b16 %v517
      %v1134 = vunpack.c.l.b16 %v518
      %v1135 = vunpack.c.h.b16 %v518
      %v1136 = vunpack.c.l.b16 %v519
      %v1137 = vunpack.c.h.b16 %v519
      %v1138 = vunpack.c.l.b16 %v520
      %v1139 = vunpack.c.h.b16 %v520
      %v1140 = vunpack.c.l.b16 %v521
      %v1141 = vunpack.c.h.b16 %v521
      %v1142 = vunpack.c.l.b16 %v522
      %v1143 = vunpack.c.h.b16 %v522
      %v1144 = vunpack.c.l.b16 %v523
      %v1145 = vunpack.c.h.b16 %v523
      %v1146 = vunpack.c.l.b16 %v524
      %v1147 = vunpack.c.h.b16 %v524
      %v1148 = vunpack.c.l.b16 %v525
      %v1149 = vunpack.c.h.b16 %v525
      %v1150 = vunpack.c.l.b16 %v526
      %v1151 = vunpack.c.h.b16 %v526
      %v1152 = vunpack.c.l.b16 %v527
      %v1153 = vunpack.c.h.b16 %v527
      %v1154 = vunpack.c.l.b16 %v528
      %v1155 = vunpack.c.h.b16 %v528
      %v1156 = vunpack.c.l.b16 %v529
      %v1157 = vunpack.c.h.b16 %v529
      %v1158 = vunpack.c.l.b16 %v530
      %v1159 = vunpack.c.h.b16 %v530
      %v1160 = vunpack.c.l.b16 %v531
      %v1161 = vunpack.c.h.b16 %v531
      %v1162 = vunpack.c.l.b16 %v532
      %v1163 = vunpack.c.h.b16 %v532
      %v1164 = vunpack.c.l.b16 %v533
      %v1165 = vunpack.c.h.b16 %v533
      %v1166 = vunpack.c.l.b16 %v534
      %v1167 = vunpack.c.h.b16 %v534
      %v1168 = vunpack.c.l.b16 %v535
      %v1169 = vunpack.c.h.b16 %v535
      %v1170 = vunpack.c.l.b16 %v536
      %v1171 = vunpack.c.h.b16 %v536
      %v1172 = vunpack.c.l.b16 %v537
      %v1173 = vunpack.c.h.b16 %v537
      %v1174 = vunpack.c.l.b16 %v538
      %v1175 = vunpack.c.h.b16 %v538
      %v1176 = vunpack.c.l.b16 %v539
      %v1177 = vunpack.c.h.b16 %v539
      %v1178 = vunpack.c.l.b16 %v540
      %v1179 = vunpack.c.h.b16 %v540
      %v1180 = vunpack.c.l.b16 %v541
      %v1181 = vunpack.c.h.b16 %v541
      %v1182 = vunpack.c.l.b16 %v542
      %v1183 = vunpack.c.h.b16 %v542
      %v1184 = vunpack.c.l.b16 %v543
      %v1185 = vunpack.c.h.b16 %v543
      %v1186 = vunpack.c.l.b16 %v544
      %v1187 = vunpack.c.h.b16 %v544
      %v1188 = vunpack.c.l.b16 %v545
      %v1189 = vunpack.c.h.b16 %v545
      %v1190 = vunpack.c.l.b16 %v546
      %v1191 = vunpack.c.h.b16 %v546
      %v1192 = vunpack.c.l.b16 %v547
      %v1193 = vunpack.c.h.b16 %v547
      %v1194 = vunpack.c.l.b16 %v548
      %v1195 = vunpack.c.h.b16 %v548
      %v1196 = vunpack.c.l.b16 %v549
      %v1197 = vunpack.c.h.b16 %v549
      %v1198 = vunpack.c.l.b16 %v550
      %v1199 = vunpack.c.h.b16 %v550
      %v1200 = vunpack.c.l.b16 %v551
      %v1201 = vunpack.c.h.b16 %v551
      %v1202 = vunpack.c.l.b16 %v552
      %v1203 = vunpack.c.h.b16 %v552
      %v1204 = vunpack.c.l.b16 %v553
      %v1205 = vunpack.c.h.b16 %v553
      %v1206 = vunpack.c.l.b16 %v554
      %v1207 = vunpack.c.h.b16 %v554
      %v1208 = vunpack.c.l.b16 %v555
      %v1209 = vunpack.c.h.b16 %v555
      %v1210 = vunpack.c.l.b16 %v556
      %v1211 = vunpack.c.h.b16 %v556
      %v1212 = vunpack.c.l.b16 %v557
      %v1213 = vunpack.c.h.b16 %v557
      %v1214 = vunpack.c.l.b16 %v558
      %v1215 = vunpack.c.h.b16 %v558
      %v1216 = vunpack.c.l.b16 %v559
      %v1217 = vunpack.c.h.b16 %v559
      %v1218 = vunpack.c.l.b16 %v560
      %v1219 = vunpack.c.h.b16 %v560
      %v1220 = vunpack.c.l.b16 %v561
      %v1221 = vunpack.c.h.b16 %v561
      %v1222 = vunpack.c.l.b16 %v562
      %v1223 = vunpack.c.h.b16 %v562
      %v1224 = vunpack.c.l.b16 %v563
      %v1225 = vunpack.c.h.b16 %v563
      %v1226 = vunpack.c.l.b16 %v564
      %v1227 = vunpack.c.h.b16 %v564
      %v1228 = vunpack.c.l.b16 %v565
      %v1229 = vunpack.c.h.b16 %v565
      %v1230 = vunpack.c.l.b16 %v566
      %v1231 = vunpack.c.h.b16 %v566
      %v1232 = vunpack.c.l.b16 %v567
      %v1233 = vunpack.c.h.b16 %v567
      %v1234 = vunpack.c.l.b16 %v568
      %v1235 = vunpack.c.h.b16 %v568
      %v1236 = vunpack.c.l.b16 %v569
      %v1237 = vunpack.c.h.b16 %v569
      %v1238 = vunpack.c.l.b16 %v570
      %v1239 = vunpack.c.h.b16 %v570
      %v1240 = vunpack.c.l.b16 %v571
      %v1241 = vunpack.c.h.b16 %v571
      %v1242 = vunpack.c.l.b16 %v572
      %v1243 = vunpack.c.h.b16 %v572
      %v1244 = vunpack.c.l.b16 %v573
      %v1245 = vunpack.c.h.b16 %v573
      %v1246 = vunpack.c.l.b16 %v574
      %v1247 = vunpack.c.h.b16 %v574
      %v1248 = vunpack.c.l.b16 %v575
      %v1249 = vunpack.c.h.b16 %v575
      %v1250 = vunpack.c.l.b16 %v576
      %v1251 = vunpack.c.h.b16 %v576
      %v1252 = vunpack.c.l.b16 %v577
      %v1253 = vunpack.c.h.b16 %v577
      %v1254 = vunpack.c.l.b16 %v578
      %v1255 = vunpack.c.h.b16 %v578
      %v1256 = vunpack.c.l.b16 %v579
      %v1257 = vunpack.c.h.b16 %v579
      %v1258 = vunpack.c.l.b16 %v580
      %v1259 = vunpack.c.h.b16 %v580
      %v1260 = vunpack.c.l.b16 %v581
      %v1261 = vunpack.c.h.b16 %v581
      %v1262 = vunpack.c.l.b16 %v582
      %v1263 = vunpack.c.h.b16 %v582
      %v1264 = vunpack.c.l.b16 %v583
      %v1265 = vunpack.c.h.b16 %v583
      %v1266 = vunpack.c.l.b16 %v584
      %v1267 = vunpack.c.h.b16 %v584
      %v1268 = vunpack.c.l.b16 %v585
      %v1269 = vunpack.c.h.b16 %v585
      %v1270 = vunpack.c.l.b16 %v586
      %v1271 = vunpack.c.h.b16 %v586
      %v1272 = vunpack.c.l.b16 %v587
      %v1273 = vunpack.c.h.b16 %v587
      %v1274 = vunpack.c.l.b16 %v588
      %v1275 = vunpack.c.h.b16 %v588
      %v1276 = vunpack.c.l.b16 %v589
      %v1277 = vunpack.c.h.b16 %v589
      %v1278 = vunpack.c.l.b16 %v590
      %v1279 = vunpack.c.h.b16 %v590
      %v1280 = vunpack.c.l.b16 %v591
      %v1281 = vunpack.c.h.b16 %v591
      %v1282 = vunpack.c.l.b16 %v592
      %v1283 = vunpack.c.h.b16 %v592
      %v1284 = vunpack.c.l.b16 %v593
      %v1285 = vunpack.c.h.b16 %v593
      %v1286 = vunpack.c.l.b16 %v594
      %v1287 = vunpack.c.h.b16 %v594
      %v1288 = vunpack.c.l.b16 %v595
      %v1289 = vunpack.c.h.b16 %v595
      %v1290 = vunpack.c.l.b16 %v596
      %v1291 = vunpack.c.h.b16 %v596
      %v1292 = vunpack.c.l.b16 %v597
      %v1293 = vunpack.c.h.b16 %v597
      %v1294 = vunpack.c.l.b16 %v598
      %v1295 = vunpack.c.h.b16 %v598
      %v1296 = vunpack.c.l.b16 %v599
      %v1297 = vunpack.c.h.b16 %v599
      %v1298 = vunpack.c.l.b16 %v600
      %v1299 = vunpack.c.h.b16 %v600
      %v1300 = vunpack.c.l.b16 %v601
      %v1301 = vunpack.c.h.b16 %v601
      %v1302 = vunpack.c.l.b16 %v602
      %v1303 = vunpack.c.h.b16 %v602
      %v1304 = vunpack.c.l.b16 %v603
      %v1305 = vunpack.c.h.b16 %v603
      %v1306 = vunpack.c.l.b16 %v604
      %v1307 = vunpack.c.h.b16 %v604
      %v1308 = vunpack.c.l.b16 %v605
      %v1309 = vunpack.c.h.b16 %v605
      %v1310 = vunpack.c.l.b16 %v606
      %v1311 = vunpack.c.h.b16 %v606
      %v1312 = vunpack.c.l.b16 %v607
      %v1313 = vunpack.c.h.b16 %v607
      %v1314 = vunpack.c.l.b16 %v608
      %v1315 = vunpack.c.h.b16 %v608
      %v1316 = vunpack.c.l.b16 %v609
      %v1317 = vunpack.c.h.b16 %v609
      %v1318 = vunpack.c.l.b16 %v610
      %v1319 = vunpack.c.h.b16 %v610
      %v1320 = vunpack.c.l.b16 %v611
      %v1321 = vunpack.c.h.b16 %v611
      %v1322 = vunpack.c.l.b16 %v612
      %v1323 = vunpack.c.h.b16 %v612
      %v1324 = vunpack.c.l.b16 %v613
      %v1325 = vunpack.c.h.b16 %v613
      %v1326 = vunpack.c.l.b16 %v614
      %v1327 = vunpack.c.h.b16 %v614
      %v1328 = vunpack.c.l.b16 %v615
      %v1329 = vunpack.c.h.b16 %v615
      %v1330 = vunpack.c.l.b16 %v616
      %v1331 = vunpack.c.h.b16 %v616
      %v1332 = vunpack.c.l.b16 %v617
      %v1333 = vunpack.c.h.b16 %v617
      %v1334 = vunpack.c.l.b16 %v618
      %v1335 = vunpack.c.h.b16 %v618
      %v1336 = vunpack.c.l.b16 %v619
      %v1337 = vunpack.c.h.b16 %v619
      %v1338 = vunpack.c.l.b16 %v620
      %v1339 = vunpack.c.h.b16 %v620
      %v1340 = vunpack.c.l.b16 %v621
      %v1341 = vunpack.c.h.b16 %v621
      %v1342 = vunpack.c.l.b16 %v622
      %v1343 = vunpack.c.h.b16 %v622
      %v1344 = vunpack.c.l.b16 %v623
      %v1345 = vunpack.c.h.b16 %v623
      %v1346 = vunpack.c.l.b16 %v624
      %v1347 = vunpack.c.h.b16 %v624
      %v1348 = vunpack.c.l.b16 %v625
      %v1349 = vunpack.c.h.b16 %v625
      %v1350 = vunpack.c.l.b16 %v626
      %v1351 = vunpack.c.h.b16 %v626
      %v1352 = vunpack.c.l.b16 %v627
      %v1353 = vunpack.c.h.b16 %v627
      %v1354 = vunpack.c.l.b16 %v628
      %v1355 = vunpack.c.h.b16 %v628
      %v1356 = vunpack.c.l.b16 %v629
      %v1357 = vunpack.c.h.b16 %v629
      %v1358 = vunpack.c.l.b16 %v630
      %v1359 = vunpack.c.h.b16 %v630
      %v1360 = vunpack.c.l.b16 %v631
      %v1361 = vunpack.c.h.b16 %v631
      %v1362 = vunpack.c.l.b16 %v632
      %v1363 = vunpack.c.h.b16 %v632
      %v1364 = vunpack.c.l.b16 %v633
      %v1365 = vunpack.c.h.b16 %v633
      %v1366 = vunpack.c.l.b16 %v634
      %v1367 = vunpack.c.h.b16 %v634
      %v1368 = vunpack.c.l.b16 %v635
      %v1369 = vunpack.c.h.b16 %v635
      %v1370 = vunpack.c.l.b16 %v636
      %v1371 = vunpack.c.h.b16 %v636
      %v1372 = vunpack.c.l.b16 %v637
      %v1373 = vunpack.c.h.b16 %v637
      %v1374 = vunpack.c.l.b16 %v638
      %v1375 = vunpack.c.h.b16 %v638
      %v1376 = vunpack.c.l.b16 %v639
      %v1377 = vunpack.c.h.b16 %v639
      %v1378 = vunpack.c.l.b16 %v640
      %v1379 = vunpack.c.h.b16 %v640
      %v1380 = vunpack.c.l.b16 %v641
      %v1381 = vunpack.c.h.b16 %v641
      %v1382 = vunpack.c.l.b16 %v642
      %v1383 = vunpack.c.h.b16 %v642
      %v1384 = vunpack.c.l.b16 %v643
      %v1385 = vunpack.c.h.b16 %v643
      %v1386 = vunpack.c.l.b16 %v644
      %v1387 = vunpack.c.h.b16 %v644
      %v1388 = vunpack.c.l.b16 %v645
      %v1389 = vunpack.c.h.b16 %v645
      %v1390 = vunpack.c.l.b16 %v646
      %v1391 = vunpack.c.h.b16 %v646
      %v1392 = vunpack.c.l.b16 %v647
      %v1393 = vunpack.c.h.b16 %v647
      %v1394 = vunpack.c.l.b16 %v648
      %v1395 = vunpack.c.h.b16 %v648
      %v1396 = vunpack.c.l.b16 %v649
      %v1397 = vunpack.c.h.b16 %v649
      %v1398 = vunpack.c.l.b16 %v650
      %v1399 = vunpack.c.h.b16 %v650
      %v1400 = vunpack.c.l.b16 %v651
      %v1401 = vunpack.c.h.b16 %v651
      %v1402 = vunpack.c.l.b16 %v652
      %v1403 = vunpack.c.h.b16 %v652
      %v1404 = vunpack.c.l.b16 %v653
      %v1405 = vunpack.c.h.b16 %v653
      %v1406 = vunpack.c.l.b16 %v654
      %v1407 = vunpack.c.h.b16 %v654
      %v1408 = vunpack.c.l.b16 %v655
      %v1409 = vunpack.c.h.b16 %v655
      %v1410 = vunpack.c.l.b16 %v656
      %v1411 = vunpack.c.h.b16 %v656
      %v1412 = vunpack.c.l.b16 %v657
      %v1413 = vunpack.c.h.b16 %v657
      %v1414 = vunpack.c.l.b16 %v658
      %v1415 = vunpack.c.h.b16 %v658
      %v1416 = vunpack.c.l.b16 %v659
      %v1417 = vunpack.c.h.b16 %v659
      %v1418 = vunpack.c.l.b16 %v660
      %v1419 = vunpack.c.h.b16 %v660
      %v1420 = vunpack.c.l.b16 %v661
      %v1421 = vunpack.c.h.b16 %v661
      %v1422 = vunpack.c.l.b16 %v662
      %v1423 = vunpack.c.h.b16 %v662
      %v1424 = vunpack.c.l.b16 %v663
      %v1425 = vunpack.c.h.b16 %v663
      %v1426 = vunpack.c.l.b16 %v664
      %v1427 = vunpack.c.h.b16 %v664
      %v1428 = vunpack.c.l.b16 %v665
      %v1429 = vunpack.c.h.b16 %v665
      %v1430 = vunpack.c.l.b16 %v666
      %v1431 = vunpack.c.h.b16 %v666
      %v1432 = vunpack.c.l.b16 %v667
      %v1433 = vunpack.c.h.b16 %v667
      %v1434 = vunpack.c.l.b16 %v668
      %v1435 = vunpack.c.h.b16 %v668
      %v1436 = vunpack.c.l.b16 %v669
      %v1437 = vunpack.c.h.b16 %v669
      %v1438 = vunpack.c.l.b16 %v670
      %v1439 = vunpack.c.h.b16 %v670
      %v1440 = vunpack.c.l.b16 %v671
      %v1441 = vunpack.c.h.b16 %v671
      %v1442 = vunpack.c.l.b16 %v672
      %v1443 = vunpack.c.h.b16 %v672
      %v1444 = vunpack.c.l.b16 %v673
      %v1445 = vunpack.c.h.b16 %v673
      %v1446 = vunpack.c.l.b16 %v674
      %v1447 = vunpack.c.h.b16 %v674
      %v1448 = vunpack.c.l.b16 %v675
      %v1449 = vunpack.c.h.b16 %v675
      %v1450 = vunpack.c.l.b16 %v676
      %v1451 = vunpack.c.h.b16 %v676
      %v1452 = vunpack.c.l.b16 %v677
      %v1453 = vunpack.c.h.b16 %v677
      %v1454 = vunpack.c.l.b16 %v678
      %v1455 = vunpack.c.h.b16 %v678
      %v1456 = vunpack.c.l.b16 %v679
      %v1457 = vunpack.c.h.b16 %v679
      %v1458 = vunpack.c.l.b16 %v680
      %v1459 = vunpack.c.h.b16 %v680
      %v1460 = vunpack.c.l.b16 %v681
      %v1461 = vunpack.c.h.b16 %v681
      %v1462 = vunpack.c.l.b16 %v682
      %v1463 = vunpack.c.h.b16 %v682
      %v1464 = vunpack.c.l.b16 %v683
      %v1465 = vunpack.c.h.b16 %v683
      %v1466 = vunpack.c.l.b16 %v684
      %v1467 = vunpack.c.h.b16 %v684
      %v1468 = vunpack.c.l.b16 %v685
      %v1469 = vunpack.c.h.b16 %v685
      %v1470 = vunpack.c.l.b16 %v686
      %v1471 = vunpack.c.h.b16 %v686
      %v1472 = vunpack.c.l.b16 %v687
      %v1473 = vunpack.c.h.b16 %v687
      %v1474 = vunpack.c.l.b16 %v688
      %v1475 = vunpack.c.h.b16 %v688
      %v1476 = vunpack.c.l.b16 %v689
      %v1477 = vunpack.c.h.b16 %v689
      %v1478 = vunpack.c.l.b16 %v690
      %v1479 = vunpack.c.h.b16 %v690
      %v1480 = vunpack.c.l.b16 %v691
      %v1481 = vunpack.c.h.b16 %v691
      %v1482 = vunpack.c.l.b16 %v692
      %v1483 = vunpack.c.h.b16 %v692
      %v1484 = vunpack.c.l.b16 %v693
      %v1485 = vunpack.c.h.b16 %v693
      %v1486 = vunpack.c.l.b16 %v694
      %v1487 = vunpack.c.h.b16 %v694
      %v1488 = vunpack.c.l.b16 %v695
      %v1489 = vunpack.c.h.b16 %v695
      %v1490 = vunpack.c.l.b16 %v696
      %v1491 = vunpack.c.h.b16 %v696
      %v1492 = vunpack.c.l.b16 %v697
      %v1493 = vunpack.c.h.b16 %v697
      %v1494 = vpack.c.b16 %v986, %v982
      %v1495 = vpack.c.b16 %v987, %v983
      %v1496 = vpack.c.b16 %v988, %v984
      %v1497 = vpack.c.b16 %v989, %v985
      %v1498 = vpack.c.b16 %v994, %v990
      %v1499 = vpack.c.b16 %v995, %v991
      %v1500 = vpack.c.b16 %v996, %v992
      %v1501 = vpack.c.b16 %v997, %v993
      %v1502 = vpack.c.b16 %v1002, %v998
      %v1503 = vpack.c.b16 %v1003, %v999
      %v1504 = vpack.c.b16 %v1004, %v1000
      %v1505 = vpack.c.b16 %v1005, %v1001
      %v1506 = vpack.c.b16 %v1010, %v1006
      %v1507 = vpack.c.b16 %v1011, %v1007
      %v1508 = vpack.c.b16 %v1012, %v1008
      %v1509 = vpack.c.b16 %v1013, %v1009
      %v1510 = vpack.c.b16 %v1018, %v1014
      %v1511 = vpack.c.b16 %v1019, %v1015
      %v1512 = vpack.c.b16 %v1020, %v1016
      %v1513 = vpack.c.b16 %v1021, %v1017
      %v1514 = vpack.c.b16 %v1026, %v1022
      %v1515 = vpack.c.b16 %v1027, %v1023
      %v1516 = vpack.c.b16 %v1028, %v1024
      %v1517 = vpack.c.b16 %v1029, %v1025
      %v1518 = vpack.c.b16 %v1034, %v1030
      %v1519 = vpack.c.b16 %v1035, %v1031
      %v1520 = vpack.c.b16 %v1036, %v1032
      %v1521 = vpack.c.b16 %v1037, %v1033
      %v1522 = vpack.c.b16 %v1042, %v1038
      %v1523 = vpack.c.b16 %v1043, %v1039
      %v1524 = vpack.c.b16 %v1044, %v1040
      %v1525 = vpack.c.b16 %v1045, %v1041
      %v1526 = vpack.c.b16 %v1050, %v1046
      %v1527 = vpack.c.b16 %v1051, %v1047
      %v1528 = vpack.c.b16 %v1052, %v1048
      %v1529 = vpack.c.b16 %v1053, %v1049
      %v1530 = vpack.c.b16 %v1058, %v1054
      %v1531 = vpack.c.b16 %v1059, %v1055
      %v1532 = vpack.c.b16 %v1060, %v1056
      %v1533 = vpack.c.b16 %v1061, %v1057
      %v1534 = vpack.c.b16 %v1066, %v1062
      %v1535 = vpack.c.b16 %v1067, %v1063
      %v1536 = vpack.c.b16 %v1068, %v1064
      %v1537 = vpack.c.b16 %v1069, %v1065
      %v1538 = vpack.c.b16 %v1074, %v1070
      %v1539 = vpack.c.b16 %v1075, %v1071
      %v1540 = vpack.c.b16 %v1076, %v1072
      %v1541 = vpack.c.b16 %v1077, %v1073
      %v1542 = vpack.c.b16 %v1082, %v1078
      %v1543 = vpack.c.b16 %v1083, %v1079
      %v1544 = vpack.c.b16 %v1084, %v1080
      %v1545 = vpack.c.b16 %v1085, %v1081
      %v1546 = vpack.c.b16 %v1090, %v1086
      %v1547 = vpack.c.b16 %v1091, %v1087
      %v1548 = vpack.c.b16 %v1092, %v1088
      %v1549 = vpack.c.b16 %v1093, %v1089
      %v1550 = vpack.c.b16 %v1098, %v1094
      %v1551 = vpack.c.b16 %v1099, %v1095
      %v1552 = vpack.c.b16 %v1100, %v1096
      %v1553 = vpack.c.b16 %v1101, %v1097
      %v1554 = vpack.c.b16 %v1106, %v1102
      %v1555 = vpack.c.b16 %v1107, %v1103
      %v1556 = vpack.c.b16 %v1108, %v1104
      %v1557 = vpack.c.b16 %v1109, %v1105
      %v1558 = vpack.c.b16 %v1114, %v1110
      %v1559 = vpack.c.b16 %v1115, %v1111
      %v1560 = vpack.c.b16 %v1116, %v1112
      %v1561 = vpack.c.b16 %v1117, %v1113
      %v1562 = vpack.c.b16 %v1122, %v1118
      %v1563 = vpack.c.b16 %v1123, %v1119
      %v1564 = vpack.c.b16 %v1124, %v1120
      %v1565 = vpack.c.b16 %v1125, %v1121
      %v1566 = vpack.c.b16 %v1130, %v1126
      %v1567 = vpack.c.b16 %v1131, %v1127
      %v1568 = vpack.c.b16 %v1132, %v1128
      %v1569 = vpack.c.b16 %v1133, %v1129
      %v1570 = vpack.c.b16 %v1138, %v1134
      %v1571 = vpack.c.b16 %v1139, %v1135
      %v1572 = vpack.c.b16 %v1140, %v1136
      %v1573 = vpack.c.b16 %v1141, %v1137
      %v1574 = vpack.c.b16 %v1146, %v1142
      %v1575 = vpack.c.b16 %v1147, %v1143
      %v1576 = vpack.c.b16 %v1148, %v1144
      %v1577 = vpack.c.b16 %v1149, %v1145
      %v1578 = vpack.c.b16 %v1154, %v1150
      %v1579 = vpack.c.b16 %v1155, %v1151
      %v1580 = vpack.c.b16 %v1156, %v1152
      %v1581 = vpack.c.b16 %v1157, %v1153
      %v1582 = vpack.c.b16 %v1162, %v1158
      %v1583 = vpack.c.b16 %v1163, %v1159
      %v1584 = vpack.c.b16 %v1164, %v1160
      %v1585 = vpack.c.b16 %v1165, %v1161
      %v1586 = vpack.c.b16 %v1170, %v1166
      %v1587 = vpack.c.b16 %v1171, %v1167
      %v1588 = vpack.c.b16 %v1172, %v1168
      %v1589 = vpack.c.b16 %v1173, %v1169
      %v1590 = vpack.c.b16 %v1178, %v1174
      %v1591 = vpack.c.b16 %v1179, %v1175
      %v1592 = vpack.c.b16 %v1180, %v1176
      %v1593 = vpack.c.b16 %v1181, %v1177
      %v1594 = vpack.c.b16 %v1186, %v1182
      %v1595 = vpack.c.b16 %v1187, %v1183
      %v1596 = vpack.c.b16 %v1188, %v1184
      %v1597 = vpack.c.b16 %v1189, %v1185
      %v1598 = vpack.c.b16 %v1194, %v1190
      %v1599 = vpack.c.b16 %v1195, %v1191
      %v1600 = vpack.c.b16 %v1196, %v1192
      %v1601 = vpack.c.b16 %v1197, %v1193
      %v1602 = vpack.c.b16 %v1202, %v1198
      %v1603 = vpack.c.b16 %v1203, %v1199
      %v1604 = vpack.c.b16 %v1204, %v1200
      %v1605 = vpack.c.b16 %v1205, %v1201
      %v1606 = vpack.c.b16 %v1210, %v1206
      %v1607 = vpack.c.b16 %v1211, %v1207
      %v1608 = vpack.c.b16 %v1212, %v1208
      %v1609 = vpack.c.b16 %v1213, %v1209
      %v1610 = vpack.c.b16 %v1218, %v1214
      %v1611 = vpack.c.b16 %v1219, %v1215
      %v1612 = vpack.c.b16 %v1220, %v1216
      %v1613 = vpack.c.b16 %v1221, %v1217
      %v1614 = vpack.c.b16 %v1226, %v1222
      %v1615 = vpack.c.b16 %v1227, %v1223
      %v1616 = vpack.c.b16 %v1228, %v1224
      %v1617 = vpack.c.b16 %v1229, %v1225
      %v1618 = vpack.c.b16 %v1234, %v1230
      %v1619 = vpack.c.b16 %v1235, %v1231
      %v1620 = vpack.c.b16 %v1236, %v1232
      %v1621 = vpack.c.b16 %v1237, %v1233
      %v1622 = vpack.c.b16 %v1242, %v1238
      %v1623 = vpack.c.b16 %v1243, %v1239
      %v1624 = vpack.c.b16 %v1244, %v1240
      %v1625 = vpack.c.b16 %v1245, %v1241
      %v1626 = vpack.c.b16 %v1250, %v1246
      %v1627 = vpack.c.b16 %v1251, %v1247
      %v1628 = vpack.c.b16 %v1252, %v1248
      %v1629 = vpack.c.b16 %v1253, %v1249
      %v1630 = vpack.c.b16 %v1258, %v1254
      %v1631 = vpack.c.b16 %v1259, %v1255
      %v1632 = vpack.c.b16 %v1260, %v1256
      %v1633 = vpack.c.b16 %v1261, %v1257
      %v1634 = vpack.c.b16 %v1266, %v1262
      %v1635 = vpack.c.b16 %v1267, %v1263
      %v1636 = vpack.c.b16 %v1268, %v1264
      %v1637 = vpack.c.b16 %v1269, %v1265
      %v1638 = vpack.c.b16 %v1274, %v1270
      %v1639 = vpack.c.b16 %v1275, %v1271
      %v1640 = vpack.c.b16 %v1276, %v1272
      %v1641 = vpack.c.b16 %v1277, %v1273
      %v1642 = vpack.c.b16 %v1282, %v1278
      %v1643 = vpack.c.b16 %v1283, %v1279
      %v1644 = vpack.c.b16 %v1284, %v1280
      %v1645 = vpack.c.b16 %v1285, %v1281
      %v1646 = vpack.c.b16 %v1290, %v1286
      %v1647 = vpack.c.b16 %v1291, %v1287
      %v1648 = vpack.c.b16 %v1292, %v1288
      %v1649 = vpack.c.b16 %v1293, %v1289
      %v1650 = vpack.c.b16 %v1298, %v1294
      %v1651 = vpack.c.b16 %v1299, %v1295
      %v1652 = vpack.c.b16 %v1300, %v1296
      %v1653 = vpack.c.b16 %v1301, %v1297
      %v1654 = vpack.c.b16 %v1306, %v1302
      %v1655 = vpack.c.b16 %v1307, %v1303
      %v1656 = vpack.c.b16 %v1308, %v1304
      %v1657 = vpack.c.b16 %v1309, %v1305
      %v1658 = vpack.c.b16 %v1314, %v1310
      %v1659 = vpack.c.b16 %v1315, %v1311
      %v1660 = vpack.c.b16 %v1316, %v1312
      %v1661 = vpack.c.b16 %v1317, %v1313
      %v1662 = vpack.c.b16 %v1322, %v1318
      %v1663 = vpack.c.b16 %v1323, %v1319
      %v1664 = vpack.c.b16 %v1324, %v1320
      %v1665 = vpack.c.b16 %v1325, %v1321
      %v1666 = vpack.c.b16 %v1330, %v1326
      %v1667 = vpack.c.b16 %v1331, %v1327
      %v1668 = vpack.c.b16 %v1332, %v1328
      %v1669 = vpack.c.b16 %v1333, %v1329
      %v1670 = vpack.c.b16 %v1338, %v1334
      %v1671 = vpack.c.b16 %v1339, %v1335
      %v1672 = vpack.c.b16 %v1340, %v1336
      %v1673 = vpack.c.b16 %v1341, %v1337
      %v1674 = vpack.c.b16 %v1346, %v1342
      %v1675 = vpack.c.b16 %v1347, %v1343
      %v1676 = vpack.c.b16 %v1348, %v1344
      %v1677 = vpack.c.b16 %v1349, %v1345
      %v1678 = vpack.c.b16 %v1354, %v1350
      %v1679 = vpack.c.b16 %v1355, %v1351
      %v1680 = vpack.c.b16 %v1356, %v1352
      %v1681 = vpack.c.b16 %v1357, %v1353
      %v1682 = vpack.c.b16 %v1362, %v1358
      %v1683 = vpack.c.b16 %v1363, %v1359
      %v1684 = vpack.c.b16 %v1364, %v1360
      %v1685 = vpack.c.b16 %v1365, %v1361
      %v1686 = vpack.c.b16 %v1370, %v1366
      %v1687 = vpack.c.b16 %v1371, %v1367
      %v1688 = vpack.c.b16 %v1372, %v1368
      %v1689 = vpack.c.b16 %v1373, %v1369
      %v1690 = vpack.c.b16 %v1378, %v1374
      %v1691 = vpack.c.b16 %v1379, %v1375
      %v1692 = vpack.c.b16 %v1380, %v1376
      %v1693 = vpack.c.b16 %v1381, %v1377
      %v1694 = vpack.c.b16 %v1386, %v1382
      %v1695 = vpack.c.b16 %v1387, %v1383
      %v1696 = vpack.c.b16 %v1388, %v1384
      %v1697 = vpack.c.b16 %v1389, %v1385
      %v1698 = vpack.c.b16 %v1394, %v1390
      %v1699 = vpack.c.b16 %v1395, %v1391
      %v1700 = vpack.c.b16 %v1396, %v1392
      %v1701 = vpack.c.b16 %v1397, %v1393
      %v1702 = vpack.c.b16 %v1402, %v1398
      %v1703 = vpack.c.b16 %v1403, %v1399
      %v1704 = vpack.c.b16 %v1404, %v1400
      %v1705 = vpack.c.b16 %v1405, %v1401
      %v1706 = vpack.c.b16 %v1410, %v1406
      %v1707 = vpack.c.b16 %v1411, %v1407
      %v1708 = vpack.c.b16 %v1412, %v1408
      %v1709 = vpack.c.b16 %v1413, %v1409
      %v1710 = vpack.c.b16 %v1418, %v1414
      %v1711 = vpack.c.b16 %v1419, %v1415
      %v1712 = vpack.c.b16 %v1420, %v1416
      %v1713 = vpack.c.b16 %v1421, %v1417
      %v1714 = vpack.c.b16 %v1426, %v1422
      %v1715 = vpack.c.b16 %v1427, %v1423
      %v1716 = vpack.c.b16 %v1428, %v1424
      %v1717 = vpack.c.b16 %v1429, %v1425
      %v1718 = vpack.c.b16 %v1434, %v1430
      %v1719 = vpack.c.b16 %v1435, %v1431
      %v1720 = vpack.c.b16 %v1436, %v1432
      %v1721 = vpack.c.b16 %v1437, %v1433
      %v1722 = vpack.c.b16 %v1442, %v1438
      %v1723 = vpack.c.b16 %v1443, %v1439
      %v1724 = vpack.c.b16 %v1444, %v1440
      %v1725 = vpack.c.b16 %v1445, %v1441
      %v1726 = vpack.c.b16 %v1450, %v1446
      %v1727 = vpack.c.b16 %v1451, %v1447
      %v1728 = vpack.c.b16 %v1452, %v1448
      %v1729 = vpack.c.b16 %v1453, %v1449
      %v1730 = vpack.c.b16 %v1458, %v1454
      %v1731 = vpack.c.b16 %v1459, %v1455
      %v1732 = vpack.c.b16 %v1460, %v1456
      %v1733 = vpack.c.b16 %v1461, %v1457
      %v1734 = vpack.c.b16 %v1466, %v1462
      %v1735 = vpack.c.b16 %v1467, %v1463
      %v1736 = vpack.c.b16 %v1468, %v1464
      %v1737 = vpack.c.b16 %v1469, %v1465
      %v1738 = vpack.c.b16 %v1474, %v1470
      %v1739 = vpack.c.b16 %v1475, %v1471
      %v1740 = vpack.c.b16 %v1476, %v1472
      %v1741 = vpack.c.b16 %v1477, %v1473
      %v1742 = vpack.c.b16 %v1482, %v1478
      %v1743 = vpack.c.b16 %v1483, %v1479
      %v1744 = vpack.c.b16 %v1484, %v1480
      %v1745 = vpack.c.b16 %v1485, %v1481
      %v1746 = vpack.c.b16 %v1490, %v1486
      %v1747 = vpack.c.b16 %v1491, %v1487
      %v1748 = vpack.c.b16 %v1492, %v1488
      %v1749 = vpack.c.b16 %v1493, %v1489
      %2006 = vmatpush.bf16.msra.mxu0 %v1522
      %2007 = vmatpush.bf16.msra.mxu0 %v1518
      %2008 = vmatpush.bf16.msra.mxu0 %v1514
      %2009 = vmatpush.bf16.msra.mxu0 %v1510
      %2010 = vmatpush.bf16.msra.mxu0 %v1506
      %2011 = vmatpush.bf16.msra.mxu0 %v1502
      %2012 = vmatpush.bf16.msra.mxu0 %v1498
      %2013 = vmatpush.bf16.msra.mxu0 %v1494
      %2014 = vmatmul.bf16.gmra.mxu0 %v710
      %v2015 = vpop.f32.mrf.mxu0
      %v2016 = vadd.f32 0.0, %v2015
      %v2017 = vpop.f32.mrf.mxu0
      %2018 = vdwg.mxu0
      %2019 = vmatpush.bf16.msra.mxu0 %v1554
      %2020 = vmatpush.bf16.msra.mxu0 %v1550
      %2021 = vmatpush.bf16.msra.mxu0 %v1546
      %2022 = vmatpush.bf16.msra.mxu0 %v1542
      %2023 = vmatpush.bf16.msra.mxu0 %v1538
      %2024 = vmatpush.bf16.msra.mxu0 %v1534
      %2025 = vmatpush.bf16.msra.mxu0 %v1530
      %2026 = vmatpush.bf16.msra.mxu0 %v1526
      %2027 = vmatmul.bf16.gmra.mxu0 %v711
      %v2028 = vpop.f32.mrf.mxu0
      %v2029 = vadd.f32 %v2016, %v2028
      %v2030 = vpop.f32.mrf.mxu0
      %2031 = vdwg.mxu0
      %2032 = vmatpush.bf16.msra.mxu0 %v1586
      %2033 = vmatpush.bf16.msra.mxu0 %v1582
      %2034 = vmatpush.bf16.msra.mxu0 %v1578
      %2035 = vmatpush.bf16.msra.mxu0 %v1574
      %2036 = vmatpush.bf16.msra.mxu0 %v1570
      %2037 = vmatpush.bf16.msra.mxu0 %v1566
      %2038 = vmatpush.bf16.msra.mxu0 %v1562
      %2039 = vmatpush.bf16.msra.mxu0 %v1558
      %2040 = vmatmul.bf16.gmra.mxu0 %v712
      %v2041 = vpop.f32.mrf.mxu0
      %v2042 = vadd.f32 %v2029, %v2041
      %v2043 = vpop.f32.mrf.mxu0
      %2044 = vdwg.mxu0
      %2045 = vmatpush.bf16.msra.mxu0 %v1618
      %2046 = vmatpush.bf16.msra.mxu0 %v1614
      %2047 = vmatpush.bf16.msra.mxu0 %v1610
      %2048 = vmatpush.bf16.msra.mxu0 %v1606
      %2049 = vmatpush.bf16.msra.mxu0 %v1602
      %2050 = vmatpush.bf16.msra.mxu0 %v1598
      %2051 = vmatpush.bf16.msra.mxu0 %v1594
      %2052 = vmatpush.bf16.msra.mxu0 %v1590
      %2053 = vmatmul.bf16.gmra.mxu0 %v713
      %v2054 = vpop.f32.mrf.mxu0
      %v2055 = vadd.f32 %v2042, %v2054
      %v2056 = vpop.f32.mrf.mxu0
      %2057 = vdwg.mxu0
      %2058 = vmatpush.bf16.msra.mxu0 %v1650
      %2059 = vmatpush.bf16.msra.mxu0 %v1646
      %2060 = vmatpush.bf16.msra.mxu0 %v1642
      %2061 = vmatpush.bf16.msra.mxu0 %v1638
      %2062 = vmatpush.bf16.msra.mxu0 %v1634
      %2063 = vmatpush.bf16.msra.mxu0 %v1630
      %2064 = vmatpush.bf16.msra.mxu0 %v1626
      %2065 = vmatpush.bf16.msra.mxu0 %v1622
      %2066 = vmatmul.bf16.gmra.mxu0 %v714
      %v2067 = vpop.f32.mrf.mxu0
      %v2068 = vadd.f32 %v2055, %v2067
      %v2069 = vpop.f32.mrf.mxu0
      %2070 = vdwg.mxu0
      %2071 = vmatpush.bf16.msra.mxu0 %v1682
      %2072 = vmatpush.bf16.msra.mxu0 %v1678
      %2073 = vmatpush.bf16.msra.mxu0 %v1674
      %2074 = vmatpush.bf16.msra.mxu0 %v1670
      %2075 = vmatpush.bf16.msra.mxu0 %v1666
      %2076 = vmatpush.bf16.msra.mxu0 %v1662
      %2077 = vmatpush.bf16.msra.mxu0 %v1658
      %2078 = vmatpush.bf16.msra.mxu0 %v1654
      %2079 = vmatmul.bf16.gmra.mxu0 %v715
      %v2080 = vpop.f32.mrf.mxu0
      %v2081 = vadd.f32 %v2068, %v2080
      %v2082 = vpop.f32.mrf.mxu0
      %2083 = vdwg.mxu0
      %2084 = vmatpush.bf16.msra.mxu0 %v1714
      %2085 = vmatpush.bf16.msra.mxu0 %v1710
      %2086 = vmatpush.bf16.msra.mxu0 %v1706
      %2087 = vmatpush.bf16.msra.mxu0 %v1702
      %2088 = vmatpush.bf16.msra.mxu0 %v1698
      %2089 = vmatpush.bf16.msra.mxu0 %v1694
      %2090 = vmatpush.bf16.msra.mxu0 %v1690
      %2091 = vmatpush.bf16.msra.mxu0 %v1686
      %2092 = vmatmul.bf16.gmra.mxu0 %v716
      %v2093 = vpop.f32.mrf.mxu0
      %v2094 = vadd.f32 %v2081, %v2093
      %v2095 = vpop.f32.mrf.mxu0
      %2096 = vdwg.mxu0
      %2097 = vmatpush.bf16.msra.mxu0 %v1746
      %2098 = vmatpush.bf16.msra.mxu0 %v1742
      %2099 = vmatpush.bf16.msra.mxu0 %v1738
      %2100 = vmatpush.bf16.msra.mxu0 %v1734
      %2101 = vmatpush.bf16.msra.mxu0 %v1730
      %2102 = vmatpush.bf16.msra.mxu0 %v1726
      %2103 = vmatpush.bf16.msra.mxu0 %v1722
      %2104 = vmatpush.bf16.msra.mxu0 %v1718
      %2105 = vmatmul.bf16.gmra.mxu0 %v717
      %v2106 = vpop.f32.mrf.mxu0
      %v2107 = vadd.f32 %v2094, %v2106
      %v2108 = vpop.f32.mrf.mxu0
      %2109 = vdwg.mxu0
      %2110 = vmatpush.bf16.msra.mxu0 %v1523
      %2111 = vmatpush.bf16.msra.mxu0 %v1519
      %2112 = vmatpush.bf16.msra.mxu0 %v1515
      %2113 = vmatpush.bf16.msra.mxu0 %v1511
      %2114 = vmatpush.bf16.msra.mxu0 %v1507
      %2115 = vmatpush.bf16.msra.mxu0 %v1503
      %2116 = vmatpush.bf16.msra.mxu0 %v1499
      %2117 = vmatpush.bf16.msra.mxu0 %v1495
      %2118 = vmatmul.bf16.gmra.mxu0 %v710
      %v2119 = vpop.f32.mrf.mxu0
      %v2120 = vadd.f32 0.0, %v2119
      %v2121 = vpop.f32.mrf.mxu0
      %2122 = vdwg.mxu0
      %2123 = vmatpush.bf16.msra.mxu0 %v1555
      %2124 = vmatpush.bf16.msra.mxu0 %v1551
      %2125 = vmatpush.bf16.msra.mxu0 %v1547
      %2126 = vmatpush.bf16.msra.mxu0 %v1543
      %2127 = vmatpush.bf16.msra.mxu0 %v1539
      %2128 = vmatpush.bf16.msra.mxu0 %v1535
      %2129 = vmatpush.bf16.msra.mxu0 %v1531
      %2130 = vmatpush.bf16.msra.mxu0 %v1527
      %2131 = vmatmul.bf16.gmra.mxu0 %v711
      %v2132 = vpop.f32.mrf.mxu0
      %v2133 = vadd.f32 %v2120, %v2132
      %v2134 = vpop.f32.mrf.mxu0
      %2135 = vdwg.mxu0
      %2136 = vmatpush.bf16.msra.mxu0 %v1587
      %2137 = vmatpush.bf16.msra.mxu0 %v1583
      %2138 = vmatpush.bf16.msra.mxu0 %v1579
      %2139 = vmatpush.bf16.msra.mxu0 %v1575
      %2140 = vmatpush.bf16.msra.mxu0 %v1571
      %2141 = vmatpush.bf16.msra.mxu0 %v1567
      %2142 = vmatpush.bf16.msra.mxu0 %v1563
      %2143 = vmatpush.bf16.msra.mxu0 %v1559
      %2144 = vmatmul.bf16.gmra.mxu0 %v712
      %v2145 = vpop.f32.mrf.mxu0
      %v2146 = vadd.f32 %v2133, %v2145
      %v2147 = vpop.f32.mrf.mxu0
      %2148 = vdwg.mxu0
      %2149 = vmatpush.bf16.msra.mxu0 %v1619
      %2150 = vmatpush.bf16.msra.mxu0 %v1615
      %2151 = vmatpush.bf16.msra.mxu0 %v1611
      %2152 = vmatpush.bf16.msra.mxu0 %v1607
      %2153 = vmatpush.bf16.msra.mxu0 %v1603
      %2154 = vmatpush.bf16.msra.mxu0 %v1599
      %2155 = vmatpush.bf16.msra.mxu0 %v1595
      %2156 = vmatpush.bf16.msra.mxu0 %v1591
      %2157 = vmatmul.bf16.gmra.mxu0 %v713
      %v2158 = vpop.f32.mrf.mxu0
      %v2159 = vadd.f32 %v2146, %v2158
      %v2160 = vpop.f32.mrf.mxu0
      %2161 = vdwg.mxu0
      %2162 = vmatpush.bf16.msra.mxu0 %v1651
      %2163 = vmatpush.bf16.msra.mxu0 %v1647
      %2164 = vmatpush.bf16.msra.mxu0 %v1643
      %2165 = vmatpush.bf16.msra.mxu0 %v1639
      %2166 = vmatpush.bf16.msra.mxu0 %v1635
      %2167 = vmatpush.bf16.msra.mxu0 %v1631
      %2168 = vmatpush.bf16.msra.mxu0 %v1627
      %2169 = vmatpush.bf16.msra.mxu0 %v1623
      %2170 = vmatmul.bf16.gmra.mxu0 %v714
      %v2171 = vpop.f32.mrf.mxu0
      %v2172 = vadd.f32 %v2159, %v2171
      %v2173 = vpop.f32.mrf.mxu0
      %2174 = vdwg.mxu0
      %2175 = vmatpush.bf16.msra.mxu0 %v1683
      %2176 = vmatpush.bf16.msra.mxu0 %v1679
      %2177 = vmatpush.bf16.msra.mxu0 %v1675
      %2178 = vmatpush.bf16.msra.mxu0 %v1671
      %2179 = vmatpush.bf16.msra.mxu0 %v1667
      %2180 = vmatpush.bf16.msra.mxu0 %v1663
      %2181 = vmatpush.bf16.msra.mxu0 %v1659
      %2182 = vmatpush.bf16.msra.mxu0 %v1655
      %2183 = vmatmul.bf16.gmra.mxu0 %v715
      %v2184 = vpop.f32.mrf.mxu0
      %v2185 = vadd.f32 %v2172, %v2184
      %v2186 = vpop.f32.mrf.mxu0
      %2187 = vdwg.mxu0
      %2188 = vmatpush.bf16.msra.mxu0 %v1715
      %2189 = vmatpush.bf16.msra.mxu0 %v1711
      %2190 = vmatpush.bf16.msra.mxu0 %v1707
      %2191 = vmatpush.bf16.msra.mxu0 %v1703
      %2192 = vmatpush.bf16.msra.mxu0 %v1699
      %2193 = vmatpush.bf16.msra.mxu0 %v1695
      %2194 = vmatpush.bf16.msra.mxu0 %v1691
      %2195 = vmatpush.bf16.msra.mxu0 %v1687
      %2196 = vmatmul.bf16.gmra.mxu0 %v716
      %v2197 = vpop.f32.mrf.mxu0
      %v2198 = vadd.f32 %v2185, %v2197
      %v2199 = vpop.f32.mrf.mxu0
      %2200 = vdwg.mxu0
      %2201 = vmatpush.bf16.msra.mxu0 %v1747
      %2202 = vmatpush.bf16.msra.mxu0 %v1743
      %2203 = vmatpush.bf16.msra.mxu0 %v1739
      %2204 = vmatpush.bf16.msra.mxu0 %v1735
      %2205 = vmatpush.bf16.msra.mxu0 %v1731
      %2206 = vmatpush.bf16.msra.mxu0 %v1727
      %2207 = vmatpush.bf16.msra.mxu0 %v1723
      %2208 = vmatpush.bf16.msra.mxu0 %v1719
      %2209 = vmatmul.bf16.gmra.mxu0 %v717
      %v2210 = vpop.f32.mrf.mxu0
      %v2211 = vadd.f32 %v2198, %v2210
      %v2212 = vpop.f32.mrf.mxu0
      %2213 = vdwg.mxu0
      %2214 = vmatpush.bf16.msra.mxu0 %v1524
      %2215 = vmatpush.bf16.msra.mxu0 %v1520
      %2216 = vmatpush.bf16.msra.mxu0 %v1516
      %2217 = vmatpush.bf16.msra.mxu0 %v1512
      %2218 = vmatpush.bf16.msra.mxu0 %v1508
      %2219 = vmatpush.bf16.msra.mxu0 %v1504
      %2220 = vmatpush.bf16.msra.mxu0 %v1500
      %2221 = vmatpush.bf16.msra.mxu0 %v1496
      %2222 = vmatmul.bf16.gmra.mxu0 %v710
      %v2223 = vpop.f32.mrf.mxu0
      %v2224 = vadd.f32 0.0, %v2223
      %v2225 = vpop.f32.mrf.mxu0
      %2226 = vdwg.mxu0
      %2227 = vmatpush.bf16.msra.mxu0 %v1556
      %2228 = vmatpush.bf16.msra.mxu0 %v1552
      %2229 = vmatpush.bf16.msra.mxu0 %v1548
      %2230 = vmatpush.bf16.msra.mxu0 %v1544
      %2231 = vmatpush.bf16.msra.mxu0 %v1540
      %2232 = vmatpush.bf16.msra.mxu0 %v1536
      %2233 = vmatpush.bf16.msra.mxu0 %v1532
      %2234 = vmatpush.bf16.msra.mxu0 %v1528
      %2235 = vmatmul.bf16.gmra.mxu0 %v711
      %v2236 = vpop.f32.mrf.mxu0
      %v2237 = vadd.f32 %v2224, %v2236
      %v2238 = vpop.f32.mrf.mxu0
      %2239 = vdwg.mxu0
      %2240 = vmatpush.bf16.msra.mxu0 %v1588
      %2241 = vmatpush.bf16.msra.mxu0 %v1584
      %2242 = vmatpush.bf16.msra.mxu0 %v1580
      %2243 = vmatpush.bf16.msra.mxu0 %v1576
      %2244 = vmatpush.bf16.msra.mxu0 %v1572
      %2245 = vmatpush.bf16.msra.mxu0 %v1568
      %2246 = vmatpush.bf16.msra.mxu0 %v1564
      %2247 = vmatpush.bf16.msra.mxu0 %v1560
      %2248 = vmatmul.bf16.gmra.mxu0 %v712
      %v2249 = vpop.f32.mrf.mxu0
      %v2250 = vadd.f32 %v2237, %v2249
      %v2251 = vpop.f32.mrf.mxu0
      %2252 = vdwg.mxu0
      %2253 = vmatpush.bf16.msra.mxu0 %v1620
      %2254 = vmatpush.bf16.msra.mxu0 %v1616
      %2255 = vmatpush.bf16.msra.mxu0 %v1612
      %2256 = vmatpush.bf16.msra.mxu0 %v1608
      %2257 = vmatpush.bf16.msra.mxu0 %v1604
      %2258 = vmatpush.bf16.msra.mxu0 %v1600
      %2259 = vmatpush.bf16.msra.mxu0 %v1596
      %2260 = vmatpush.bf16.msra.mxu0 %v1592
      %2261 = vmatmul.bf16.gmra.mxu0 %v713
      %v2262 = vpop.f32.mrf.mxu0
      %v2263 = vadd.f32 %v2250, %v2262
      %v2264 = vpop.f32.mrf.mxu0
      %2265 = vdwg.mxu0
      %2266 = vmatpush.bf16.msra.mxu0 %v1652
      %2267 = vmatpush.bf16.msra.mxu0 %v1648
      %2268 = vmatpush.bf16.msra.mxu0 %v1644
      %2269 = vmatpush.bf16.msra.mxu0 %v1640
      %2270 = vmatpush.bf16.msra.mxu0 %v1636
      %2271 = vmatpush.bf16.msra.mxu0 %v1632
      %2272 = vmatpush.bf16.msra.mxu0 %v1628
      %2273 = vmatpush.bf16.msra.mxu0 %v1624
      %2274 = vmatmul.bf16.gmra.mxu0 %v714
      %v2275 = vpop.f32.mrf.mxu0
      %v2276 = vadd.f32 %v2263, %v2275
      %v2277 = vpop.f32.mrf.mxu0
      %2278 = vdwg.mxu0
      %2279 = vmatpush.bf16.msra.mxu0 %v1684
      %2280 = vmatpush.bf16.msra.mxu0 %v1680
      %2281 = vmatpush.bf16.msra.mxu0 %v1676
      %2282 = vmatpush.bf16.msra.mxu0 %v1672
      %2283 = vmatpush.bf16.msra.mxu0 %v1668
      %2284 = vmatpush.bf16.msra.mxu0 %v1664
      %2285 = vmatpush.bf16.msra.mxu0 %v1660
      %2286 = vmatpush.bf16.msra.mxu0 %v1656
      %2287 = vmatmul.bf16.gmra.mxu0 %v715
      %v2288 = vpop.f32.mrf.mxu0
      %v2289 = vadd.f32 %v2276, %v2288
      %v2290 = vpop.f32.mrf.mxu0
      %2291 = vdwg.mxu0
      %2292 = vmatpush.bf16.msra.mxu0 %v1716
      %2293 = vmatpush.bf16.msra.mxu0 %v1712
      %2294 = vmatpush.bf16.msra.mxu0 %v1708
      %2295 = vmatpush.bf16.msra.mxu0 %v1704
      %2296 = vmatpush.bf16.msra.mxu0 %v1700
      %2297 = vmatpush.bf16.msra.mxu0 %v1696
      %2298 = vmatpush.bf16.msra.mxu0 %v1692
      %2299 = vmatpush.bf16.msra.mxu0 %v1688
      %2300 = vmatmul.bf16.gmra.mxu0 %v716
      %v2301 = vpop.f32.mrf.mxu0
      %v2302 = vadd.f32 %v2289, %v2301
      %v2303 = vpop.f32.mrf.mxu0
      %2304 = vdwg.mxu0
      %2305 = vmatpush.bf16.msra.mxu0 %v1748
      %2306 = vmatpush.bf16.msra.mxu0 %v1744
      %2307 = vmatpush.bf16.msra.mxu0 %v1740
      %2308 = vmatpush.bf16.msra.mxu0 %v1736
      %2309 = vmatpush.bf16.msra.mxu0 %v1732
      %2310 = vmatpush.bf16.msra.mxu0 %v1728
      %2311 = vmatpush.bf16.msra.mxu0 %v1724
      %2312 = vmatpush.bf16.msra.mxu0 %v1720
      %2313 = vmatmul.bf16.gmra.mxu0 %v717
      %v2314 = vpop.f32.mrf.mxu0
      %v2315 = vadd.f32 %v2302, %v2314
      %v2316 = vpop.f32.mrf.mxu0
      %2317 = vdwg.mxu0
      %2318 = vmatpush.bf16.msra.mxu0 %v1525
      %2319 = vmatpush.bf16.msra.mxu0 %v1521
      %2320 = vmatpush.bf16.msra.mxu0 %v1517
      %2321 = vmatpush.bf16.msra.mxu0 %v1513
      %2322 = vmatpush.bf16.msra.mxu0 %v1509
      %2323 = vmatpush.bf16.msra.mxu0 %v1505
      %2324 = vmatpush.bf16.msra.mxu0 %v1501
      %2325 = vmatpush.bf16.msra.mxu0 %v1497
      %2326 = vmatmul.bf16.gmra.mxu0 %v710
      %v2327 = vpop.f32.mrf.mxu0
      %v2328 = vadd.f32 0.0, %v2327
      %v2329 = vpop.f32.mrf.mxu0
      %2330 = vdwg.mxu0
      %2331 = vmatpush.bf16.msra.mxu0 %v1557
      %2332 = vmatpush.bf16.msra.mxu0 %v1553
      %2333 = vmatpush.bf16.msra.mxu0 %v1549
      %2334 = vmatpush.bf16.msra.mxu0 %v1545
      %2335 = vmatpush.bf16.msra.mxu0 %v1541
      %2336 = vmatpush.bf16.msra.mxu0 %v1537
      %2337 = vmatpush.bf16.msra.mxu0 %v1533
      %2338 = vmatpush.bf16.msra.mxu0 %v1529
      %2339 = vmatmul.bf16.gmra.mxu0 %v711
      %v2340 = vpop.f32.mrf.mxu0
      %v2341 = vadd.f32 %v2328, %v2340
      %v2342 = vpop.f32.mrf.mxu0
      %2343 = vdwg.mxu0
      %2344 = vmatpush.bf16.msra.mxu0 %v1589
      %2345 = vmatpush.bf16.msra.mxu0 %v1585
      %2346 = vmatpush.bf16.msra.mxu0 %v1581
      %2347 = vmatpush.bf16.msra.mxu0 %v1577
      %2348 = vmatpush.bf16.msra.mxu0 %v1573
      %2349 = vmatpush.bf16.msra.mxu0 %v1569
      %2350 = vmatpush.bf16.msra.mxu0 %v1565
      %2351 = vmatpush.bf16.msra.mxu0 %v1561
      %2352 = vmatmul.bf16.gmra.mxu0 %v712
      %v2353 = vpop.f32.mrf.mxu0
      %v2354 = vadd.f32 %v2341, %v2353
      %v2355 = vpop.f32.mrf.mxu0
      %2356 = vdwg.mxu0
      %2357 = vmatpush.bf16.msra.mxu0 %v1621
      %2358 = vmatpush.bf16.msra.mxu0 %v1617
      %2359 = vmatpush.bf16.msra.mxu0 %v1613
      %2360 = vmatpush.bf16.msra.mxu0 %v1609
      %2361 = vmatpush.bf16.msra.mxu0 %v1605
      %2362 = vmatpush.bf16.msra.mxu0 %v1601
      %2363 = vmatpush.bf16.msra.mxu0 %v1597
      %2364 = vmatpush.bf16.msra.mxu0 %v1593
      %2365 = vmatmul.bf16.gmra.mxu0 %v713
      %v2366 = vpop.f32.mrf.mxu0
      %v2367 = vadd.f32 %v2354, %v2366
      %v2368 = vpop.f32.mrf.mxu0
      %2369 = vdwg.mxu0
      %2370 = vmatpush.bf16.msra.mxu0 %v1653
      %2371 = vmatpush.bf16.msra.mxu0 %v1649
      %2372 = vmatpush.bf16.msra.mxu0 %v1645
      %2373 = vmatpush.bf16.msra.mxu0 %v1641
      %2374 = vmatpush.bf16.msra.mxu0 %v1637
      %2375 = vmatpush.bf16.msra.mxu0 %v1633
      %2376 = vmatpush.bf16.msra.mxu0 %v1629
      %2377 = vmatpush.bf16.msra.mxu0 %v1625
      %2378 = vmatmul.bf16.gmra.mxu0 %v714
      %v2379 = vpop.f32.mrf.mxu0
      %v2380 = vadd.f32 %v2367, %v2379
      %v2381 = vpop.f32.mrf.mxu0
      %2382 = vdwg.mxu0
      %2383 = vmatpush.bf16.msra.mxu0 %v1685
      %2384 = vmatpush.bf16.msra.mxu0 %v1681
      %2385 = vmatpush.bf16.msra.mxu0 %v1677
      %2386 = vmatpush.bf16.msra.mxu0 %v1673
      %2387 = vmatpush.bf16.msra.mxu0 %v1669
      %2388 = vmatpush.bf16.msra.mxu0 %v1665
      %2389 = vmatpush.bf16.msra.mxu0 %v1661
      %2390 = vmatpush.bf16.msra.mxu0 %v1657
      %2391 = vmatmul.bf16.gmra.mxu0 %v715
      %v2392 = vpop.f32.mrf.mxu0
      %v2393 = vadd.f32 %v2380, %v2392
      %v2394 = vpop.f32.mrf.mxu0
      %2395 = vdwg.mxu0
      %2396 = vmatpush.bf16.msra.mxu0 %v1717
      %2397 = vmatpush.bf16.msra.mxu0 %v1713
      %2398 = vmatpush.bf16.msra.mxu0 %v1709
      %2399 = vmatpush.bf16.msra.mxu0 %v1705
      %2400 = vmatpush.bf16.msra.mxu0 %v1701
      %2401 = vmatpush.bf16.msra.mxu0 %v1697
      %2402 = vmatpush.bf16.msra.mxu0 %v1693
      %2403 = vmatpush.bf16.msra.mxu0 %v1689
      %2404 = vmatmul.bf16.gmra.mxu0 %v716
      %v2405 = vpop.f32.mrf.mxu0
      %v2406 = vadd.f32 %v2393, %v2405
      %v2407 = vpop.f32.mrf.mxu0
      %2408 = vdwg.mxu0
      %2409 = vmatpush.bf16.msra.mxu0 %v1749
      %2410 = vmatpush.bf16.msra.mxu0 %v1745
      %2411 = vmatpush.bf16.msra.mxu0 %v1741
      %2412 = vmatpush.bf16.msra.mxu0 %v1737
      %2413 = vmatpush.bf16.msra.mxu0 %v1733
      %2414 = vmatpush.bf16.msra.mxu0 %v1729
      %2415 = vmatpush.bf16.msra.mxu0 %v1725
      %2416 = vmatpush.bf16.msra.mxu0 %v1721
      %2417 = vmatmul.bf16.gmra.mxu0 %v717
      %v2418 = vpop.f32.mrf.mxu0
      %v2419 = vadd.f32 %v2406, %v2418
      %v2420 = vpop.f32.mrf.mxu0
      %2421 = vdwg.mxu0
      %v2422 = vadd.f32 %v434, %v2107
      %v2423 = vadd.f32 %v435, %v2211
      %v2424 = vadd.f32 %v436, %v2315
      %v2425 = vadd.f32 %v437, %v2419
      %2426 = vst [vmem:[#allocation2] sm:$0xff] %v2422
      %2427 = vst [vmem:[#allocation2 + $0x8] sm:$0xff] %v2423
      %2428 = vst [vmem:[#allocation2 + $0x10] sm:$0xff] %v2424
      %2429 = vst [vmem:[#allocation2 + $0x18] sm:$0xff] %v2425
      %p2430 = scmp.eq.s32.totalorder %s23, 3
      // Predicated region
      $region73: #{second_model_forward.9} parent=67 // pred_check
        %p2431 = pneg %p2430
      $region74: #{second_model_forward.9} parent=67 // pred_check_branch
        %2433 = sbr.rel (%p2431) target = $region76
      $region75: #{second_model_forward.9} parent=67 // pred_region
        %v2434 = vld [vmem:[#allocation2] sm:$0xff]
        %v2435 = vld [vmem:[#allocation2 + $0x8] sm:$0xff]
        %v2436 = vld [vmem:[#allocation2 + $0x10] sm:$0xff]
        %v2437 = vld [vmem:[#allocation2 + $0x18] sm:$0xff]
        %v2438 = vld [vmem:[%s2] sm:$0xf]
        %v2440 = vperm.slane %v2438, 0
        %v2441 = vperm.slane %v2438, 1
        %v2442 = vperm.slane %v2438, 2
        %v2443 = vperm.slane %v2438, 3
        %v2448 = vadd.f32 %v2434, %v2440
        %v2449 = vadd.f32 %v2435, %v2441
        %v2450 = vadd.f32 %v2436, %v2442
        %v2451 = vadd.f32 %v2437, %v2443
        %vm2452 = vcmp.gt.f32.partialorder %v2448, 0.0
        %vm2453 = vcmp.gt.f32.partialorder %v2449, 0.0
        %vm2454 = vcmp.gt.f32.partialorder %v2450, 0.0
        %vm2455 = vcmp.gt.f32.partialorder %v2451, 0.0
        %v2456 = vmul.f32 %v2448, 0.2
        %v2457 = vmul.f32 %v2449, 0.2
        %v2458 = vmul.f32 %v2450, 0.2
        %v2459 = vmul.f32 %v2451, 0.2
        %v2460 = vsel %vm2452, %v2448, %v2456
        %v2461 = vsel %vm2453, %v2449, %v2457
        %v2462 = vsel %vm2454, %v2450, %v2458
        %v2463 = vsel %vm2455, %v2451, %v2459
        %v2464 = vld [vmem:[%s3] sm:$0x3]
        %vm2465 = vcmask 64512
        %v2467 = vsel %vm2465, %v2464, 0
        %2469 = vmatpush.msra.mxu0 0.0
        %2470 = vmatpush.msra.mxu0 0.0
        %2471 = vmatpush.msra.mxu0 0.0
        %2472 = vmatpush.msra.mxu0 0.0
        %2473 = vmatpush.msra.mxu0 0.0
        %2474 = vmatpush.msra.mxu0 0.0
        %2475 = vmatpush.msra.mxu0 0.0
        %2476 = vmatpush.msra.mxu0 0.0
        %2477 = vmatpush.msra.mxu0 0.0
        %2478 = vmatpush.msra.mxu0 0.0
        %2479 = vmatpush.msra.mxu0 0.0
        %2480 = vmatpush.msra.mxu0 0.0
        %2481 = vmatpush.msra.mxu0 0.0
        %2482 = vmatpush.msra.mxu0 0.0
        %2483 = vmatpush.msra.mxu0 0.0
        %2484 = vmatpush.msra.mxu0 %v2460
        %2485 = vmatmul.f32.gmra.mxu0 %v2467
        %v2486 = vpop.f32.mrf.mxu0
        %v2487 = vadd.f32 0.0, %v2486
        %2488 = vdwg.mxu0
        %2489 = vmatpush.msra.mxu0 0.0
        %2490 = vmatpush.msra.mxu0 0.0
        %2491 = vmatpush.msra.mxu0 0.0
        %2492 = vmatpush.msra.mxu0 0.0
        %2493 = vmatpush.msra.mxu0 0.0
        %2494 = vmatpush.msra.mxu0 0.0
        %2495 = vmatpush.msra.mxu0 0.0
        %2496 = vmatpush.msra.mxu0 0.0
        %2497 = vmatpush.msra.mxu0 0.0
        %2498 = vmatpush.msra.mxu0 0.0
        %2499 = vmatpush.msra.mxu0 0.0
        %2500 = vmatpush.msra.mxu0 0.0
        %2501 = vmatpush.msra.mxu0 0.0
        %2502 = vmatpush.msra.mxu0 0.0
        %2503 = vmatpush.msra.mxu0 0.0
        %2504 = vmatpush.msra.mxu0 %v2461
        %2505 = vmatmul.f32.gmra.mxu0 %v2467
        %v2506 = vpop.f32.mrf.mxu0
        %v2507 = vadd.f32 0.0, %v2506
        %2508 = vdwg.mxu0
        %2509 = vmatpush.msra.mxu0 0.0
        %2510 = vmatpush.msra.mxu0 0.0
        %2511 = vmatpush.msra.mxu0 0.0
        %2512 = vmatpush.msra.mxu0 0.0
        %2513 = vmatpush.msra.mxu0 0.0
        %2514 = vmatpush.msra.mxu0 0.0
        %2515 = vmatpush.msra.mxu0 0.0
        %2516 = vmatpush.msra.mxu0 0.0
        %2517 = vmatpush.msra.mxu0 0.0
        %2518 = vmatpush.msra.mxu0 0.0
        %2519 = vmatpush.msra.mxu0 0.0
        %2520 = vmatpush.msra.mxu0 0.0
        %2521 = vmatpush.msra.mxu0 0.0
        %2522 = vmatpush.msra.mxu0 0.0
        %2523 = vmatpush.msra.mxu0 0.0
        %2524 = vmatpush.msra.mxu0 %v2462
        %2525 = vmatmul.f32.gmra.mxu0 %v2467
        %v2526 = vpop.f32.mrf.mxu0
        %v2527 = vadd.f32 0.0, %v2526
        %2528 = vdwg.mxu0
        %2529 = vmatpush.msra.mxu0 0.0
        %2530 = vmatpush.msra.mxu0 0.0
        %2531 = vmatpush.msra.mxu0 0.0
        %2532 = vmatpush.msra.mxu0 0.0
        %2533 = vmatpush.msra.mxu0 0.0
        %2534 = vmatpush.msra.mxu0 0.0
        %2535 = vmatpush.msra.mxu0 0.0
        %2536 = vmatpush.msra.mxu0 0.0
        %2537 = vmatpush.msra.mxu0 0.0
        %2538 = vmatpush.msra.mxu0 0.0
        %2539 = vmatpush.msra.mxu0 0.0
        %2540 = vmatpush.msra.mxu0 0.0
        %2541 = vmatpush.msra.mxu0 0.0
        %2542 = vmatpush.msra.mxu0 0.0
        %2543 = vmatpush.msra.mxu0 0.0
        %2544 = vmatpush.msra.mxu0 %v2463
        %2545 = vmatmul.f32.gmra.mxu0 %v2467
        %v2546 = vpop.f32.mrf.mxu0
        %v2547 = vadd.f32 0.0, %v2546
        %2548 = vdwg.mxu0
        %v2549 = vld [vmem:[%s4] sm:$0xff]
        %v2550 = vld [vmem:[%s4 + $0x8] sm:$0xff]
        %v2551 = vld [vmem:[%s4 + $0x10] sm:$0xff]
        %v2552 = vld [vmem:[%s4 + $0x18] sm:$0xff]
        %v2553 = vld [vmem:[%s4 + $0x20] sm:$0xff]
        %v2554 = vld [vmem:[%s4 + $0x28] sm:$0xff]
        %v2555 = vld [vmem:[%s4 + $0x30] sm:$0xff]
        %v2556 = vld [vmem:[%s4 + $0x38] sm:$0xff]
        %v2557 = vld [vmem:[%s4 + $0x40] sm:$0xff]
        %v2558 = vld [vmem:[%s4 + $0x48] sm:$0xff]
        %v2559 = vld [vmem:[%s4 + $0x50] sm:$0xff]
        %v2560 = vld [vmem:[%s4 + $0x58] sm:$0xff]
        %v2561 = vld [vmem:[%s4 + $0x60] sm:$0xff]
        %v2562 = vld [vmem:[%s4 + $0x68] sm:$0xff]
        %v2563 = vld [vmem:[%s4 + $0x70] sm:$0xff]
        %v2564 = vld [vmem:[%s4 + $0x78] sm:$0xff]
        %v2565 = vld [vmem:[%s4 + $0x80] sm:$0xff]
        %v2566 = vld [vmem:[%s4 + $0x88] sm:$0xff]
        %v2567 = vld [vmem:[%s4 + $0x90] sm:$0xff]
        %v2568 = vld [vmem:[%s4 + $0x98] sm:$0xff]
        %v2569 = vld [vmem:[%s4 + $0xa0] sm:$0xff]
        %v2570 = vld [vmem:[%s4 + $0xa8] sm:$0xff]
        %v2571 = vld [vmem:[%s4 + $0xb0] sm:$0xff]
        %v2572 = vld [vmem:[%s4 + $0xb8] sm:$0xff]
        %v2573 = vld [vmem:[%s4 + $0xc0] sm:$0xff]
        %v2574 = vld [vmem:[%s4 + $0xc8] sm:$0xff]
        %v2575 = vld [vmem:[%s4 + $0xd0] sm:$0xff]
        %v2576 = vld [vmem:[%s4 + $0xd8] sm:$0xff]
        %v2577 = vld [vmem:[%s4 + $0xe0] sm:$0xff]
        %v2578 = vld [vmem:[%s4 + $0xe8] sm:$0xff]
        %v2579 = vld [vmem:[%s4 + $0xf0] sm:$0xff]
        %v2580 = vld [vmem:[%s4 + $0xf8] sm:$0xff]
        %v2581 = vld [vmem:[%s4 + $0x100] sm:$0xff]
        %v2582 = vld [vmem:[%s4 + $0x108] sm:$0xff]
        %v2583 = vld [vmem:[%s4 + $0x110] sm:$0xff]
        %v2584 = vld [vmem:[%s4 + $0x118] sm:$0xff]
        %v2585 = vld [vmem:[%s4 + $0x120] sm:$0xff]
        %v2586 = vld [vmem:[%s4 + $0x128] sm:$0xff]
        %v2587 = vld [vmem:[%s4 + $0x130] sm:$0xff]
        %v2588 = vld [vmem:[%s4 + $0x138] sm:$0xff]
        %v2589 = vld [vmem:[%s4 + $0x140] sm:$0xff]
        %v2590 = vld [vmem:[%s4 + $0x148] sm:$0xff]
        %v2591 = vld [vmem:[%s4 + $0x150] sm:$0xff]
        %v2592 = vld [vmem:[%s4 + $0x158] sm:$0xff]
        %v2593 = vld [vmem:[%s4 + $0x160] sm:$0xff]
        %v2594 = vld [vmem:[%s4 + $0x168] sm:$0xff]
        %v2595 = vld [vmem:[%s4 + $0x170] sm:$0xff]
        %v2596 = vld [vmem:[%s4 + $0x178] sm:$0xff]
        %v2597 = vld [vmem:[%s4 + $0x180] sm:$0xff]
        %v2598 = vld [vmem:[%s4 + $0x188] sm:$0xff]
        %v2599 = vld [vmem:[%s4 + $0x190] sm:$0xff]
        %v2600 = vld [vmem:[%s4 + $0x198] sm:$0xff]
        %v2601 = vld [vmem:[%s4 + $0x1a0] sm:$0xff]
        %v2602 = vld [vmem:[%s4 + $0x1a8] sm:$0xff]
        %v2603 = vld [vmem:[%s4 + $0x1b0] sm:$0xff]
        %v2604 = vld [vmem:[%s4 + $0x1b8] sm:$0xff]
        %v2605 = vld [vmem:[%s4 + $0x1c0] sm:$0xff]
        %v2606 = vld [vmem:[%s4 + $0x1c8] sm:$0xff]
        %v2607 = vld [vmem:[%s4 + $0x1d0] sm:$0xff]
        %v2608 = vld [vmem:[%s4 + $0x1d8] sm:$0xff]
        %v2609 = vld [vmem:[%s4 + $0x1e0] sm:$0xff]
        %v2610 = vld [vmem:[%s4 + $0x1e8] sm:$0xff]
        %v2611 = vld [vmem:[%s4 + $0x1f0] sm:$0xff]
        %v2612 = vld [vmem:[%s4 + $0x1f8] sm:$0xff]
        %v2613 = vld [vmem:[%s5] sm:$0x1]
        %v2615 = vperm.slane %v2613, 0
        %2617 = vmatpush.msra.mxu0 %v2564
        %2618 = vmatpush.msra.mxu0 %v2563
        %2619 = vmatpush.msra.mxu0 %v2562
        %2620 = vmatpush.msra.mxu0 %v2561
        %2621 = vmatpush.msra.mxu0 %v2560
        %2622 = vmatpush.msra.mxu0 %v2559
        %2623 = vmatpush.msra.mxu0 %v2558
        %2624 = vmatpush.msra.mxu0 %v2557
        %2625 = vmatpush.msra.mxu0 %v2556
        %2626 = vmatpush.msra.mxu0 %v2555
        %2627 = vmatpush.msra.mxu0 %v2554
        %2628 = vmatpush.msra.mxu0 %v2553
        %2629 = vmatpush.msra.mxu0 %v2552
        %2630 = vmatpush.msra.mxu0 %v2551
        %2631 = vmatpush.msra.mxu0 %v2550
        %2632 = vmatpush.msra.mxu0 %v2549
        %2633 = vmatmul.f32.gmra.mxu0 %v2487
        %v2634 = vpop.f32.mrf.mxu0
        %v2635 = vadd.f32 %v2615, %v2634
        %2636 = vdwg.mxu0
        %2637 = vmatpush.msra.mxu0 %v2580
        %2638 = vmatpush.msra.mxu0 %v2579
        %2639 = vmatpush.msra.mxu0 %v2578
        %2640 = vmatpush.msra.mxu0 %v2577
        %2641 = vmatpush.msra.mxu0 %v2576
        %2642 = vmatpush.msra.mxu0 %v2575
        %2643 = vmatpush.msra.mxu0 %v2574
        %2644 = vmatpush.msra.mxu0 %v2573
        %2645 = vmatpush.msra.mxu0 %v2572
        %2646 = vmatpush.msra.mxu0 %v2571
        %2647 = vmatpush.msra.mxu0 %v2570
        %2648 = vmatpush.msra.mxu0 %v2569
        %2649 = vmatpush.msra.mxu0 %v2568
        %2650 = vmatpush.msra.mxu0 %v2567
        %2651 = vmatpush.msra.mxu0 %v2566
        %2652 = vmatpush.msra.mxu0 %v2565
        %2653 = vmatmul.f32.gmra.mxu0 %v2507
        %v2654 = vpop.f32.mrf.mxu0
        %v2655 = vadd.f32 %v2635, %v2654
        %2656 = vdwg.mxu0
        %2657 = vmatpush.msra.mxu0 %v2596
        %2658 = vmatpush.msra.mxu0 %v2595
        %2659 = vmatpush.msra.mxu0 %v2594
        %2660 = vmatpush.msra.mxu0 %v2593
        %2661 = vmatpush.msra.mxu0 %v2592
        %2662 = vmatpush.msra.mxu0 %v2591
        %2663 = vmatpush.msra.mxu0 %v2590
        %2664 = vmatpush.msra.mxu0 %v2589
        %2665 = vmatpush.msra.mxu0 %v2588
        %2666 = vmatpush.msra.mxu0 %v2587
        %2667 = vmatpush.msra.mxu0 %v2586
        %2668 = vmatpush.msra.mxu0 %v2585
        %2669 = vmatpush.msra.mxu0 %v2584
        %2670 = vmatpush.msra.mxu0 %v2583
        %2671 = vmatpush.msra.mxu0 %v2582
        %2672 = vmatpush.msra.mxu0 %v2581
        %2673 = vmatmul.f32.gmra.mxu0 %v2527
        %v2674 = vpop.f32.mrf.mxu0
        %v2675 = vadd.f32 %v2655, %v2674
        %2676 = vdwg.mxu0
        %2677 = vmatpush.msra.mxu0 %v2612
        %2678 = vmatpush.msra.mxu0 %v2611
        %2679 = vmatpush.msra.mxu0 %v2610
        %2680 = vmatpush.msra.mxu0 %v2609
        %2681 = vmatpush.msra.mxu0 %v2608
        %2682 = vmatpush.msra.mxu0 %v2607
        %2683 = vmatpush.msra.mxu0 %v2606
        %2684 = vmatpush.msra.mxu0 %v2605
        %2685 = vmatpush.msra.mxu0 %v2604
        %2686 = vmatpush.msra.mxu0 %v2603
        %2687 = vmatpush.msra.mxu0 %v2602
        %2688 = vmatpush.msra.mxu0 %v2601
        %2689 = vmatpush.msra.mxu0 %v2600
        %2690 = vmatpush.msra.mxu0 %v2599
        %2691 = vmatpush.msra.mxu0 %v2598
        %2692 = vmatpush.msra.mxu0 %v2597
        %2693 = vmatmul.f32.gmra.mxu0 %v2547
        %v2694 = vpop.f32.mrf.mxu0
        %v2695 = vadd.f32 %v2675, %v2694
        %2696 = vdwg.mxu0
        %v2697 = vmax.f32 %v2695, 0.0
        %v2698 = vld [vmem:[%s6] sm:$0xff]
        %v2699 = vld [vmem:[%s6 + $0x8] sm:$0xff]
        %v2700 = vld [vmem:[%s6 + $0x10] sm:$0xff]
        %v2701 = vld [vmem:[%s6 + $0x18] sm:$0xff]
        %v2702 = vld [vmem:[%s6 + $0x20] sm:$0xff]
        %v2703 = vld [vmem:[%s6 + $0x28] sm:$0xff]
        %v2704 = vld [vmem:[%s6 + $0x30] sm:$0xff]
        %v2705 = vld [vmem:[%s6 + $0x38] sm:$0xff]
        %v2706 = vld [vmem:[%s6 + $0x40] sm:$0xff]
        %v2707 = vld [vmem:[%s6 + $0x48] sm:$0xff]
        %v2708 = vld [vmem:[%s6 + $0x50] sm:$0xff]
        %v2709 = vld [vmem:[%s6 + $0x58] sm:$0xff]
        %v2710 = vld [vmem:[%s6 + $0x60] sm:$0xff]
        %v2711 = vld [vmem:[%s6 + $0x68] sm:$0xff]
        %v2712 = vld [vmem:[%s6 + $0x70] sm:$0xff]
        %v2713 = vld [vmem:[%s6 + $0x78] sm:$0xff]
        %v2714 = vld [vmem:[%s7] sm:$0xf]
        %v2716 = vperm.slane %v2714, 0
        %v2717 = vperm.slane %v2714, 1
        %v2718 = vperm.slane %v2714, 2
        %v2719 = vperm.slane %v2714, 3
        %vm2724 = vcmask 261120
        %v2726 = vsel %vm2724, %v2697, 0
        %2728 = vmatpush.msra.mxu0 0.0
        %2729 = vmatpush.msra.mxu0 0.0
        %2730 = vmatpush.msra.mxu0 0.0
        %2731 = vmatpush.msra.mxu0 0.0
        %2732 = vmatpush.msra.mxu0 0.0
        %2733 = vmatpush.msra.mxu0 0.0
        %2734 = vmatpush.msra.mxu0 0.0
        %2735 = vmatpush.msra.mxu0 0.0
        %2736 = vmatpush.msra.mxu0 0.0
        %2737 = vmatpush.msra.mxu0 0.0
        %2738 = vmatpush.msra.mxu0 0.0
        %2739 = vmatpush.msra.mxu0 0.0
        %2740 = vmatpush.msra.mxu0 %v2710
        %2741 = vmatpush.msra.mxu0 %v2706
        %2742 = vmatpush.msra.mxu0 %v2702
        %2743 = vmatpush.msra.mxu0 %v2698
        %2744 = vmatmul.f32.gmra.mxu0 %v2726
        %v2745 = vpop.f32.mrf.mxu0
        %v2746 = vadd.f32 %v2716, %v2745
        %2747 = vdwg.mxu0
        %2748 = vmatpush.msra.mxu0 0.0
        %2749 = vmatpush.msra.mxu0 0.0
        %2750 = vmatpush.msra.mxu0 0.0
        %2751 = vmatpush.msra.mxu0 0.0
        %2752 = vmatpush.msra.mxu0 0.0
        %2753 = vmatpush.msra.mxu0 0.0
        %2754 = vmatpush.msra.mxu0 0.0
        %2755 = vmatpush.msra.mxu0 0.0
        %2756 = vmatpush.msra.mxu0 0.0
        %2757 = vmatpush.msra.mxu0 0.0
        %2758 = vmatpush.msra.mxu0 0.0
        %2759 = vmatpush.msra.mxu0 0.0
        %2760 = vmatpush.msra.mxu0 %v2711
        %2761 = vmatpush.msra.mxu0 %v2707
        %2762 = vmatpush.msra.mxu0 %v2703
        %2763 = vmatpush.msra.mxu0 %v2699
        %2764 = vmatmul.f32.gmra.mxu0 %v2726
        %v2765 = vpop.f32.mrf.mxu0
        %v2766 = vadd.f32 %v2717, %v2765
        %2767 = vdwg.mxu0
        %2768 = vmatpush.msra.mxu0 0.0
        %2769 = vmatpush.msra.mxu0 0.0
        %2770 = vmatpush.msra.mxu0 0.0
        %2771 = vmatpush.msra.mxu0 0.0
        %2772 = vmatpush.msra.mxu0 0.0
        %2773 = vmatpush.msra.mxu0 0.0
        %2774 = vmatpush.msra.mxu0 0.0
        %2775 = vmatpush.msra.mxu0 0.0
        %2776 = vmatpush.msra.mxu0 0.0
        %2777 = vmatpush.msra.mxu0 0.0
        %2778 = vmatpush.msra.mxu0 0.0
        %2779 = vmatpush.msra.mxu0 0.0
        %2780 = vmatpush.msra.mxu0 %v2712
        %2781 = vmatpush.msra.mxu0 %v2708
        %2782 = vmatpush.msra.mxu0 %v2704
        %2783 = vmatpush.msra.mxu0 %v2700
        %2784 = vmatmul.f32.gmra.mxu0 %v2726
        %v2785 = vpop.f32.mrf.mxu0
        %v2786 = vadd.f32 %v2718, %v2785
        %2787 = vdwg.mxu0
        %2788 = vmatpush.msra.mxu0 0.0
        %2789 = vmatpush.msra.mxu0 0.0
        %2790 = vmatpush.msra.mxu0 0.0
        %2791 = vmatpush.msra.mxu0 0.0
        %2792 = vmatpush.msra.mxu0 0.0
        %2793 = vmatpush.msra.mxu0 0.0
        %2794 = vmatpush.msra.mxu0 0.0
        %2795 = vmatpush.msra.mxu0 0.0
        %2796 = vmatpush.msra.mxu0 0.0
        %2797 = vmatpush.msra.mxu0 0.0
        %2798 = vmatpush.msra.mxu0 0.0
        %2799 = vmatpush.msra.mxu0 0.0
        %2800 = vmatpush.msra.mxu0 %v2713
        %2801 = vmatpush.msra.mxu0 %v2709
        %2802 = vmatpush.msra.mxu0 %v2705
        %2803 = vmatpush.msra.mxu0 %v2701
        %2804 = vmatmul.f32.gmra.mxu0 %v2726
        %v2805 = vpop.f32.mrf.mxu0
        %v2806 = vadd.f32 %v2719, %v2805
        %2807 = vdwg.mxu0
        %v2808 = vxor.u32 %v2746, 2147483648
        %v2809 = vxor.u32 %v2766, 2147483648
        %v2810 = vxor.u32 %v2786, 2147483648
        %v2811 = vxor.u32 %v2806, 2147483648
        %v2812 = vmul.f32 %v2808, 1.442695
        %v2813 = vpow.pop %v2812
        %v2814 = vmul.f32 %v2809, 1.442695
        %v2815 = vpow.pop %v2814
        %v2816 = vmul.f32 %v2810, 1.442695
        %v2817 = vpow.pop %v2816
        %v2818 = vmul.f32 %v2811, 1.442695
        %v2819 = vpow.pop %v2818
        %v2820 = vadd.f32 %v2813, 1.0
        %v2821 = vadd.f32 %v2815, 1.0
        %v2822 = vadd.f32 %v2817, 1.0
        %v2823 = vadd.f32 %v2819, 1.0
        %v2824 = vrcp.pop %v2820
        %v2825 = vmul.f32 %v2820, %v2824
        %v2826 = vsub.f32 1.0, %v2825
        %v2827 = vmul.f32 %v2824, %v2826
        %v2828 = vadd.f32 %v2824, %v2827
        %vm2829 = vweird.f32 %v2820
        %vm2830 = vweird.f32 %v2824
        %vm2831 = vmor %vm2829, %vm2830
        %v2832 = vsel %vm2831, %v2824, %v2828
        %v2833 = vand.u32 2147483647, %v2820
        %vm2834 = vcmp.eq.f32.partialorder %v2833, 8.507059e+37
        %v2835 = vand.u32 %v2820, 2147483648
        %v2836 = vor.u32 1.1754944e-38, %v2835
        %v2837 = vsel %vm2834, %v2836, %v2832
        %v2838 = vmul.f32 1.0, %v2837
        %v2839 = vrcp.pop %v2821
        %v2840 = vmul.f32 %v2821, %v2839
        %v2841 = vsub.f32 1.0, %v2840
        %v2842 = vmul.f32 %v2839, %v2841
        %v2843 = vadd.f32 %v2839, %v2842
        %vm2844 = vweird.f32 %v2821
        %vm2845 = vweird.f32 %v2839
        %vm2846 = vmor %vm2844, %vm2845
        %v2847 = vsel %vm2846, %v2839, %v2843
        %v2848 = vand.u32 2147483647, %v2821
        %vm2849 = vcmp.eq.f32.partialorder %v2848, 8.507059e+37
        %v2850 = vand.u32 %v2821, 2147483648
        %v2851 = vor.u32 1.1754944e-38, %v2850
        %v2852 = vsel %vm2849, %v2851, %v2847
        %v2853 = vmul.f32 1.0, %v2852
        %v2854 = vrcp.pop %v2822
        %v2855 = vmul.f32 %v2822, %v2854
        %v2856 = vsub.f32 1.0, %v2855
        %v2857 = vmul.f32 %v2854, %v2856
        %v2858 = vadd.f32 %v2854, %v2857
        %vm2859 = vweird.f32 %v2822
        %vm2860 = vweird.f32 %v2854
        %vm2861 = vmor %vm2859, %vm2860
        %v2862 = vsel %vm2861, %v2854, %v2858
        %v2863 = vand.u32 2147483647, %v2822
        %vm2864 = vcmp.eq.f32.partialorder %v2863, 8.507059e+37
        %v2865 = vand.u32 %v2822, 2147483648
        %v2866 = vor.u32 1.1754944e-38, %v2865
        %v2867 = vsel %vm2864, %v2866, %v2862
        %v2868 = vmul.f32 1.0, %v2867
        %v2869 = vrcp.pop %v2823
        %v2870 = vmul.f32 %v2823, %v2869
        %v2871 = vsub.f32 1.0, %v2870
        %v2872 = vmul.f32 %v2869, %v2871
        %v2873 = vadd.f32 %v2869, %v2872
        %vm2874 = vweird.f32 %v2823
        %vm2875 = vweird.f32 %v2869
        %vm2876 = vmor %vm2874, %vm2875
        %v2877 = vsel %vm2876, %v2869, %v2873
        %v2878 = vand.u32 2147483647, %v2823
        %vm2879 = vcmp.eq.f32.partialorder %v2878, 8.507059e+37
        %v2880 = vand.u32 %v2823, 2147483648
        %v2881 = vor.u32 1.1754944e-38, %v2880
        %v2882 = vsel %vm2879, %v2881, %v2877
        %v2883 = vmul.f32 1.0, %v2882
        %v2884 = vmul.f32 %v2487, %v2838
        %v2885 = vmul.f32 %v2507, %v2853
        %v2886 = vmul.f32 %v2527, %v2868
        %v2887 = vmul.f32 %v2547, %v2883
        %v2888 = vld [vmem:[%s8] sm:$0xff]
        %v2889 = vld [vmem:[%s8 + $0x8] sm:$0xff]
        %v2890 = vld [vmem:[%s8 + $0x10] sm:$0xff]
        %v2891 = vld [vmem:[%s8 + $0x18] sm:$0xff]
        %v2892 = vld [vmem:[%s8 + $0x20] sm:$0xff]
        %v2893 = vld [vmem:[%s8 + $0x28] sm:$0xff]
        %v2894 = vld [vmem:[%s8 + $0x30] sm:$0xff]
        %v2895 = vld [vmem:[%s8 + $0x38] sm:$0xff]
        %v2896 = vld [vmem:[%s8 + $0x40] sm:$0xff]
        %v2897 = vld [vmem:[%s8 + $0x48] sm:$0xff]
        %v2898 = vld [vmem:[%s8 + $0x50] sm:$0xff]
        %v2899 = vld [vmem:[%s8 + $0x58] sm:$0xff]
        %v2900 = vld [vmem:[%s8 + $0x60] sm:$0xff]
        %v2901 = vld [vmem:[%s8 + $0x68] sm:$0xff]
        %v2902 = vld [vmem:[%s8 + $0x70] sm:$0xff]
        %v2903 = vld [vmem:[%s8 + $0x78] sm:$0xff]
        %v2904 = vld [vmem:[%s8 + $0x80] sm:$0xff]
        %v2905 = vld [vmem:[%s8 + $0x88] sm:$0xff]
        %v2906 = vld [vmem:[%s8 + $0x90] sm:$0xff]
        %v2907 = vld [vmem:[%s8 + $0x98] sm:$0xff]
        %v2908 = vld [vmem:[%s8 + $0xa0] sm:$0xff]
        %v2909 = vld [vmem:[%s8 + $0xa8] sm:$0xff]
        %v2910 = vld [vmem:[%s8 + $0xb0] sm:$0xff]
        %v2911 = vld [vmem:[%s8 + $0xb8] sm:$0xff]
        %v2912 = vld [vmem:[%s8 + $0xc0] sm:$0xff]
        %v2913 = vld [vmem:[%s8 + $0xc8] sm:$0xff]
        %v2914 = vld [vmem:[%s8 + $0xd0] sm:$0xff]
        %v2915 = vld [vmem:[%s8 + $0xd8] sm:$0xff]
        %v2916 = vld [vmem:[%s8 + $0xe0] sm:$0xff]
        %v2917 = vld [vmem:[%s8 + $0xe8] sm:$0xff]
        %v2918 = vld [vmem:[%s8 + $0xf0] sm:$0xff]
        %v2919 = vld [vmem:[%s8 + $0xf8] sm:$0xff]
        %v2920 = vld [vmem:[%s8 + $0x100] sm:$0xff]
        %v2921 = vld [vmem:[%s8 + $0x108] sm:$0xff]
        %v2922 = vld [vmem:[%s8 + $0x110] sm:$0xff]
        %v2923 = vld [vmem:[%s8 + $0x118] sm:$0xff]
        %v2924 = vld [vmem:[%s8 + $0x120] sm:$0xff]
        %v2925 = vld [vmem:[%s8 + $0x128] sm:$0xff]
        %v2926 = vld [vmem:[%s8 + $0x130] sm:$0xff]
        %v2927 = vld [vmem:[%s8 + $0x138] sm:$0xff]
        %v2928 = vld [vmem:[%s8 + $0x140] sm:$0xff]
        %v2929 = vld [vmem:[%s8 + $0x148] sm:$0xff]
        %v2930 = vld [vmem:[%s8 + $0x150] sm:$0xff]
        %v2931 = vld [vmem:[%s8 + $0x158] sm:$0xff]
        %v2932 = vld [vmem:[%s8 + $0x160] sm:$0xff]
        %v2933 = vld [vmem:[%s8 + $0x168] sm:$0xff]
        %v2934 = vld [vmem:[%s8 + $0x170] sm:$0xff]
        %v2935 = vld [vmem:[%s8 + $0x178] sm:$0xff]
        %v2936 = vld [vmem:[%s8 + $0x180] sm:$0xff]
        %v2937 = vld [vmem:[%s8 + $0x188] sm:$0xff]
        %v2938 = vld [vmem:[%s8 + $0x190] sm:$0xff]
        %v2939 = vld [vmem:[%s8 + $0x198] sm:$0xff]
        %v2940 = vld [vmem:[%s8 + $0x1a0] sm:$0xff]
        %v2941 = vld [vmem:[%s8 + $0x1a8] sm:$0xff]
        %v2942 = vld [vmem:[%s8 + $0x1b0] sm:$0xff]
        %v2943 = vld [vmem:[%s8 + $0x1b8] sm:$0xff]
        %v2944 = vld [vmem:[%s8 + $0x1c0] sm:$0xff]
        %v2945 = vld [vmem:[%s8 + $0x1c8] sm:$0xff]
        %v2946 = vld [vmem:[%s8 + $0x1d0] sm:$0xff]
        %v2947 = vld [vmem:[%s8 + $0x1d8] sm:$0xff]
        %v2948 = vld [vmem:[%s8 + $0x1e0] sm:$0xff]
        %v2949 = vld [vmem:[%s8 + $0x1e8] sm:$0xff]
        %v2950 = vld [vmem:[%s8 + $0x1f0] sm:$0xff]
        %v2951 = vld [vmem:[%s8 + $0x1f8] sm:$0xff]
        %v2952 = vld [vmem:[%s9] sm:$0x1]
        %v2954 = vperm.slane %v2952, 0
        %2956 = vmatpush.msra.mxu0 %v2903
        %2957 = vmatpush.msra.mxu0 %v2902
        %2958 = vmatpush.msra.mxu0 %v2901
        %2959 = vmatpush.msra.mxu0 %v2900
        %2960 = vmatpush.msra.mxu0 %v2899
        %2961 = vmatpush.msra.mxu0 %v2898
        %2962 = vmatpush.msra.mxu0 %v2897
        %2963 = vmatpush.msra.mxu0 %v2896
        %2964 = vmatpush.msra.mxu0 %v2895
        %2965 = vmatpush.msra.mxu0 %v2894
        %2966 = vmatpush.msra.mxu0 %v2893
        %2967 = vmatpush.msra.mxu0 %v2892
        %2968 = vmatpush.msra.mxu0 %v2891
        %2969 = vmatpush.msra.mxu0 %v2890
        %2970 = vmatpush.msra.mxu0 %v2889
        %2971 = vmatpush.msra.mxu0 %v2888
        %2972 = vmatmul.f32.gmra.mxu0 %v2884
        %v2973 = vpop.f32.mrf.mxu0
        %v2974 = vadd.f32 %v2954, %v2973
        %2975 = vdwg.mxu0
        %2976 = vmatpush.msra.mxu0 %v2919
        %2977 = vmatpush.msra.mxu0 %v2918
        %2978 = vmatpush.msra.mxu0 %v2917
        %2979 = vmatpush.msra.mxu0 %v2916
        %2980 = vmatpush.msra.mxu0 %v2915
        %2981 = vmatpush.msra.mxu0 %v2914
        %2982 = vmatpush.msra.mxu0 %v2913
        %2983 = vmatpush.msra.mxu0 %v2912
        %2984 = vmatpush.msra.mxu0 %v2911
        %2985 = vmatpush.msra.mxu0 %v2910
        %2986 = vmatpush.msra.mxu0 %v2909
        %2987 = vmatpush.msra.mxu0 %v2908
        %2988 = vmatpush.msra.mxu0 %v2907
        %2989 = vmatpush.msra.mxu0 %v2906
        %2990 = vmatpush.msra.mxu0 %v2905
        %2991 = vmatpush.msra.mxu0 %v2904
        %2992 = vmatmul.f32.gmra.mxu0 %v2885
        %v2993 = vpop.f32.mrf.mxu0
        %v2994 = vadd.f32 %v2974, %v2993
        %2995 = vdwg.mxu0
        %2996 = vmatpush.msra.mxu0 %v2935
        %2997 = vmatpush.msra.mxu0 %v2934
        %2998 = vmatpush.msra.mxu0 %v2933
        %2999 = vmatpush.msra.mxu0 %v2932
        %3000 = vmatpush.msra.mxu0 %v2931
        %3001 = vmatpush.msra.mxu0 %v2930
        %3002 = vmatpush.msra.mxu0 %v2929
        %3003 = vmatpush.msra.mxu0 %v2928
        %3004 = vmatpush.msra.mxu0 %v2927
        %3005 = vmatpush.msra.mxu0 %v2926
        %3006 = vmatpush.msra.mxu0 %v2925
        %3007 = vmatpush.msra.mxu0 %v2924
        %3008 = vmatpush.msra.mxu0 %v2923
        %3009 = vmatpush.msra.mxu0 %v2922
        %3010 = vmatpush.msra.mxu0 %v2921
        %3011 = vmatpush.msra.mxu0 %v2920
        %3012 = vmatmul.f32.gmra.mxu0 %v2886
        %v3013 = vpop.f32.mrf.mxu0
        %v3014 = vadd.f32 %v2994, %v3013
        %3015 = vdwg.mxu0
        %3016 = vmatpush.msra.mxu0 %v2951
        %3017 = vmatpush.msra.mxu0 %v2950
        %3018 = vmatpush.msra.mxu0 %v2949
        %3019 = vmatpush.msra.mxu0 %v2948
        %3020 = vmatpush.msra.mxu0 %v2947
        %3021 = vmatpush.msra.mxu0 %v2946
        %3022 = vmatpush.msra.mxu0 %v2945
        %3023 = vmatpush.msra.mxu0 %v2944
        %3024 = vmatpush.msra.mxu0 %v2943
        %3025 = vmatpush.msra.mxu0 %v2942
        %3026 = vmatpush.msra.mxu0 %v2941
        %3027 = vmatpush.msra.mxu0 %v2940
        %3028 = vmatpush.msra.mxu0 %v2939
        %3029 = vmatpush.msra.mxu0 %v2938
        %3030 = vmatpush.msra.mxu0 %v2937
        %3031 = vmatpush.msra.mxu0 %v2936
        %3032 = vmatmul.f32.gmra.mxu0 %v2887
        %v3033 = vpop.f32.mrf.mxu0
        %v3034 = vadd.f32 %v3014, %v3033
        %3035 = vdwg.mxu0
        %v3036 = vld [vmem:[%s10] sm:$0xff]
        %v3037 = vld [vmem:[%s10 + $0x8] sm:$0xff]
        %v3038 = vld [vmem:[%s10 + $0x10] sm:$0xff]
        %v3039 = vld [vmem:[%s10 + $0x18] sm:$0xff]
        %v3040 = vld [vmem:[%s11] sm:$0x1]
        %v3042 = vperm.slane %v3040, 0
        %v3045 = vsel %vm2724, %v3034, 0
        %3047 = vmatpush.msra.mxu0 0.0
        %3048 = vmatpush.msra.mxu0 0.0
        %3049 = vmatpush.msra.mxu0 0.0
        %3050 = vmatpush.msra.mxu0 0.0
        %3051 = vmatpush.msra.mxu0 0.0
        %3052 = vmatpush.msra.mxu0 0.0
        %3053 = vmatpush.msra.mxu0 0.0
        %3054 = vmatpush.msra.mxu0 0.0
        %3055 = vmatpush.msra.mxu0 0.0
        %3056 = vmatpush.msra.mxu0 0.0
        %3057 = vmatpush.msra.mxu0 0.0
        %3058 = vmatpush.msra.mxu0 0.0
        %3059 = vmatpush.msra.mxu0 %v3039
        %3060 = vmatpush.msra.mxu0 %v3038
        %3061 = vmatpush.msra.mxu0 %v3037
        %3062 = vmatpush.msra.mxu0 %v3036
        %3063 = vmatmul.f32.gmra.mxu0 %v3045
        %v3064 = vpop.f32.mrf.mxu0
        %v3065 = vadd.f32 %v3042, %v3064
        %3066 = vdwg.mxu0
        %vm3067 = vcmask 74752
        %3068 = vst.msk [vmem:[%s12] sm:$0x3] %vm3067, %v3065
      $region76: #{second_model_forward.9} parent=67 // pred_fallthru
        _
      // Predicated region
      $region77: #{second_model_forward.9} parent=67 // pred_check
        %p3069 = pneg %p298
      $region78: #{second_model_forward.9} parent=67 // pred_check_branch
        %3071 = sbr.rel (%p3069) target = $region80
      $region79: #{second_model_forward.9} parent=67 // pred_region
        _
      $region80: #{second_model_forward.9} parent=67 // pred_fallthru
        _
      // Predicated region
      $region81: #{second_model_forward.9} parent=67 // pred_check
        %p3072 = pneg %p298
      $region82: #{second_model_forward.9} parent=67 // pred_check_branch
        %3074 = sbr.rel (%p3072) target = $region84
      $region83: #{second_model_forward.9} parent=67 // pred_region
        _
      $region84: #{second_model_forward.9} parent=67 // pred_fallthru
        _
    $region68: #{second_model_forward.9} parent=5 // pred_fallthru
      _
    %p3075 = scmp.le.s32.totalorder 2, %s18
    // Predicated region
    $region85: #{second_model_forward.9} parent=5 // pred_check
      %p3076 = pneg %p3075
    $region86: #{second_model_forward.9} parent=5 // pred_check_branch
      %3078 = sbr.rel (%p3076) target = $region88
    $region87: #{second_model_forward.9} parent=5 // pred_region
      %s3079 = ssub.s32 %s18, 2
    $region88: #{second_model_forward.9} parent=5 // pred_fallthru
      _
  $region6: #{second_model_forward.9} parent=0 // loop_footer
    %s22 = sadd.s32 1, %s18
  $region7: #{second_model_forward.9} parent=0 // loop_footer_branch
    %17 = sbr.rel target = $region3
  $region8: #{second_model_forward.9} parent=0 // loop_exit
    _

</llo_original>
